<compile_context>
chip_gen: v7x
topology: tpu7x:2x2x1
jax: 0.10.0
libtpu: 0.0.40
codegen_flags: <defaults>
</compile_context>

<pallas_src>
import jax
import jax.numpy as jnp
from jax.experimental import pallas as pl
from jax.experimental.pallas import tpu as pltpu


_SLOPE = 0.01


def _leaky_relu(x, slope=_SLOPE):
    return jnp.where(x > 0, x, slope * x)


def _resblock_kernel(x_ref, w1_ref, b1_ref, w2_ref, b2_ref, o_ref):
    # x_ref / o_ref blocks: (C, T) — channels on sublanes, spatial on lanes.
    x = x_ref[...].astype(jnp.float32)                      # (C, T)
    # conv1 (1x1x1) == channel-mixing matmul: (C,C) @ (C,T)
    h = jnp.dot(w1_ref[...], x,
                preferred_element_type=jnp.float32,
                precision=jax.lax.Precision.HIGHEST)
    h = _leaky_relu(h + b1_ref[...])
    # conv2 (1x1x1) + bias + residual + final LeakyReLU, all fused
    y = jnp.dot(w2_ref[...], h,
                preferred_element_type=jnp.float32,
                precision=jax.lax.Precision.HIGHEST)
    y = y + b2_ref[...] + x
    o_ref[...] = _leaky_relu(y).astype(o_ref.dtype)


def _pick_tile(s_pad, n, c, itemsize, *, target_bytes=2 << 20, min_steps=4):
    """Largest 128-multiple tile that divides s_pad, ~target_bytes per block,
    but small enough that the grid has >= min_steps steps (v7x has 2 TCs)."""
    target_lanes = max(128, (target_bytes // (itemsize * c)) // 128 * 128)
    tile = min(target_lanes, s_pad)
    while s_pad % tile:
        tile -= 128
    # Keep both TensorCores fed on v7x: prefer more (smaller) steps over one
    # giant block when the grid would otherwise collapse to 1-3 steps.
    while n * (s_pad // tile) < min_steps:
        nxt = tile - 128
        while nxt >= 128 and s_pad % nxt:
            nxt -= 128
        if nxt < 128 or nxt == tile:
            break
        tile = nxt
    return tile


def resnet_block_forward(x_ncdhw, w1, b1, w2, b2):
    """Fused forward of `resnet_block`.

    x_ncdhw: (N, C, D, H, W); w1, w2: (C, C, 1, 1, 1); b1, b2: (C,)
    """
    N, C, D, H, W = x_ncdhw.shape
    S = D * H * W
    itemsize = jnp.dtype(x_ncdhw.dtype).itemsize

    # Native NCDHW layout -> (N, C, S); spatial is the lane-dense last dim.
    x3 = x_ncdhw.reshape(N, C, S)

    # Pad only to a multiple of 128 lanes (at most 127 garbage lanes); the
    # tile is then chosen to divide s_pad exactly, so no tile-sized padding
    # and no extra HBM pass for typical power-of-two volumes (S % 128 == 0).
    s_pad = pl.cdiv(S, 128) * 128
    if s_pad != S:
        x3 = jnp.pad(x3, ((0, 0), (0, 0), (0, s_pad - S)))

    tile = _pick_tile(s_pad, N, C, itemsize)
    grid = (N, s_pad // tile)

    # 1x1x1 conv weights -> (Cout, Cin) matrices; biases as (C, 1) columns.
    w1_mat = w1[:, :, 0, 0, 0].astype(jnp.float32)
    w2_mat = w2[:, :, 0, 0, 0].astype(jnp.float32)
    b1_col = b1.reshape(C, 1).astype(jnp.float32)
    b2_col = b2.reshape(C, 1).astype(jnp.float32)

    # VMEM budget: double-buffered input + output blocks, plus the f32
    # temporaries (x, h, y) Mosaic keeps live across the two dots.  Stay well
    # under v7x's 64 MiB physical VMEM (scoped default is 32 MiB).
    block_io_bytes = C * tile * itemsize
    f32_tmp_bytes = 3 * C * tile * 4
    vmem_need = 4 * block_io_bytes + f32_tmp_bytes
    vmem_limit = int(min(max(2 * vmem_need, 32 << 20), 48 << 20))

    out3 = pl.pallas_call(
        _resblock_kernel,
        out_shape=jax.ShapeDtypeStruct((N, C, s_pad), x_ncdhw.dtype),
        grid_spec=pltpu.PrefetchScalarGridSpec(
            num_scalar_prefetch=0,
            grid=grid,
            in_specs=[
                # x slab: leading N dim squeezed -> kernel sees (C, tile)
                pl.BlockSpec((pl.Squeezed(), C, tile), lambda n, s: (n, 0, s)),
                pl.BlockSpec((C, C), lambda n, s: (0, 0)),   # W1 (resident)
                pl.BlockSpec((C, 1), lambda n, s: (0, 0)),   # b1
                pl.BlockSpec((C, C), lambda n, s: (0, 0)),   # W2 (resident)
                pl.BlockSpec((C, 1), lambda n, s: (0, 0)),   # b2
            ],
            out_specs=pl.BlockSpec((pl.Squeezed(), C, tile),
                                   lambda n, s: (n, 0, s)),
        ),
        compiler_params=pltpu.CompilerParams(
            dimension_semantics=("parallel", "parallel"),
            vmem_limit_bytes=vmem_limit),
    )(x3, w1_mat, b1_col, w2_mat, b2_col)

    if s_pad != S:
        out3 = out3[:, :, :S]
    return out3.reshape(N, C, D, H, W)


def _reference(x, w1, b1, w2, b2):
    """Plain JAX reference matching the PyTorch module."""
    dn = ("NCDHW", "OIDHW", "NCDHW")
    hp = jax.lax.Precision.HIGHEST
    y = jax.lax.conv_general_dilated(
        x, w1, window_strides=(1, 1, 1), padding=((0, 0),) * 3,
        dimension_numbers=dn, precision=hp) + b1.reshape(1, -1, 1, 1, 1)
    y = _leaky_relu(y)
    y = jax.lax.conv_general_dilated(
        y, w2, window_strides=(1, 1, 1), padding=((0, 0),) * 3,
        dimension_numbers=dn, precision=hp) + b2.reshape(1, -1, 1, 1, 1)
    y = y + x
    return _leaky_relu(y)


if __name__ == "__main__":
    # Small shapes consistent with resnet_block(ef_dim=8) on a 3D feature volume.
    N, C, D, H, W = 2, 8, 16, 16, 16
    key = jax.random.PRNGKey(0)
    kx, k1, kb1, k2, kb2 = jax.random.split(key, 5)

    x = jax.random.normal(kx, (N, C, D, H, W), dtype=jnp.float32)
    # Deterministic synthetic params (shapes from nn.Conv3d(C, C, 1)).
    fan = C * 1 * 1 * 1
    w1 = jax.random.uniform(k1, (C, C, 1, 1, 1), jnp.float32, -1.0, 1.0) / jnp.sqrt(fan)
    b1 = jax.random.uniform(kb1, (C,), jnp.float32, -1.0, 1.0) / jnp.sqrt(fan)
    w2 = jax.random.uniform(k2, (C, C, 1, 1, 1), jnp.float32, -1.0, 1.0) / jnp.sqrt(fan)
    b2 = jax.random.uniform(kb2, (C,), jnp.float32, -1.0, 1.0) / jnp.sqrt(fan)

    out = jax.block_until_ready(resnet_block_forward(x, w1, b1, w2, b2))
    ref = jax.block_until_ready(_reference(x, w1, b1, w2, b2))

    assert out.shape == (N, C, D, H, W)
    assert jnp.max(jnp.abs(out - ref)) < 1e-4, "mismatch vs reference"
    print("KERNEL_OK")
</pallas_src>

<mosaic_0001>
module attributes {stable_mosaic.version = 11 : i64} {
  func.func @_resblock_kernel(%arg0: i32, %arg1: i32, %arg2: memref<1x8x2048xf32, #tpu.memory_space<vmem>>, %arg3: memref<8x8xf32, #tpu.memory_space<vmem>>, %arg4: memref<8x1xf32, #tpu.memory_space<vmem>>, %arg5: memref<8x8xf32, #tpu.memory_space<vmem>>, %arg6: memref<8x1xf32, #tpu.memory_space<vmem>>, %arg7: memref<1x8x2048xf32, #tpu.memory_space<vmem>>) attributes {dimension_semantics = [#tpu.dimension_semantics<parallel>, #tpu.dimension_semantics<parallel>], iteration_bounds = array<i64: 2, 2>, scalar_prefetch = 0 : i64, scratch_operands = 0 : i64, tpu.core_type = #tpu.core_type<tc>, window_params = [{transform_indices = @transform_0, window_bounds = array<i64: 1, 8, 2048>}, {pipeline_mode = #tpu.pipeline_mode<synchronous>, transform_indices = @transform_1, window_bounds = array<i64: 8, 8>}, {pipeline_mode = #tpu.pipeline_mode<synchronous>, transform_indices = @transform_2, window_bounds = array<i64: 8, 1>}, {pipeline_mode = #tpu.pipeline_mode<synchronous>, transform_indices = @transform_3, window_bounds = array<i64: 8, 8>}, {pipeline_mode = #tpu.pipeline_mode<synchronous>, transform_indices = @transform_4, window_bounds = array<i64: 8, 1>}, {transform_indices = @transform_5, window_bounds = array<i64: 1, 8, 2048>}]} {
    %c0 = arith.constant 0 : index
    %c0_0 = arith.constant 0 : index
    %c0_1 = arith.constant 0 : index
    %0 = vector.load %arg2[%c0, %c0_0, %c0_1] : memref<1x8x2048xf32, #tpu.memory_space<vmem>>, vector<1x8x2048xf32>
    %1 = vector.shape_cast %0 : vector<1x8x2048xf32> to vector<8x2048xf32>
    %c0_2 = arith.constant 0 : index
    %c0_3 = arith.constant 0 : index
    %2 = vector.load %arg3[%c0_2, %c0_3] : memref<8x8xf32, #tpu.memory_space<vmem>>, vector<8x8xf32>
    %cst = arith.constant dense<0.000000e+00> : vector<8x2048xf32>
    %3 = tpu.matmul %2, %1, %cst {dimension_numbers = #tpu.dot_dimension_numbers<[1], [0], [0], [1], [0, 0, 1, 1], [], []>, precision = #tpu.contract_precision<fp32>} : vector<8x8xf32>, vector<8x2048xf32>, vector<8x2048xf32> -> vector<8x2048xf32>
    %c0_4 = arith.constant 0 : index
    %c0_5 = arith.constant 0 : index
    %4 = vector.load %arg4[%c0_4, %c0_5] : memref<8x1xf32, #tpu.memory_space<vmem>>, vector<8x1xf32>
    %5 = vector.broadcast %4 : vector<8x1xf32> to vector<8x2048xf32>
    %6 = arith.addf %3, %5 : vector<8x2048xf32>
    %cst_6 = arith.constant 0.000000e+00 : f32
    %7 = vector.broadcast %cst_6 : f32 to vector<8x2048xf32>
    %8 = arith.cmpf ogt, %6, %7 : vector<8x2048xf32>
    %cst_7 = arith.constant 0.00999999977 : f32
    %9 = vector.broadcast %cst_7 : f32 to vector<8x2048xf32>
    %10 = arith.mulf %9, %6 : vector<8x2048xf32>
    %11 = arith.select %8, %6, %10 : vector<8x2048xi1>, vector<8x2048xf32>
    %c0_8 = arith.constant 0 : index
    %c0_9 = arith.constant 0 : index
    %12 = vector.load %arg5[%c0_8, %c0_9] : memref<8x8xf32, #tpu.memory_space<vmem>>, vector<8x8xf32>
    %cst_10 = arith.constant dense<0.000000e+00> : vector<8x2048xf32>
    %13 = tpu.matmul %12, %11, %cst_10 {dimension_numbers = #tpu.dot_dimension_numbers<[1], [0], [0], [1], [0, 0, 1, 1], [], []>, precision = #tpu.contract_precision<fp32>} : vector<8x8xf32>, vector<8x2048xf32>, vector<8x2048xf32> -> vector<8x2048xf32>
    %c0_11 = arith.constant 0 : index
    %c0_12 = arith.constant 0 : index
    %14 = vector.load %arg6[%c0_11, %c0_12] : memref<8x1xf32, #tpu.memory_space<vmem>>, vector<8x1xf32>
    %15 = vector.broadcast %14 : vector<8x1xf32> to vector<8x2048xf32>
    %16 = arith.addf %13, %15 : vector<8x2048xf32>
    %17 = arith.addf %16, %1 : vector<8x2048xf32>
    %cst_13 = arith.constant 0.000000e+00 : f32
    %18 = vector.broadcast %cst_13 : f32 to vector<8x2048xf32>
    %19 = arith.cmpf ogt, %17, %18 : vector<8x2048xf32>
    %cst_14 = arith.constant 0.00999999977 : f32
    %20 = vector.broadcast %cst_14 : f32 to vector<8x2048xf32>
    %21 = arith.mulf %20, %17 : vector<8x2048xf32>
    %22 = arith.select %19, %17, %21 : vector<8x2048xi1>, vector<8x2048xf32>
    %c0_15 = arith.constant 0 : index
    %c0_16 = arith.constant 0 : index
    %c0_17 = arith.constant 0 : index
    %23 = vector.load %arg7[%c0_15, %c0_16, %c0_17] : memref<1x8x2048xf32, #tpu.memory_space<vmem>>, vector<1x8x2048xf32>
    %24 = vector.shape_cast %23 : vector<1x8x2048xf32> to vector<8x2048xf32>
    %25 = vector.shape_cast %22 : vector<8x2048xf32> to vector<1x8x2048xf32>
    tpu.vector_store %arg7[%c0_15, %c0_16, %c0_17], %25 {strides = array<i32>} : memref<1x8x2048xf32, #tpu.memory_space<vmem>>, vector<1x8x2048xf32>,
    return
  }
  func.func @transform_0(%arg0: i32, %arg1: i32) -> (i32, i32, i32) {
    %c0_i32 = arith.constant 0 : i32
    %c0_i32_0 = arith.constant 0 : i32
    return %arg0, %c0_i32, %arg1 : i32, i32, i32
  }
  func.func @transform_1(%arg0: i32, %arg1: i32) -> (i32, i32) {
    %c0_i32 = arith.constant 0 : i32
    %c0_i32_0 = arith.constant 0 : i32
    %c0_i32_1 = arith.constant 0 : i32
    return %c0_i32, %c0_i32_0 : i32, i32
  }
  func.func @transform_2(%arg0: i32, %arg1: i32) -> (i32, i32) {
    %c0_i32 = arith.constant 0 : i32
    %c0_i32_0 = arith.constant 0 : i32
    %c0_i32_1 = arith.constant 0 : i32
    return %c0_i32, %c0_i32_0 : i32, i32
  }
  func.func @transform_3(%arg0: i32, %arg1: i32) -> (i32, i32) {
    %c0_i32 = arith.constant 0 : i32
    %c0_i32_0 = arith.constant 0 : i32
    %c0_i32_1 = arith.constant 0 : i32
    return %c0_i32, %c0_i32_0 : i32, i32
  }
  func.func @transform_4(%arg0: i32, %arg1: i32) -> (i32, i32) {
    %c0_i32 = arith.constant 0 : i32
    %c0_i32_0 = arith.constant 0 : i32
    %c0_i32_1 = arith.constant 0 : i32
    return %c0_i32, %c0_i32_0 : i32, i32
  }
  func.func @transform_5(%arg0: i32, %arg1: i32) -> (i32, i32, i32) {
    %c0_i32 = arith.constant 0 : i32
    %c0_i32_0 = arith.constant 0 : i32
    return %arg0, %c0_i32, %arg1 : i32, i32, i32
  }
}

</mosaic_0001>

<llo_original>
// kernel: tpu_custom_call.1
$region0: #{tpu_custom_call.1}
  #allocation0 [shape = 'u32[]', space=smem, size = 0x4, offset = 0x4, fixed_abs, tag = 'smem constant byte address 0x4 - core index']
  #allocation1 [shape = 'u32[144,128]{1,0:T(1,128)}', space=vmem, size = 0x12000, scoped, tag = 'internal scratch']
  %s0 = inlined_call_operand.hbm [shape: f32[2,8,4096], index: 0, kind: input, shape index: {}]
  %s1 = inlined_call_operand.vmem [shape: f32[8,8], index: 1, kind: input, shape index: {}]
  %s2 = inlined_call_operand.vmem [shape: f32[8,1], index: 2, kind: input, shape index: {}]
  %s3 = inlined_call_operand.vmem [shape: f32[8,8], index: 3, kind: input, shape index: {}]
  %s4 = inlined_call_operand.vmem [shape: f32[8,1], index: 4, kind: input, shape index: {}]
  %s5 = inlined_call_operand.hbm [shape: f32[2,8,4096], index: 5, kind: output, shape index: {}]
  %s6 = sld [smem:[#allocation0]]
  $region57: #{tpu_custom_call.1} parent=0
    _
  %s8 = ssub.s32 1, %s6
  %s9 = scalar_select 0, %s8, %s6
  $region1: #{tpu_custom_call.1} parent=0
    #allocation2 [shape = 'u8[131072]{0}', space=vmem, size = 0x20000, scoped, tag = 'input window, operand 0']
    #allocation3 [shape = 's32[2]{0}', space=sflag, size = 0x8, scoped, tag = 'scoped memory for tpu_custom_call.1']
    #allocation4 [shape = 's32[2]{0}', space=sflag, size = 0x8, scoped, tag = 'scoped memory for tpu_custom_call.1']
    #allocation5 [shape = 'u8[131072]{0}', space=vmem, size = 0x20000, scoped, tag = 'output window, operand 0']
    %10 = vsyncpa [#allocation3], 0
    %s11 = scalar_lea.sflag [#allocation3], 1
    %12 = vsyncpa %s11, 0
    %13 = vsyncpa [#allocation4], 0
    %s14 = scalar_lea.sflag [#allocation4], 1
    %15 = vsyncpa %s14, 0
    loop: start=0, step=1, limit=6
    $region2: #{tpu_custom_call.1} parent=1 // loop_pre_header
      _
    $region3: #{tpu_custom_call.1} parent=1 // loop_header
      %s17 = sphi 0, %s21
      %p18 = scmp.ge.s32.totalorder %s17, 6
      %s24 = sphi 0, %s36
      %s25 = sphi 0, %s32
      %s26 = sphi 0, %s24
      %s27 = sphi 0, %s25
      %s28 = sphi 0, %s26
      %s29 = sphi 0, %s27
      %s41 = sphi 0, %s43
      %s44 = sphi 0, %s41
      %s45 = sphi 0, %s44
      %s61 = sphi 0, %s45
      %s65 = sphi 0, %s65
      %s67 = sphi 0, %s65
      %s68 = sphi 0, %s67
      %s82 = sphi 0, %s68
      %s86 = sphi 0, %s86
      %s88 = sphi 0, %s86
      %s89 = sphi 0, %s88
      %s103 = sphi 0, %s89
      %s107 = sphi 0, %s107
      %s109 = sphi 0, %s107
      %s110 = sphi 0, %s109
      %s124 = sphi 0, %s110
      %s128 = sphi 0, %s128
      %s130 = sphi 0, %s128
      %s131 = sphi 0, %s130
      %s145 = sphi 0, %s131
      %s153 = sphi 0, %s155
      %s156 = sphi 0, %s153
      %s157 = sphi 0, %s156
      %s173 = sphi 0, %s157
    $region4: #{tpu_custom_call.1} parent=1 // loop_header_branch
      %20 = sbr.rel (%p18) target = $region8
    $region5: #{tpu_custom_call.1} parent=1 // loop_body
      %s22 = ssub.s32 %s17, 1
      %s23 = ssub.s32 %s17, 2
      %s30 = sadd.s32 1, %s25
      %p31 = scmp.ge.s32.totalorder %s30, 2
      %s32 = scalar_select %p31, 0, %s30
      %s33 = sadd.s32 1, %s24
      %s34 = scalar_select %p31, %s33, %s24
      %p35 = scmp.ge.s32.totalorder %s34, 2
      %s36 = scalar_select %p35, 0, %s34
      %s37 = ssub.s32 %s24, %s36
      %s38 = ssub.s32 %s25, %s32
      %s39 = sor.u32 %s37, %s38
      %p40 = scmp.eq.s32.totalorder %s39, 0
      %s42 = sadd.s32 %s41, 1
      %s43 = scalar_select %p40, %s41, %s42
      %p46 = pneg %p40
      %p47 = scmp.eq.s32.totalorder %s17, 3
      %p48 = por %p46, %p47
      %p49 = scmp.ne.s32.totalorder %s41, %s44
      %p50 = scmp.eq.s32.totalorder %s17, 0
      %p51 = por %p49, %p50
      %p52 = scmp.ne.s32.totalorder %s41, %s44
      %p53 = scmp.eq.s32.totalorder %s22, 3
      %p54 = por %p52, %p53
      %p55 = scmp.ne.s32.totalorder %s44, %s45
      %p56 = scmp.eq.s32.totalorder %s22, 0
      %p57 = por %p55, %p56
      %p58 = scmp.ne.s32.totalorder %s44, %s45
      %p59 = scmp.eq.s32.totalorder %s23, 3
      %p60 = por %p58, %p59
      %p62 = scmp.ne.s32.totalorder %s45, %s61
      %p63 = scmp.eq.s32.totalorder %s23, 0
      %p64 = por %p62, %p63
      %s66 = sadd.s32 %s65, 1
      %p69 = scmp.eq.s32.totalorder %s17, 3
      %p70 = scmp.ne.s32.totalorder %s65, %s67
      %p71 = scmp.eq.s32.totalorder %s17, 0
      %p72 = por %p70, %p71
      %p73 = scmp.ne.s32.totalorder %s65, %s67
      %p74 = scmp.eq.s32.totalorder %s22, 3
      %p75 = por %p73, %p74
      %p76 = scmp.ne.s32.totalorder %s67, %s68
      %p77 = scmp.eq.s32.totalorder %s22, 0
      %p78 = por %p76, %p77
      %p79 = scmp.ne.s32.totalorder %s67, %s68
      %p80 = scmp.eq.s32.totalorder %s23, 3
      %p81 = por %p79, %p80
      %p83 = scmp.ne.s32.totalorder %s68, %s82
      %p84 = scmp.eq.s32.totalorder %s23, 0
      %p85 = por %p83, %p84
      %s87 = sadd.s32 %s86, 1
      %p90 = scmp.eq.s32.totalorder %s17, 3
      %p91 = scmp.ne.s32.totalorder %s86, %s88
      %p92 = scmp.eq.s32.totalorder %s17, 0
      %p93 = por %p91, %p92
      %p94 = scmp.ne.s32.totalorder %s86, %s88
      %p95 = scmp.eq.s32.totalorder %s22, 3
      %p96 = por %p94, %p95
      %p97 = scmp.ne.s32.totalorder %s88, %s89
      %p98 = scmp.eq.s32.totalorder %s22, 0
      %p99 = por %p97, %p98
      %p100 = scmp.ne.s32.totalorder %s88, %s89
      %p101 = scmp.eq.s32.totalorder %s23, 3
      %p102 = por %p100, %p101
      %p104 = scmp.ne.s32.totalorder %s89, %s103
      %p105 = scmp.eq.s32.totalorder %s23, 0
      %p106 = por %p104, %p105
      %s108 = sadd.s32 %s107, 1
      %p111 = scmp.eq.s32.totalorder %s17, 3
      %p112 = scmp.ne.s32.totalorder %s107, %s109
      %p113 = scmp.eq.s32.totalorder %s17, 0
      %p114 = por %p112, %p113
      %p115 = scmp.ne.s32.totalorder %s107, %s109
      %p116 = scmp.eq.s32.totalorder %s22, 3
      %p117 = por %p115, %p116
      %p118 = scmp.ne.s32.totalorder %s109, %s110
      %p119 = scmp.eq.s32.totalorder %s22, 0
      %p120 = por %p118, %p119
      %p121 = scmp.ne.s32.totalorder %s109, %s110
      %p122 = scmp.eq.s32.totalorder %s23, 3
      %p123 = por %p121, %p122
      %p125 = scmp.ne.s32.totalorder %s110, %s124
      %p126 = scmp.eq.s32.totalorder %s23, 0
      %p127 = por %p125, %p126
      %s129 = sadd.s32 %s128, 1
      %p132 = scmp.eq.s32.totalorder %s17, 3
      %p133 = scmp.ne.s32.totalorder %s128, %s130
      %p134 = scmp.eq.s32.totalorder %s17, 0
      %p135 = por %p133, %p134
      %p136 = scmp.ne.s32.totalorder %s128, %s130
      %p137 = scmp.eq.s32.totalorder %s22, 3
      %p138 = por %p136, %p137
      %p139 = scmp.ne.s32.totalorder %s130, %s131
      %p140 = scmp.eq.s32.totalorder %s22, 0
      %p141 = por %p139, %p140
      %p142 = scmp.ne.s32.totalorder %s130, %s131
      %p143 = scmp.eq.s32.totalorder %s23, 3
      %p144 = por %p142, %p143
      %p146 = scmp.ne.s32.totalorder %s131, %s145
      %p147 = scmp.eq.s32.totalorder %s23, 0
      %p148 = por %p146, %p147
      %s149 = ssub.s32 %s24, %s36
      %s150 = ssub.s32 %s25, %s32
      %s151 = sor.u32 %s149, %s150
      %p152 = scmp.eq.s32.totalorder %s151, 0
      %s154 = sadd.s32 %s153, 1
      %s155 = scalar_select %p152, %s153, %s154
      %p158 = pneg %p152
      %p159 = scmp.eq.s32.totalorder %s17, 3
      %p160 = por %p158, %p159
      %p161 = scmp.ne.s32.totalorder %s153, %s156
      %p162 = scmp.eq.s32.totalorder %s17, 0
      %p163 = por %p161, %p162
      %p164 = scmp.ne.s32.totalorder %s153, %s156
      %p165 = scmp.eq.s32.totalorder %s22, 3
      %p166 = por %p164, %p165
      %p167 = scmp.ne.s32.totalorder %s156, %s157
      %p168 = scmp.eq.s32.totalorder %s22, 0
      %p169 = por %p167, %p168
      %p170 = scmp.ne.s32.totalorder %s156, %s157
      %p171 = scmp.eq.s32.totalorder %s23, 3
      %p172 = por %p170, %p171
      %p174 = scmp.ne.s32.totalorder %s157, %s173
      %p175 = scmp.eq.s32.totalorder %s23, 0
      %p176 = por %p174, %p175
      %p177 = scmp.le.s32.totalorder 1, %s17
      %p178 = scmp.lt.s32.totalorder %s17, 5
      %p179 = pnand %p177, %p178
      %p180 = pneg %p179
      // Predicated region
      $region9: #{tpu_custom_call.1} parent=5 // pred_check
        _
      $region10: #{tpu_custom_call.1} parent=5 // pred_check_branch
        %182 = sbr.rel (%p179) target = $region12
      $region11: #{tpu_custom_call.1} parent=5 // pred_region
        %s183 = ssub.s32 %s17, 1
        // Predicated region
        $region13: #{tpu_custom_call.1} parent=11 // pred_check
          %p184 = pneg %p78
        $region14: #{tpu_custom_call.1} parent=11 // pred_check_branch
          %186 = sbr.rel (%p184) target = $region16
        $region15: #{tpu_custom_call.1} parent=11 // pred_region
          _
        $region16: #{tpu_custom_call.1} parent=11 // pred_fallthru
          _
        // Predicated region
        $region17: #{tpu_custom_call.1} parent=11 // pred_check
          %p187 = pneg %p99
        $region18: #{tpu_custom_call.1} parent=11 // pred_check_branch
          %189 = sbr.rel (%p187) target = $region20
        $region19: #{tpu_custom_call.1} parent=11 // pred_region
          _
        $region20: #{tpu_custom_call.1} parent=11 // pred_fallthru
          _
        // Predicated region
        $region21: #{tpu_custom_call.1} parent=11 // pred_check
          %p190 = pneg %p120
        $region22: #{tpu_custom_call.1} parent=11 // pred_check_branch
          %192 = sbr.rel (%p190) target = $region24
        $region23: #{tpu_custom_call.1} parent=11 // pred_region
          _
        $region24: #{tpu_custom_call.1} parent=11 // pred_fallthru
          _
        // Predicated region
        $region25: #{tpu_custom_call.1} parent=11 // pred_check
          %p193 = pneg %p141
        $region26: #{tpu_custom_call.1} parent=11 // pred_check_branch
          %195 = sbr.rel (%p193) target = $region28
        $region27: #{tpu_custom_call.1} parent=11 // pred_region
          _
        $region28: #{tpu_custom_call.1} parent=11 // pred_fallthru
          _
      $region12: #{tpu_custom_call.1} parent=5 // pred_fallthru
        _
      %p196 = scmp.lt.s32.totalorder %s17, 4
      // Predicated region
      $region29: #{tpu_custom_call.1} parent=5 // pred_check
        %p197 = pneg %p196
      $region30: #{tpu_custom_call.1} parent=5 // pred_check_branch
        %199 = sbr.rel (%p197) target = $region32
      $region31: #{tpu_custom_call.1} parent=5 // pred_region
        // Predicated region
        $region33: #{tpu_custom_call.1} parent=31 // pred_check
          %p200 = pneg %p51
        $region34: #{tpu_custom_call.1} parent=31 // pred_check_branch
          %202 = sbr.rel (%p200) target = $region36
        $region35: #{tpu_custom_call.1} parent=31 // pred_region
          %s203 = sand.u32 %s41, 1
          %s204 = scalar_lea.sflag [#allocation3], %s203
          %s205 = sand.u32 %s41, 1
          %s206 = smul.addr %s205, 128
          %s207 = scalar_lea.vmem [#allocation2], %s206
          %s208 = smul.u32 16, %s25
          %s210 = ssub.s32 2048, 2048
          %211 = vsyncadd %s204, %s210
          %s212 = smul.addr %s24, 32
          %s213 = sadd.s32 %s208, %s212
          %s214 = smul.addr %s213, 128
          %s215 = scalar_lea.hbm %s0, %s214
          %s217 = sshll.u32 %s207, 4
          %s218 = int_to_ptr.vmem [resolvable:$true] %s217
          %220 = dma.hbm_to_vmem [thread:$0]  %s215, 2048, %s218, %s204
        $region36: #{tpu_custom_call.1} parent=31 // pred_fallthru
          _
      $region32: #{tpu_custom_call.1} parent=5 // pred_fallthru
        _
      %p221 = scmp.le.s32.totalorder 1, %s17
      %p222 = scmp.lt.s32.totalorder %s17, 5
      %p223 = pnand %p221, %p222
      %p224 = pneg %p223
      // Predicated region
      $region37: #{tpu_custom_call.1} parent=5 // pred_check
        _
      $region38: #{tpu_custom_call.1} parent=5 // pred_check_branch
        %226 = sbr.rel (%p223) target = $region40
      $region39: #{tpu_custom_call.1} parent=5 // pred_region
        %s227 = ssub.s32 %s17, 1
        %s228 = sand.u32 %s44, 1
        %s229 = scalar_lea.sflag [#allocation3], %s228
        %s230 = sand.u32 %s44, 1
        %s231 = smul.addr %s230, 128
        %s232 = scalar_lea.vmem [#allocation2], %s231
        // Predicated region
        $region41: #{tpu_custom_call.1} parent=39 // pred_check
          %p233 = pneg %p57
        $region42: #{tpu_custom_call.1} parent=39 // pred_check_branch
          %235 = sbr.rel (%p233) target = $region44
        $region43: #{tpu_custom_call.1} parent=39 // pred_region
          %236 = dma.done %s229, 2048
        $region44: #{tpu_custom_call.1} parent=39 // pred_fallthru
          _
        %s237 = sand.u32 %s44, 1
        %s238 = scalar_lea.sflag [#allocation3], %s237
        %s239 = sand.u32 %s44, 1
        %s240 = smul.addr %s239, 128
        %s241 = scalar_lea.vmem [#allocation2], %s240
        %p242 = pneg %p57
        %p243 = pneg %p54
        %p244 = pneg %p78
        %p245 = pneg %p75
        %p246 = pneg %p99
        %p247 = pneg %p96
        %p248 = pneg %p120
        %p249 = pneg %p117
        %p250 = pneg %p141
        %p251 = pneg %p138
        %p252 = pneg %p169
        %p253 = pneg %p166
        %s254 = sand.u32 %s156, 1
        %s255 = scalar_lea.sflag [#allocation4], %s254
        %s256 = sand.u32 %s156, 1
        %s257 = smul.addr %s256, 128
        %s258 = scalar_lea.vmem [#allocation5], %s257
        %s259 = smul.u32 16, %s27
        %s260 = smul.u32 16, %s27
        %v261 = vld [vmem:[%s232] sm:$0xff]
        %v262 = vld [vmem:[%s232 + $0x8] sm:$0xff]
        %v263 = vld [vmem:[%s232 + $0x10] sm:$0xff]
        %v264 = vld [vmem:[%s232 + $0x18] sm:$0xff]
        %v265 = vld [vmem:[%s232 + $0x20] sm:$0xff]
        %v266 = vld [vmem:[%s232 + $0x28] sm:$0xff]
        %v267 = vld [vmem:[%s232 + $0x30] sm:$0xff]
        %v268 = vld [vmem:[%s232 + $0x38] sm:$0xff]
        %v269 = vld [vmem:[%s232 + $0x40] sm:$0xff]
        %v270 = vld [vmem:[%s232 + $0x48] sm:$0xff]
        %v271 = vld [vmem:[%s232 + $0x50] sm:$0xff]
        %v272 = vld [vmem:[%s232 + $0x58] sm:$0xff]
        %v273 = vld [vmem:[%s232 + $0x60] sm:$0xff]
        %v274 = vld [vmem:[%s232 + $0x68] sm:$0xff]
        %v275 = vld [vmem:[%s232 + $0x70] sm:$0xff]
        %v276 = vld [vmem:[%s232 + $0x78] sm:$0xff]
        %v277 = vld [vmem:[%s1] sm:$0xff]
        %v278 = vld [vmem:[%s2] sm:$0xff]
        %280 = vset.pattern.permute.xlu0 0
        %281 = vperm.xlu0 %280, %v278
        %v282 = vpop.permute.xlu0 %281
        %vm284 = vcmask 64512
        %v286 = vsel %vm284, %v277, 0
        %v288 = vand.u32 %v262, 4294901760
        %289 = vmatprep.subr.mxu0 %v288
        %v290 = vand.u32 %v261, 4294901760
        %291 = vmatpush1.msra.mxu0 %v290
        %292 = vmatprep.subr.mxu0 0.0
        %293 = vmatpush1.msra.mxu0 0.0
        %294 = vmatprep.subr.mxu0 0.0
        %295 = vmatpush1.msra.mxu0 0.0
        %296 = vmatprep.subr.mxu0 0.0
        %297 = vmatpush1.msra.mxu0 0.0
        %298 = vmatprep.subr.mxu0 0.0
        %299 = vmatpush1.msra.mxu0 0.0
        %300 = vmatprep.subr.mxu0 0.0
        %301 = vmatpush1.msra.mxu0 0.0
        %302 = vmatprep.subr.mxu0 0.0
        %303 = vmatpush1.msra.mxu0 0.0
        %304 = vmatprep.subr.mxu0 0.0
        %305 = vmatpush1.msra.mxu0 0.0
        %306 = vmatprep.subr.mxu0 0.0
        %307 = vmatpush1.msra.mxu0 0.0
        %308 = vmatprep.subr.mxu0 0.0
        %309 = vmatpush1.msra.mxu0 0.0
        %310 = vmatprep.subr.mxu0 0.0
        %311 = vmatpush1.msra.mxu0 0.0
        %312 = vmatprep.subr.mxu0 0.0
        %313 = vmatpush1.msra.mxu0 0.0
        %314 = vmatprep.subr.mxu0 0.0
        %315 = vmatpush1.msra.mxu0 0.0
        %316 = vmatprep.subr.mxu0 0.0
        %317 = vmatpush1.msra.mxu0 0.0
        %318 = vmatprep.subr.mxu0 0.0
        %319 = vmatpush1.msra.mxu0 0.0
        %320 = vmatprep.subr.mxu0 0.0
        %321 = vmatpush1.msra.mxu0 0.0
        %322 = vmatprep.subr.mxu0 0.0
        %323 = vmatpush1.msra.mxu0 0.0
        %324 = vmatprep.subr.mxu0 0.0
        %325 = vmatpush1.msra.mxu0 0.0
        %326 = vmatprep.subr.mxu0 0.0
        %327 = vmatpush1.msra.mxu0 0.0
        %328 = vmatprep.subr.mxu0 0.0
        %329 = vmatpush1.msra.mxu0 0.0
        %330 = vmatprep.subr.mxu0 0.0
        %331 = vmatpush1.msra.mxu0 0.0
        %332 = vmatprep.subr.mxu0 0.0
        %333 = vmatpush1.msra.mxu0 0.0
        %334 = vmatprep.subr.mxu0 0.0
        %335 = vmatpush1.msra.mxu0 0.0
        %336 = vmatprep.subr.mxu0 0.0
        %337 = vmatpush1.msra.mxu0 0.0
        %338 = vmatprep.subr.mxu0 0.0
        %339 = vmatpush1.msra.mxu0 0.0
        %340 = vmatprep.subr.mxu0 0.0
        %341 = vmatpush1.msra.mxu0 0.0
        %342 = vmatprep.subr.mxu0 0.0
        %343 = vmatpush1.msra.mxu0 0.0
        %344 = vmatprep.subr.mxu0 0.0
        %345 = vmatpush1.msra.mxu0 0.0
        %346 = vmatprep.subr.mxu0 0.0
        %347 = vmatpush1.msra.mxu0 0.0
        %348 = vmatprep.subr.mxu0 0.0
        %349 = vmatpush1.msra.mxu0 0.0
        %350 = vmatprep.subr.mxu0 0.0
        %351 = vmatpush1.msra.mxu0 0.0
        %352 = vmatprep.subr.mxu0 0.0
        %353 = vmatpush1.msra.mxu0 0.0
        %354 = vmatprep.mubr.f32.mxu0 0.0
        %v355 = vand.u32 %v286, 4294901760
        %v356 = vsub.f32 %v286, %v355
        %v357 = vand.u32 %v356, 4294901760
        %v358 = vsub.f32 %v356, %v357
        %v359 = vand.u32 %v358, 4294901760
        %360 = vmatmul.mubr.f32.gmra.mrb[0].mxu0 %v359
        %v361 = vpop.f32.mrb[0].mxu0
        %v362 = vadd.f32 %v282, %v361
        %v363 = vpop.f32.mrb[0].mxu0
        %v364 = vadd.f32 %v282, %v363
        %365 = vdwg.mxu0
        %v366 = vand.u32 %v262, 4294901760
        %v367 = vsub.f32 %v262, %v366
        %v368 = vand.u32 %v367, 4294901760
        %v369 = vsub.f32 %v367, %v368
        %v370 = vand.u32 %v369, 4294901760
        %371 = vmatprep.subr.mxu0 %v370
        %v372 = vand.u32 %v261, 4294901760
        %v373 = vsub.f32 %v261, %v372
        %v374 = vand.u32 %v373, 4294901760
        %v375 = vsub.f32 %v373, %v374
        %v376 = vand.u32 %v375, 4294901760
        %377 = vmatpush1.msra.mxu0 %v376
        %378 = vmatprep.subr.mxu0 0.0
        %379 = vmatpush1.msra.mxu0 0.0
        %380 = vmatprep.subr.mxu0 0.0
        %381 = vmatpush1.msra.mxu0 0.0
        %382 = vmatprep.subr.mxu0 0.0
        %383 = vmatpush1.msra.mxu0 0.0
        %384 = vmatprep.subr.mxu0 0.0
        %385 = vmatpush1.msra.mxu0 0.0
        %386 = vmatprep.subr.mxu0 0.0
        %387 = vmatpush1.msra.mxu0 0.0
        %388 = vmatprep.subr.mxu0 0.0
        %389 = vmatpush1.msra.mxu0 0.0
        %390 = vmatprep.subr.mxu0 0.0
        %391 = vmatpush1.msra.mxu0 0.0
        %392 = vmatprep.subr.mxu0 0.0
        %393 = vmatpush1.msra.mxu0 0.0
        %394 = vmatprep.subr.mxu0 0.0
        %395 = vmatpush1.msra.mxu0 0.0
        %396 = vmatprep.subr.mxu0 0.0
        %397 = vmatpush1.msra.mxu0 0.0
        %398 = vmatprep.subr.mxu0 0.0
        %399 = vmatpush1.msra.mxu0 0.0
        %400 = vmatprep.subr.mxu0 0.0
        %401 = vmatpush1.msra.mxu0 0.0
        %402 = vmatprep.subr.mxu0 0.0
        %403 = vmatpush1.msra.mxu0 0.0
        %404 = vmatprep.subr.mxu0 0.0
        %405 = vmatpush1.msra.mxu0 0.0
        %406 = vmatprep.subr.mxu0 0.0
        %407 = vmatpush1.msra.mxu0 0.0
        %408 = vmatprep.subr.mxu0 0.0
        %409 = vmatpush1.msra.mxu0 0.0
        %410 = vmatprep.subr.mxu0 0.0
        %411 = vmatpush1.msra.mxu0 0.0
        %412 = vmatprep.subr.mxu0 0.0
        %413 = vmatpush1.msra.mxu0 0.0
        %414 = vmatprep.subr.mxu0 0.0
        %415 = vmatpush1.msra.mxu0 0.0
        %416 = vmatprep.subr.mxu0 0.0
        %417 = vmatpush1.msra.mxu0 0.0
        %418 = vmatprep.subr.mxu0 0.0
        %419 = vmatpush1.msra.mxu0 0.0
        %420 = vmatprep.subr.mxu0 0.0
        %421 = vmatpush1.msra.mxu0 0.0
        %422 = vmatprep.subr.mxu0 0.0
        %423 = vmatpush1.msra.mxu0 0.0
        %424 = vmatprep.subr.mxu0 0.0
        %425 = vmatpush1.msra.mxu0 0.0
        %426 = vmatprep.subr.mxu0 0.0
        %427 = vmatpush1.msra.mxu0 0.0
        %428 = vmatprep.subr.mxu0 0.0
        %429 = vmatpush1.msra.mxu0 0.0
        %430 = vmatprep.subr.mxu0 0.0
        %431 = vmatpush1.msra.mxu0 0.0
        %432 = vmatprep.subr.mxu0 0.0
        %433 = vmatpush1.msra.mxu0 0.0
        %434 = vmatprep.subr.mxu0 0.0
        %435 = vmatpush1.msra.mxu0 0.0
        %436 = vmatprep.subr.mxu0 0.0
        %437 = vmatpush1.msra.mxu0 0.0
        %438 = vmatprep.subr.mxu0 0.0
        %439 = vmatpush1.msra.mxu0 0.0
        %440 = vmatprep.mubr.f32.mxu0 0.0
        %v441 = vand.u32 %v286, 4294901760
        %442 = vmatmul.mubr.f32.gmra.mrb[0].mxu0 %v441
        %v443 = vpop.f32.mrb[0].mxu0
        %v444 = vadd.f32 %v362, %v443
        %v445 = vpop.f32.mrb[0].mxu0
        %v446 = vadd.f32 %v364, %v445
        %447 = vdwg.mxu0
        %v448 = vand.u32 %v262, 4294901760
        %v449 = vsub.f32 %v262, %v448
        %450 = vmatprep.subr.mxu0 %v449
        %v451 = vand.u32 %v261, 4294901760
        %v452 = vsub.f32 %v261, %v451
        %453 = vmatpush1.msra.mxu0 %v452
        %454 = vmatprep.subr.mxu0 0.0
        %455 = vmatpush1.msra.mxu0 0.0
        %456 = vmatprep.subr.mxu0 0.0
        %457 = vmatpush1.msra.mxu0 0.0
        %458 = vmatprep.subr.mxu0 0.0
        %459 = vmatpush1.msra.mxu0 0.0
        %460 = vmatprep.subr.mxu0 0.0
        %461 = vmatpush1.msra.mxu0 0.0
        %462 = vmatprep.subr.mxu0 0.0
        %463 = vmatpush1.msra.mxu0 0.0
        %464 = vmatprep.subr.mxu0 0.0
        %465 = vmatpush1.msra.mxu0 0.0
        %466 = vmatprep.subr.mxu0 0.0
        %467 = vmatpush1.msra.mxu0 0.0
        %468 = vmatprep.subr.mxu0 0.0
        %469 = vmatpush1.msra.mxu0 0.0
        %470 = vmatprep.subr.mxu0 0.0
        %471 = vmatpush1.msra.mxu0 0.0
        %472 = vmatprep.subr.mxu0 0.0
        %473 = vmatpush1.msra.mxu0 0.0
        %474 = vmatprep.subr.mxu0 0.0
        %475 = vmatpush1.msra.mxu0 0.0
        %476 = vmatprep.subr.mxu0 0.0
        %477 = vmatpush1.msra.mxu0 0.0
        %478 = vmatprep.subr.mxu0 0.0
        %479 = vmatpush1.msra.mxu0 0.0
        %480 = vmatprep.subr.mxu0 0.0
        %481 = vmatpush1.msra.mxu0 0.0
        %482 = vmatprep.subr.mxu0 0.0
        %483 = vmatpush1.msra.mxu0 0.0
        %484 = vmatprep.subr.mxu0 0.0
        %485 = vmatpush1.msra.mxu0 0.0
        %486 = vmatprep.subr.mxu0 0.0
        %487 = vmatpush1.msra.mxu0 0.0
        %488 = vmatprep.subr.mxu0 0.0
        %489 = vmatpush1.msra.mxu0 0.0
        %490 = vmatprep.subr.mxu0 0.0
        %491 = vmatpush1.msra.mxu0 0.0
        %492 = vmatprep.subr.mxu0 0.0
        %493 = vmatpush1.msra.mxu0 0.0
        %494 = vmatprep.subr.mxu0 0.0
        %495 = vmatpush1.msra.mxu0 0.0
        %496 = vmatprep.subr.mxu0 0.0
        %497 = vmatpush1.msra.mxu0 0.0
        %498 = vmatprep.subr.mxu0 0.0
        %499 = vmatpush1.msra.mxu0 0.0
        %500 = vmatprep.subr.mxu0 0.0
        %501 = vmatpush1.msra.mxu0 0.0
        %502 = vmatprep.subr.mxu0 0.0
        %503 = vmatpush1.msra.mxu0 0.0
        %504 = vmatprep.subr.mxu0 0.0
        %505 = vmatpush1.msra.mxu0 0.0
        %506 = vmatprep.subr.mxu0 0.0
        %507 = vmatpush1.msra.mxu0 0.0
        %508 = vmatprep.subr.mxu0 0.0
        %509 = vmatpush1.msra.mxu0 0.0
        %510 = vmatprep.subr.mxu0 0.0
        %511 = vmatpush1.msra.mxu0 0.0
        %512 = vmatprep.subr.mxu0 0.0
        %513 = vmatpush1.msra.mxu0 0.0
        %514 = vmatprep.subr.mxu0 0.0
        %515 = vmatpush1.msra.mxu0 0.0
        %516 = vmatprep.mubr.f32.mxu0 0.0
        %v517 = vand.u32 %v286, 4294901760
        %v518 = vsub.f32 %v286, %v517
        %519 = vmatmul.mubr.f32.gmra.mrb[0].mxu0 %v518
        %v520 = vpop.f32.mrb[0].mxu0
        %v521 = vadd.f32 %v444, %v520
        %v522 = vpop.f32.mrb[0].mxu0
        %v523 = vadd.f32 %v446, %v522
        %524 = vdwg.mxu0
        %v525 = vand.u32 %v262, 4294901760
        %526 = vmatprep.subr.mxu0 %v525
        %v527 = vand.u32 %v261, 4294901760
        %528 = vmatpush1.msra.mxu0 %v527
        %529 = vmatprep.subr.mxu0 0.0
        %530 = vmatpush1.msra.mxu0 0.0
        %531 = vmatprep.subr.mxu0 0.0
        %532 = vmatpush1.msra.mxu0 0.0
        %533 = vmatprep.subr.mxu0 0.0
        %534 = vmatpush1.msra.mxu0 0.0
        %535 = vmatprep.subr.mxu0 0.0
        %536 = vmatpush1.msra.mxu0 0.0
        %537 = vmatprep.subr.mxu0 0.0
        %538 = vmatpush1.msra.mxu0 0.0
        %539 = vmatprep.subr.mxu0 0.0
        %540 = vmatpush1.msra.mxu0 0.0
        %541 = vmatprep.subr.mxu0 0.0
        %542 = vmatpush1.msra.mxu0 0.0
        %543 = vmatprep.subr.mxu0 0.0
        %544 = vmatpush1.msra.mxu0 0.0
        %545 = vmatprep.subr.mxu0 0.0
        %546 = vmatpush1.msra.mxu0 0.0
        %547 = vmatprep.subr.mxu0 0.0
        %548 = vmatpush1.msra.mxu0 0.0
        %549 = vmatprep.subr.mxu0 0.0
        %550 = vmatpush1.msra.mxu0 0.0
        %551 = vmatprep.subr.mxu0 0.0
        %552 = vmatpush1.msra.mxu0 0.0
        %553 = vmatprep.subr.mxu0 0.0
        %554 = vmatpush1.msra.mxu0 0.0
        %555 = vmatprep.subr.mxu0 0.0
        %556 = vmatpush1.msra.mxu0 0.0
        %557 = vmatprep.subr.mxu0 0.0
        %558 = vmatpush1.msra.mxu0 0.0
        %559 = vmatprep.subr.mxu0 0.0
        %560 = vmatpush1.msra.mxu0 0.0
        %561 = vmatprep.subr.mxu0 0.0
        %562 = vmatpush1.msra.mxu0 0.0
        %563 = vmatprep.subr.mxu0 0.0
        %564 = vmatpush1.msra.mxu0 0.0
        %565 = vmatprep.subr.mxu0 0.0
        %566 = vmatpush1.msra.mxu0 0.0
        %567 = vmatprep.subr.mxu0 0.0
        %568 = vmatpush1.msra.mxu0 0.0
        %569 = vmatprep.subr.mxu0 0.0
        %570 = vmatpush1.msra.mxu0 0.0
        %571 = vmatprep.subr.mxu0 0.0
        %572 = vmatpush1.msra.mxu0 0.0
        %573 = vmatprep.subr.mxu0 0.0
        %574 = vmatpush1.msra.mxu0 0.0
        %575 = vmatprep.subr.mxu0 0.0
        %576 = vmatpush1.msra.mxu0 0.0
        %577 = vmatprep.subr.mxu0 0.0
        %578 = vmatpush1.msra.mxu0 0.0
        %579 = vmatprep.subr.mxu0 0.0
        %580 = vmatpush1.msra.mxu0 0.0
        %581 = vmatprep.subr.mxu0 0.0
        %582 = vmatpush1.msra.mxu0 0.0
        %583 = vmatprep.subr.mxu0 0.0
        %584 = vmatpush1.msra.mxu0 0.0
        %585 = vmatprep.subr.mxu0 0.0
        %586 = vmatpush1.msra.mxu0 0.0
        %587 = vmatprep.subr.mxu0 0.0
        %588 = vmatpush1.msra.mxu0 0.0
        %589 = vmatprep.subr.mxu0 0.0
        %590 = vmatpush1.msra.mxu0 0.0
        %591 = vmatprep.mubr.f32.mxu0 0.0
        %v592 = vand.u32 %v286, 4294901760
        %v593 = vsub.f32 %v286, %v592
        %v594 = vand.u32 %v593, 4294901760
        %595 = vmatmul.mubr.f32.gmra.mrb[0].mxu0 %v594
        %v596 = vpop.f32.mrb[0].mxu0
        %v597 = vadd.f32 %v521, %v596
        %v598 = vpop.f32.mrb[0].mxu0
        %v599 = vadd.f32 %v523, %v598
        %600 = vdwg.mxu0
        %v601 = vand.u32 %v262, 4294901760
        %v602 = vsub.f32 %v262, %v601
        %v603 = vand.u32 %v602, 4294901760
        %604 = vmatprep.subr.mxu0 %v603
        %v605 = vand.u32 %v261, 4294901760
        %v606 = vsub.f32 %v261, %v605
        %v607 = vand.u32 %v606, 4294901760
        %608 = vmatpush1.msra.mxu0 %v607
        %609 = vmatprep.subr.mxu0 0.0
        %610 = vmatpush1.msra.mxu0 0.0
        %611 = vmatprep.subr.mxu0 0.0
        %612 = vmatpush1.msra.mxu0 0.0
        %613 = vmatprep.subr.mxu0 0.0
        %614 = vmatpush1.msra.mxu0 0.0
        %615 = vmatprep.subr.mxu0 0.0
        %616 = vmatpush1.msra.mxu0 0.0
        %617 = vmatprep.subr.mxu0 0.0
        %618 = vmatpush1.msra.mxu0 0.0
        %619 = vmatprep.subr.mxu0 0.0
        %620 = vmatpush1.msra.mxu0 0.0
        %621 = vmatprep.subr.mxu0 0.0
        %622 = vmatpush1.msra.mxu0 0.0
        %623 = vmatprep.subr.mxu0 0.0
        %624 = vmatpush1.msra.mxu0 0.0
        %625 = vmatprep.subr.mxu0 0.0
        %626 = vmatpush1.msra.mxu0 0.0
        %627 = vmatprep.subr.mxu0 0.0
        %628 = vmatpush1.msra.mxu0 0.0
        %629 = vmatprep.subr.mxu0 0.0
        %630 = vmatpush1.msra.mxu0 0.0
        %631 = vmatprep.subr.mxu0 0.0
        %632 = vmatpush1.msra.mxu0 0.0
        %633 = vmatprep.subr.mxu0 0.0
        %634 = vmatpush1.msra.mxu0 0.0
        %635 = vmatprep.subr.mxu0 0.0
        %636 = vmatpush1.msra.mxu0 0.0
        %637 = vmatprep.subr.mxu0 0.0
        %638 = vmatpush1.msra.mxu0 0.0
        %639 = vmatprep.subr.mxu0 0.0
        %640 = vmatpush1.msra.mxu0 0.0
        %641 = vmatprep.subr.mxu0 0.0
        %642 = vmatpush1.msra.mxu0 0.0
        %643 = vmatprep.subr.mxu0 0.0
        %644 = vmatpush1.msra.mxu0 0.0
        %645 = vmatprep.subr.mxu0 0.0
        %646 = vmatpush1.msra.mxu0 0.0
        %647 = vmatprep.subr.mxu0 0.0
        %648 = vmatpush1.msra.mxu0 0.0
        %649 = vmatprep.subr.mxu0 0.0
        %650 = vmatpush1.msra.mxu0 0.0
        %651 = vmatprep.subr.mxu0 0.0
        %652 = vmatpush1.msra.mxu0 0.0
        %653 = vmatprep.subr.mxu0 0.0
        %654 = vmatpush1.msra.mxu0 0.0
        %655 = vmatprep.subr.mxu0 0.0
        %656 = vmatpush1.msra.mxu0 0.0
        %657 = vmatprep.subr.mxu0 0.0
        %658 = vmatpush1.msra.mxu0 0.0
        %659 = vmatprep.subr.mxu0 0.0
        %660 = vmatpush1.msra.mxu0 0.0
        %661 = vmatprep.subr.mxu0 0.0
        %662 = vmatpush1.msra.mxu0 0.0
        %663 = vmatprep.subr.mxu0 0.0
        %664 = vmatpush1.msra.mxu0 0.0
        %665 = vmatprep.subr.mxu0 0.0
        %666 = vmatpush1.msra.mxu0 0.0
        %667 = vmatprep.subr.mxu0 0.0
        %668 = vmatpush1.msra.mxu0 0.0
        %669 = vmatprep.subr.mxu0 0.0
        %670 = vmatpush1.msra.mxu0 0.0
        %671 = vmatprep.mubr.f32.mxu0 0.0
        %v672 = vand.u32 %v286, 4294901760
        %673 = vmatmul.mubr.f32.gmra.mrb[0].mxu0 %v672
        %v674 = vpop.f32.mrb[0].mxu0
        %v675 = vadd.f32 %v597, %v674
        %v676 = vpop.f32.mrb[0].mxu0
        %v677 = vadd.f32 %v599, %v676
        %678 = vdwg.mxu0
        %v679 = vand.u32 %v262, 4294901760
        %680 = vmatprep.subr.mxu0 %v679
        %v681 = vand.u32 %v261, 4294901760
        %682 = vmatpush1.msra.mxu0 %v681
        %683 = vmatprep.subr.mxu0 0.0
        %684 = vmatpush1.msra.mxu0 0.0
        %685 = vmatprep.subr.mxu0 0.0
        %686 = vmatpush1.msra.mxu0 0.0
        %687 = vmatprep.subr.mxu0 0.0
        %688 = vmatpush1.msra.mxu0 0.0
        %689 = vmatprep.subr.mxu0 0.0
        %690 = vmatpush1.msra.mxu0 0.0
        %691 = vmatprep.subr.mxu0 0.0
        %692 = vmatpush1.msra.mxu0 0.0
        %693 = vmatprep.subr.mxu0 0.0
        %694 = vmatpush1.msra.mxu0 0.0
        %695 = vmatprep.subr.mxu0 0.0
        %696 = vmatpush1.msra.mxu0 0.0
        %697 = vmatprep.subr.mxu0 0.0
        %698 = vmatpush1.msra.mxu0 0.0
        %699 = vmatprep.subr.mxu0 0.0
        %700 = vmatpush1.msra.mxu0 0.0
        %701 = vmatprep.subr.mxu0 0.0
        %702 = vmatpush1.msra.mxu0 0.0
        %703 = vmatprep.subr.mxu0 0.0
        %704 = vmatpush1.msra.mxu0 0.0
        %705 = vmatprep.subr.mxu0 0.0
        %706 = vmatpush1.msra.mxu0 0.0
        %707 = vmatprep.subr.mxu0 0.0
        %708 = vmatpush1.msra.mxu0 0.0
        %709 = vmatprep.subr.mxu0 0.0
        %710 = vmatpush1.msra.mxu0 0.0
        %711 = vmatprep.subr.mxu0 0.0
        %712 = vmatpush1.msra.mxu0 0.0
        %713 = vmatprep.subr.mxu0 0.0
        %714 = vmatpush1.msra.mxu0 0.0
        %715 = vmatprep.subr.mxu0 0.0
        %716 = vmatpush1.msra.mxu0 0.0
        %717 = vmatprep.subr.mxu0 0.0
        %718 = vmatpush1.msra.mxu0 0.0
        %719 = vmatprep.subr.mxu0 0.0
        %720 = vmatpush1.msra.mxu0 0.0
        %721 = vmatprep.subr.mxu0 0.0
        %722 = vmatpush1.msra.mxu0 0.0
        %723 = vmatprep.subr.mxu0 0.0
        %724 = vmatpush1.msra.mxu0 0.0
        %725 = vmatprep.subr.mxu0 0.0
        %726 = vmatpush1.msra.mxu0 0.0
        %727 = vmatprep.subr.mxu0 0.0
        %728 = vmatpush1.msra.mxu0 0.0
        %729 = vmatprep.subr.mxu0 0.0
        %730 = vmatpush1.msra.mxu0 0.0
        %731 = vmatprep.subr.mxu0 0.0
        %732 = vmatpush1.msra.mxu0 0.0
        %733 = vmatprep.subr.mxu0 0.0
        %734 = vmatpush1.msra.mxu0 0.0
        %735 = vmatprep.subr.mxu0 0.0
        %736 = vmatpush1.msra.mxu0 0.0
        %737 = vmatprep.subr.mxu0 0.0
        %738 = vmatpush1.msra.mxu0 0.0
        %739 = vmatprep.subr.mxu0 0.0
        %740 = vmatpush1.msra.mxu0 0.0
        %741 = vmatprep.subr.mxu0 0.0
        %742 = vmatpush1.msra.mxu0 0.0
        %743 = vmatprep.subr.mxu0 0.0
        %744 = vmatpush1.msra.mxu0 0.0
        %745 = vmatprep.mubr.f32.mxu0 0.0
        %v746 = vand.u32 %v286, 4294901760
        %747 = vmatmul.mubr.f32.gmra.mrb[0].mxu0 %v746
        %v748 = vpop.f32.mrb[0].mxu0
        %v749 = vadd.f32 %v675, %v748
        %v750 = vpop.f32.mrb[0].mxu0
        %v751 = vadd.f32 %v677, %v750
        %752 = vdwg.mxu0
        %v753 = vand.u32 %v264, 4294901760
        %754 = vmatprep.subr.mxu0 %v753
        %v755 = vand.u32 %v263, 4294901760
        %756 = vmatpush1.msra.mxu0 %v755
        %757 = vmatprep.subr.mxu0 0.0
        %758 = vmatpush1.msra.mxu0 0.0
        %759 = vmatprep.subr.mxu0 0.0
        %760 = vmatpush1.msra.mxu0 0.0
        %761 = vmatprep.subr.mxu0 0.0
        %762 = vmatpush1.msra.mxu0 0.0
        %763 = vmatprep.subr.mxu0 0.0
        %764 = vmatpush1.msra.mxu0 0.0
        %765 = vmatprep.subr.mxu0 0.0
        %766 = vmatpush1.msra.mxu0 0.0
        %767 = vmatprep.subr.mxu0 0.0
        %768 = vmatpush1.msra.mxu0 0.0
        %769 = vmatprep.subr.mxu0 0.0
        %770 = vmatpush1.msra.mxu0 0.0
        %771 = vmatprep.subr.mxu0 0.0
        %772 = vmatpush1.msra.mxu0 0.0
        %773 = vmatprep.subr.mxu0 0.0
        %774 = vmatpush1.msra.mxu0 0.0
        %775 = vmatprep.subr.mxu0 0.0
        %776 = vmatpush1.msra.mxu0 0.0
        %777 = vmatprep.subr.mxu0 0.0
        %778 = vmatpush1.msra.mxu0 0.0
        %779 = vmatprep.subr.mxu0 0.0
        %780 = vmatpush1.msra.mxu0 0.0
        %781 = vmatprep.subr.mxu0 0.0
        %782 = vmatpush1.msra.mxu0 0.0
        %783 = vmatprep.subr.mxu0 0.0
        %784 = vmatpush1.msra.mxu0 0.0
        %785 = vmatprep.subr.mxu0 0.0
        %786 = vmatpush1.msra.mxu0 0.0
        %787 = vmatprep.subr.mxu0 0.0
        %788 = vmatpush1.msra.mxu0 0.0
        %789 = vmatprep.subr.mxu0 0.0
        %790 = vmatpush1.msra.mxu0 0.0
        %791 = vmatprep.subr.mxu0 0.0
        %792 = vmatpush1.msra.mxu0 0.0
        %793 = vmatprep.subr.mxu0 0.0
        %794 = vmatpush1.msra.mxu0 0.0
        %795 = vmatprep.subr.mxu0 0.0
        %796 = vmatpush1.msra.mxu0 0.0
        %797 = vmatprep.subr.mxu0 0.0
        %798 = vmatpush1.msra.mxu0 0.0
        %799 = vmatprep.subr.mxu0 0.0
        %800 = vmatpush1.msra.mxu0 0.0
        %801 = vmatprep.subr.mxu0 0.0
        %802 = vmatpush1.msra.mxu0 0.0
        %803 = vmatprep.subr.mxu0 0.0
        %804 = vmatpush1.msra.mxu0 0.0
        %805 = vmatprep.subr.mxu0 0.0
        %806 = vmatpush1.msra.mxu0 0.0
        %807 = vmatprep.subr.mxu0 0.0
        %808 = vmatpush1.msra.mxu0 0.0
        %809 = vmatprep.subr.mxu0 0.0
        %810 = vmatpush1.msra.mxu0 0.0
        %811 = vmatprep.subr.mxu0 0.0
        %812 = vmatpush1.msra.mxu0 0.0
        %813 = vmatprep.subr.mxu0 0.0
        %814 = vmatpush1.msra.mxu0 0.0
        %815 = vmatprep.subr.mxu0 0.0
        %816 = vmatpush1.msra.mxu0 0.0
        %817 = vmatprep.subr.mxu0 0.0
        %818 = vmatpush1.msra.mxu0 0.0
        %819 = vmatprep.mubr.f32.mxu0 0.0
        %v820 = vand.u32 %v286, 4294901760
        %v821 = vsub.f32 %v286, %v820
        %v822 = vand.u32 %v821, 4294901760
        %v823 = vsub.f32 %v821, %v822
        %v824 = vand.u32 %v823, 4294901760
        %825 = vmatmul.mubr.f32.gmra.mrb[0].mxu0 %v824
        %v826 = vpop.f32.mrb[0].mxu0
        %v827 = vadd.f32 %v282, %v826
        %v828 = vpop.f32.mrb[0].mxu0
        %v829 = vadd.f32 %v282, %v828
        %830 = vdwg.mxu0
        %v831 = vand.u32 %v264, 4294901760
        %v832 = vsub.f32 %v264, %v831
        %v833 = vand.u32 %v832, 4294901760
        %v834 = vsub.f32 %v832, %v833
        %v835 = vand.u32 %v834, 4294901760
        %836 = vmatprep.subr.mxu0 %v835
        %v837 = vand.u32 %v263, 4294901760
        %v838 = vsub.f32 %v263, %v837
        %v839 = vand.u32 %v838, 4294901760
        %v840 = vsub.f32 %v838, %v839
        %v841 = vand.u32 %v840, 4294901760
        %842 = vmatpush1.msra.mxu0 %v841
        %843 = vmatprep.subr.mxu0 0.0
        %844 = vmatpush1.msra.mxu0 0.0
        %845 = vmatprep.subr.mxu0 0.0
        %846 = vmatpush1.msra.mxu0 0.0
        %847 = vmatprep.subr.mxu0 0.0
        %848 = vmatpush1.msra.mxu0 0.0
        %849 = vmatprep.subr.mxu0 0.0
        %850 = vmatpush1.msra.mxu0 0.0
        %851 = vmatprep.subr.mxu0 0.0
        %852 = vmatpush1.msra.mxu0 0.0
        %853 = vmatprep.subr.mxu0 0.0
        %854 = vmatpush1.msra.mxu0 0.0
        %855 = vmatprep.subr.mxu0 0.0
        %856 = vmatpush1.msra.mxu0 0.0
        %857 = vmatprep.subr.mxu0 0.0
        %858 = vmatpush1.msra.mxu0 0.0
        %859 = vmatprep.subr.mxu0 0.0
        %860 = vmatpush1.msra.mxu0 0.0
        %861 = vmatprep.subr.mxu0 0.0
        %862 = vmatpush1.msra.mxu0 0.0
        %863 = vmatprep.subr.mxu0 0.0
        %864 = vmatpush1.msra.mxu0 0.0
        %865 = vmatprep.subr.mxu0 0.0
        %866 = vmatpush1.msra.mxu0 0.0
        %867 = vmatprep.subr.mxu0 0.0
        %868 = vmatpush1.msra.mxu0 0.0
        %869 = vmatprep.subr.mxu0 0.0
        %870 = vmatpush1.msra.mxu0 0.0
        %871 = vmatprep.subr.mxu0 0.0
        %872 = vmatpush1.msra.mxu0 0.0
        %873 = vmatprep.subr.mxu0 0.0
        %874 = vmatpush1.msra.mxu0 0.0
        %875 = vmatprep.subr.mxu0 0.0
        %876 = vmatpush1.msra.mxu0 0.0
        %877 = vmatprep.subr.mxu0 0.0
        %878 = vmatpush1.msra.mxu0 0.0
        %879 = vmatprep.subr.mxu0 0.0
        %880 = vmatpush1.msra.mxu0 0.0
        %881 = vmatprep.subr.mxu0 0.0
        %882 = vmatpush1.msra.mxu0 0.0
        %883 = vmatprep.subr.mxu0 0.0
        %884 = vmatpush1.msra.mxu0 0.0
        %885 = vmatprep.subr.mxu0 0.0
        %886 = vmatpush1.msra.mxu0 0.0
        %887 = vmatprep.subr.mxu0 0.0
        %888 = vmatpush1.msra.mxu0 0.0
        %889 = vmatprep.subr.mxu0 0.0
        %890 = vmatpush1.msra.mxu0 0.0
        %891 = vmatprep.subr.mxu0 0.0
        %892 = vmatpush1.msra.mxu0 0.0
        %893 = vmatprep.subr.mxu0 0.0
        %894 = vmatpush1.msra.mxu0 0.0
        %895 = vmatprep.subr.mxu0 0.0
        %896 = vmatpush1.msra.mxu0 0.0
        %897 = vmatprep.subr.mxu0 0.0
        %898 = vmatpush1.msra.mxu0 0.0
        %899 = vmatprep.subr.mxu0 0.0
        %900 = vmatpush1.msra.mxu0 0.0
        %901 = vmatprep.subr.mxu0 0.0
        %902 = vmatpush1.msra.mxu0 0.0
        %903 = vmatprep.subr.mxu0 0.0
        %904 = vmatpush1.msra.mxu0 0.0
        %905 = vmatprep.mubr.f32.mxu0 0.0
        %v906 = vand.u32 %v286, 4294901760
        %907 = vmatmul.mubr.f32.gmra.mrb[0].mxu0 %v906
        %v908 = vpop.f32.mrb[0].mxu0
        %v909 = vadd.f32 %v827, %v908
        %v910 = vpop.f32.mrb[0].mxu0
        %v911 = vadd.f32 %v829, %v910
        %912 = vdwg.mxu0
        %v913 = vand.u32 %v264, 4294901760
        %v914 = vsub.f32 %v264, %v913
        %915 = vmatprep.subr.mxu0 %v914
        %v916 = vand.u32 %v263, 4294901760
        %v917 = vsub.f32 %v263, %v916
        %918 = vmatpush1.msra.mxu0 %v917
        %919 = vmatprep.subr.mxu0 0.0
        %920 = vmatpush1.msra.mxu0 0.0
        %921 = vmatprep.subr.mxu0 0.0
        %922 = vmatpush1.msra.mxu0 0.0
        %923 = vmatprep.subr.mxu0 0.0
        %924 = vmatpush1.msra.mxu0 0.0
        %925 = vmatprep.subr.mxu0 0.0
        %926 = vmatpush1.msra.mxu0 0.0
        %927 = vmatprep.subr.mxu0 0.0
        %928 = vmatpush1.msra.mxu0 0.0
        %929 = vmatprep.subr.mxu0 0.0
        %930 = vmatpush1.msra.mxu0 0.0
        %931 = vmatprep.subr.mxu0 0.0
        %932 = vmatpush1.msra.mxu0 0.0
        %933 = vmatprep.subr.mxu0 0.0
        %934 = vmatpush1.msra.mxu0 0.0
        %935 = vmatprep.subr.mxu0 0.0
        %936 = vmatpush1.msra.mxu0 0.0
        %937 = vmatprep.subr.mxu0 0.0
        %938 = vmatpush1.msra.mxu0 0.0
        %939 = vmatprep.subr.mxu0 0.0
        %940 = vmatpush1.msra.mxu0 0.0
        %941 = vmatprep.subr.mxu0 0.0
        %942 = vmatpush1.msra.mxu0 0.0
        %943 = vmatprep.subr.mxu0 0.0
        %944 = vmatpush1.msra.mxu0 0.0
        %945 = vmatprep.subr.mxu0 0.0
        %946 = vmatpush1.msra.mxu0 0.0
        %947 = vmatprep.subr.mxu0 0.0
        %948 = vmatpush1.msra.mxu0 0.0
        %949 = vmatprep.subr.mxu0 0.0
        %950 = vmatpush1.msra.mxu0 0.0
        %951 = vmatprep.subr.mxu0 0.0
        %952 = vmatpush1.msra.mxu0 0.0
        %953 = vmatprep.subr.mxu0 0.0
        %954 = vmatpush1.msra.mxu0 0.0
        %955 = vmatprep.subr.mxu0 0.0
        %956 = vmatpush1.msra.mxu0 0.0
        %957 = vmatprep.subr.mxu0 0.0
        %958 = vmatpush1.msra.mxu0 0.0
        %959 = vmatprep.subr.mxu0 0.0
        %960 = vmatpush1.msra.mxu0 0.0
        %961 = vmatprep.subr.mxu0 0.0
        %962 = vmatpush1.msra.mxu0 0.0
        %963 = vmatprep.subr.mxu0 0.0
        %964 = vmatpush1.msra.mxu0 0.0
        %965 = vmatprep.subr.mxu0 0.0
        %966 = vmatpush1.msra.mxu0 0.0
        %967 = vmatprep.subr.mxu0 0.0
        %968 = vmatpush1.msra.mxu0 0.0
        %969 = vmatprep.subr.mxu0 0.0
        %970 = vmatpush1.msra.mxu0 0.0
        %971 = vmatprep.subr.mxu0 0.0
        %972 = vmatpush1.msra.mxu0 0.0
        %973 = vmatprep.subr.mxu0 0.0
        %974 = vmatpush1.msra.mxu0 0.0
        %975 = vmatprep.subr.mxu0 0.0
        %976 = vmatpush1.msra.mxu0 0.0
        %977 = vmatprep.subr.mxu0 0.0
        %978 = vmatpush1.msra.mxu0 0.0
        %979 = vmatprep.subr.mxu0 0.0
        %980 = vmatpush1.msra.mxu0 0.0
        %981 = vmatprep.mubr.f32.mxu0 0.0
        %v982 = vand.u32 %v286, 4294901760
        %v983 = vsub.f32 %v286, %v982
        %984 = vmatmul.mubr.f32.gmra.mrb[0].mxu0 %v983
        %v985 = vpop.f32.mrb[0].mxu0
        %v986 = vadd.f32 %v909, %v985
        %v987 = vpop.f32.mrb[0].mxu0
        %v988 = vadd.f32 %v911, %v987
        %989 = vdwg.mxu0
        %v990 = vand.u32 %v264, 4294901760
        %991 = vmatprep.subr.mxu0 %v990
        %v992 = vand.u32 %v263, 4294901760
        %993 = vmatpush1.msra.mxu0 %v992
        %994 = vmatprep.subr.mxu0 0.0
        %995 = vmatpush1.msra.mxu0 0.0
        %996 = vmatprep.subr.mxu0 0.0
        %997 = vmatpush1.msra.mxu0 0.0
        %998 = vmatprep.subr.mxu0 0.0
        %999 = vmatpush1.msra.mxu0 0.0
        %1000 = vmatprep.subr.mxu0 0.0
        %1001 = vmatpush1.msra.mxu0 0.0
        %1002 = vmatprep.subr.mxu0 0.0
        %1003 = vmatpush1.msra.mxu0 0.0
        %1004 = vmatprep.subr.mxu0 0.0
        %1005 = vmatpush1.msra.mxu0 0.0
        %1006 = vmatprep.subr.mxu0 0.0
        %1007 = vmatpush1.msra.mxu0 0.0
        %1008 = vmatprep.subr.mxu0 0.0
        %1009 = vmatpush1.msra.mxu0 0.0
        %1010 = vmatprep.subr.mxu0 0.0
        %1011 = vmatpush1.msra.mxu0 0.0
        %1012 = vmatprep.subr.mxu0 0.0
        %1013 = vmatpush1.msra.mxu0 0.0
        %1014 = vmatprep.subr.mxu0 0.0
        %1015 = vmatpush1.msra.mxu0 0.0
        %1016 = vmatprep.subr.mxu0 0.0
        %1017 = vmatpush1.msra.mxu0 0.0
        %1018 = vmatprep.subr.mxu0 0.0
        %1019 = vmatpush1.msra.mxu0 0.0
        %1020 = vmatprep.subr.mxu0 0.0
        %1021 = vmatpush1.msra.mxu0 0.0
        %1022 = vmatprep.subr.mxu0 0.0
        %1023 = vmatpush1.msra.mxu0 0.0
        %1024 = vmatprep.subr.mxu0 0.0
        %1025 = vmatpush1.msra.mxu0 0.0
        %1026 = vmatprep.subr.mxu0 0.0
        %1027 = vmatpush1.msra.mxu0 0.0
        %1028 = vmatprep.subr.mxu0 0.0
        %1029 = vmatpush1.msra.mxu0 0.0
        %1030 = vmatprep.subr.mxu0 0.0
        %1031 = vmatpush1.msra.mxu0 0.0
        %1032 = vmatprep.subr.mxu0 0.0
        %1033 = vmatpush1.msra.mxu0 0.0
        %1034 = vmatprep.subr.mxu0 0.0
        %1035 = vmatpush1.msra.mxu0 0.0
        %1036 = vmatprep.subr.mxu0 0.0
        %1037 = vmatpush1.msra.mxu0 0.0
        %1038 = vmatprep.subr.mxu0 0.0
        %1039 = vmatpush1.msra.mxu0 0.0
        %1040 = vmatprep.subr.mxu0 0.0
        %1041 = vmatpush1.msra.mxu0 0.0
        %1042 = vmatprep.subr.mxu0 0.0
        %1043 = vmatpush1.msra.mxu0 0.0
        %1044 = vmatprep.subr.mxu0 0.0
        %1045 = vmatpush1.msra.mxu0 0.0
        %1046 = vmatprep.subr.mxu0 0.0
        %1047 = vmatpush1.msra.mxu0 0.0
        %1048 = vmatprep.subr.mxu0 0.0
        %1049 = vmatpush1.msra.mxu0 0.0
        %1050 = vmatprep.subr.mxu0 0.0
        %1051 = vmatpush1.msra.mxu0 0.0
        %1052 = vmatprep.subr.mxu0 0.0
        %1053 = vmatpush1.msra.mxu0 0.0
        %1054 = vmatprep.subr.mxu0 0.0
        %1055 = vmatpush1.msra.mxu0 0.0
        %1056 = vmatprep.mubr.f32.mxu0 0.0
        %v1057 = vand.u32 %v286, 4294901760
        %v1058 = vsub.f32 %v286, %v1057
        %v1059 = vand.u32 %v1058, 4294901760
        %1060 = vmatmul.mubr.f32.gmra.mrb[0].mxu0 %v1059
        %v1061 = vpop.f32.mrb[0].mxu0
        %v1062 = vadd.f32 %v986, %v1061
        %v1063 = vpop.f32.mrb[0].mxu0
        %v1064 = vadd.f32 %v988, %v1063
        %1065 = vdwg.mxu0
        %v1066 = vand.u32 %v264, 4294901760
        %v1067 = vsub.f32 %v264, %v1066
        %v1068 = vand.u32 %v1067, 4294901760
        %1069 = vmatprep.subr.mxu0 %v1068
        %v1070 = vand.u32 %v263, 4294901760
        %v1071 = vsub.f32 %v263, %v1070
        %v1072 = vand.u32 %v1071, 4294901760
        %1073 = vmatpush1.msra.mxu0 %v1072
        %1074 = vmatprep.subr.mxu0 0.0
        %1075 = vmatpush1.msra.mxu0 0.0
        %1076 = vmatprep.subr.mxu0 0.0
        %1077 = vmatpush1.msra.mxu0 0.0
        %1078 = vmatprep.subr.mxu0 0.0
        %1079 = vmatpush1.msra.mxu0 0.0
        %1080 = vmatprep.subr.mxu0 0.0
        %1081 = vmatpush1.msra.mxu0 0.0
        %1082 = vmatprep.subr.mxu0 0.0
        %1083 = vmatpush1.msra.mxu0 0.0
        %1084 = vmatprep.subr.mxu0 0.0
        %1085 = vmatpush1.msra.mxu0 0.0
        %1086 = vmatprep.subr.mxu0 0.0
        %1087 = vmatpush1.msra.mxu0 0.0
        %1088 = vmatprep.subr.mxu0 0.0
        %1089 = vmatpush1.msra.mxu0 0.0
        %1090 = vmatprep.subr.mxu0 0.0
        %1091 = vmatpush1.msra.mxu0 0.0
        %1092 = vmatprep.subr.mxu0 0.0
        %1093 = vmatpush1.msra.mxu0 0.0
        %1094 = vmatprep.subr.mxu0 0.0
        %1095 = vmatpush1.msra.mxu0 0.0
        %1096 = vmatprep.subr.mxu0 0.0
        %1097 = vmatpush1.msra.mxu0 0.0
        %1098 = vmatprep.subr.mxu0 0.0
        %1099 = vmatpush1.msra.mxu0 0.0
        %1100 = vmatprep.subr.mxu0 0.0
        %1101 = vmatpush1.msra.mxu0 0.0
        %1102 = vmatprep.subr.mxu0 0.0
        %1103 = vmatpush1.msra.mxu0 0.0
        %1104 = vmatprep.subr.mxu0 0.0
        %1105 = vmatpush1.msra.mxu0 0.0
        %1106 = vmatprep.subr.mxu0 0.0
        %1107 = vmatpush1.msra.mxu0 0.0
        %1108 = vmatprep.subr.mxu0 0.0
        %1109 = vmatpush1.msra.mxu0 0.0
        %1110 = vmatprep.subr.mxu0 0.0
        %1111 = vmatpush1.msra.mxu0 0.0
        %1112 = vmatprep.subr.mxu0 0.0
        %1113 = vmatpush1.msra.mxu0 0.0
        %1114 = vmatprep.subr.mxu0 0.0
        %1115 = vmatpush1.msra.mxu0 0.0
        %1116 = vmatprep.subr.mxu0 0.0
        %1117 = vmatpush1.msra.mxu0 0.0
        %1118 = vmatprep.subr.mxu0 0.0
        %1119 = vmatpush1.msra.mxu0 0.0
        %1120 = vmatprep.subr.mxu0 0.0
        %1121 = vmatpush1.msra.mxu0 0.0
        %1122 = vmatprep.subr.mxu0 0.0
        %1123 = vmatpush1.msra.mxu0 0.0
        %1124 = vmatprep.subr.mxu0 0.0
        %1125 = vmatpush1.msra.mxu0 0.0
        %1126 = vmatprep.subr.mxu0 0.0
        %1127 = vmatpush1.msra.mxu0 0.0
        %1128 = vmatprep.subr.mxu0 0.0
        %1129 = vmatpush1.msra.mxu0 0.0
        %1130 = vmatprep.subr.mxu0 0.0
        %1131 = vmatpush1.msra.mxu0 0.0
        %1132 = vmatprep.subr.mxu0 0.0
        %1133 = vmatpush1.msra.mxu0 0.0
        %1134 = vmatprep.subr.mxu0 0.0
        %1135 = vmatpush1.msra.mxu0 0.0
        %1136 = vmatprep.mubr.f32.mxu0 0.0
        %v1137 = vand.u32 %v286, 4294901760
        %1138 = vmatmul.mubr.f32.gmra.mrb[0].mxu0 %v1137
        %v1139 = vpop.f32.mrb[0].mxu0
        %v1140 = vadd.f32 %v1062, %v1139
        %v1141 = vpop.f32.mrb[0].mxu0
        %v1142 = vadd.f32 %v1064, %v1141
        %1143 = vdwg.mxu0
        %v1144 = vand.u32 %v264, 4294901760
        %1145 = vmatprep.subr.mxu0 %v1144
        %v1146 = vand.u32 %v263, 4294901760
        %1147 = vmatpush1.msra.mxu0 %v1146
        %1148 = vmatprep.subr.mxu0 0.0
        %1149 = vmatpush1.msra.mxu0 0.0
        %1150 = vmatprep.subr.mxu0 0.0
        %1151 = vmatpush1.msra.mxu0 0.0
        %1152 = vmatprep.subr.mxu0 0.0
        %1153 = vmatpush1.msra.mxu0 0.0
        %1154 = vmatprep.subr.mxu0 0.0
        %1155 = vmatpush1.msra.mxu0 0.0
        %1156 = vmatprep.subr.mxu0 0.0
        %1157 = vmatpush1.msra.mxu0 0.0
        %1158 = vmatprep.subr.mxu0 0.0
        %1159 = vmatpush1.msra.mxu0 0.0
        %1160 = vmatprep.subr.mxu0 0.0
        %1161 = vmatpush1.msra.mxu0 0.0
        %1162 = vmatprep.subr.mxu0 0.0
        %1163 = vmatpush1.msra.mxu0 0.0
        %1164 = vmatprep.subr.mxu0 0.0
        %1165 = vmatpush1.msra.mxu0 0.0
        %1166 = vmatprep.subr.mxu0 0.0
        %1167 = vmatpush1.msra.mxu0 0.0
        %1168 = vmatprep.subr.mxu0 0.0
        %1169 = vmatpush1.msra.mxu0 0.0
        %1170 = vmatprep.subr.mxu0 0.0
        %1171 = vmatpush1.msra.mxu0 0.0
        %1172 = vmatprep.subr.mxu0 0.0
        %1173 = vmatpush1.msra.mxu0 0.0
        %1174 = vmatprep.subr.mxu0 0.0
        %1175 = vmatpush1.msra.mxu0 0.0
        %1176 = vmatprep.subr.mxu0 0.0
        %1177 = vmatpush1.msra.mxu0 0.0
        %1178 = vmatprep.subr.mxu0 0.0
        %1179 = vmatpush1.msra.mxu0 0.0
        %1180 = vmatprep.subr.mxu0 0.0
        %1181 = vmatpush1.msra.mxu0 0.0
        %1182 = vmatprep.subr.mxu0 0.0
        %1183 = vmatpush1.msra.mxu0 0.0
        %1184 = vmatprep.subr.mxu0 0.0
        %1185 = vmatpush1.msra.mxu0 0.0
        %1186 = vmatprep.subr.mxu0 0.0
        %1187 = vmatpush1.msra.mxu0 0.0
        %1188 = vmatprep.subr.mxu0 0.0
        %1189 = vmatpush1.msra.mxu0 0.0
        %1190 = vmatprep.subr.mxu0 0.0
        %1191 = vmatpush1.msra.mxu0 0.0
        %1192 = vmatprep.subr.mxu0 0.0
        %1193 = vmatpush1.msra.mxu0 0.0
        %1194 = vmatprep.subr.mxu0 0.0
        %1195 = vmatpush1.msra.mxu0 0.0
        %1196 = vmatprep.subr.mxu0 0.0
        %1197 = vmatpush1.msra.mxu0 0.0
        %1198 = vmatprep.subr.mxu0 0.0
        %1199 = vmatpush1.msra.mxu0 0.0
        %1200 = vmatprep.subr.mxu0 0.0
        %1201 = vmatpush1.msra.mxu0 0.0
        %1202 = vmatprep.subr.mxu0 0.0
        %1203 = vmatpush1.msra.mxu0 0.0
        %1204 = vmatprep.subr.mxu0 0.0
        %1205 = vmatpush1.msra.mxu0 0.0
        %1206 = vmatprep.subr.mxu0 0.0
        %1207 = vmatpush1.msra.mxu0 0.0
        %1208 = vmatprep.subr.mxu0 0.0
        %1209 = vmatpush1.msra.mxu0 0.0
        %1210 = vmatprep.mubr.f32.mxu0 0.0
        %v1211 = vand.u32 %v286, 4294901760
        %1212 = vmatmul.mubr.f32.gmra.mrb[0].mxu0 %v1211
        %v1213 = vpop.f32.mrb[0].mxu0
        %v1214 = vadd.f32 %v1140, %v1213
        %v1215 = vpop.f32.mrb[0].mxu0
        %v1216 = vadd.f32 %v1142, %v1215
        %1217 = vdwg.mxu0
        %v1218 = vand.u32 %v266, 4294901760
        %1219 = vmatprep.subr.mxu0 %v1218
        %v1220 = vand.u32 %v265, 4294901760
        %1221 = vmatpush1.msra.mxu0 %v1220
        %1222 = vmatprep.subr.mxu0 0.0
        %1223 = vmatpush1.msra.mxu0 0.0
        %1224 = vmatprep.subr.mxu0 0.0
        %1225 = vmatpush1.msra.mxu0 0.0
        %1226 = vmatprep.subr.mxu0 0.0
        %1227 = vmatpush1.msra.mxu0 0.0
        %1228 = vmatprep.subr.mxu0 0.0
        %1229 = vmatpush1.msra.mxu0 0.0
        %1230 = vmatprep.subr.mxu0 0.0
        %1231 = vmatpush1.msra.mxu0 0.0
        %1232 = vmatprep.subr.mxu0 0.0
        %1233 = vmatpush1.msra.mxu0 0.0
        %1234 = vmatprep.subr.mxu0 0.0
        %1235 = vmatpush1.msra.mxu0 0.0
        %1236 = vmatprep.subr.mxu0 0.0
        %1237 = vmatpush1.msra.mxu0 0.0
        %1238 = vmatprep.subr.mxu0 0.0
        %1239 = vmatpush1.msra.mxu0 0.0
        %1240 = vmatprep.subr.mxu0 0.0
        %1241 = vmatpush1.msra.mxu0 0.0
        %1242 = vmatprep.subr.mxu0 0.0
        %1243 = vmatpush1.msra.mxu0 0.0
        %1244 = vmatprep.subr.mxu0 0.0
        %1245 = vmatpush1.msra.mxu0 0.0
        %1246 = vmatprep.subr.mxu0 0.0
        %1247 = vmatpush1.msra.mxu0 0.0
        %1248 = vmatprep.subr.mxu0 0.0
        %1249 = vmatpush1.msra.mxu0 0.0
        %1250 = vmatprep.subr.mxu0 0.0
        %1251 = vmatpush1.msra.mxu0 0.0
        %1252 = vmatprep.subr.mxu0 0.0
        %1253 = vmatpush1.msra.mxu0 0.0
        %1254 = vmatprep.subr.mxu0 0.0
        %1255 = vmatpush1.msra.mxu0 0.0
        %1256 = vmatprep.subr.mxu0 0.0
        %1257 = vmatpush1.msra.mxu0 0.0
        %1258 = vmatprep.subr.mxu0 0.0
        %1259 = vmatpush1.msra.mxu0 0.0
        %1260 = vmatprep.subr.mxu0 0.0
        %1261 = vmatpush1.msra.mxu0 0.0
        %1262 = vmatprep.subr.mxu0 0.0
        %1263 = vmatpush1.msra.mxu0 0.0
        %1264 = vmatprep.subr.mxu0 0.0
        %1265 = vmatpush1.msra.mxu0 0.0
        %1266 = vmatprep.subr.mxu0 0.0
        %1267 = vmatpush1.msra.mxu0 0.0
        %1268 = vmatprep.subr.mxu0 0.0
        %1269 = vmatpush1.msra.mxu0 0.0
        %1270 = vmatprep.subr.mxu0 0.0
        %1271 = vmatpush1.msra.mxu0 0.0
        %1272 = vmatprep.subr.mxu0 0.0
        %1273 = vmatpush1.msra.mxu0 0.0
        %1274 = vmatprep.subr.mxu0 0.0
        %1275 = vmatpush1.msra.mxu0 0.0
        %1276 = vmatprep.subr.mxu0 0.0
        %1277 = vmatpush1.msra.mxu0 0.0
        %1278 = vmatprep.subr.mxu0 0.0
        %1279 = vmatpush1.msra.mxu0 0.0
        %1280 = vmatprep.subr.mxu0 0.0
        %1281 = vmatpush1.msra.mxu0 0.0
        %1282 = vmatprep.subr.mxu0 0.0
        %1283 = vmatpush1.msra.mxu0 0.0
        %1284 = vmatprep.mubr.f32.mxu0 0.0
        %v1285 = vand.u32 %v286, 4294901760
        %v1286 = vsub.f32 %v286, %v1285
        %v1287 = vand.u32 %v1286, 4294901760
        %v1288 = vsub.f32 %v1286, %v1287
        %v1289 = vand.u32 %v1288, 4294901760
        %1290 = vmatmul.mubr.f32.gmra.mrb[0].mxu0 %v1289
        %v1291 = vpop.f32.mrb[0].mxu0
        %v1292 = vadd.f32 %v282, %v1291
        %v1293 = vpop.f32.mrb[0].mxu0
        %v1294 = vadd.f32 %v282, %v1293
        %1295 = vdwg.mxu0
        %v1296 = vand.u32 %v266, 4294901760
        %v1297 = vsub.f32 %v266, %v1296
        %v1298 = vand.u32 %v1297, 4294901760
        %v1299 = vsub.f32 %v1297, %v1298
        %v1300 = vand.u32 %v1299, 4294901760
        %1301 = vmatprep.subr.mxu0 %v1300
        %v1302 = vand.u32 %v265, 4294901760
        %v1303 = vsub.f32 %v265, %v1302
        %v1304 = vand.u32 %v1303, 4294901760
        %v1305 = vsub.f32 %v1303, %v1304
        %v1306 = vand.u32 %v1305, 4294901760
        %1307 = vmatpush1.msra.mxu0 %v1306
        %1308 = vmatprep.subr.mxu0 0.0
        %1309 = vmatpush1.msra.mxu0 0.0
        %1310 = vmatprep.subr.mxu0 0.0
        %1311 = vmatpush1.msra.mxu0 0.0
        %1312 = vmatprep.subr.mxu0 0.0
        %1313 = vmatpush1.msra.mxu0 0.0
        %1314 = vmatprep.subr.mxu0 0.0
        %1315 = vmatpush1.msra.mxu0 0.0
        %1316 = vmatprep.subr.mxu0 0.0
        %1317 = vmatpush1.msra.mxu0 0.0
        %1318 = vmatprep.subr.mxu0 0.0
        %1319 = vmatpush1.msra.mxu0 0.0
        %1320 = vmatprep.subr.mxu0 0.0
        %1321 = vmatpush1.msra.mxu0 0.0
        %1322 = vmatprep.subr.mxu0 0.0
        %1323 = vmatpush1.msra.mxu0 0.0
        %1324 = vmatprep.subr.mxu0 0.0
        %1325 = vmatpush1.msra.mxu0 0.0
        %1326 = vmatprep.subr.mxu0 0.0
        %1327 = vmatpush1.msra.mxu0 0.0
        %1328 = vmatprep.subr.mxu0 0.0
        %1329 = vmatpush1.msra.mxu0 0.0
        %1330 = vmatprep.subr.mxu0 0.0
        %1331 = vmatpush1.msra.mxu0 0.0
        %1332 = vmatprep.subr.mxu0 0.0
        %1333 = vmatpush1.msra.mxu0 0.0
        %1334 = vmatprep.subr.mxu0 0.0
        %1335 = vmatpush1.msra.mxu0 0.0
        %1336 = vmatprep.subr.mxu0 0.0
        %1337 = vmatpush1.msra.mxu0 0.0
        %1338 = vmatprep.subr.mxu0 0.0
        %1339 = vmatpush1.msra.mxu0 0.0
        %1340 = vmatprep.subr.mxu0 0.0
        %1341 = vmatpush1.msra.mxu0 0.0
        %1342 = vmatprep.subr.mxu0 0.0
        %1343 = vmatpush1.msra.mxu0 0.0
        %1344 = vmatprep.subr.mxu0 0.0
        %1345 = vmatpush1.msra.mxu0 0.0
        %1346 = vmatprep.subr.mxu0 0.0
        %1347 = vmatpush1.msra.mxu0 0.0
        %1348 = vmatprep.subr.mxu0 0.0
        %1349 = vmatpush1.msra.mxu0 0.0
        %1350 = vmatprep.subr.mxu0 0.0
        %1351 = vmatpush1.msra.mxu0 0.0
        %1352 = vmatprep.subr.mxu0 0.0
        %1353 = vmatpush1.msra.mxu0 0.0
        %1354 = vmatprep.subr.mxu0 0.0
        %1355 = vmatpush1.msra.mxu0 0.0
        %1356 = vmatprep.subr.mxu0 0.0
        %1357 = vmatpush1.msra.mxu0 0.0
        %1358 = vmatprep.subr.mxu0 0.0
        %1359 = vmatpush1.msra.mxu0 0.0
        %1360 = vmatprep.subr.mxu0 0.0
        %1361 = vmatpush1.msra.mxu0 0.0
        %1362 = vmatprep.subr.mxu0 0.0
        %1363 = vmatpush1.msra.mxu0 0.0
        %1364 = vmatprep.subr.mxu0 0.0
        %1365 = vmatpush1.msra.mxu0 0.0
        %1366 = vmatprep.subr.mxu0 0.0
        %1367 = vmatpush1.msra.mxu0 0.0
        %1368 = vmatprep.subr.mxu0 0.0
        %1369 = vmatpush1.msra.mxu0 0.0
        %1370 = vmatprep.mubr.f32.mxu0 0.0
        %v1371 = vand.u32 %v286, 4294901760
        %1372 = vmatmul.mubr.f32.gmra.mrb[0].mxu0 %v1371
        %v1373 = vpop.f32.mrb[0].mxu0
        %v1374 = vadd.f32 %v1292, %v1373
        %v1375 = vpop.f32.mrb[0].mxu0
        %v1376 = vadd.f32 %v1294, %v1375
        %1377 = vdwg.mxu0
        %v1378 = vand.u32 %v266, 4294901760
        %v1379 = vsub.f32 %v266, %v1378
        %1380 = vmatprep.subr.mxu0 %v1379
        %v1381 = vand.u32 %v265, 4294901760
        %v1382 = vsub.f32 %v265, %v1381
        %1383 = vmatpush1.msra.mxu0 %v1382
        %1384 = vmatprep.subr.mxu0 0.0
        %1385 = vmatpush1.msra.mxu0 0.0
        %1386 = vmatprep.subr.mxu0 0.0
        %1387 = vmatpush1.msra.mxu0 0.0
        %1388 = vmatprep.subr.mxu0 0.0
        %1389 = vmatpush1.msra.mxu0 0.0
        %1390 = vmatprep.subr.mxu0 0.0
        %1391 = vmatpush1.msra.mxu0 0.0
        %1392 = vmatprep.subr.mxu0 0.0
        %1393 = vmatpush1.msra.mxu0 0.0
        %1394 = vmatprep.subr.mxu0 0.0
        %1395 = vmatpush1.msra.mxu0 0.0
        %1396 = vmatprep.subr.mxu0 0.0
        %1397 = vmatpush1.msra.mxu0 0.0
        %1398 = vmatprep.subr.mxu0 0.0
        %1399 = vmatpush1.msra.mxu0 0.0
        %1400 = vmatprep.subr.mxu0 0.0
        %1401 = vmatpush1.msra.mxu0 0.0
        %1402 = vmatprep.subr.mxu0 0.0
        %1403 = vmatpush1.msra.mxu0 0.0
        %1404 = vmatprep.subr.mxu0 0.0
        %1405 = vmatpush1.msra.mxu0 0.0
        %1406 = vmatprep.subr.mxu0 0.0
        %1407 = vmatpush1.msra.mxu0 0.0
        %1408 = vmatprep.subr.mxu0 0.0
        %1409 = vmatpush1.msra.mxu0 0.0
        %1410 = vmatprep.subr.mxu0 0.0
        %1411 = vmatpush1.msra.mxu0 0.0
        %1412 = vmatprep.subr.mxu0 0.0
        %1413 = vmatpush1.msra.mxu0 0.0
        %1414 = vmatprep.subr.mxu0 0.0
        %1415 = vmatpush1.msra.mxu0 0.0
        %1416 = vmatprep.subr.mxu0 0.0
        %1417 = vmatpush1.msra.mxu0 0.0
        %1418 = vmatprep.subr.mxu0 0.0
        %1419 = vmatpush1.msra.mxu0 0.0
        %1420 = vmatprep.subr.mxu0 0.0
        %1421 = vmatpush1.msra.mxu0 0.0
        %1422 = vmatprep.subr.mxu0 0.0
        %1423 = vmatpush1.msra.mxu0 0.0
        %1424 = vmatprep.subr.mxu0 0.0
        %1425 = vmatpush1.msra.mxu0 0.0
        %1426 = vmatprep.subr.mxu0 0.0
        %1427 = vmatpush1.msra.mxu0 0.0
        %1428 = vmatprep.subr.mxu0 0.0
        %1429 = vmatpush1.msra.mxu0 0.0
        %1430 = vmatprep.subr.mxu0 0.0
        %1431 = vmatpush1.msra.mxu0 0.0
        %1432 = vmatprep.subr.mxu0 0.0
        %1433 = vmatpush1.msra.mxu0 0.0
        %1434 = vmatprep.subr.mxu0 0.0
        %1435 = vmatpush1.msra.mxu0 0.0
        %1436 = vmatprep.subr.mxu0 0.0
        %1437 = vmatpush1.msra.mxu0 0.0
        %1438 = vmatprep.subr.mxu0 0.0
        %1439 = vmatpush1.msra.mxu0 0.0
        %1440 = vmatprep.subr.mxu0 0.0
        %1441 = vmatpush1.msra.mxu0 0.0
        %1442 = vmatprep.subr.mxu0 0.0
        %1443 = vmatpush1.msra.mxu0 0.0
        %1444 = vmatprep.subr.mxu0 0.0
        %1445 = vmatpush1.msra.mxu0 0.0
        %1446 = vmatprep.mubr.f32.mxu0 0.0
        %v1447 = vand.u32 %v286, 4294901760
        %v1448 = vsub.f32 %v286, %v1447
        %1449 = vmatmul.mubr.f32.gmra.mrb[0].mxu0 %v1448
        %v1450 = vpop.f32.mrb[0].mxu0
        %v1451 = vadd.f32 %v1374, %v1450
        %v1452 = vpop.f32.mrb[0].mxu0
        %v1453 = vadd.f32 %v1376, %v1452
        %1454 = vdwg.mxu0
        %v1455 = vand.u32 %v266, 4294901760
        %1456 = vmatprep.subr.mxu0 %v1455
        %v1457 = vand.u32 %v265, 4294901760
        %1458 = vmatpush1.msra.mxu0 %v1457
        %1459 = vmatprep.subr.mxu0 0.0
        %1460 = vmatpush1.msra.mxu0 0.0
        %1461 = vmatprep.subr.mxu0 0.0
        %1462 = vmatpush1.msra.mxu0 0.0
        %1463 = vmatprep.subr.mxu0 0.0
        %1464 = vmatpush1.msra.mxu0 0.0
        %1465 = vmatprep.subr.mxu0 0.0
        %1466 = vmatpush1.msra.mxu0 0.0
        %1467 = vmatprep.subr.mxu0 0.0
        %1468 = vmatpush1.msra.mxu0 0.0
        %1469 = vmatprep.subr.mxu0 0.0
        %1470 = vmatpush1.msra.mxu0 0.0
        %1471 = vmatprep.subr.mxu0 0.0
        %1472 = vmatpush1.msra.mxu0 0.0
        %1473 = vmatprep.subr.mxu0 0.0
        %1474 = vmatpush1.msra.mxu0 0.0
        %1475 = vmatprep.subr.mxu0 0.0
        %1476 = vmatpush1.msra.mxu0 0.0
        %1477 = vmatprep.subr.mxu0 0.0
        %1478 = vmatpush1.msra.mxu0 0.0
        %1479 = vmatprep.subr.mxu0 0.0
        %1480 = vmatpush1.msra.mxu0 0.0
        %1481 = vmatprep.subr.mxu0 0.0
        %1482 = vmatpush1.msra.mxu0 0.0
        %1483 = vmatprep.subr.mxu0 0.0
        %1484 = vmatpush1.msra.mxu0 0.0
        %1485 = vmatprep.subr.mxu0 0.0
        %1486 = vmatpush1.msra.mxu0 0.0
        %1487 = vmatprep.subr.mxu0 0.0
        %1488 = vmatpush1.msra.mxu0 0.0
        %1489 = vmatprep.subr.mxu0 0.0
        %1490 = vmatpush1.msra.mxu0 0.0
        %1491 = vmatprep.subr.mxu0 0.0
        %1492 = vmatpush1.msra.mxu0 0.0
        %1493 = vmatprep.subr.mxu0 0.0
        %1494 = vmatpush1.msra.mxu0 0.0
        %1495 = vmatprep.subr.mxu0 0.0
        %1496 = vmatpush1.msra.mxu0 0.0
        %1497 = vmatprep.subr.mxu0 0.0
        %1498 = vmatpush1.msra.mxu0 0.0
        %1499 = vmatprep.subr.mxu0 0.0
        %1500 = vmatpush1.msra.mxu0 0.0
        %1501 = vmatprep.subr.mxu0 0.0
        %1502 = vmatpush1.msra.mxu0 0.0
        %1503 = vmatprep.subr.mxu0 0.0
        %1504 = vmatpush1.msra.mxu0 0.0
        %1505 = vmatprep.subr.mxu0 0.0
        %1506 = vmatpush1.msra.mxu0 0.0
        %1507 = vmatprep.subr.mxu0 0.0
        %1508 = vmatpush1.msra.mxu0 0.0
        %1509 = vmatprep.subr.mxu0 0.0
        %1510 = vmatpush1.msra.mxu0 0.0
        %1511 = vmatprep.subr.mxu0 0.0
        %1512 = vmatpush1.msra.mxu0 0.0
        %1513 = vmatprep.subr.mxu0 0.0
        %1514 = vmatpush1.msra.mxu0 0.0
        %1515 = vmatprep.subr.mxu0 0.0
        %1516 = vmatpush1.msra.mxu0 0.0
        %1517 = vmatprep.subr.mxu0 0.0
        %1518 = vmatpush1.msra.mxu0 0.0
        %1519 = vmatprep.subr.mxu0 0.0
        %1520 = vmatpush1.msra.mxu0 0.0
        %1521 = vmatprep.mubr.f32.mxu0 0.0
        %v1522 = vand.u32 %v286, 4294901760
        %v1523 = vsub.f32 %v286, %v1522
        %v1524 = vand.u32 %v1523, 4294901760
        %1525 = vmatmul.mubr.f32.gmra.mrb[0].mxu0 %v1524
        %v1526 = vpop.f32.mrb[0].mxu0
        %v1527 = vadd.f32 %v1451, %v1526
        %v1528 = vpop.f32.mrb[0].mxu0
        %v1529 = vadd.f32 %v1453, %v1528
        %1530 = vdwg.mxu0
        %v1531 = vand.u32 %v266, 4294901760
        %v1532 = vsub.f32 %v266, %v1531
        %v1533 = vand.u32 %v1532, 4294901760
        %1534 = vmatprep.subr.mxu0 %v1533
        %v1535 = vand.u32 %v265, 4294901760
        %v1536 = vsub.f32 %v265, %v1535
        %v1537 = vand.u32 %v1536, 4294901760
        %1538 = vmatpush1.msra.mxu0 %v1537
        %1539 = vmatprep.subr.mxu0 0.0
        %1540 = vmatpush1.msra.mxu0 0.0
        %1541 = vmatprep.subr.mxu0 0.0
        %1542 = vmatpush1.msra.mxu0 0.0
        %1543 = vmatprep.subr.mxu0 0.0
        %1544 = vmatpush1.msra.mxu0 0.0
        %1545 = vmatprep.subr.mxu0 0.0
        %1546 = vmatpush1.msra.mxu0 0.0
        %1547 = vmatprep.subr.mxu0 0.0
        %1548 = vmatpush1.msra.mxu0 0.0
        %1549 = vmatprep.subr.mxu0 0.0
        %1550 = vmatpush1.msra.mxu0 0.0
        %1551 = vmatprep.subr.mxu0 0.0
        %1552 = vmatpush1.msra.mxu0 0.0
        %1553 = vmatprep.subr.mxu0 0.0
        %1554 = vmatpush1.msra.mxu0 0.0
        %1555 = vmatprep.subr.mxu0 0.0
        %1556 = vmatpush1.msra.mxu0 0.0
        %1557 = vmatprep.subr.mxu0 0.0
        %1558 = vmatpush1.msra.mxu0 0.0
        %1559 = vmatprep.subr.mxu0 0.0
        %1560 = vmatpush1.msra.mxu0 0.0
        %1561 = vmatprep.subr.mxu0 0.0
        %1562 = vmatpush1.msra.mxu0 0.0
        %1563 = vmatprep.subr.mxu0 0.0
        %1564 = vmatpush1.msra.mxu0 0.0
        %1565 = vmatprep.subr.mxu0 0.0
        %1566 = vmatpush1.msra.mxu0 0.0
        %1567 = vmatprep.subr.mxu0 0.0
        %1568 = vmatpush1.msra.mxu0 0.0
        %1569 = vmatprep.subr.mxu0 0.0
        %1570 = vmatpush1.msra.mxu0 0.0
        %1571 = vmatprep.subr.mxu0 0.0
        %1572 = vmatpush1.msra.mxu0 0.0
        %1573 = vmatprep.subr.mxu0 0.0
        %1574 = vmatpush1.msra.mxu0 0.0
        %1575 = vmatprep.subr.mxu0 0.0
        %1576 = vmatpush1.msra.mxu0 0.0
        %1577 = vmatprep.subr.mxu0 0.0
        %1578 = vmatpush1.msra.mxu0 0.0
        %1579 = vmatprep.subr.mxu0 0.0
        %1580 = vmatpush1.msra.mxu0 0.0
        %1581 = vmatprep.subr.mxu0 0.0
        %1582 = vmatpush1.msra.mxu0 0.0
        %1583 = vmatprep.subr.mxu0 0.0
        %1584 = vmatpush1.msra.mxu0 0.0
        %1585 = vmatprep.subr.mxu0 0.0
        %1586 = vmatpush1.msra.mxu0 0.0
        %1587 = vmatprep.subr.mxu0 0.0
        %1588 = vmatpush1.msra.mxu0 0.0
        %1589 = vmatprep.subr.mxu0 0.0
        %1590 = vmatpush1.msra.mxu0 0.0
        %1591 = vmatprep.subr.mxu0 0.0
        %1592 = vmatpush1.msra.mxu0 0.0
        %1593 = vmatprep.subr.mxu0 0.0
        %1594 = vmatpush1.msra.mxu0 0.0
        %1595 = vmatprep.subr.mxu0 0.0
        %1596 = vmatpush1.msra.mxu0 0.0
        %1597 = vmatprep.subr.mxu0 0.0
        %1598 = vmatpush1.msra.mxu0 0.0
        %1599 = vmatprep.subr.mxu0 0.0
        %1600 = vmatpush1.msra.mxu0 0.0
        %1601 = vmatprep.mubr.f32.mxu0 0.0
        %v1602 = vand.u32 %v286, 4294901760
        %1603 = vmatmul.mubr.f32.gmra.mrb[0].mxu0 %v1602
        %v1604 = vpop.f32.mrb[0].mxu0
        %v1605 = vadd.f32 %v1527, %v1604
        %v1606 = vpop.f32.mrb[0].mxu0
        %v1607 = vadd.f32 %v1529, %v1606
        %1608 = vdwg.mxu0
        %v1609 = vand.u32 %v266, 4294901760
        %1610 = vmatprep.subr.mxu0 %v1609
        %v1611 = vand.u32 %v265, 4294901760
        %1612 = vmatpush1.msra.mxu0 %v1611
        %1613 = vmatprep.subr.mxu0 0.0
        %1614 = vmatpush1.msra.mxu0 0.0
        %1615 = vmatprep.subr.mxu0 0.0
        %1616 = vmatpush1.msra.mxu0 0.0
        %1617 = vmatprep.subr.mxu0 0.0
        %1618 = vmatpush1.msra.mxu0 0.0
        %1619 = vmatprep.subr.mxu0 0.0
        %1620 = vmatpush1.msra.mxu0 0.0
        %1621 = vmatprep.subr.mxu0 0.0
        %1622 = vmatpush1.msra.mxu0 0.0
        %1623 = vmatprep.subr.mxu0 0.0
        %1624 = vmatpush1.msra.mxu0 0.0
        %1625 = vmatprep.subr.mxu0 0.0
        %1626 = vmatpush1.msra.mxu0 0.0
        %1627 = vmatprep.subr.mxu0 0.0
        %1628 = vmatpush1.msra.mxu0 0.0
        %1629 = vmatprep.subr.mxu0 0.0
        %1630 = vmatpush1.msra.mxu0 0.0
        %1631 = vmatprep.subr.mxu0 0.0
        %1632 = vmatpush1.msra.mxu0 0.0
        %1633 = vmatprep.subr.mxu0 0.0
        %1634 = vmatpush1.msra.mxu0 0.0
        %1635 = vmatprep.subr.mxu0 0.0
        %1636 = vmatpush1.msra.mxu0 0.0
        %1637 = vmatprep.subr.mxu0 0.0
        %1638 = vmatpush1.msra.mxu0 0.0
        %1639 = vmatprep.subr.mxu0 0.0
        %1640 = vmatpush1.msra.mxu0 0.0
        %1641 = vmatprep.subr.mxu0 0.0
        %1642 = vmatpush1.msra.mxu0 0.0
        %1643 = vmatprep.subr.mxu0 0.0
        %1644 = vmatpush1.msra.mxu0 0.0
        %1645 = vmatprep.subr.mxu0 0.0
        %1646 = vmatpush1.msra.mxu0 0.0
        %1647 = vmatprep.subr.mxu0 0.0
        %1648 = vmatpush1.msra.mxu0 0.0
        %1649 = vmatprep.subr.mxu0 0.0
        %1650 = vmatpush1.msra.mxu0 0.0
        %1651 = vmatprep.subr.mxu0 0.0
        %1652 = vmatpush1.msra.mxu0 0.0
        %1653 = vmatprep.subr.mxu0 0.0
        %1654 = vmatpush1.msra.mxu0 0.0
        %1655 = vmatprep.subr.mxu0 0.0
        %1656 = vmatpush1.msra.mxu0 0.0
        %1657 = vmatprep.subr.mxu0 0.0
        %1658 = vmatpush1.msra.mxu0 0.0
        %1659 = vmatprep.subr.mxu0 0.0
        %1660 = vmatpush1.msra.mxu0 0.0
        %1661 = vmatprep.subr.mxu0 0.0
        %1662 = vmatpush1.msra.mxu0 0.0
        %1663 = vmatprep.subr.mxu0 0.0
        %1664 = vmatpush1.msra.mxu0 0.0
        %1665 = vmatprep.subr.mxu0 0.0
        %1666 = vmatpush1.msra.mxu0 0.0
        %1667 = vmatprep.subr.mxu0 0.0
        %1668 = vmatpush1.msra.mxu0 0.0
        %1669 = vmatprep.subr.mxu0 0.0
        %1670 = vmatpush1.msra.mxu0 0.0
        %1671 = vmatprep.subr.mxu0 0.0
        %1672 = vmatpush1.msra.mxu0 0.0
        %1673 = vmatprep.subr.mxu0 0.0
        %1674 = vmatpush1.msra.mxu0 0.0
        %1675 = vmatprep.mubr.f32.mxu0 0.0
        %v1676 = vand.u32 %v286, 4294901760
        %1677 = vmatmul.mubr.f32.gmra.mrb[0].mxu0 %v1676
        %v1678 = vpop.f32.mrb[0].mxu0
        %v1679 = vadd.f32 %v1605, %v1678
        %v1680 = vpop.f32.mrb[0].mxu0
        %v1681 = vadd.f32 %v1607, %v1680
        %1682 = vdwg.mxu0
        %v1683 = vand.u32 %v268, 4294901760
        %1684 = vmatprep.subr.mxu0 %v1683
        %v1685 = vand.u32 %v267, 4294901760
        %1686 = vmatpush1.msra.mxu0 %v1685
        %1687 = vmatprep.subr.mxu0 0.0
        %1688 = vmatpush1.msra.mxu0 0.0
        %1689 = vmatprep.subr.mxu0 0.0
        %1690 = vmatpush1.msra.mxu0 0.0
        %1691 = vmatprep.subr.mxu0 0.0
        %1692 = vmatpush1.msra.mxu0 0.0
        %1693 = vmatprep.subr.mxu0 0.0
        %1694 = vmatpush1.msra.mxu0 0.0
        %1695 = vmatprep.subr.mxu0 0.0
        %1696 = vmatpush1.msra.mxu0 0.0
        %1697 = vmatprep.subr.mxu0 0.0
        %1698 = vmatpush1.msra.mxu0 0.0
        %1699 = vmatprep.subr.mxu0 0.0
        %1700 = vmatpush1.msra.mxu0 0.0
        %1701 = vmatprep.subr.mxu0 0.0
        %1702 = vmatpush1.msra.mxu0 0.0
        %1703 = vmatprep.subr.mxu0 0.0
        %1704 = vmatpush1.msra.mxu0 0.0
        %1705 = vmatprep.subr.mxu0 0.0
        %1706 = vmatpush1.msra.mxu0 0.0
        %1707 = vmatprep.subr.mxu0 0.0
        %1708 = vmatpush1.msra.mxu0 0.0
        %1709 = vmatprep.subr.mxu0 0.0
        %1710 = vmatpush1.msra.mxu0 0.0
        %1711 = vmatprep.subr.mxu0 0.0
        %1712 = vmatpush1.msra.mxu0 0.0
        %1713 = vmatprep.subr.mxu0 0.0
        %1714 = vmatpush1.msra.mxu0 0.0
        %1715 = vmatprep.subr.mxu0 0.0
        %1716 = vmatpush1.msra.mxu0 0.0
        %1717 = vmatprep.subr.mxu0 0.0
        %1718 = vmatpush1.msra.mxu0 0.0
        %1719 = vmatprep.subr.mxu0 0.0
        %1720 = vmatpush1.msra.mxu0 0.0
        %1721 = vmatprep.subr.mxu0 0.0
        %1722 = vmatpush1.msra.mxu0 0.0
        %1723 = vmatprep.subr.mxu0 0.0
        %1724 = vmatpush1.msra.mxu0 0.0
        %1725 = vmatprep.subr.mxu0 0.0
        %1726 = vmatpush1.msra.mxu0 0.0
        %1727 = vmatprep.subr.mxu0 0.0
        %1728 = vmatpush1.msra.mxu0 0.0
        %1729 = vmatprep.subr.mxu0 0.0
        %1730 = vmatpush1.msra.mxu0 0.0
        %1731 = vmatprep.subr.mxu0 0.0
        %1732 = vmatpush1.msra.mxu0 0.0
        %1733 = vmatprep.subr.mxu0 0.0
        %1734 = vmatpush1.msra.mxu0 0.0
        %1735 = vmatprep.subr.mxu0 0.0
        %1736 = vmatpush1.msra.mxu0 0.0
        %1737 = vmatprep.subr.mxu0 0.0
        %1738 = vmatpush1.msra.mxu0 0.0
        %1739 = vmatprep.subr.mxu0 0.0
        %1740 = vmatpush1.msra.mxu0 0.0
        %1741 = vmatprep.subr.mxu0 0.0
        %1742 = vmatpush1.msra.mxu0 0.0
        %1743 = vmatprep.subr.mxu0 0.0
        %1744 = vmatpush1.msra.mxu0 0.0
        %1745 = vmatprep.subr.mxu0 0.0
        %1746 = vmatpush1.msra.mxu0 0.0
        %1747 = vmatprep.subr.mxu0 0.0
        %1748 = vmatpush1.msra.mxu0 0.0
        %1749 = vmatprep.mubr.f32.mxu0 0.0
        %v1750 = vand.u32 %v286, 4294901760
        %v1751 = vsub.f32 %v286, %v1750
        %v1752 = vand.u32 %v1751, 4294901760
        %v1753 = vsub.f32 %v1751, %v1752
        %v1754 = vand.u32 %v1753, 4294901760
        %1755 = vmatmul.mubr.f32.gmra.mrb[0].mxu0 %v1754
        %v1756 = vpop.f32.mrb[0].mxu0
        %v1757 = vadd.f32 %v282, %v1756
        %v1758 = vpop.f32.mrb[0].mxu0
        %v1759 = vadd.f32 %v282, %v1758
        %1760 = vdwg.mxu0
        %v1761 = vand.u32 %v268, 4294901760
        %v1762 = vsub.f32 %v268, %v1761
        %v1763 = vand.u32 %v1762, 4294901760
        %v1764 = vsub.f32 %v1762, %v1763
        %v1765 = vand.u32 %v1764, 4294901760
        %1766 = vmatprep.subr.mxu0 %v1765
        %v1767 = vand.u32 %v267, 4294901760
        %v1768 = vsub.f32 %v267, %v1767
        %v1769 = vand.u32 %v1768, 4294901760
        %v1770 = vsub.f32 %v1768, %v1769
        %v1771 = vand.u32 %v1770, 4294901760
        %1772 = vmatpush1.msra.mxu0 %v1771
        %1773 = vmatprep.subr.mxu0 0.0
        %1774 = vmatpush1.msra.mxu0 0.0
        %1775 = vmatprep.subr.mxu0 0.0
        %1776 = vmatpush1.msra.mxu0 0.0
        %1777 = vmatprep.subr.mxu0 0.0
        %1778 = vmatpush1.msra.mxu0 0.0
        %1779 = vmatprep.subr.mxu0 0.0
        %1780 = vmatpush1.msra.mxu0 0.0
        %1781 = vmatprep.subr.mxu0 0.0
        %1782 = vmatpush1.msra.mxu0 0.0
        %1783 = vmatprep.subr.mxu0 0.0
        %1784 = vmatpush1.msra.mxu0 0.0
        %1785 = vmatprep.subr.mxu0 0.0
        %1786 = vmatpush1.msra.mxu0 0.0
        %1787 = vmatprep.subr.mxu0 0.0
        %1788 = vmatpush1.msra.mxu0 0.0
        %1789 = vmatprep.subr.mxu0 0.0
        %1790 = vmatpush1.msra.mxu0 0.0
        %1791 = vmatprep.subr.mxu0 0.0
        %1792 = vmatpush1.msra.mxu0 0.0
        %1793 = vmatprep.subr.mxu0 0.0
        %1794 = vmatpush1.msra.mxu0 0.0
        %1795 = vmatprep.subr.mxu0 0.0
        %1796 = vmatpush1.msra.mxu0 0.0
        %1797 = vmatprep.subr.mxu0 0.0
        %1798 = vmatpush1.msra.mxu0 0.0
        %1799 = vmatprep.subr.mxu0 0.0
        %1800 = vmatpush1.msra.mxu0 0.0
        %1801 = vmatprep.subr.mxu0 0.0
        %1802 = vmatpush1.msra.mxu0 0.0
        %1803 = vmatprep.subr.mxu0 0.0
        %1804 = vmatpush1.msra.mxu0 0.0
        %1805 = vmatprep.subr.mxu0 0.0
        %1806 = vmatpush1.msra.mxu0 0.0
        %1807 = vmatprep.subr.mxu0 0.0
        %1808 = vmatpush1.msra.mxu0 0.0
        %1809 = vmatprep.subr.mxu0 0.0
        %1810 = vmatpush1.msra.mxu0 0.0
        %1811 = vmatprep.subr.mxu0 0.0
        %1812 = vmatpush1.msra.mxu0 0.0
        %1813 = vmatprep.subr.mxu0 0.0
        %1814 = vmatpush1.msra.mxu0 0.0
        %1815 = vmatprep.subr.mxu0 0.0
        %1816 = vmatpush1.msra.mxu0 0.0
        %1817 = vmatprep.subr.mxu0 0.0
        %1818 = vmatpush1.msra.mxu0 0.0
        %1819 = vmatprep.subr.mxu0 0.0
        %1820 = vmatpush1.msra.mxu0 0.0
        %1821 = vmatprep.subr.mxu0 0.0
        %1822 = vmatpush1.msra.mxu0 0.0
        %1823 = vmatprep.subr.mxu0 0.0
        %1824 = vmatpush1.msra.mxu0 0.0
        %1825 = vmatprep.subr.mxu0 0.0
        %1826 = vmatpush1.msra.mxu0 0.0
        %1827 = vmatprep.subr.mxu0 0.0
        %1828 = vmatpush1.msra.mxu0 0.0
        %1829 = vmatprep.subr.mxu0 0.0
        %1830 = vmatpush1.msra.mxu0 0.0
        %1831 = vmatprep.subr.mxu0 0.0
        %1832 = vmatpush1.msra.mxu0 0.0
        %1833 = vmatprep.subr.mxu0 0.0
        %1834 = vmatpush1.msra.mxu0 0.0
        %1835 = vmatprep.mubr.f32.mxu0 0.0
        %v1836 = vand.u32 %v286, 4294901760
        %1837 = vmatmul.mubr.f32.gmra.mrb[0].mxu0 %v1836
        %v1838 = vpop.f32.mrb[0].mxu0
        %v1839 = vadd.f32 %v1757, %v1838
        %v1840 = vpop.f32.mrb[0].mxu0
        %v1841 = vadd.f32 %v1759, %v1840
        %1842 = vdwg.mxu0
        %v1843 = vand.u32 %v268, 4294901760
        %v1844 = vsub.f32 %v268, %v1843
        %1845 = vmatprep.subr.mxu0 %v1844
        %v1846 = vand.u32 %v267, 4294901760
        %v1847 = vsub.f32 %v267, %v1846
        %1848 = vmatpush1.msra.mxu0 %v1847
        %1849 = vmatprep.subr.mxu0 0.0
        %1850 = vmatpush1.msra.mxu0 0.0
        %1851 = vmatprep.subr.mxu0 0.0
        %1852 = vmatpush1.msra.mxu0 0.0
        %1853 = vmatprep.subr.mxu0 0.0
        %1854 = vmatpush1.msra.mxu0 0.0
        %1855 = vmatprep.subr.mxu0 0.0
        %1856 = vmatpush1.msra.mxu0 0.0
        %1857 = vmatprep.subr.mxu0 0.0
        %1858 = vmatpush1.msra.mxu0 0.0
        %1859 = vmatprep.subr.mxu0 0.0
        %1860 = vmatpush1.msra.mxu0 0.0
        %1861 = vmatprep.subr.mxu0 0.0
        %1862 = vmatpush1.msra.mxu0 0.0
        %1863 = vmatprep.subr.mxu0 0.0
        %1864 = vmatpush1.msra.mxu0 0.0
        %1865 = vmatprep.subr.mxu0 0.0
        %1866 = vmatpush1.msra.mxu0 0.0
        %1867 = vmatprep.subr.mxu0 0.0
        %1868 = vmatpush1.msra.mxu0 0.0
        %1869 = vmatprep.subr.mxu0 0.0
        %1870 = vmatpush1.msra.mxu0 0.0
        %1871 = vmatprep.subr.mxu0 0.0
        %1872 = vmatpush1.msra.mxu0 0.0
        %1873 = vmatprep.subr.mxu0 0.0
        %1874 = vmatpush1.msra.mxu0 0.0
        %1875 = vmatprep.subr.mxu0 0.0
        %1876 = vmatpush1.msra.mxu0 0.0
        %1877 = vmatprep.subr.mxu0 0.0
        %1878 = vmatpush1.msra.mxu0 0.0
        %1879 = vmatprep.subr.mxu0 0.0
        %1880 = vmatpush1.msra.mxu0 0.0
        %1881 = vmatprep.subr.mxu0 0.0
        %1882 = vmatpush1.msra.mxu0 0.0
        %1883 = vmatprep.subr.mxu0 0.0
        %1884 = vmatpush1.msra.mxu0 0.0
        %1885 = vmatprep.subr.mxu0 0.0
        %1886 = vmatpush1.msra.mxu0 0.0
        %1887 = vmatprep.subr.mxu0 0.0
        %1888 = vmatpush1.msra.mxu0 0.0
        %1889 = vmatprep.subr.mxu0 0.0
        %1890 = vmatpush1.msra.mxu0 0.0
        %1891 = vmatprep.subr.mxu0 0.0
        %1892 = vmatpush1.msra.mxu0 0.0
        %1893 = vmatprep.subr.mxu0 0.0
        %1894 = vmatpush1.msra.mxu0 0.0
        %1895 = vmatprep.subr.mxu0 0.0
        %1896 = vmatpush1.msra.mxu0 0.0
        %1897 = vmatprep.subr.mxu0 0.0
        %1898 = vmatpush1.msra.mxu0 0.0
        %1899 = vmatprep.subr.mxu0 0.0
        %1900 = vmatpush1.msra.mxu0 0.0
        %1901 = vmatprep.subr.mxu0 0.0
        %1902 = vmatpush1.msra.mxu0 0.0
        %1903 = vmatprep.subr.mxu0 0.0
        %1904 = vmatpush1.msra.mxu0 0.0
        %1905 = vmatprep.subr.mxu0 0.0
        %1906 = vmatpush1.msra.mxu0 0.0
        %1907 = vmatprep.subr.mxu0 0.0
        %1908 = vmatpush1.msra.mxu0 0.0
        %1909 = vmatprep.subr.mxu0 0.0
        %1910 = vmatpush1.msra.mxu0 0.0
        %1911 = vmatprep.mubr.f32.mxu0 0.0
        %v1912 = vand.u32 %v286, 4294901760
        %v1913 = vsub.f32 %v286, %v1912
        %1914 = vmatmul.mubr.f32.gmra.mrb[0].mxu0 %v1913
        %v1915 = vpop.f32.mrb[0].mxu0
        %v1916 = vadd.f32 %v1839, %v1915
        %v1917 = vpop.f32.mrb[0].mxu0
        %v1918 = vadd.f32 %v1841, %v1917
        %1919 = vdwg.mxu0
        %v1920 = vand.u32 %v268, 4294901760
        %1921 = vmatprep.subr.mxu0 %v1920
        %v1922 = vand.u32 %v267, 4294901760
        %1923 = vmatpush1.msra.mxu0 %v1922
        %1924 = vmatprep.subr.mxu0 0.0
        %1925 = vmatpush1.msra.mxu0 0.0
        %1926 = vmatprep.subr.mxu0 0.0
        %1927 = vmatpush1.msra.mxu0 0.0
        %1928 = vmatprep.subr.mxu0 0.0
        %1929 = vmatpush1.msra.mxu0 0.0
        %1930 = vmatprep.subr.mxu0 0.0
        %1931 = vmatpush1.msra.mxu0 0.0
        %1932 = vmatprep.subr.mxu0 0.0
        %1933 = vmatpush1.msra.mxu0 0.0
        %1934 = vmatprep.subr.mxu0 0.0
        %1935 = vmatpush1.msra.mxu0 0.0
        %1936 = vmatprep.subr.mxu0 0.0
        %1937 = vmatpush1.msra.mxu0 0.0
        %1938 = vmatprep.subr.mxu0 0.0
        %1939 = vmatpush1.msra.mxu0 0.0
        %1940 = vmatprep.subr.mxu0 0.0
        %1941 = vmatpush1.msra.mxu0 0.0
        %1942 = vmatprep.subr.mxu0 0.0
        %1943 = vmatpush1.msra.mxu0 0.0
        %1944 = vmatprep.subr.mxu0 0.0
        %1945 = vmatpush1.msra.mxu0 0.0
        %1946 = vmatprep.subr.mxu0 0.0
        %1947 = vmatpush1.msra.mxu0 0.0
        %1948 = vmatprep.subr.mxu0 0.0
        %1949 = vmatpush1.msra.mxu0 0.0
        %1950 = vmatprep.subr.mxu0 0.0
        %1951 = vmatpush1.msra.mxu0 0.0
        %1952 = vmatprep.subr.mxu0 0.0
        %1953 = vmatpush1.msra.mxu0 0.0
        %1954 = vmatprep.subr.mxu0 0.0
        %1955 = vmatpush1.msra.mxu0 0.0
        %1956 = vmatprep.subr.mxu0 0.0
        %1957 = vmatpush1.msra.mxu0 0.0
        %1958 = vmatprep.subr.mxu0 0.0
        %1959 = vmatpush1.msra.mxu0 0.0
        %1960 = vmatprep.subr.mxu0 0.0
        %1961 = vmatpush1.msra.mxu0 0.0
        %1962 = vmatprep.subr.mxu0 0.0
        %1963 = vmatpush1.msra.mxu0 0.0
        %1964 = vmatprep.subr.mxu0 0.0
        %1965 = vmatpush1.msra.mxu0 0.0
        %1966 = vmatprep.subr.mxu0 0.0
        %1967 = vmatpush1.msra.mxu0 0.0
        %1968 = vmatprep.subr.mxu0 0.0
        %1969 = vmatpush1.msra.mxu0 0.0
        %1970 = vmatprep.subr.mxu0 0.0
        %1971 = vmatpush1.msra.mxu0 0.0
        %1972 = vmatprep.subr.mxu0 0.0
        %1973 = vmatpush1.msra.mxu0 0.0
        %1974 = vmatprep.subr.mxu0 0.0
        %1975 = vmatpush1.msra.mxu0 0.0
        %1976 = vmatprep.subr.mxu0 0.0
        %1977 = vmatpush1.msra.mxu0 0.0
        %1978 = vmatprep.subr.mxu0 0.0
        %1979 = vmatpush1.msra.mxu0 0.0
        %1980 = vmatprep.subr.mxu0 0.0
        %1981 = vmatpush1.msra.mxu0 0.0
        %1982 = vmatprep.subr.mxu0 0.0
        %1983 = vmatpush1.msra.mxu0 0.0
        %1984 = vmatprep.subr.mxu0 0.0
        %1985 = vmatpush1.msra.mxu0 0.0
        %1986 = vmatprep.mubr.f32.mxu0 0.0
        %v1987 = vand.u32 %v286, 4294901760
        %v1988 = vsub.f32 %v286, %v1987
        %v1989 = vand.u32 %v1988, 4294901760
        %1990 = vmatmul.mubr.f32.gmra.mrb[0].mxu0 %v1989
        %v1991 = vpop.f32.mrb[0].mxu0
        %v1992 = vadd.f32 %v1916, %v1991
        %v1993 = vpop.f32.mrb[0].mxu0
        %v1994 = vadd.f32 %v1918, %v1993
        %1995 = vdwg.mxu0
        %v1996 = vand.u32 %v268, 4294901760
        %v1997 = vsub.f32 %v268, %v1996
        %v1998 = vand.u32 %v1997, 4294901760
        %1999 = vmatprep.subr.mxu0 %v1998
        %v2000 = vand.u32 %v267, 4294901760
        %v2001 = vsub.f32 %v267, %v2000
        %v2002 = vand.u32 %v2001, 4294901760
        %2003 = vmatpush1.msra.mxu0 %v2002
        %2004 = vmatprep.subr.mxu0 0.0
        %2005 = vmatpush1.msra.mxu0 0.0
        %2006 = vmatprep.subr.mxu0 0.0
        %2007 = vmatpush1.msra.mxu0 0.0
        %2008 = vmatprep.subr.mxu0 0.0
        %2009 = vmatpush1.msra.mxu0 0.0
        %2010 = vmatprep.subr.mxu0 0.0
        %2011 = vmatpush1.msra.mxu0 0.0
        %2012 = vmatprep.subr.mxu0 0.0
        %2013 = vmatpush1.msra.mxu0 0.0
        %2014 = vmatprep.subr.mxu0 0.0
        %2015 = vmatpush1.msra.mxu0 0.0
        %2016 = vmatprep.subr.mxu0 0.0
        %2017 = vmatpush1.msra.mxu0 0.0
        %2018 = vmatprep.subr.mxu0 0.0
        %2019 = vmatpush1.msra.mxu0 0.0
        %2020 = vmatprep.subr.mxu0 0.0
        %2021 = vmatpush1.msra.mxu0 0.0
        %2022 = vmatprep.subr.mxu0 0.0
        %2023 = vmatpush1.msra.mxu0 0.0
        %2024 = vmatprep.subr.mxu0 0.0
        %2025 = vmatpush1.msra.mxu0 0.0
        %2026 = vmatprep.subr.mxu0 0.0
        %2027 = vmatpush1.msra.mxu0 0.0
        %2028 = vmatprep.subr.mxu0 0.0
        %2029 = vmatpush1.msra.mxu0 0.0
        %2030 = vmatprep.subr.mxu0 0.0
        %2031 = vmatpush1.msra.mxu0 0.0
        %2032 = vmatprep.subr.mxu0 0.0
        %2033 = vmatpush1.msra.mxu0 0.0
        %2034 = vmatprep.subr.mxu0 0.0
        %2035 = vmatpush1.msra.mxu0 0.0
        %2036 = vmatprep.subr.mxu0 0.0
        %2037 = vmatpush1.msra.mxu0 0.0
        %2038 = vmatprep.subr.mxu0 0.0
        %2039 = vmatpush1.msra.mxu0 0.0
        %2040 = vmatprep.subr.mxu0 0.0
        %2041 = vmatpush1.msra.mxu0 0.0
        %2042 = vmatprep.subr.mxu0 0.0
        %2043 = vmatpush1.msra.mxu0 0.0
        %2044 = vmatprep.subr.mxu0 0.0
        %2045 = vmatpush1.msra.mxu0 0.0
        %2046 = vmatprep.subr.mxu0 0.0
        %2047 = vmatpush1.msra.mxu0 0.0
        %2048 = vmatprep.subr.mxu0 0.0
        %2049 = vmatpush1.msra.mxu0 0.0
        %2050 = vmatprep.subr.mxu0 0.0
        %2051 = vmatpush1.msra.mxu0 0.0
        %2052 = vmatprep.subr.mxu0 0.0
        %2053 = vmatpush1.msra.mxu0 0.0
        %2054 = vmatprep.subr.mxu0 0.0
        %2055 = vmatpush1.msra.mxu0 0.0
        %2056 = vmatprep.subr.mxu0 0.0
        %2057 = vmatpush1.msra.mxu0 0.0
        %2058 = vmatprep.subr.mxu0 0.0
        %2059 = vmatpush1.msra.mxu0 0.0
        %2060 = vmatprep.subr.mxu0 0.0
        %2061 = vmatpush1.msra.mxu0 0.0
        %2062 = vmatprep.subr.mxu0 0.0
        %2063 = vmatpush1.msra.mxu0 0.0
        %2064 = vmatprep.subr.mxu0 0.0
        %2065 = vmatpush1.msra.mxu0 0.0
        %2066 = vmatprep.mubr.f32.mxu0 0.0
        %v2067 = vand.u32 %v286, 4294901760
        %2068 = vmatmul.mubr.f32.gmra.mrb[0].mxu0 %v2067
        %v2069 = vpop.f32.mrb[0].mxu0
        %v2070 = vadd.f32 %v1992, %v2069
        %v2071 = vpop.f32.mrb[0].mxu0
        %v2072 = vadd.f32 %v1994, %v2071
        %2073 = vdwg.mxu0
        %v2074 = vand.u32 %v268, 4294901760
        %2075 = vmatprep.subr.mxu0 %v2074
        %v2076 = vand.u32 %v267, 4294901760
        %2077 = vmatpush1.msra.mxu0 %v2076
        %2078 = vmatprep.subr.mxu0 0.0
        %2079 = vmatpush1.msra.mxu0 0.0
        %2080 = vmatprep.subr.mxu0 0.0
        %2081 = vmatpush1.msra.mxu0 0.0
        %2082 = vmatprep.subr.mxu0 0.0
        %2083 = vmatpush1.msra.mxu0 0.0
        %2084 = vmatprep.subr.mxu0 0.0
        %2085 = vmatpush1.msra.mxu0 0.0
        %2086 = vmatprep.subr.mxu0 0.0
        %2087 = vmatpush1.msra.mxu0 0.0
        %2088 = vmatprep.subr.mxu0 0.0
        %2089 = vmatpush1.msra.mxu0 0.0
        %2090 = vmatprep.subr.mxu0 0.0
        %2091 = vmatpush1.msra.mxu0 0.0
        %2092 = vmatprep.subr.mxu0 0.0
        %2093 = vmatpush1.msra.mxu0 0.0
        %2094 = vmatprep.subr.mxu0 0.0
        %2095 = vmatpush1.msra.mxu0 0.0
        %2096 = vmatprep.subr.mxu0 0.0
        %2097 = vmatpush1.msra.mxu0 0.0
        %2098 = vmatprep.subr.mxu0 0.0
        %2099 = vmatpush1.msra.mxu0 0.0
        %2100 = vmatprep.subr.mxu0 0.0
        %2101 = vmatpush1.msra.mxu0 0.0
        %2102 = vmatprep.subr.mxu0 0.0
        %2103 = vmatpush1.msra.mxu0 0.0
        %2104 = vmatprep.subr.mxu0 0.0
        %2105 = vmatpush1.msra.mxu0 0.0
        %2106 = vmatprep.subr.mxu0 0.0
        %2107 = vmatpush1.msra.mxu0 0.0
        %2108 = vmatprep.subr.mxu0 0.0
        %2109 = vmatpush1.msra.mxu0 0.0
        %2110 = vmatprep.subr.mxu0 0.0
        %2111 = vmatpush1.msra.mxu0 0.0
        %2112 = vmatprep.subr.mxu0 0.0
        %2113 = vmatpush1.msra.mxu0 0.0
        %2114 = vmatprep.subr.mxu0 0.0
        %2115 = vmatpush1.msra.mxu0 0.0
        %2116 = vmatprep.subr.mxu0 0.0
        %2117 = vmatpush1.msra.mxu0 0.0
        %2118 = vmatprep.subr.mxu0 0.0
        %2119 = vmatpush1.msra.mxu0 0.0
        %2120 = vmatprep.subr.mxu0 0.0
        %2121 = vmatpush1.msra.mxu0 0.0
        %2122 = vmatprep.subr.mxu0 0.0
        %2123 = vmatpush1.msra.mxu0 0.0
        %2124 = vmatprep.subr.mxu0 0.0
        %2125 = vmatpush1.msra.mxu0 0.0
        %2126 = vmatprep.subr.mxu0 0.0
        %2127 = vmatpush1.msra.mxu0 0.0
        %2128 = vmatprep.subr.mxu0 0.0
        %2129 = vmatpush1.msra.mxu0 0.0
        %2130 = vmatprep.subr.mxu0 0.0
        %2131 = vmatpush1.msra.mxu0 0.0
        %2132 = vmatprep.subr.mxu0 0.0
        %2133 = vmatpush1.msra.mxu0 0.0
        %2134 = vmatprep.subr.mxu0 0.0
        %2135 = vmatpush1.msra.mxu0 0.0
        %2136 = vmatprep.subr.mxu0 0.0
        %2137 = vmatpush1.msra.mxu0 0.0
        %2138 = vmatprep.subr.mxu0 0.0
        %2139 = vmatpush1.msra.mxu0 0.0
        %2140 = vmatprep.mubr.f32.mxu0 0.0
        %v2141 = vand.u32 %v286, 4294901760
        %2142 = vmatmul.mubr.f32.gmra.mrb[0].mxu0 %v2141
        %v2143 = vpop.f32.mrb[0].mxu0
        %v2144 = vadd.f32 %v2070, %v2143
        %v2145 = vpop.f32.mrb[0].mxu0
        %v2146 = vadd.f32 %v2072, %v2145
        %2147 = vdwg.mxu0
        %v2148 = vand.u32 %v270, 4294901760
        %2149 = vmatprep.subr.mxu0 %v2148
        %v2150 = vand.u32 %v269, 4294901760
        %2151 = vmatpush1.msra.mxu0 %v2150
        %2152 = vmatprep.subr.mxu0 0.0
        %2153 = vmatpush1.msra.mxu0 0.0
        %2154 = vmatprep.subr.mxu0 0.0
        %2155 = vmatpush1.msra.mxu0 0.0
        %2156 = vmatprep.subr.mxu0 0.0
        %2157 = vmatpush1.msra.mxu0 0.0
        %2158 = vmatprep.subr.mxu0 0.0
        %2159 = vmatpush1.msra.mxu0 0.0
        %2160 = vmatprep.subr.mxu0 0.0
        %2161 = vmatpush1.msra.mxu0 0.0
        %2162 = vmatprep.subr.mxu0 0.0
        %2163 = vmatpush1.msra.mxu0 0.0
        %2164 = vmatprep.subr.mxu0 0.0
        %2165 = vmatpush1.msra.mxu0 0.0
        %2166 = vmatprep.subr.mxu0 0.0
        %2167 = vmatpush1.msra.mxu0 0.0
        %2168 = vmatprep.subr.mxu0 0.0
        %2169 = vmatpush1.msra.mxu0 0.0
        %2170 = vmatprep.subr.mxu0 0.0
        %2171 = vmatpush1.msra.mxu0 0.0
        %2172 = vmatprep.subr.mxu0 0.0
        %2173 = vmatpush1.msra.mxu0 0.0
        %2174 = vmatprep.subr.mxu0 0.0
        %2175 = vmatpush1.msra.mxu0 0.0
        %2176 = vmatprep.subr.mxu0 0.0
        %2177 = vmatpush1.msra.mxu0 0.0
        %2178 = vmatprep.subr.mxu0 0.0
        %2179 = vmatpush1.msra.mxu0 0.0
        %2180 = vmatprep.subr.mxu0 0.0
        %2181 = vmatpush1.msra.mxu0 0.0
        %2182 = vmatprep.subr.mxu0 0.0
        %2183 = vmatpush1.msra.mxu0 0.0
        %2184 = vmatprep.subr.mxu0 0.0
        %2185 = vmatpush1.msra.mxu0 0.0
        %2186 = vmatprep.subr.mxu0 0.0
        %2187 = vmatpush1.msra.mxu0 0.0
        %2188 = vmatprep.subr.mxu0 0.0
        %2189 = vmatpush1.msra.mxu0 0.0
        %2190 = vmatprep.subr.mxu0 0.0
        %2191 = vmatpush1.msra.mxu0 0.0
        %2192 = vmatprep.subr.mxu0 0.0
        %2193 = vmatpush1.msra.mxu0 0.0
        %2194 = vmatprep.subr.mxu0 0.0
        %2195 = vmatpush1.msra.mxu0 0.0
        %2196 = vmatprep.subr.mxu0 0.0
        %2197 = vmatpush1.msra.mxu0 0.0
        %2198 = vmatprep.subr.mxu0 0.0
        %2199 = vmatpush1.msra.mxu0 0.0
        %2200 = vmatprep.subr.mxu0 0.0
        %2201 = vmatpush1.msra.mxu0 0.0
        %2202 = vmatprep.subr.mxu0 0.0
        %2203 = vmatpush1.msra.mxu0 0.0
        %2204 = vmatprep.subr.mxu0 0.0
        %2205 = vmatpush1.msra.mxu0 0.0
        %2206 = vmatprep.subr.mxu0 0.0
        %2207 = vmatpush1.msra.mxu0 0.0
        %2208 = vmatprep.subr.mxu0 0.0
        %2209 = vmatpush1.msra.mxu0 0.0
        %2210 = vmatprep.subr.mxu0 0.0
        %2211 = vmatpush1.msra.mxu0 0.0
        %2212 = vmatprep.subr.mxu0 0.0
        %2213 = vmatpush1.msra.mxu0 0.0
        %2214 = vmatprep.mubr.f32.mxu0 0.0
        %v2215 = vand.u32 %v286, 4294901760
        %v2216 = vsub.f32 %v286, %v2215
        %v2217 = vand.u32 %v2216, 4294901760
        %v2218 = vsub.f32 %v2216, %v2217
        %v2219 = vand.u32 %v2218, 4294901760
        %2220 = vmatmul.mubr.f32.gmra.mrb[0].mxu0 %v2219
        %v2221 = vpop.f32.mrb[0].mxu0
        %v2222 = vadd.f32 %v282, %v2221
        %v2223 = vpop.f32.mrb[0].mxu0
        %v2224 = vadd.f32 %v282, %v2223
        %2225 = vdwg.mxu0
        %v2226 = vand.u32 %v270, 4294901760
        %v2227 = vsub.f32 %v270, %v2226
        %v2228 = vand.u32 %v2227, 4294901760
        %v2229 = vsub.f32 %v2227, %v2228
        %v2230 = vand.u32 %v2229, 4294901760
        %2231 = vmatprep.subr.mxu0 %v2230
        %v2232 = vand.u32 %v269, 4294901760
        %v2233 = vsub.f32 %v269, %v2232
        %v2234 = vand.u32 %v2233, 4294901760
        %v2235 = vsub.f32 %v2233, %v2234
        %v2236 = vand.u32 %v2235, 4294901760
        %2237 = vmatpush1.msra.mxu0 %v2236
        %2238 = vmatprep.subr.mxu0 0.0
        %2239 = vmatpush1.msra.mxu0 0.0
        %2240 = vmatprep.subr.mxu0 0.0
        %2241 = vmatpush1.msra.mxu0 0.0
        %2242 = vmatprep.subr.mxu0 0.0
        %2243 = vmatpush1.msra.mxu0 0.0
        %2244 = vmatprep.subr.mxu0 0.0
        %2245 = vmatpush1.msra.mxu0 0.0
        %2246 = vmatprep.subr.mxu0 0.0
        %2247 = vmatpush1.msra.mxu0 0.0
        %2248 = vmatprep.subr.mxu0 0.0
        %2249 = vmatpush1.msra.mxu0 0.0
        %2250 = vmatprep.subr.mxu0 0.0
        %2251 = vmatpush1.msra.mxu0 0.0
        %2252 = vmatprep.subr.mxu0 0.0
        %2253 = vmatpush1.msra.mxu0 0.0
        %2254 = vmatprep.subr.mxu0 0.0
        %2255 = vmatpush1.msra.mxu0 0.0
        %2256 = vmatprep.subr.mxu0 0.0
        %2257 = vmatpush1.msra.mxu0 0.0
        %2258 = vmatprep.subr.mxu0 0.0
        %2259 = vmatpush1.msra.mxu0 0.0
        %2260 = vmatprep.subr.mxu0 0.0
        %2261 = vmatpush1.msra.mxu0 0.0
        %2262 = vmatprep.subr.mxu0 0.0
        %2263 = vmatpush1.msra.mxu0 0.0
        %2264 = vmatprep.subr.mxu0 0.0
        %2265 = vmatpush1.msra.mxu0 0.0
        %2266 = vmatprep.subr.mxu0 0.0
        %2267 = vmatpush1.msra.mxu0 0.0
        %2268 = vmatprep.subr.mxu0 0.0
        %2269 = vmatpush1.msra.mxu0 0.0
        %2270 = vmatprep.subr.mxu0 0.0
        %2271 = vmatpush1.msra.mxu0 0.0
        %2272 = vmatprep.subr.mxu0 0.0
        %2273 = vmatpush1.msra.mxu0 0.0
        %2274 = vmatprep.subr.mxu0 0.0
        %2275 = vmatpush1.msra.mxu0 0.0
        %2276 = vmatprep.subr.mxu0 0.0
        %2277 = vmatpush1.msra.mxu0 0.0
        %2278 = vmatprep.subr.mxu0 0.0
        %2279 = vmatpush1.msra.mxu0 0.0
        %2280 = vmatprep.subr.mxu0 0.0
        %2281 = vmatpush1.msra.mxu0 0.0
        %2282 = vmatprep.subr.mxu0 0.0
        %2283 = vmatpush1.msra.mxu0 0.0
        %2284 = vmatprep.subr.mxu0 0.0
        %2285 = vmatpush1.msra.mxu0 0.0
        %2286 = vmatprep.subr.mxu0 0.0
        %2287 = vmatpush1.msra.mxu0 0.0
        %2288 = vmatprep.subr.mxu0 0.0
        %2289 = vmatpush1.msra.mxu0 0.0
        %2290 = vmatprep.subr.mxu0 0.0
        %2291 = vmatpush1.msra.mxu0 0.0
        %2292 = vmatprep.subr.mxu0 0.0
        %2293 = vmatpush1.msra.mxu0 0.0
        %2294 = vmatprep.subr.mxu0 0.0
        %2295 = vmatpush1.msra.mxu0 0.0
        %2296 = vmatprep.subr.mxu0 0.0
        %2297 = vmatpush1.msra.mxu0 0.0
        %2298 = vmatprep.subr.mxu0 0.0
        %2299 = vmatpush1.msra.mxu0 0.0
        %2300 = vmatprep.mubr.f32.mxu0 0.0
        %v2301 = vand.u32 %v286, 4294901760
        %2302 = vmatmul.mubr.f32.gmra.mrb[0].mxu0 %v2301
        %v2303 = vpop.f32.mrb[0].mxu0
        %v2304 = vadd.f32 %v2222, %v2303
        %v2305 = vpop.f32.mrb[0].mxu0
        %v2306 = vadd.f32 %v2224, %v2305
        %2307 = vdwg.mxu0
        %v2308 = vand.u32 %v270, 4294901760
        %v2309 = vsub.f32 %v270, %v2308
        %2310 = vmatprep.subr.mxu0 %v2309
        %v2311 = vand.u32 %v269, 4294901760
        %v2312 = vsub.f32 %v269, %v2311
        %2313 = vmatpush1.msra.mxu0 %v2312
        %2314 = vmatprep.subr.mxu0 0.0
        %2315 = vmatpush1.msra.mxu0 0.0
        %2316 = vmatprep.subr.mxu0 0.0
        %2317 = vmatpush1.msra.mxu0 0.0
        %2318 = vmatprep.subr.mxu0 0.0
        %2319 = vmatpush1.msra.mxu0 0.0
        %2320 = vmatprep.subr.mxu0 0.0
        %2321 = vmatpush1.msra.mxu0 0.0
        %2322 = vmatprep.subr.mxu0 0.0
        %2323 = vmatpush1.msra.mxu0 0.0
        %2324 = vmatprep.subr.mxu0 0.0
        %2325 = vmatpush1.msra.mxu0 0.0
        %2326 = vmatprep.subr.mxu0 0.0
        %2327 = vmatpush1.msra.mxu0 0.0
        %2328 = vmatprep.subr.mxu0 0.0
        %2329 = vmatpush1.msra.mxu0 0.0
        %2330 = vmatprep.subr.mxu0 0.0
        %2331 = vmatpush1.msra.mxu0 0.0
        %2332 = vmatprep.subr.mxu0 0.0
        %2333 = vmatpush1.msra.mxu0 0.0
        %2334 = vmatprep.subr.mxu0 0.0
        %2335 = vmatpush1.msra.mxu0 0.0
        %2336 = vmatprep.subr.mxu0 0.0
        %2337 = vmatpush1.msra.mxu0 0.0
        %2338 = vmatprep.subr.mxu0 0.0
        %2339 = vmatpush1.msra.mxu0 0.0
        %2340 = vmatprep.subr.mxu0 0.0
        %2341 = vmatpush1.msra.mxu0 0.0
        %2342 = vmatprep.subr.mxu0 0.0
        %2343 = vmatpush1.msra.mxu0 0.0
        %2344 = vmatprep.subr.mxu0 0.0
        %2345 = vmatpush1.msra.mxu0 0.0
        %2346 = vmatprep.subr.mxu0 0.0
        %2347 = vmatpush1.msra.mxu0 0.0
        %2348 = vmatprep.subr.mxu0 0.0
        %2349 = vmatpush1.msra.mxu0 0.0
        %2350 = vmatprep.subr.mxu0 0.0
        %2351 = vmatpush1.msra.mxu0 0.0
        %2352 = vmatprep.subr.mxu0 0.0
        %2353 = vmatpush1.msra.mxu0 0.0
        %2354 = vmatprep.subr.mxu0 0.0
        %2355 = vmatpush1.msra.mxu0 0.0
        %2356 = vmatprep.subr.mxu0 0.0
        %2357 = vmatpush1.msra.mxu0 0.0
        %2358 = vmatprep.subr.mxu0 0.0
        %2359 = vmatpush1.msra.mxu0 0.0
        %2360 = vmatprep.subr.mxu0 0.0
        %2361 = vmatpush1.msra.mxu0 0.0
        %2362 = vmatprep.subr.mxu0 0.0
        %2363 = vmatpush1.msra.mxu0 0.0
        %2364 = vmatprep.subr.mxu0 0.0
        %2365 = vmatpush1.msra.mxu0 0.0
        %2366 = vmatprep.subr.mxu0 0.0
        %2367 = vmatpush1.msra.mxu0 0.0
        %2368 = vmatprep.subr.mxu0 0.0
        %2369 = vmatpush1.msra.mxu0 0.0
        %2370 = vmatprep.subr.mxu0 0.0
        %2371 = vmatpush1.msra.mxu0 0.0
        %2372 = vmatprep.subr.mxu0 0.0
        %2373 = vmatpush1.msra.mxu0 0.0
        %2374 = vmatprep.subr.mxu0 0.0
        %2375 = vmatpush1.msra.mxu0 0.0
        %2376 = vmatprep.mubr.f32.mxu0 0.0
        %v2377 = vand.u32 %v286, 4294901760
        %v2378 = vsub.f32 %v286, %v2377
        %2379 = vmatmul.mubr.f32.gmra.mrb[0].mxu0 %v2378
        %v2380 = vpop.f32.mrb[0].mxu0
        %v2381 = vadd.f32 %v2304, %v2380
        %v2382 = vpop.f32.mrb[0].mxu0
        %v2383 = vadd.f32 %v2306, %v2382
        %2384 = vdwg.mxu0
        %v2385 = vand.u32 %v270, 4294901760
        %2386 = vmatprep.subr.mxu0 %v2385
        %v2387 = vand.u32 %v269, 4294901760
        %2388 = vmatpush1.msra.mxu0 %v2387
        %2389 = vmatprep.subr.mxu0 0.0
        %2390 = vmatpush1.msra.mxu0 0.0
        %2391 = vmatprep.subr.mxu0 0.0
        %2392 = vmatpush1.msra.mxu0 0.0
        %2393 = vmatprep.subr.mxu0 0.0
        %2394 = vmatpush1.msra.mxu0 0.0
        %2395 = vmatprep.subr.mxu0 0.0
        %2396 = vmatpush1.msra.mxu0 0.0
        %2397 = vmatprep.subr.mxu0 0.0
        %2398 = vmatpush1.msra.mxu0 0.0
        %2399 = vmatprep.subr.mxu0 0.0
        %2400 = vmatpush1.msra.mxu0 0.0
        %2401 = vmatprep.subr.mxu0 0.0
        %2402 = vmatpush1.msra.mxu0 0.0
        %2403 = vmatprep.subr.mxu0 0.0
        %2404 = vmatpush1.msra.mxu0 0.0
        %2405 = vmatprep.subr.mxu0 0.0
        %2406 = vmatpush1.msra.mxu0 0.0
        %2407 = vmatprep.subr.mxu0 0.0
        %2408 = vmatpush1.msra.mxu0 0.0
        %2409 = vmatprep.subr.mxu0 0.0
        %2410 = vmatpush1.msra.mxu0 0.0
        %2411 = vmatprep.subr.mxu0 0.0
        %2412 = vmatpush1.msra.mxu0 0.0
        %2413 = vmatprep.subr.mxu0 0.0
        %2414 = vmatpush1.msra.mxu0 0.0
        %2415 = vmatprep.subr.mxu0 0.0
        %2416 = vmatpush1.msra.mxu0 0.0
        %2417 = vmatprep.subr.mxu0 0.0
        %2418 = vmatpush1.msra.mxu0 0.0
        %2419 = vmatprep.subr.mxu0 0.0
        %2420 = vmatpush1.msra.mxu0 0.0
        %2421 = vmatprep.subr.mxu0 0.0
        %2422 = vmatpush1.msra.mxu0 0.0
        %2423 = vmatprep.subr.mxu0 0.0
        %2424 = vmatpush1.msra.mxu0 0.0
        %2425 = vmatprep.subr.mxu0 0.0
        %2426 = vmatpush1.msra.mxu0 0.0
        %2427 = vmatprep.subr.mxu0 0.0
        %2428 = vmatpush1.msra.mxu0 0.0
        %2429 = vmatprep.subr.mxu0 0.0
        %2430 = vmatpush1.msra.mxu0 0.0
        %2431 = vmatprep.subr.mxu0 0.0
        %2432 = vmatpush1.msra.mxu0 0.0
        %2433 = vmatprep.subr.mxu0 0.0
        %2434 = vmatpush1.msra.mxu0 0.0
        %2435 = vmatprep.subr.mxu0 0.0
        %2436 = vmatpush1.msra.mxu0 0.0
        %2437 = vmatprep.subr.mxu0 0.0
        %2438 = vmatpush1.msra.mxu0 0.0
        %2439 = vmatprep.subr.mxu0 0.0
        %2440 = vmatpush1.msra.mxu0 0.0
        %2441 = vmatprep.subr.mxu0 0.0
        %2442 = vmatpush1.msra.mxu0 0.0
        %2443 = vmatprep.subr.mxu0 0.0
        %2444 = vmatpush1.msra.mxu0 0.0
        %2445 = vmatprep.subr.mxu0 0.0
        %2446 = vmatpush1.msra.mxu0 0.0
        %2447 = vmatprep.subr.mxu0 0.0
        %2448 = vmatpush1.msra.mxu0 0.0
        %2449 = vmatprep.subr.mxu0 0.0
        %2450 = vmatpush1.msra.mxu0 0.0
        %2451 = vmatprep.mubr.f32.mxu0 0.0
        %v2452 = vand.u32 %v286, 4294901760
        %v2453 = vsub.f32 %v286, %v2452
        %v2454 = vand.u32 %v2453, 4294901760
        %2455 = vmatmul.mubr.f32.gmra.mrb[0].mxu0 %v2454
        %v2456 = vpop.f32.mrb[0].mxu0
        %v2457 = vadd.f32 %v2381, %v2456
        %v2458 = vpop.f32.mrb[0].mxu0
        %v2459 = vadd.f32 %v2383, %v2458
        %2460 = vdwg.mxu0
        %v2461 = vand.u32 %v270, 4294901760
        %v2462 = vsub.f32 %v270, %v2461
        %v2463 = vand.u32 %v2462, 4294901760
        %2464 = vmatprep.subr.mxu0 %v2463
        %v2465 = vand.u32 %v269, 4294901760
        %v2466 = vsub.f32 %v269, %v2465
        %v2467 = vand.u32 %v2466, 4294901760
        %2468 = vmatpush1.msra.mxu0 %v2467
        %2469 = vmatprep.subr.mxu0 0.0
        %2470 = vmatpush1.msra.mxu0 0.0
        %2471 = vmatprep.subr.mxu0 0.0
        %2472 = vmatpush1.msra.mxu0 0.0
        %2473 = vmatprep.subr.mxu0 0.0
        %2474 = vmatpush1.msra.mxu0 0.0
        %2475 = vmatprep.subr.mxu0 0.0
        %2476 = vmatpush1.msra.mxu0 0.0
        %2477 = vmatprep.subr.mxu0 0.0
        %2478 = vmatpush1.msra.mxu0 0.0
        %2479 = vmatprep.subr.mxu0 0.0
        %2480 = vmatpush1.msra.mxu0 0.0
        %2481 = vmatprep.subr.mxu0 0.0
        %2482 = vmatpush1.msra.mxu0 0.0
        %2483 = vmatprep.subr.mxu0 0.0
        %2484 = vmatpush1.msra.mxu0 0.0
        %2485 = vmatprep.subr.mxu0 0.0
        %2486 = vmatpush1.msra.mxu0 0.0
        %2487 = vmatprep.subr.mxu0 0.0
        %2488 = vmatpush1.msra.mxu0 0.0
        %2489 = vmatprep.subr.mxu0 0.0
        %2490 = vmatpush1.msra.mxu0 0.0
        %2491 = vmatprep.subr.mxu0 0.0
        %2492 = vmatpush1.msra.mxu0 0.0
        %2493 = vmatprep.subr.mxu0 0.0
        %2494 = vmatpush1.msra.mxu0 0.0
        %2495 = vmatprep.subr.mxu0 0.0
        %2496 = vmatpush1.msra.mxu0 0.0
        %2497 = vmatprep.subr.mxu0 0.0
        %2498 = vmatpush1.msra.mxu0 0.0
        %2499 = vmatprep.subr.mxu0 0.0
        %2500 = vmatpush1.msra.mxu0 0.0
        %2501 = vmatprep.subr.mxu0 0.0
        %2502 = vmatpush1.msra.mxu0 0.0
        %2503 = vmatprep.subr.mxu0 0.0
        %2504 = vmatpush1.msra.mxu0 0.0
        %2505 = vmatprep.subr.mxu0 0.0
        %2506 = vmatpush1.msra.mxu0 0.0
        %2507 = vmatprep.subr.mxu0 0.0
        %2508 = vmatpush1.msra.mxu0 0.0
        %2509 = vmatprep.subr.mxu0 0.0
        %2510 = vmatpush1.msra.mxu0 0.0
        %2511 = vmatprep.subr.mxu0 0.0
        %2512 = vmatpush1.msra.mxu0 0.0
        %2513 = vmatprep.subr.mxu0 0.0
        %2514 = vmatpush1.msra.mxu0 0.0
        %2515 = vmatprep.subr.mxu0 0.0
        %2516 = vmatpush1.msra.mxu0 0.0
        %2517 = vmatprep.subr.mxu0 0.0
        %2518 = vmatpush1.msra.mxu0 0.0
        %2519 = vmatprep.subr.mxu0 0.0
        %2520 = vmatpush1.msra.mxu0 0.0
        %2521 = vmatprep.subr.mxu0 0.0
        %2522 = vmatpush1.msra.mxu0 0.0
        %2523 = vmatprep.subr.mxu0 0.0
        %2524 = vmatpush1.msra.mxu0 0.0
        %2525 = vmatprep.subr.mxu0 0.0
        %2526 = vmatpush1.msra.mxu0 0.0
        %2527 = vmatprep.subr.mxu0 0.0
        %2528 = vmatpush1.msra.mxu0 0.0
        %2529 = vmatprep.subr.mxu0 0.0
        %2530 = vmatpush1.msra.mxu0 0.0
        %2531 = vmatprep.mubr.f32.mxu0 0.0
        %v2532 = vand.u32 %v286, 4294901760
        %2533 = vmatmul.mubr.f32.gmra.mrb[0].mxu0 %v2532
        %v2534 = vpop.f32.mrb[0].mxu0
        %v2535 = vadd.f32 %v2457, %v2534
        %v2536 = vpop.f32.mrb[0].mxu0
        %v2537 = vadd.f32 %v2459, %v2536
        %2538 = vdwg.mxu0
        %v2539 = vand.u32 %v270, 4294901760
        %2540 = vmatprep.subr.mxu0 %v2539
        %v2541 = vand.u32 %v269, 4294901760
        %2542 = vmatpush1.msra.mxu0 %v2541
        %2543 = vmatprep.subr.mxu0 0.0
        %2544 = vmatpush1.msra.mxu0 0.0
        %2545 = vmatprep.subr.mxu0 0.0
        %2546 = vmatpush1.msra.mxu0 0.0
        %2547 = vmatprep.subr.mxu0 0.0
        %2548 = vmatpush1.msra.mxu0 0.0
        %2549 = vmatprep.subr.mxu0 0.0
        %2550 = vmatpush1.msra.mxu0 0.0
        %2551 = vmatprep.subr.mxu0 0.0
        %2552 = vmatpush1.msra.mxu0 0.0
        %2553 = vmatprep.subr.mxu0 0.0
        %2554 = vmatpush1.msra.mxu0 0.0
        %2555 = vmatprep.subr.mxu0 0.0
        %2556 = vmatpush1.msra.mxu0 0.0
        %2557 = vmatprep.subr.mxu0 0.0
        %2558 = vmatpush1.msra.mxu0 0.0
        %2559 = vmatprep.subr.mxu0 0.0
        %2560 = vmatpush1.msra.mxu0 0.0
        %2561 = vmatprep.subr.mxu0 0.0
        %2562 = vmatpush1.msra.mxu0 0.0
        %2563 = vmatprep.subr.mxu0 0.0
        %2564 = vmatpush1.msra.mxu0 0.0
        %2565 = vmatprep.subr.mxu0 0.0
        %2566 = vmatpush1.msra.mxu0 0.0
        %2567 = vmatprep.subr.mxu0 0.0
        %2568 = vmatpush1.msra.mxu0 0.0
        %2569 = vmatprep.subr.mxu0 0.0
        %2570 = vmatpush1.msra.mxu0 0.0
        %2571 = vmatprep.subr.mxu0 0.0
        %2572 = vmatpush1.msra.mxu0 0.0
        %2573 = vmatprep.subr.mxu0 0.0
        %2574 = vmatpush1.msra.mxu0 0.0
        %2575 = vmatprep.subr.mxu0 0.0
        %2576 = vmatpush1.msra.mxu0 0.0
        %2577 = vmatprep.subr.mxu0 0.0
        %2578 = vmatpush1.msra.mxu0 0.0
        %2579 = vmatprep.subr.mxu0 0.0
        %2580 = vmatpush1.msra.mxu0 0.0
        %2581 = vmatprep.subr.mxu0 0.0
        %2582 = vmatpush1.msra.mxu0 0.0
        %2583 = vmatprep.subr.mxu0 0.0
        %2584 = vmatpush1.msra.mxu0 0.0
        %2585 = vmatprep.subr.mxu0 0.0
        %2586 = vmatpush1.msra.mxu0 0.0
        %2587 = vmatprep.subr.mxu0 0.0
        %2588 = vmatpush1.msra.mxu0 0.0
        %2589 = vmatprep.subr.mxu0 0.0
        %2590 = vmatpush1.msra.mxu0 0.0
        %2591 = vmatprep.subr.mxu0 0.0
        %2592 = vmatpush1.msra.mxu0 0.0
        %2593 = vmatprep.subr.mxu0 0.0
        %2594 = vmatpush1.msra.mxu0 0.0
        %2595 = vmatprep.subr.mxu0 0.0
        %2596 = vmatpush1.msra.mxu0 0.0
        %2597 = vmatprep.subr.mxu0 0.0
        %2598 = vmatpush1.msra.mxu0 0.0
        %2599 = vmatprep.subr.mxu0 0.0
        %2600 = vmatpush1.msra.mxu0 0.0
        %2601 = vmatprep.subr.mxu0 0.0
        %2602 = vmatpush1.msra.mxu0 0.0
        %2603 = vmatprep.subr.mxu0 0.0
        %2604 = vmatpush1.msra.mxu0 0.0
        %2605 = vmatprep.mubr.f32.mxu0 0.0
        %v2606 = vand.u32 %v286, 4294901760
        %2607 = vmatmul.mubr.f32.gmra.mrb[0].mxu0 %v2606
        %v2608 = vpop.f32.mrb[0].mxu0
        %v2609 = vadd.f32 %v2535, %v2608
        %v2610 = vpop.f32.mrb[0].mxu0
        %v2611 = vadd.f32 %v2537, %v2610
        %2612 = vdwg.mxu0
        %v2613 = vand.u32 %v272, 4294901760
        %2614 = vmatprep.subr.mxu0 %v2613
        %v2615 = vand.u32 %v271, 4294901760
        %2616 = vmatpush1.msra.mxu0 %v2615
        %2617 = vmatprep.subr.mxu0 0.0
        %2618 = vmatpush1.msra.mxu0 0.0
        %2619 = vmatprep.subr.mxu0 0.0
        %2620 = vmatpush1.msra.mxu0 0.0
        %2621 = vmatprep.subr.mxu0 0.0
        %2622 = vmatpush1.msra.mxu0 0.0
        %2623 = vmatprep.subr.mxu0 0.0
        %2624 = vmatpush1.msra.mxu0 0.0
        %2625 = vmatprep.subr.mxu0 0.0
        %2626 = vmatpush1.msra.mxu0 0.0
        %2627 = vmatprep.subr.mxu0 0.0
        %2628 = vmatpush1.msra.mxu0 0.0
        %2629 = vmatprep.subr.mxu0 0.0
        %2630 = vmatpush1.msra.mxu0 0.0
        %2631 = vmatprep.subr.mxu0 0.0
        %2632 = vmatpush1.msra.mxu0 0.0
        %2633 = vmatprep.subr.mxu0 0.0
        %2634 = vmatpush1.msra.mxu0 0.0
        %2635 = vmatprep.subr.mxu0 0.0
        %2636 = vmatpush1.msra.mxu0 0.0
        %2637 = vmatprep.subr.mxu0 0.0
        %2638 = vmatpush1.msra.mxu0 0.0
        %2639 = vmatprep.subr.mxu0 0.0
        %2640 = vmatpush1.msra.mxu0 0.0
        %2641 = vmatprep.subr.mxu0 0.0
        %2642 = vmatpush1.msra.mxu0 0.0
        %2643 = vmatprep.subr.mxu0 0.0
        %2644 = vmatpush1.msra.mxu0 0.0
        %2645 = vmatprep.subr.mxu0 0.0
        %2646 = vmatpush1.msra.mxu0 0.0
        %2647 = vmatprep.subr.mxu0 0.0
        %2648 = vmatpush1.msra.mxu0 0.0
        %2649 = vmatprep.subr.mxu0 0.0
        %2650 = vmatpush1.msra.mxu0 0.0
        %2651 = vmatprep.subr.mxu0 0.0
        %2652 = vmatpush1.msra.mxu0 0.0
        %2653 = vmatprep.subr.mxu0 0.0
        %2654 = vmatpush1.msra.mxu0 0.0
        %2655 = vmatprep.subr.mxu0 0.0
        %2656 = vmatpush1.msra.mxu0 0.0
        %2657 = vmatprep.subr.mxu0 0.0
        %2658 = vmatpush1.msra.mxu0 0.0
        %2659 = vmatprep.subr.mxu0 0.0
        %2660 = vmatpush1.msra.mxu0 0.0
        %2661 = vmatprep.subr.mxu0 0.0
        %2662 = vmatpush1.msra.mxu0 0.0
        %2663 = vmatprep.subr.mxu0 0.0
        %2664 = vmatpush1.msra.mxu0 0.0
        %2665 = vmatprep.subr.mxu0 0.0
        %2666 = vmatpush1.msra.mxu0 0.0
        %2667 = vmatprep.subr.mxu0 0.0
        %2668 = vmatpush1.msra.mxu0 0.0
        %2669 = vmatprep.subr.mxu0 0.0
        %2670 = vmatpush1.msra.mxu0 0.0
        %2671 = vmatprep.subr.mxu0 0.0
        %2672 = vmatpush1.msra.mxu0 0.0
        %2673 = vmatprep.subr.mxu0 0.0
        %2674 = vmatpush1.msra.mxu0 0.0
        %2675 = vmatprep.subr.mxu0 0.0
        %2676 = vmatpush1.msra.mxu0 0.0
        %2677 = vmatprep.subr.mxu0 0.0
        %2678 = vmatpush1.msra.mxu0 0.0
        %2679 = vmatprep.mubr.f32.mxu0 0.0
        %v2680 = vand.u32 %v286, 4294901760
        %v2681 = vsub.f32 %v286, %v2680
        %v2682 = vand.u32 %v2681, 4294901760
        %v2683 = vsub.f32 %v2681, %v2682
        %v2684 = vand.u32 %v2683, 4294901760
        %2685 = vmatmul.mubr.f32.gmra.mrb[0].mxu0 %v2684
        %v2686 = vpop.f32.mrb[0].mxu0
        %v2687 = vadd.f32 %v282, %v2686
        %v2688 = vpop.f32.mrb[0].mxu0
        %v2689 = vadd.f32 %v282, %v2688
        %2690 = vdwg.mxu0
        %v2691 = vand.u32 %v272, 4294901760
        %v2692 = vsub.f32 %v272, %v2691
        %v2693 = vand.u32 %v2692, 4294901760
        %v2694 = vsub.f32 %v2692, %v2693
        %v2695 = vand.u32 %v2694, 4294901760
        %2696 = vmatprep.subr.mxu0 %v2695
        %v2697 = vand.u32 %v271, 4294901760
        %v2698 = vsub.f32 %v271, %v2697
        %v2699 = vand.u32 %v2698, 4294901760
        %v2700 = vsub.f32 %v2698, %v2699
        %v2701 = vand.u32 %v2700, 4294901760
        %2702 = vmatpush1.msra.mxu0 %v2701
        %2703 = vmatprep.subr.mxu0 0.0
        %2704 = vmatpush1.msra.mxu0 0.0
        %2705 = vmatprep.subr.mxu0 0.0
        %2706 = vmatpush1.msra.mxu0 0.0
        %2707 = vmatprep.subr.mxu0 0.0
        %2708 = vmatpush1.msra.mxu0 0.0
        %2709 = vmatprep.subr.mxu0 0.0
        %2710 = vmatpush1.msra.mxu0 0.0
        %2711 = vmatprep.subr.mxu0 0.0
        %2712 = vmatpush1.msra.mxu0 0.0
        %2713 = vmatprep.subr.mxu0 0.0
        %2714 = vmatpush1.msra.mxu0 0.0
        %2715 = vmatprep.subr.mxu0 0.0
        %2716 = vmatpush1.msra.mxu0 0.0
        %2717 = vmatprep.subr.mxu0 0.0
        %2718 = vmatpush1.msra.mxu0 0.0
        %2719 = vmatprep.subr.mxu0 0.0
        %2720 = vmatpush1.msra.mxu0 0.0
        %2721 = vmatprep.subr.mxu0 0.0
        %2722 = vmatpush1.msra.mxu0 0.0
        %2723 = vmatprep.subr.mxu0 0.0
        %2724 = vmatpush1.msra.mxu0 0.0
        %2725 = vmatprep.subr.mxu0 0.0
        %2726 = vmatpush1.msra.mxu0 0.0
        %2727 = vmatprep.subr.mxu0 0.0
        %2728 = vmatpush1.msra.mxu0 0.0
        %2729 = vmatprep.subr.mxu0 0.0
        %2730 = vmatpush1.msra.mxu0 0.0
        %2731 = vmatprep.subr.mxu0 0.0
        %2732 = vmatpush1.msra.mxu0 0.0
        %2733 = vmatprep.subr.mxu0 0.0
        %2734 = vmatpush1.msra.mxu0 0.0
        %2735 = vmatprep.subr.mxu0 0.0
        %2736 = vmatpush1.msra.mxu0 0.0
        %2737 = vmatprep.subr.mxu0 0.0
        %2738 = vmatpush1.msra.mxu0 0.0
        %2739 = vmatprep.subr.mxu0 0.0
        %2740 = vmatpush1.msra.mxu0 0.0
        %2741 = vmatprep.subr.mxu0 0.0
        %2742 = vmatpush1.msra.mxu0 0.0
        %2743 = vmatprep.subr.mxu0 0.0
        %2744 = vmatpush1.msra.mxu0 0.0
        %2745 = vmatprep.subr.mxu0 0.0
        %2746 = vmatpush1.msra.mxu0 0.0
        %2747 = vmatprep.subr.mxu0 0.0
        %2748 = vmatpush1.msra.mxu0 0.0
        %2749 = vmatprep.subr.mxu0 0.0
        %2750 = vmatpush1.msra.mxu0 0.0
        %2751 = vmatprep.subr.mxu0 0.0
        %2752 = vmatpush1.msra.mxu0 0.0
        %2753 = vmatprep.subr.mxu0 0.0
        %2754 = vmatpush1.msra.mxu0 0.0
        %2755 = vmatprep.subr.mxu0 0.0
        %2756 = vmatpush1.msra.mxu0 0.0
        %2757 = vmatprep.subr.mxu0 0.0
        %2758 = vmatpush1.msra.mxu0 0.0
        %2759 = vmatprep.subr.mxu0 0.0
        %2760 = vmatpush1.msra.mxu0 0.0
        %2761 = vmatprep.subr.mxu0 0.0
        %2762 = vmatpush1.msra.mxu0 0.0
        %2763 = vmatprep.subr.mxu0 0.0
        %2764 = vmatpush1.msra.mxu0 0.0
        %2765 = vmatprep.mubr.f32.mxu0 0.0
        %v2766 = vand.u32 %v286, 4294901760
        %2767 = vmatmul.mubr.f32.gmra.mrb[0].mxu0 %v2766
        %v2768 = vpop.f32.mrb[0].mxu0
        %v2769 = vadd.f32 %v2687, %v2768
        %v2770 = vpop.f32.mrb[0].mxu0
        %v2771 = vadd.f32 %v2689, %v2770
        %2772 = vdwg.mxu0
        %v2773 = vand.u32 %v272, 4294901760
        %v2774 = vsub.f32 %v272, %v2773
        %2775 = vmatprep.subr.mxu0 %v2774
        %v2776 = vand.u32 %v271, 4294901760
        %v2777 = vsub.f32 %v271, %v2776
        %2778 = vmatpush1.msra.mxu0 %v2777
        %2779 = vmatprep.subr.mxu0 0.0
        %2780 = vmatpush1.msra.mxu0 0.0
        %2781 = vmatprep.subr.mxu0 0.0
        %2782 = vmatpush1.msra.mxu0 0.0
        %2783 = vmatprep.subr.mxu0 0.0
        %2784 = vmatpush1.msra.mxu0 0.0
        %2785 = vmatprep.subr.mxu0 0.0
        %2786 = vmatpush1.msra.mxu0 0.0
        %2787 = vmatprep.subr.mxu0 0.0
        %2788 = vmatpush1.msra.mxu0 0.0
        %2789 = vmatprep.subr.mxu0 0.0
        %2790 = vmatpush1.msra.mxu0 0.0
        %2791 = vmatprep.subr.mxu0 0.0
        %2792 = vmatpush1.msra.mxu0 0.0
        %2793 = vmatprep.subr.mxu0 0.0
        %2794 = vmatpush1.msra.mxu0 0.0
        %2795 = vmatprep.subr.mxu0 0.0
        %2796 = vmatpush1.msra.mxu0 0.0
        %2797 = vmatprep.subr.mxu0 0.0
        %2798 = vmatpush1.msra.mxu0 0.0
        %2799 = vmatprep.subr.mxu0 0.0
        %2800 = vmatpush1.msra.mxu0 0.0
        %2801 = vmatprep.subr.mxu0 0.0
        %2802 = vmatpush1.msra.mxu0 0.0
        %2803 = vmatprep.subr.mxu0 0.0
        %2804 = vmatpush1.msra.mxu0 0.0
        %2805 = vmatprep.subr.mxu0 0.0
        %2806 = vmatpush1.msra.mxu0 0.0
        %2807 = vmatprep.subr.mxu0 0.0
        %2808 = vmatpush1.msra.mxu0 0.0
        %2809 = vmatprep.subr.mxu0 0.0
        %2810 = vmatpush1.msra.mxu0 0.0
        %2811 = vmatprep.subr.mxu0 0.0
        %2812 = vmatpush1.msra.mxu0 0.0
        %2813 = vmatprep.subr.mxu0 0.0
        %2814 = vmatpush1.msra.mxu0 0.0
        %2815 = vmatprep.subr.mxu0 0.0
        %2816 = vmatpush1.msra.mxu0 0.0
        %2817 = vmatprep.subr.mxu0 0.0
        %2818 = vmatpush1.msra.mxu0 0.0
        %2819 = vmatprep.subr.mxu0 0.0
        %2820 = vmatpush1.msra.mxu0 0.0
        %2821 = vmatprep.subr.mxu0 0.0
        %2822 = vmatpush1.msra.mxu0 0.0
        %2823 = vmatprep.subr.mxu0 0.0
        %2824 = vmatpush1.msra.mxu0 0.0
        %2825 = vmatprep.subr.mxu0 0.0
        %2826 = vmatpush1.msra.mxu0 0.0
        %2827 = vmatprep.subr.mxu0 0.0
        %2828 = vmatpush1.msra.mxu0 0.0
        %2829 = vmatprep.subr.mxu0 0.0
        %2830 = vmatpush1.msra.mxu0 0.0
        %2831 = vmatprep.subr.mxu0 0.0
        %2832 = vmatpush1.msra.mxu0 0.0
        %2833 = vmatprep.subr.mxu0 0.0
        %2834 = vmatpush1.msra.mxu0 0.0
        %2835 = vmatprep.subr.mxu0 0.0
        %2836 = vmatpush1.msra.mxu0 0.0
        %2837 = vmatprep.subr.mxu0 0.0
        %2838 = vmatpush1.msra.mxu0 0.0
        %2839 = vmatprep.subr.mxu0 0.0
        %2840 = vmatpush1.msra.mxu0 0.0
        %2841 = vmatprep.mubr.f32.mxu0 0.0
        %v2842 = vand.u32 %v286, 4294901760
        %v2843 = vsub.f32 %v286, %v2842
        %2844 = vmatmul.mubr.f32.gmra.mrb[0].mxu0 %v2843
        %v2845 = vpop.f32.mrb[0].mxu0
        %v2846 = vadd.f32 %v2769, %v2845
        %v2847 = vpop.f32.mrb[0].mxu0
        %v2848 = vadd.f32 %v2771, %v2847
        %2849 = vdwg.mxu0
        %v2850 = vand.u32 %v272, 4294901760
        %2851 = vmatprep.subr.mxu0 %v2850
        %v2852 = vand.u32 %v271, 4294901760
        %2853 = vmatpush1.msra.mxu0 %v2852
        %2854 = vmatprep.subr.mxu0 0.0
        %2855 = vmatpush1.msra.mxu0 0.0
        %2856 = vmatprep.subr.mxu0 0.0
        %2857 = vmatpush1.msra.mxu0 0.0
        %2858 = vmatprep.subr.mxu0 0.0
        %2859 = vmatpush1.msra.mxu0 0.0
        %2860 = vmatprep.subr.mxu0 0.0
        %2861 = vmatpush1.msra.mxu0 0.0
        %2862 = vmatprep.subr.mxu0 0.0
        %2863 = vmatpush1.msra.mxu0 0.0
        %2864 = vmatprep.subr.mxu0 0.0
        %2865 = vmatpush1.msra.mxu0 0.0
        %2866 = vmatprep.subr.mxu0 0.0
        %2867 = vmatpush1.msra.mxu0 0.0
        %2868 = vmatprep.subr.mxu0 0.0
        %2869 = vmatpush1.msra.mxu0 0.0
        %2870 = vmatprep.subr.mxu0 0.0
        %2871 = vmatpush1.msra.mxu0 0.0
        %2872 = vmatprep.subr.mxu0 0.0
        %2873 = vmatpush1.msra.mxu0 0.0
        %2874 = vmatprep.subr.mxu0 0.0
        %2875 = vmatpush1.msra.mxu0 0.0
        %2876 = vmatprep.subr.mxu0 0.0
        %2877 = vmatpush1.msra.mxu0 0.0
        %2878 = vmatprep.subr.mxu0 0.0
        %2879 = vmatpush1.msra.mxu0 0.0
        %2880 = vmatprep.subr.mxu0 0.0
        %2881 = vmatpush1.msra.mxu0 0.0
        %2882 = vmatprep.subr.mxu0 0.0
        %2883 = vmatpush1.msra.mxu0 0.0
        %2884 = vmatprep.subr.mxu0 0.0
        %2885 = vmatpush1.msra.mxu0 0.0
        %2886 = vmatprep.subr.mxu0 0.0
        %2887 = vmatpush1.msra.mxu0 0.0
        %2888 = vmatprep.subr.mxu0 0.0
        %2889 = vmatpush1.msra.mxu0 0.0
        %2890 = vmatprep.subr.mxu0 0.0
        %2891 = vmatpush1.msra.mxu0 0.0
        %2892 = vmatprep.subr.mxu0 0.0
        %2893 = vmatpush1.msra.mxu0 0.0
        %2894 = vmatprep.subr.mxu0 0.0
        %2895 = vmatpush1.msra.mxu0 0.0
        %2896 = vmatprep.subr.mxu0 0.0
        %2897 = vmatpush1.msra.mxu0 0.0
        %2898 = vmatprep.subr.mxu0 0.0
        %2899 = vmatpush1.msra.mxu0 0.0
        %2900 = vmatprep.subr.mxu0 0.0
        %2901 = vmatpush1.msra.mxu0 0.0
        %2902 = vmatprep.subr.mxu0 0.0
        %2903 = vmatpush1.msra.mxu0 0.0
        %2904 = vmatprep.subr.mxu0 0.0
        %2905 = vmatpush1.msra.mxu0 0.0
        %2906 = vmatprep.subr.mxu0 0.0
        %2907 = vmatpush1.msra.mxu0 0.0
        %2908 = vmatprep.subr.mxu0 0.0
        %2909 = vmatpush1.msra.mxu0 0.0
        %2910 = vmatprep.subr.mxu0 0.0
        %2911 = vmatpush1.msra.mxu0 0.0
        %2912 = vmatprep.subr.mxu0 0.0
        %2913 = vmatpush1.msra.mxu0 0.0
        %2914 = vmatprep.subr.mxu0 0.0
        %2915 = vmatpush1.msra.mxu0 0.0
        %2916 = vmatprep.mubr.f32.mxu0 0.0
        %v2917 = vand.u32 %v286, 4294901760
        %v2918 = vsub.f32 %v286, %v2917
        %v2919 = vand.u32 %v2918, 4294901760
        %2920 = vmatmul.mubr.f32.gmra.mrb[0].mxu0 %v2919
        %v2921 = vpop.f32.mrb[0].mxu0
        %v2922 = vadd.f32 %v2846, %v2921
        %v2923 = vpop.f32.mrb[0].mxu0
        %v2924 = vadd.f32 %v2848, %v2923
        %2925 = vdwg.mxu0
        %v2926 = vand.u32 %v272, 4294901760
        %v2927 = vsub.f32 %v272, %v2926
        %v2928 = vand.u32 %v2927, 4294901760
        %2929 = vmatprep.subr.mxu0 %v2928
        %v2930 = vand.u32 %v271, 4294901760
        %v2931 = vsub.f32 %v271, %v2930
        %v2932 = vand.u32 %v2931, 4294901760
        %2933 = vmatpush1.msra.mxu0 %v2932
        %2934 = vmatprep.subr.mxu0 0.0
        %2935 = vmatpush1.msra.mxu0 0.0
        %2936 = vmatprep.subr.mxu0 0.0
        %2937 = vmatpush1.msra.mxu0 0.0
        %2938 = vmatprep.subr.mxu0 0.0
        %2939 = vmatpush1.msra.mxu0 0.0
        %2940 = vmatprep.subr.mxu0 0.0
        %2941 = vmatpush1.msra.mxu0 0.0
        %2942 = vmatprep.subr.mxu0 0.0
        %2943 = vmatpush1.msra.mxu0 0.0
        %2944 = vmatprep.subr.mxu0 0.0
        %2945 = vmatpush1.msra.mxu0 0.0
        %2946 = vmatprep.subr.mxu0 0.0
        %2947 = vmatpush1.msra.mxu0 0.0
        %2948 = vmatprep.subr.mxu0 0.0
        %2949 = vmatpush1.msra.mxu0 0.0
        %2950 = vmatprep.subr.mxu0 0.0
        %2951 = vmatpush1.msra.mxu0 0.0
        %2952 = vmatprep.subr.mxu0 0.0
        %2953 = vmatpush1.msra.mxu0 0.0
        %2954 = vmatprep.subr.mxu0 0.0
        %2955 = vmatpush1.msra.mxu0 0.0
        %2956 = vmatprep.subr.mxu0 0.0
        %2957 = vmatpush1.msra.mxu0 0.0
        %2958 = vmatprep.subr.mxu0 0.0
        %2959 = vmatpush1.msra.mxu0 0.0
        %2960 = vmatprep.subr.mxu0 0.0
        %2961 = vmatpush1.msra.mxu0 0.0
        %2962 = vmatprep.subr.mxu0 0.0
        %2963 = vmatpush1.msra.mxu0 0.0
        %2964 = vmatprep.subr.mxu0 0.0
        %2965 = vmatpush1.msra.mxu0 0.0
        %2966 = vmatprep.subr.mxu0 0.0
        %2967 = vmatpush1.msra.mxu0 0.0
        %2968 = vmatprep.subr.mxu0 0.0
        %2969 = vmatpush1.msra.mxu0 0.0
        %2970 = vmatprep.subr.mxu0 0.0
        %2971 = vmatpush1.msra.mxu0 0.0
        %2972 = vmatprep.subr.mxu0 0.0
        %2973 = vmatpush1.msra.mxu0 0.0
        %2974 = vmatprep.subr.mxu0 0.0
        %2975 = vmatpush1.msra.mxu0 0.0
        %2976 = vmatprep.subr.mxu0 0.0
        %2977 = vmatpush1.msra.mxu0 0.0
        %2978 = vmatprep.subr.mxu0 0.0
        %2979 = vmatpush1.msra.mxu0 0.0
        %2980 = vmatprep.subr.mxu0 0.0
        %2981 = vmatpush1.msra.mxu0 0.0
        %2982 = vmatprep.subr.mxu0 0.0
        %2983 = vmatpush1.msra.mxu0 0.0
        %2984 = vmatprep.subr.mxu0 0.0
        %2985 = vmatpush1.msra.mxu0 0.0
        %2986 = vmatprep.subr.mxu0 0.0
        %2987 = vmatpush1.msra.mxu0 0.0
        %2988 = vmatprep.subr.mxu0 0.0
        %2989 = vmatpush1.msra.mxu0 0.0
        %2990 = vmatprep.subr.mxu0 0.0
        %2991 = vmatpush1.msra.mxu0 0.0
        %2992 = vmatprep.subr.mxu0 0.0
        %2993 = vmatpush1.msra.mxu0 0.0
        %2994 = vmatprep.subr.mxu0 0.0
        %2995 = vmatpush1.msra.mxu0 0.0
        %2996 = vmatprep.mubr.f32.mxu0 0.0
        %v2997 = vand.u32 %v286, 4294901760
        %2998 = vmatmul.mubr.f32.gmra.mrb[0].mxu0 %v2997
        %v2999 = vpop.f32.mrb[0].mxu0
        %v3000 = vadd.f32 %v2922, %v2999
        %v3001 = vpop.f32.mrb[0].mxu0
        %v3002 = vadd.f32 %v2924, %v3001
        %3003 = vdwg.mxu0
        %v3004 = vand.u32 %v272, 4294901760
        %3005 = vmatprep.subr.mxu0 %v3004
        %v3006 = vand.u32 %v271, 4294901760
        %3007 = vmatpush1.msra.mxu0 %v3006
        %3008 = vmatprep.subr.mxu0 0.0
        %3009 = vmatpush1.msra.mxu0 0.0
        %3010 = vmatprep.subr.mxu0 0.0
        %3011 = vmatpush1.msra.mxu0 0.0
        %3012 = vmatprep.subr.mxu0 0.0
        %3013 = vmatpush1.msra.mxu0 0.0
        %3014 = vmatprep.subr.mxu0 0.0
        %3015 = vmatpush1.msra.mxu0 0.0
        %3016 = vmatprep.subr.mxu0 0.0
        %3017 = vmatpush1.msra.mxu0 0.0
        %3018 = vmatprep.subr.mxu0 0.0
        %3019 = vmatpush1.msra.mxu0 0.0
        %3020 = vmatprep.subr.mxu0 0.0
        %3021 = vmatpush1.msra.mxu0 0.0
        %3022 = vmatprep.subr.mxu0 0.0
        %3023 = vmatpush1.msra.mxu0 0.0
        %3024 = vmatprep.subr.mxu0 0.0
        %3025 = vmatpush1.msra.mxu0 0.0
        %3026 = vmatprep.subr.mxu0 0.0
        %3027 = vmatpush1.msra.mxu0 0.0
        %3028 = vmatprep.subr.mxu0 0.0
        %3029 = vmatpush1.msra.mxu0 0.0
        %3030 = vmatprep.subr.mxu0 0.0
        %3031 = vmatpush1.msra.mxu0 0.0
        %3032 = vmatprep.subr.mxu0 0.0
        %3033 = vmatpush1.msra.mxu0 0.0
        %3034 = vmatprep.subr.mxu0 0.0
        %3035 = vmatpush1.msra.mxu0 0.0
        %3036 = vmatprep.subr.mxu0 0.0
        %3037 = vmatpush1.msra.mxu0 0.0
        %3038 = vmatprep.subr.mxu0 0.0
        %3039 = vmatpush1.msra.mxu0 0.0
        %3040 = vmatprep.subr.mxu0 0.0
        %3041 = vmatpush1.msra.mxu0 0.0
        %3042 = vmatprep.subr.mxu0 0.0
        %3043 = vmatpush1.msra.mxu0 0.0
        %3044 = vmatprep.subr.mxu0 0.0
        %3045 = vmatpush1.msra.mxu0 0.0
        %3046 = vmatprep.subr.mxu0 0.0
        %3047 = vmatpush1.msra.mxu0 0.0
        %3048 = vmatprep.subr.mxu0 0.0
        %3049 = vmatpush1.msra.mxu0 0.0
        %3050 = vmatprep.subr.mxu0 0.0
        %3051 = vmatpush1.msra.mxu0 0.0
        %3052 = vmatprep.subr.mxu0 0.0
        %3053 = vmatpush1.msra.mxu0 0.0
        %3054 = vmatprep.subr.mxu0 0.0
        %3055 = vmatpush1.msra.mxu0 0.0
        %3056 = vmatprep.subr.mxu0 0.0
        %3057 = vmatpush1.msra.mxu0 0.0
        %3058 = vmatprep.subr.mxu0 0.0
        %3059 = vmatpush1.msra.mxu0 0.0
        %3060 = vmatprep.subr.mxu0 0.0
        %3061 = vmatpush1.msra.mxu0 0.0
        %3062 = vmatprep.subr.mxu0 0.0
        %3063 = vmatpush1.msra.mxu0 0.0
        %3064 = vmatprep.subr.mxu0 0.0
        %3065 = vmatpush1.msra.mxu0 0.0
        %3066 = vmatprep.subr.mxu0 0.0
        %3067 = vmatpush1.msra.mxu0 0.0
        %3068 = vmatprep.subr.mxu0 0.0
        %3069 = vmatpush1.msra.mxu0 0.0
        %3070 = vmatprep.mubr.f32.mxu0 0.0
        %v3071 = vand.u32 %v286, 4294901760
        %3072 = vmatmul.mubr.f32.gmra.mrb[0].mxu0 %v3071
        %v3073 = vpop.f32.mrb[0].mxu0
        %v3074 = vadd.f32 %v3000, %v3073
        %v3075 = vpop.f32.mrb[0].mxu0
        %v3076 = vadd.f32 %v3002, %v3075
        %3077 = vdwg.mxu0
        %v3078 = vand.u32 %v274, 4294901760
        %3079 = vmatprep.subr.mxu0 %v3078
        %v3080 = vand.u32 %v273, 4294901760
        %3081 = vmatpush1.msra.mxu0 %v3080
        %3082 = vmatprep.subr.mxu0 0.0
        %3083 = vmatpush1.msra.mxu0 0.0
        %3084 = vmatprep.subr.mxu0 0.0
        %3085 = vmatpush1.msra.mxu0 0.0
        %3086 = vmatprep.subr.mxu0 0.0
        %3087 = vmatpush1.msra.mxu0 0.0
        %3088 = vmatprep.subr.mxu0 0.0
        %3089 = vmatpush1.msra.mxu0 0.0
        %3090 = vmatprep.subr.mxu0 0.0
        %3091 = vmatpush1.msra.mxu0 0.0
        %3092 = vmatprep.subr.mxu0 0.0
        %3093 = vmatpush1.msra.mxu0 0.0
        %3094 = vmatprep.subr.mxu0 0.0
        %3095 = vmatpush1.msra.mxu0 0.0
        %3096 = vmatprep.subr.mxu0 0.0
        %3097 = vmatpush1.msra.mxu0 0.0
        %3098 = vmatprep.subr.mxu0 0.0
        %3099 = vmatpush1.msra.mxu0 0.0
        %3100 = vmatprep.subr.mxu0 0.0
        %3101 = vmatpush1.msra.mxu0 0.0
        %3102 = vmatprep.subr.mxu0 0.0
        %3103 = vmatpush1.msra.mxu0 0.0
        %3104 = vmatprep.subr.mxu0 0.0
        %3105 = vmatpush1.msra.mxu0 0.0
        %3106 = vmatprep.subr.mxu0 0.0
        %3107 = vmatpush1.msra.mxu0 0.0
        %3108 = vmatprep.subr.mxu0 0.0
        %3109 = vmatpush1.msra.mxu0 0.0
        %3110 = vmatprep.subr.mxu0 0.0
        %3111 = vmatpush1.msra.mxu0 0.0
        %3112 = vmatprep.subr.mxu0 0.0
        %3113 = vmatpush1.msra.mxu0 0.0
        %3114 = vmatprep.subr.mxu0 0.0
        %3115 = vmatpush1.msra.mxu0 0.0
        %3116 = vmatprep.subr.mxu0 0.0
        %3117 = vmatpush1.msra.mxu0 0.0
        %3118 = vmatprep.subr.mxu0 0.0
        %3119 = vmatpush1.msra.mxu0 0.0
        %3120 = vmatprep.subr.mxu0 0.0
        %3121 = vmatpush1.msra.mxu0 0.0
        %3122 = vmatprep.subr.mxu0 0.0
        %3123 = vmatpush1.msra.mxu0 0.0
        %3124 = vmatprep.subr.mxu0 0.0
        %3125 = vmatpush1.msra.mxu0 0.0
        %3126 = vmatprep.subr.mxu0 0.0
        %3127 = vmatpush1.msra.mxu0 0.0
        %3128 = vmatprep.subr.mxu0 0.0
        %3129 = vmatpush1.msra.mxu0 0.0
        %3130 = vmatprep.subr.mxu0 0.0
        %3131 = vmatpush1.msra.mxu0 0.0
        %3132 = vmatprep.subr.mxu0 0.0
        %3133 = vmatpush1.msra.mxu0 0.0
        %3134 = vmatprep.subr.mxu0 0.0
        %3135 = vmatpush1.msra.mxu0 0.0
        %3136 = vmatprep.subr.mxu0 0.0
        %3137 = vmatpush1.msra.mxu0 0.0
        %3138 = vmatprep.subr.mxu0 0.0
        %3139 = vmatpush1.msra.mxu0 0.0
        %3140 = vmatprep.subr.mxu0 0.0
        %3141 = vmatpush1.msra.mxu0 0.0
        %3142 = vmatprep.subr.mxu0 0.0
        %3143 = vmatpush1.msra.mxu0 0.0
        %3144 = vmatprep.mubr.f32.mxu0 0.0
        %v3145 = vand.u32 %v286, 4294901760
        %v3146 = vsub.f32 %v286, %v3145
        %v3147 = vand.u32 %v3146, 4294901760
        %v3148 = vsub.f32 %v3146, %v3147
        %v3149 = vand.u32 %v3148, 4294901760
        %3150 = vmatmul.mubr.f32.gmra.mrb[0].mxu0 %v3149
        %v3151 = vpop.f32.mrb[0].mxu0
        %v3152 = vadd.f32 %v282, %v3151
        %v3153 = vpop.f32.mrb[0].mxu0
        %v3154 = vadd.f32 %v282, %v3153
        %3155 = vdwg.mxu0
        %v3156 = vand.u32 %v274, 4294901760
        %v3157 = vsub.f32 %v274, %v3156
        %v3158 = vand.u32 %v3157, 4294901760
        %v3159 = vsub.f32 %v3157, %v3158
        %v3160 = vand.u32 %v3159, 4294901760
        %3161 = vmatprep.subr.mxu0 %v3160
        %v3162 = vand.u32 %v273, 4294901760
        %v3163 = vsub.f32 %v273, %v3162
        %v3164 = vand.u32 %v3163, 4294901760
        %v3165 = vsub.f32 %v3163, %v3164
        %v3166 = vand.u32 %v3165, 4294901760
        %3167 = vmatpush1.msra.mxu0 %v3166
        %3168 = vmatprep.subr.mxu0 0.0
        %3169 = vmatpush1.msra.mxu0 0.0
        %3170 = vmatprep.subr.mxu0 0.0
        %3171 = vmatpush1.msra.mxu0 0.0
        %3172 = vmatprep.subr.mxu0 0.0
        %3173 = vmatpush1.msra.mxu0 0.0
        %3174 = vmatprep.subr.mxu0 0.0
        %3175 = vmatpush1.msra.mxu0 0.0
        %3176 = vmatprep.subr.mxu0 0.0
        %3177 = vmatpush1.msra.mxu0 0.0
        %3178 = vmatprep.subr.mxu0 0.0
        %3179 = vmatpush1.msra.mxu0 0.0
        %3180 = vmatprep.subr.mxu0 0.0
        %3181 = vmatpush1.msra.mxu0 0.0
        %3182 = vmatprep.subr.mxu0 0.0
        %3183 = vmatpush1.msra.mxu0 0.0
        %3184 = vmatprep.subr.mxu0 0.0
        %3185 = vmatpush1.msra.mxu0 0.0
        %3186 = vmatprep.subr.mxu0 0.0
        %3187 = vmatpush1.msra.mxu0 0.0
        %3188 = vmatprep.subr.mxu0 0.0
        %3189 = vmatpush1.msra.mxu0 0.0
        %3190 = vmatprep.subr.mxu0 0.0
        %3191 = vmatpush1.msra.mxu0 0.0
        %3192 = vmatprep.subr.mxu0 0.0
        %3193 = vmatpush1.msra.mxu0 0.0
        %3194 = vmatprep.subr.mxu0 0.0
        %3195 = vmatpush1.msra.mxu0 0.0
        %3196 = vmatprep.subr.mxu0 0.0
        %3197 = vmatpush1.msra.mxu0 0.0
        %3198 = vmatprep.subr.mxu0 0.0
        %3199 = vmatpush1.msra.mxu0 0.0
        %3200 = vmatprep.subr.mxu0 0.0
        %3201 = vmatpush1.msra.mxu0 0.0
        %3202 = vmatprep.subr.mxu0 0.0
        %3203 = vmatpush1.msra.mxu0 0.0
        %3204 = vmatprep.subr.mxu0 0.0
        %3205 = vmatpush1.msra.mxu0 0.0
        %3206 = vmatprep.subr.mxu0 0.0
        %3207 = vmatpush1.msra.mxu0 0.0
        %3208 = vmatprep.subr.mxu0 0.0
        %3209 = vmatpush1.msra.mxu0 0.0
        %3210 = vmatprep.subr.mxu0 0.0
        %3211 = vmatpush1.msra.mxu0 0.0
        %3212 = vmatprep.subr.mxu0 0.0
        %3213 = vmatpush1.msra.mxu0 0.0
        %3214 = vmatprep.subr.mxu0 0.0
        %3215 = vmatpush1.msra.mxu0 0.0
        %3216 = vmatprep.subr.mxu0 0.0
        %3217 = vmatpush1.msra.mxu0 0.0
        %3218 = vmatprep.subr.mxu0 0.0
        %3219 = vmatpush1.msra.mxu0 0.0
        %3220 = vmatprep.subr.mxu0 0.0
        %3221 = vmatpush1.msra.mxu0 0.0
        %3222 = vmatprep.subr.mxu0 0.0
        %3223 = vmatpush1.msra.mxu0 0.0
        %3224 = vmatprep.subr.mxu0 0.0
        %3225 = vmatpush1.msra.mxu0 0.0
        %3226 = vmatprep.subr.mxu0 0.0
        %3227 = vmatpush1.msra.mxu0 0.0
        %3228 = vmatprep.subr.mxu0 0.0
        %3229 = vmatpush1.msra.mxu0 0.0
        %3230 = vmatprep.mubr.f32.mxu0 0.0
        %v3231 = vand.u32 %v286, 4294901760
        %3232 = vmatmul.mubr.f32.gmra.mrb[0].mxu0 %v3231
        %v3233 = vpop.f32.mrb[0].mxu0
        %v3234 = vadd.f32 %v3152, %v3233
        %v3235 = vpop.f32.mrb[0].mxu0
        %v3236 = vadd.f32 %v3154, %v3235
        %3237 = vdwg.mxu0
        %v3238 = vand.u32 %v274, 4294901760
        %v3239 = vsub.f32 %v274, %v3238
        %3240 = vmatprep.subr.mxu0 %v3239
        %v3241 = vand.u32 %v273, 4294901760
        %v3242 = vsub.f32 %v273, %v3241
        %3243 = vmatpush1.msra.mxu0 %v3242
        %3244 = vmatprep.subr.mxu0 0.0
        %3245 = vmatpush1.msra.mxu0 0.0
        %3246 = vmatprep.subr.mxu0 0.0
        %3247 = vmatpush1.msra.mxu0 0.0
        %3248 = vmatprep.subr.mxu0 0.0
        %3249 = vmatpush1.msra.mxu0 0.0
        %3250 = vmatprep.subr.mxu0 0.0
        %3251 = vmatpush1.msra.mxu0 0.0
        %3252 = vmatprep.subr.mxu0 0.0
        %3253 = vmatpush1.msra.mxu0 0.0
        %3254 = vmatprep.subr.mxu0 0.0
        %3255 = vmatpush1.msra.mxu0 0.0
        %3256 = vmatprep.subr.mxu0 0.0
        %3257 = vmatpush1.msra.mxu0 0.0
        %3258 = vmatprep.subr.mxu0 0.0
        %3259 = vmatpush1.msra.mxu0 0.0
        %3260 = vmatprep.subr.mxu0 0.0
        %3261 = vmatpush1.msra.mxu0 0.0
        %3262 = vmatprep.subr.mxu0 0.0
        %3263 = vmatpush1.msra.mxu0 0.0
        %3264 = vmatprep.subr.mxu0 0.0
        %3265 = vmatpush1.msra.mxu0 0.0
        %3266 = vmatprep.subr.mxu0 0.0
        %3267 = vmatpush1.msra.mxu0 0.0
        %3268 = vmatprep.subr.mxu0 0.0
        %3269 = vmatpush1.msra.mxu0 0.0
        %3270 = vmatprep.subr.mxu0 0.0
        %3271 = vmatpush1.msra.mxu0 0.0
        %3272 = vmatprep.subr.mxu0 0.0
        %3273 = vmatpush1.msra.mxu0 0.0
        %3274 = vmatprep.subr.mxu0 0.0
        %3275 = vmatpush1.msra.mxu0 0.0
        %3276 = vmatprep.subr.mxu0 0.0
        %3277 = vmatpush1.msra.mxu0 0.0
        %3278 = vmatprep.subr.mxu0 0.0
        %3279 = vmatpush1.msra.mxu0 0.0
        %3280 = vmatprep.subr.mxu0 0.0
        %3281 = vmatpush1.msra.mxu0 0.0
        %3282 = vmatprep.subr.mxu0 0.0
        %3283 = vmatpush1.msra.mxu0 0.0
        %3284 = vmatprep.subr.mxu0 0.0
        %3285 = vmatpush1.msra.mxu0 0.0
        %3286 = vmatprep.subr.mxu0 0.0
        %3287 = vmatpush1.msra.mxu0 0.0
        %3288 = vmatprep.subr.mxu0 0.0
        %3289 = vmatpush1.msra.mxu0 0.0
        %3290 = vmatprep.subr.mxu0 0.0
        %3291 = vmatpush1.msra.mxu0 0.0
        %3292 = vmatprep.subr.mxu0 0.0
        %3293 = vmatpush1.msra.mxu0 0.0
        %3294 = vmatprep.subr.mxu0 0.0
        %3295 = vmatpush1.msra.mxu0 0.0
        %3296 = vmatprep.subr.mxu0 0.0
        %3297 = vmatpush1.msra.mxu0 0.0
        %3298 = vmatprep.subr.mxu0 0.0
        %3299 = vmatpush1.msra.mxu0 0.0
        %3300 = vmatprep.subr.mxu0 0.0
        %3301 = vmatpush1.msra.mxu0 0.0
        %3302 = vmatprep.subr.mxu0 0.0
        %3303 = vmatpush1.msra.mxu0 0.0
        %3304 = vmatprep.subr.mxu0 0.0
        %3305 = vmatpush1.msra.mxu0 0.0
        %3306 = vmatprep.mubr.f32.mxu0 0.0
        %v3307 = vand.u32 %v286, 4294901760
        %v3308 = vsub.f32 %v286, %v3307
        %3309 = vmatmul.mubr.f32.gmra.mrb[0].mxu0 %v3308
        %v3310 = vpop.f32.mrb[0].mxu0
        %v3311 = vadd.f32 %v3234, %v3310
        %v3312 = vpop.f32.mrb[0].mxu0
        %v3313 = vadd.f32 %v3236, %v3312
        %3314 = vdwg.mxu0
        %v3315 = vand.u32 %v274, 4294901760
        %3316 = vmatprep.subr.mxu0 %v3315
        %v3317 = vand.u32 %v273, 4294901760
        %3318 = vmatpush1.msra.mxu0 %v3317
        %3319 = vmatprep.subr.mxu0 0.0
        %3320 = vmatpush1.msra.mxu0 0.0
        %3321 = vmatprep.subr.mxu0 0.0
        %3322 = vmatpush1.msra.mxu0 0.0
        %3323 = vmatprep.subr.mxu0 0.0
        %3324 = vmatpush1.msra.mxu0 0.0
        %3325 = vmatprep.subr.mxu0 0.0
        %3326 = vmatpush1.msra.mxu0 0.0
        %3327 = vmatprep.subr.mxu0 0.0
        %3328 = vmatpush1.msra.mxu0 0.0
        %3329 = vmatprep.subr.mxu0 0.0
        %3330 = vmatpush1.msra.mxu0 0.0
        %3331 = vmatprep.subr.mxu0 0.0
        %3332 = vmatpush1.msra.mxu0 0.0
        %3333 = vmatprep.subr.mxu0 0.0
        %3334 = vmatpush1.msra.mxu0 0.0
        %3335 = vmatprep.subr.mxu0 0.0
        %3336 = vmatpush1.msra.mxu0 0.0
        %3337 = vmatprep.subr.mxu0 0.0
        %3338 = vmatpush1.msra.mxu0 0.0
        %3339 = vmatprep.subr.mxu0 0.0
        %3340 = vmatpush1.msra.mxu0 0.0
        %3341 = vmatprep.subr.mxu0 0.0
        %3342 = vmatpush1.msra.mxu0 0.0
        %3343 = vmatprep.subr.mxu0 0.0
        %3344 = vmatpush1.msra.mxu0 0.0
        %3345 = vmatprep.subr.mxu0 0.0
        %3346 = vmatpush1.msra.mxu0 0.0
        %3347 = vmatprep.subr.mxu0 0.0
        %3348 = vmatpush1.msra.mxu0 0.0
        %3349 = vmatprep.subr.mxu0 0.0
        %3350 = vmatpush1.msra.mxu0 0.0
        %3351 = vmatprep.subr.mxu0 0.0
        %3352 = vmatpush1.msra.mxu0 0.0
        %3353 = vmatprep.subr.mxu0 0.0
        %3354 = vmatpush1.msra.mxu0 0.0
        %3355 = vmatprep.subr.mxu0 0.0
        %3356 = vmatpush1.msra.mxu0 0.0
        %3357 = vmatprep.subr.mxu0 0.0
        %3358 = vmatpush1.msra.mxu0 0.0
        %3359 = vmatprep.subr.mxu0 0.0
        %3360 = vmatpush1.msra.mxu0 0.0
        %3361 = vmatprep.subr.mxu0 0.0
        %3362 = vmatpush1.msra.mxu0 0.0
        %3363 = vmatprep.subr.mxu0 0.0
        %3364 = vmatpush1.msra.mxu0 0.0
        %3365 = vmatprep.subr.mxu0 0.0
        %3366 = vmatpush1.msra.mxu0 0.0
        %3367 = vmatprep.subr.mxu0 0.0
        %3368 = vmatpush1.msra.mxu0 0.0
        %3369 = vmatprep.subr.mxu0 0.0
        %3370 = vmatpush1.msra.mxu0 0.0
        %3371 = vmatprep.subr.mxu0 0.0
        %3372 = vmatpush1.msra.mxu0 0.0
        %3373 = vmatprep.subr.mxu0 0.0
        %3374 = vmatpush1.msra.mxu0 0.0
        %3375 = vmatprep.subr.mxu0 0.0
        %3376 = vmatpush1.msra.mxu0 0.0
        %3377 = vmatprep.subr.mxu0 0.0
        %3378 = vmatpush1.msra.mxu0 0.0
        %3379 = vmatprep.subr.mxu0 0.0
        %3380 = vmatpush1.msra.mxu0 0.0
        %3381 = vmatprep.mubr.f32.mxu0 0.0
        %v3382 = vand.u32 %v286, 4294901760
        %v3383 = vsub.f32 %v286, %v3382
        %v3384 = vand.u32 %v3383, 4294901760
        %3385 = vmatmul.mubr.f32.gmra.mrb[0].mxu0 %v3384
        %v3386 = vpop.f32.mrb[0].mxu0
        %v3387 = vadd.f32 %v3311, %v3386
        %v3388 = vpop.f32.mrb[0].mxu0
        %v3389 = vadd.f32 %v3313, %v3388
        %3390 = vdwg.mxu0
        %v3391 = vand.u32 %v274, 4294901760
        %v3392 = vsub.f32 %v274, %v3391
        %v3393 = vand.u32 %v3392, 4294901760
        %3394 = vmatprep.subr.mxu0 %v3393
        %v3395 = vand.u32 %v273, 4294901760
        %v3396 = vsub.f32 %v273, %v3395
        %v3397 = vand.u32 %v3396, 4294901760
        %3398 = vmatpush1.msra.mxu0 %v3397
        %3399 = vmatprep.subr.mxu0 0.0
        %3400 = vmatpush1.msra.mxu0 0.0
        %3401 = vmatprep.subr.mxu0 0.0
        %3402 = vmatpush1.msra.mxu0 0.0
        %3403 = vmatprep.subr.mxu0 0.0
        %3404 = vmatpush1.msra.mxu0 0.0
        %3405 = vmatprep.subr.mxu0 0.0
        %3406 = vmatpush1.msra.mxu0 0.0
        %3407 = vmatprep.subr.mxu0 0.0
        %3408 = vmatpush1.msra.mxu0 0.0
        %3409 = vmatprep.subr.mxu0 0.0
        %3410 = vmatpush1.msra.mxu0 0.0
        %3411 = vmatprep.subr.mxu0 0.0
        %3412 = vmatpush1.msra.mxu0 0.0
        %3413 = vmatprep.subr.mxu0 0.0
        %3414 = vmatpush1.msra.mxu0 0.0
        %3415 = vmatprep.subr.mxu0 0.0
        %3416 = vmatpush1.msra.mxu0 0.0
        %3417 = vmatprep.subr.mxu0 0.0
        %3418 = vmatpush1.msra.mxu0 0.0
        %3419 = vmatprep.subr.mxu0 0.0
        %3420 = vmatpush1.msra.mxu0 0.0
        %3421 = vmatprep.subr.mxu0 0.0
        %3422 = vmatpush1.msra.mxu0 0.0
        %3423 = vmatprep.subr.mxu0 0.0
        %3424 = vmatpush1.msra.mxu0 0.0
        %3425 = vmatprep.subr.mxu0 0.0
        %3426 = vmatpush1.msra.mxu0 0.0
        %3427 = vmatprep.subr.mxu0 0.0
        %3428 = vmatpush1.msra.mxu0 0.0
        %3429 = vmatprep.subr.mxu0 0.0
        %3430 = vmatpush1.msra.mxu0 0.0
        %3431 = vmatprep.subr.mxu0 0.0
        %3432 = vmatpush1.msra.mxu0 0.0
        %3433 = vmatprep.subr.mxu0 0.0
        %3434 = vmatpush1.msra.mxu0 0.0
        %3435 = vmatprep.subr.mxu0 0.0
        %3436 = vmatpush1.msra.mxu0 0.0
        %3437 = vmatprep.subr.mxu0 0.0
        %3438 = vmatpush1.msra.mxu0 0.0
        %3439 = vmatprep.subr.mxu0 0.0
        %3440 = vmatpush1.msra.mxu0 0.0
        %3441 = vmatprep.subr.mxu0 0.0
        %3442 = vmatpush1.msra.mxu0 0.0
        %3443 = vmatprep.subr.mxu0 0.0
        %3444 = vmatpush1.msra.mxu0 0.0
        %3445 = vmatprep.subr.mxu0 0.0
        %3446 = vmatpush1.msra.mxu0 0.0
        %3447 = vmatprep.subr.mxu0 0.0
        %3448 = vmatpush1.msra.mxu0 0.0
        %3449 = vmatprep.subr.mxu0 0.0
        %3450 = vmatpush1.msra.mxu0 0.0
        %3451 = vmatprep.subr.mxu0 0.0
        %3452 = vmatpush1.msra.mxu0 0.0
        %3453 = vmatprep.subr.mxu0 0.0
        %3454 = vmatpush1.msra.mxu0 0.0
        %3455 = vmatprep.subr.mxu0 0.0
        %3456 = vmatpush1.msra.mxu0 0.0
        %3457 = vmatprep.subr.mxu0 0.0
        %3458 = vmatpush1.msra.mxu0 0.0
        %3459 = vmatprep.subr.mxu0 0.0
        %3460 = vmatpush1.msra.mxu0 0.0
        %3461 = vmatprep.mubr.f32.mxu0 0.0
        %v3462 = vand.u32 %v286, 4294901760
        %3463 = vmatmul.mubr.f32.gmra.mrb[0].mxu0 %v3462
        %v3464 = vpop.f32.mrb[0].mxu0
        %v3465 = vadd.f32 %v3387, %v3464
        %v3466 = vpop.f32.mrb[0].mxu0
        %v3467 = vadd.f32 %v3389, %v3466
        %3468 = vdwg.mxu0
        %v3469 = vand.u32 %v274, 4294901760
        %3470 = vmatprep.subr.mxu0 %v3469
        %v3471 = vand.u32 %v273, 4294901760
        %3472 = vmatpush1.msra.mxu0 %v3471
        %3473 = vmatprep.subr.mxu0 0.0
        %3474 = vmatpush1.msra.mxu0 0.0
        %3475 = vmatprep.subr.mxu0 0.0
        %3476 = vmatpush1.msra.mxu0 0.0
        %3477 = vmatprep.subr.mxu0 0.0
        %3478 = vmatpush1.msra.mxu0 0.0
        %3479 = vmatprep.subr.mxu0 0.0
        %3480 = vmatpush1.msra.mxu0 0.0
        %3481 = vmatprep.subr.mxu0 0.0
        %3482 = vmatpush1.msra.mxu0 0.0
        %3483 = vmatprep.subr.mxu0 0.0
        %3484 = vmatpush1.msra.mxu0 0.0
        %3485 = vmatprep.subr.mxu0 0.0
        %3486 = vmatpush1.msra.mxu0 0.0
        %3487 = vmatprep.subr.mxu0 0.0
        %3488 = vmatpush1.msra.mxu0 0.0
        %3489 = vmatprep.subr.mxu0 0.0
        %3490 = vmatpush1.msra.mxu0 0.0
        %3491 = vmatprep.subr.mxu0 0.0
        %3492 = vmatpush1.msra.mxu0 0.0
        %3493 = vmatprep.subr.mxu0 0.0
        %3494 = vmatpush1.msra.mxu0 0.0
        %3495 = vmatprep.subr.mxu0 0.0
        %3496 = vmatpush1.msra.mxu0 0.0
        %3497 = vmatprep.subr.mxu0 0.0
        %3498 = vmatpush1.msra.mxu0 0.0
        %3499 = vmatprep.subr.mxu0 0.0
        %3500 = vmatpush1.msra.mxu0 0.0
        %3501 = vmatprep.subr.mxu0 0.0
        %3502 = vmatpush1.msra.mxu0 0.0
        %3503 = vmatprep.subr.mxu0 0.0
        %3504 = vmatpush1.msra.mxu0 0.0
        %3505 = vmatprep.subr.mxu0 0.0
        %3506 = vmatpush1.msra.mxu0 0.0
        %3507 = vmatprep.subr.mxu0 0.0
        %3508 = vmatpush1.msra.mxu0 0.0
        %3509 = vmatprep.subr.mxu0 0.0
        %3510 = vmatpush1.msra.mxu0 0.0
        %3511 = vmatprep.subr.mxu0 0.0
        %3512 = vmatpush1.msra.mxu0 0.0
        %3513 = vmatprep.subr.mxu0 0.0
        %3514 = vmatpush1.msra.mxu0 0.0
        %3515 = vmatprep.subr.mxu0 0.0
        %3516 = vmatpush1.msra.mxu0 0.0
        %3517 = vmatprep.subr.mxu0 0.0
        %3518 = vmatpush1.msra.mxu0 0.0
        %3519 = vmatprep.subr.mxu0 0.0
        %3520 = vmatpush1.msra.mxu0 0.0
        %3521 = vmatprep.subr.mxu0 0.0
        %3522 = vmatpush1.msra.mxu0 0.0
        %3523 = vmatprep.subr.mxu0 0.0
        %3524 = vmatpush1.msra.mxu0 0.0
        %3525 = vmatprep.subr.mxu0 0.0
        %3526 = vmatpush1.msra.mxu0 0.0
        %3527 = vmatprep.subr.mxu0 0.0
        %3528 = vmatpush1.msra.mxu0 0.0
        %3529 = vmatprep.subr.mxu0 0.0
        %3530 = vmatpush1.msra.mxu0 0.0
        %3531 = vmatprep.subr.mxu0 0.0
        %3532 = vmatpush1.msra.mxu0 0.0
        %3533 = vmatprep.subr.mxu0 0.0
        %3534 = vmatpush1.msra.mxu0 0.0
        %3535 = vmatprep.mubr.f32.mxu0 0.0
        %v3536 = vand.u32 %v286, 4294901760
        %3537 = vmatmul.mubr.f32.gmra.mrb[0].mxu0 %v3536
        %v3538 = vpop.f32.mrb[0].mxu0
        %v3539 = vadd.f32 %v3465, %v3538
        %v3540 = vpop.f32.mrb[0].mxu0
        %v3541 = vadd.f32 %v3467, %v3540
        %3542 = vdwg.mxu0
        %v3543 = vand.u32 %v276, 4294901760
        %3544 = vmatprep.subr.mxu0 %v3543
        %v3545 = vand.u32 %v275, 4294901760
        %3546 = vmatpush1.msra.mxu0 %v3545
        %3547 = vmatprep.subr.mxu0 0.0
        %3548 = vmatpush1.msra.mxu0 0.0
        %3549 = vmatprep.subr.mxu0 0.0
        %3550 = vmatpush1.msra.mxu0 0.0
        %3551 = vmatprep.subr.mxu0 0.0
        %3552 = vmatpush1.msra.mxu0 0.0
        %3553 = vmatprep.subr.mxu0 0.0
        %3554 = vmatpush1.msra.mxu0 0.0
        %3555 = vmatprep.subr.mxu0 0.0
        %3556 = vmatpush1.msra.mxu0 0.0
        %3557 = vmatprep.subr.mxu0 0.0
        %3558 = vmatpush1.msra.mxu0 0.0
        %3559 = vmatprep.subr.mxu0 0.0
        %3560 = vmatpush1.msra.mxu0 0.0
        %3561 = vmatprep.subr.mxu0 0.0
        %3562 = vmatpush1.msra.mxu0 0.0
        %3563 = vmatprep.subr.mxu0 0.0
        %3564 = vmatpush1.msra.mxu0 0.0
        %3565 = vmatprep.subr.mxu0 0.0
        %3566 = vmatpush1.msra.mxu0 0.0
        %3567 = vmatprep.subr.mxu0 0.0
        %3568 = vmatpush1.msra.mxu0 0.0
        %3569 = vmatprep.subr.mxu0 0.0
        %3570 = vmatpush1.msra.mxu0 0.0
        %3571 = vmatprep.subr.mxu0 0.0
        %3572 = vmatpush1.msra.mxu0 0.0
        %3573 = vmatprep.subr.mxu0 0.0
        %3574 = vmatpush1.msra.mxu0 0.0
        %3575 = vmatprep.subr.mxu0 0.0
        %3576 = vmatpush1.msra.mxu0 0.0
        %3577 = vmatprep.subr.mxu0 0.0
        %3578 = vmatpush1.msra.mxu0 0.0
        %3579 = vmatprep.subr.mxu0 0.0
        %3580 = vmatpush1.msra.mxu0 0.0
        %3581 = vmatprep.subr.mxu0 0.0
        %3582 = vmatpush1.msra.mxu0 0.0
        %3583 = vmatprep.subr.mxu0 0.0
        %3584 = vmatpush1.msra.mxu0 0.0
        %3585 = vmatprep.subr.mxu0 0.0
        %3586 = vmatpush1.msra.mxu0 0.0
        %3587 = vmatprep.subr.mxu0 0.0
        %3588 = vmatpush1.msra.mxu0 0.0
        %3589 = vmatprep.subr.mxu0 0.0
        %3590 = vmatpush1.msra.mxu0 0.0
        %3591 = vmatprep.subr.mxu0 0.0
        %3592 = vmatpush1.msra.mxu0 0.0
        %3593 = vmatprep.subr.mxu0 0.0
        %3594 = vmatpush1.msra.mxu0 0.0
        %3595 = vmatprep.subr.mxu0 0.0
        %3596 = vmatpush1.msra.mxu0 0.0
        %3597 = vmatprep.subr.mxu0 0.0
        %3598 = vmatpush1.msra.mxu0 0.0
        %3599 = vmatprep.subr.mxu0 0.0
        %3600 = vmatpush1.msra.mxu0 0.0
        %3601 = vmatprep.subr.mxu0 0.0
        %3602 = vmatpush1.msra.mxu0 0.0
        %3603 = vmatprep.subr.mxu0 0.0
        %3604 = vmatpush1.msra.mxu0 0.0
        %3605 = vmatprep.subr.mxu0 0.0
        %3606 = vmatpush1.msra.mxu0 0.0
        %3607 = vmatprep.subr.mxu0 0.0
        %3608 = vmatpush1.msra.mxu0 0.0
        %3609 = vmatprep.mubr.f32.mxu0 0.0
        %v3610 = vand.u32 %v286, 4294901760
        %v3611 = vsub.f32 %v286, %v3610
        %v3612 = vand.u32 %v3611, 4294901760
        %v3613 = vsub.f32 %v3611, %v3612
        %v3614 = vand.u32 %v3613, 4294901760
        %3615 = vmatmul.mubr.f32.gmra.mrb[0].mxu0 %v3614
        %v3616 = vpop.f32.mrb[0].mxu0
        %v3617 = vadd.f32 %v282, %v3616
        %v3618 = vpop.f32.mrb[0].mxu0
        %v3619 = vadd.f32 %v282, %v3618
        %3620 = vdwg.mxu0
        %v3621 = vand.u32 %v276, 4294901760
        %v3622 = vsub.f32 %v276, %v3621
        %v3623 = vand.u32 %v3622, 4294901760
        %v3624 = vsub.f32 %v3622, %v3623
        %v3625 = vand.u32 %v3624, 4294901760
        %3626 = vmatprep.subr.mxu0 %v3625
        %v3627 = vand.u32 %v275, 4294901760
        %v3628 = vsub.f32 %v275, %v3627
        %v3629 = vand.u32 %v3628, 4294901760
        %v3630 = vsub.f32 %v3628, %v3629
        %v3631 = vand.u32 %v3630, 4294901760
        %3632 = vmatpush1.msra.mxu0 %v3631
        %3633 = vmatprep.subr.mxu0 0.0
        %3634 = vmatpush1.msra.mxu0 0.0
        %3635 = vmatprep.subr.mxu0 0.0
        %3636 = vmatpush1.msra.mxu0 0.0
        %3637 = vmatprep.subr.mxu0 0.0
        %3638 = vmatpush1.msra.mxu0 0.0
        %3639 = vmatprep.subr.mxu0 0.0
        %3640 = vmatpush1.msra.mxu0 0.0
        %3641 = vmatprep.subr.mxu0 0.0
        %3642 = vmatpush1.msra.mxu0 0.0
        %3643 = vmatprep.subr.mxu0 0.0
        %3644 = vmatpush1.msra.mxu0 0.0
        %3645 = vmatprep.subr.mxu0 0.0
        %3646 = vmatpush1.msra.mxu0 0.0
        %3647 = vmatprep.subr.mxu0 0.0
        %3648 = vmatpush1.msra.mxu0 0.0
        %3649 = vmatprep.subr.mxu0 0.0
        %3650 = vmatpush1.msra.mxu0 0.0
        %3651 = vmatprep.subr.mxu0 0.0
        %3652 = vmatpush1.msra.mxu0 0.0
        %3653 = vmatprep.subr.mxu0 0.0
        %3654 = vmatpush1.msra.mxu0 0.0
        %3655 = vmatprep.subr.mxu0 0.0
        %3656 = vmatpush1.msra.mxu0 0.0
        %3657 = vmatprep.subr.mxu0 0.0
        %3658 = vmatpush1.msra.mxu0 0.0
        %3659 = vmatprep.subr.mxu0 0.0
        %3660 = vmatpush1.msra.mxu0 0.0
        %3661 = vmatprep.subr.mxu0 0.0
        %3662 = vmatpush1.msra.mxu0 0.0
        %3663 = vmatprep.subr.mxu0 0.0
        %3664 = vmatpush1.msra.mxu0 0.0
        %3665 = vmatprep.subr.mxu0 0.0
        %3666 = vmatpush1.msra.mxu0 0.0
        %3667 = vmatprep.subr.mxu0 0.0
        %3668 = vmatpush1.msra.mxu0 0.0
        %3669 = vmatprep.subr.mxu0 0.0
        %3670 = vmatpush1.msra.mxu0 0.0
        %3671 = vmatprep.subr.mxu0 0.0
        %3672 = vmatpush1.msra.mxu0 0.0
        %3673 = vmatprep.subr.mxu0 0.0
        %3674 = vmatpush1.msra.mxu0 0.0
        %3675 = vmatprep.subr.mxu0 0.0
        %3676 = vmatpush1.msra.mxu0 0.0
        %3677 = vmatprep.subr.mxu0 0.0
        %3678 = vmatpush1.msra.mxu0 0.0
        %3679 = vmatprep.subr.mxu0 0.0
        %3680 = vmatpush1.msra.mxu0 0.0
        %3681 = vmatprep.subr.mxu0 0.0
        %3682 = vmatpush1.msra.mxu0 0.0
        %3683 = vmatprep.subr.mxu0 0.0
        %3684 = vmatpush1.msra.mxu0 0.0
        %3685 = vmatprep.subr.mxu0 0.0
        %3686 = vmatpush1.msra.mxu0 0.0
        %3687 = vmatprep.subr.mxu0 0.0
        %3688 = vmatpush1.msra.mxu0 0.0
        %3689 = vmatprep.subr.mxu0 0.0
        %3690 = vmatpush1.msra.mxu0 0.0
        %3691 = vmatprep.subr.mxu0 0.0
        %3692 = vmatpush1.msra.mxu0 0.0
        %3693 = vmatprep.subr.mxu0 0.0
        %3694 = vmatpush1.msra.mxu0 0.0
        %3695 = vmatprep.mubr.f32.mxu0 0.0
        %v3696 = vand.u32 %v286, 4294901760
        %3697 = vmatmul.mubr.f32.gmra.mrb[0].mxu0 %v3696
        %v3698 = vpop.f32.mrb[0].mxu0
        %v3699 = vadd.f32 %v3617, %v3698
        %v3700 = vpop.f32.mrb[0].mxu0
        %v3701 = vadd.f32 %v3619, %v3700
        %3702 = vdwg.mxu0
        %v3703 = vand.u32 %v276, 4294901760
        %v3704 = vsub.f32 %v276, %v3703
        %3705 = vmatprep.subr.mxu0 %v3704
        %v3706 = vand.u32 %v275, 4294901760
        %v3707 = vsub.f32 %v275, %v3706
        %3708 = vmatpush1.msra.mxu0 %v3707
        %3709 = vmatprep.subr.mxu0 0.0
        %3710 = vmatpush1.msra.mxu0 0.0
        %3711 = vmatprep.subr.mxu0 0.0
        %3712 = vmatpush1.msra.mxu0 0.0
        %3713 = vmatprep.subr.mxu0 0.0
        %3714 = vmatpush1.msra.mxu0 0.0
        %3715 = vmatprep.subr.mxu0 0.0
        %3716 = vmatpush1.msra.mxu0 0.0
        %3717 = vmatprep.subr.mxu0 0.0
        %3718 = vmatpush1.msra.mxu0 0.0
        %3719 = vmatprep.subr.mxu0 0.0
        %3720 = vmatpush1.msra.mxu0 0.0
        %3721 = vmatprep.subr.mxu0 0.0
        %3722 = vmatpush1.msra.mxu0 0.0
        %3723 = vmatprep.subr.mxu0 0.0
        %3724 = vmatpush1.msra.mxu0 0.0
        %3725 = vmatprep.subr.mxu0 0.0
        %3726 = vmatpush1.msra.mxu0 0.0
        %3727 = vmatprep.subr.mxu0 0.0
        %3728 = vmatpush1.msra.mxu0 0.0
        %3729 = vmatprep.subr.mxu0 0.0
        %3730 = vmatpush1.msra.mxu0 0.0
        %3731 = vmatprep.subr.mxu0 0.0
        %3732 = vmatpush1.msra.mxu0 0.0
        %3733 = vmatprep.subr.mxu0 0.0
        %3734 = vmatpush1.msra.mxu0 0.0
        %3735 = vmatprep.subr.mxu0 0.0
        %3736 = vmatpush1.msra.mxu0 0.0
        %3737 = vmatprep.subr.mxu0 0.0
        %3738 = vmatpush1.msra.mxu0 0.0
        %3739 = vmatprep.subr.mxu0 0.0
        %3740 = vmatpush1.msra.mxu0 0.0
        %3741 = vmatprep.subr.mxu0 0.0
        %3742 = vmatpush1.msra.mxu0 0.0
        %3743 = vmatprep.subr.mxu0 0.0
        %3744 = vmatpush1.msra.mxu0 0.0
        %3745 = vmatprep.subr.mxu0 0.0
        %3746 = vmatpush1.msra.mxu0 0.0
        %3747 = vmatprep.subr.mxu0 0.0
        %3748 = vmatpush1.msra.mxu0 0.0
        %3749 = vmatprep.subr.mxu0 0.0
        %3750 = vmatpush1.msra.mxu0 0.0
        %3751 = vmatprep.subr.mxu0 0.0
        %3752 = vmatpush1.msra.mxu0 0.0
        %3753 = vmatprep.subr.mxu0 0.0
        %3754 = vmatpush1.msra.mxu0 0.0
        %3755 = vmatprep.subr.mxu0 0.0
        %3756 = vmatpush1.msra.mxu0 0.0
        %3757 = vmatprep.subr.mxu0 0.0
        %3758 = vmatpush1.msra.mxu0 0.0
        %3759 = vmatprep.subr.mxu0 0.0
        %3760 = vmatpush1.msra.mxu0 0.0
        %3761 = vmatprep.subr.mxu0 0.0
        %3762 = vmatpush1.msra.mxu0 0.0
        %3763 = vmatprep.subr.mxu0 0.0
        %3764 = vmatpush1.msra.mxu0 0.0
        %3765 = vmatprep.subr.mxu0 0.0
        %3766 = vmatpush1.msra.mxu0 0.0
        %3767 = vmatprep.subr.mxu0 0.0
        %3768 = vmatpush1.msra.mxu0 0.0
        %3769 = vmatprep.subr.mxu0 0.0
        %3770 = vmatpush1.msra.mxu0 0.0
        %3771 = vmatprep.mubr.f32.mxu0 0.0
        %v3772 = vand.u32 %v286, 4294901760
        %v3773 = vsub.f32 %v286, %v3772
        %3774 = vmatmul.mubr.f32.gmra.mrb[0].mxu0 %v3773
        %v3775 = vpop.f32.mrb[0].mxu0
        %v3776 = vadd.f32 %v3699, %v3775
        %v3777 = vpop.f32.mrb[0].mxu0
        %v3778 = vadd.f32 %v3701, %v3777
        %3779 = vdwg.mxu0
        %v3780 = vand.u32 %v276, 4294901760
        %3781 = vmatprep.subr.mxu0 %v3780
        %v3782 = vand.u32 %v275, 4294901760
        %3783 = vmatpush1.msra.mxu0 %v3782
        %3784 = vmatprep.subr.mxu0 0.0
        %3785 = vmatpush1.msra.mxu0 0.0
        %3786 = vmatprep.subr.mxu0 0.0
        %3787 = vmatpush1.msra.mxu0 0.0
        %3788 = vmatprep.subr.mxu0 0.0
        %3789 = vmatpush1.msra.mxu0 0.0
        %3790 = vmatprep.subr.mxu0 0.0
        %3791 = vmatpush1.msra.mxu0 0.0
        %3792 = vmatprep.subr.mxu0 0.0
        %3793 = vmatpush1.msra.mxu0 0.0
        %3794 = vmatprep.subr.mxu0 0.0
        %3795 = vmatpush1.msra.mxu0 0.0
        %3796 = vmatprep.subr.mxu0 0.0
        %3797 = vmatpush1.msra.mxu0 0.0
        %3798 = vmatprep.subr.mxu0 0.0
        %3799 = vmatpush1.msra.mxu0 0.0
        %3800 = vmatprep.subr.mxu0 0.0
        %3801 = vmatpush1.msra.mxu0 0.0
        %3802 = vmatprep.subr.mxu0 0.0
        %3803 = vmatpush1.msra.mxu0 0.0
        %3804 = vmatprep.subr.mxu0 0.0
        %3805 = vmatpush1.msra.mxu0 0.0
        %3806 = vmatprep.subr.mxu0 0.0
        %3807 = vmatpush1.msra.mxu0 0.0
        %3808 = vmatprep.subr.mxu0 0.0
        %3809 = vmatpush1.msra.mxu0 0.0
        %3810 = vmatprep.subr.mxu0 0.0
        %3811 = vmatpush1.msra.mxu0 0.0
        %3812 = vmatprep.subr.mxu0 0.0
        %3813 = vmatpush1.msra.mxu0 0.0
        %3814 = vmatprep.subr.mxu0 0.0
        %3815 = vmatpush1.msra.mxu0 0.0
        %3816 = vmatprep.subr.mxu0 0.0
        %3817 = vmatpush1.msra.mxu0 0.0
        %3818 = vmatprep.subr.mxu0 0.0
        %3819 = vmatpush1.msra.mxu0 0.0
        %3820 = vmatprep.subr.mxu0 0.0
        %3821 = vmatpush1.msra.mxu0 0.0
        %3822 = vmatprep.subr.mxu0 0.0
        %3823 = vmatpush1.msra.mxu0 0.0
        %3824 = vmatprep.subr.mxu0 0.0
        %3825 = vmatpush1.msra.mxu0 0.0
        %3826 = vmatprep.subr.mxu0 0.0
        %3827 = vmatpush1.msra.mxu0 0.0
        %3828 = vmatprep.subr.mxu0 0.0
        %3829 = vmatpush1.msra.mxu0 0.0
        %3830 = vmatprep.subr.mxu0 0.0
        %3831 = vmatpush1.msra.mxu0 0.0
        %3832 = vmatprep.subr.mxu0 0.0
        %3833 = vmatpush1.msra.mxu0 0.0
        %3834 = vmatprep.subr.mxu0 0.0
        %3835 = vmatpush1.msra.mxu0 0.0
        %3836 = vmatprep.subr.mxu0 0.0
        %3837 = vmatpush1.msra.mxu0 0.0
        %3838 = vmatprep.subr.mxu0 0.0
        %3839 = vmatpush1.msra.mxu0 0.0
        %3840 = vmatprep.subr.mxu0 0.0
        %3841 = vmatpush1.msra.mxu0 0.0
        %3842 = vmatprep.subr.mxu0 0.0
        %3843 = vmatpush1.msra.mxu0 0.0
        %3844 = vmatprep.subr.mxu0 0.0
        %3845 = vmatpush1.msra.mxu0 0.0
        %3846 = vmatprep.mubr.f32.mxu0 0.0
        %v3847 = vand.u32 %v286, 4294901760
        %v3848 = vsub.f32 %v286, %v3847
        %v3849 = vand.u32 %v3848, 4294901760
        %3850 = vmatmul.mubr.f32.gmra.mrb[0].mxu0 %v3849
        %v3851 = vpop.f32.mrb[0].mxu0
        %v3852 = vadd.f32 %v3776, %v3851
        %v3853 = vpop.f32.mrb[0].mxu0
        %v3854 = vadd.f32 %v3778, %v3853
        %3855 = vdwg.mxu0
        %v3856 = vand.u32 %v276, 4294901760
        %v3857 = vsub.f32 %v276, %v3856
        %v3858 = vand.u32 %v3857, 4294901760
        %3859 = vmatprep.subr.mxu0 %v3858
        %v3860 = vand.u32 %v275, 4294901760
        %v3861 = vsub.f32 %v275, %v3860
        %v3862 = vand.u32 %v3861, 4294901760
        %3863 = vmatpush1.msra.mxu0 %v3862
        %3864 = vmatprep.subr.mxu0 0.0
        %3865 = vmatpush1.msra.mxu0 0.0
        %3866 = vmatprep.subr.mxu0 0.0
        %3867 = vmatpush1.msra.mxu0 0.0
        %3868 = vmatprep.subr.mxu0 0.0
        %3869 = vmatpush1.msra.mxu0 0.0
        %3870 = vmatprep.subr.mxu0 0.0
        %3871 = vmatpush1.msra.mxu0 0.0
        %3872 = vmatprep.subr.mxu0 0.0
        %3873 = vmatpush1.msra.mxu0 0.0
        %3874 = vmatprep.subr.mxu0 0.0
        %3875 = vmatpush1.msra.mxu0 0.0
        %3876 = vmatprep.subr.mxu0 0.0
        %3877 = vmatpush1.msra.mxu0 0.0
        %3878 = vmatprep.subr.mxu0 0.0
        %3879 = vmatpush1.msra.mxu0 0.0
        %3880 = vmatprep.subr.mxu0 0.0
        %3881 = vmatpush1.msra.mxu0 0.0
        %3882 = vmatprep.subr.mxu0 0.0
        %3883 = vmatpush1.msra.mxu0 0.0
        %3884 = vmatprep.subr.mxu0 0.0
        %3885 = vmatpush1.msra.mxu0 0.0
        %3886 = vmatprep.subr.mxu0 0.0
        %3887 = vmatpush1.msra.mxu0 0.0
        %3888 = vmatprep.subr.mxu0 0.0
        %3889 = vmatpush1.msra.mxu0 0.0
        %3890 = vmatprep.subr.mxu0 0.0
        %3891 = vmatpush1.msra.mxu0 0.0
        %3892 = vmatprep.subr.mxu0 0.0
        %3893 = vmatpush1.msra.mxu0 0.0
        %3894 = vmatprep.subr.mxu0 0.0
        %3895 = vmatpush1.msra.mxu0 0.0
        %3896 = vmatprep.subr.mxu0 0.0
        %3897 = vmatpush1.msra.mxu0 0.0
        %3898 = vmatprep.subr.mxu0 0.0
        %3899 = vmatpush1.msra.mxu0 0.0
        %3900 = vmatprep.subr.mxu0 0.0
        %3901 = vmatpush1.msra.mxu0 0.0
        %3902 = vmatprep.subr.mxu0 0.0
        %3903 = vmatpush1.msra.mxu0 0.0
        %3904 = vmatprep.subr.mxu0 0.0
        %3905 = vmatpush1.msra.mxu0 0.0
        %3906 = vmatprep.subr.mxu0 0.0
        %3907 = vmatpush1.msra.mxu0 0.0
        %3908 = vmatprep.subr.mxu0 0.0
        %3909 = vmatpush1.msra.mxu0 0.0
        %3910 = vmatprep.subr.mxu0 0.0
        %3911 = vmatpush1.msra.mxu0 0.0
        %3912 = vmatprep.subr.mxu0 0.0
        %3913 = vmatpush1.msra.mxu0 0.0
        %3914 = vmatprep.subr.mxu0 0.0
        %3915 = vmatpush1.msra.mxu0 0.0
        %3916 = vmatprep.subr.mxu0 0.0
        %3917 = vmatpush1.msra.mxu0 0.0
        %3918 = vmatprep.subr.mxu0 0.0
        %3919 = vmatpush1.msra.mxu0 0.0
        %3920 = vmatprep.subr.mxu0 0.0
        %3921 = vmatpush1.msra.mxu0 0.0
        %3922 = vmatprep.subr.mxu0 0.0
        %3923 = vmatpush1.msra.mxu0 0.0
        %3924 = vmatprep.subr.mxu0 0.0
        %3925 = vmatpush1.msra.mxu0 0.0
        %3926 = vmatprep.mubr.f32.mxu0 0.0
        %v3927 = vand.u32 %v286, 4294901760
        %3928 = vmatmul.mubr.f32.gmra.mrb[0].mxu0 %v3927
        %v3929 = vpop.f32.mrb[0].mxu0
        %v3930 = vadd.f32 %v3852, %v3929
        %v3931 = vpop.f32.mrb[0].mxu0
        %v3932 = vadd.f32 %v3854, %v3931
        %3933 = vdwg.mxu0
        %v3934 = vand.u32 %v276, 4294901760
        %3935 = vmatprep.subr.mxu0 %v3934
        %v3936 = vand.u32 %v275, 4294901760
        %3937 = vmatpush1.msra.mxu0 %v3936
        %3938 = vmatprep.subr.mxu0 0.0
        %3939 = vmatpush1.msra.mxu0 0.0
        %3940 = vmatprep.subr.mxu0 0.0
        %3941 = vmatpush1.msra.mxu0 0.0
        %3942 = vmatprep.subr.mxu0 0.0
        %3943 = vmatpush1.msra.mxu0 0.0
        %3944 = vmatprep.subr.mxu0 0.0
        %3945 = vmatpush1.msra.mxu0 0.0
        %3946 = vmatprep.subr.mxu0 0.0
        %3947 = vmatpush1.msra.mxu0 0.0
        %3948 = vmatprep.subr.mxu0 0.0
        %3949 = vmatpush1.msra.mxu0 0.0
        %3950 = vmatprep.subr.mxu0 0.0
        %3951 = vmatpush1.msra.mxu0 0.0
        %3952 = vmatprep.subr.mxu0 0.0
        %3953 = vmatpush1.msra.mxu0 0.0
        %3954 = vmatprep.subr.mxu0 0.0
        %3955 = vmatpush1.msra.mxu0 0.0
        %3956 = vmatprep.subr.mxu0 0.0
        %3957 = vmatpush1.msra.mxu0 0.0
        %3958 = vmatprep.subr.mxu0 0.0
        %3959 = vmatpush1.msra.mxu0 0.0
        %3960 = vmatprep.subr.mxu0 0.0
        %3961 = vmatpush1.msra.mxu0 0.0
        %3962 = vmatprep.subr.mxu0 0.0
        %3963 = vmatpush1.msra.mxu0 0.0
        %3964 = vmatprep.subr.mxu0 0.0
        %3965 = vmatpush1.msra.mxu0 0.0
        %3966 = vmatprep.subr.mxu0 0.0
        %3967 = vmatpush1.msra.mxu0 0.0
        %3968 = vmatprep.subr.mxu0 0.0
        %3969 = vmatpush1.msra.mxu0 0.0
        %3970 = vmatprep.subr.mxu0 0.0
        %3971 = vmatpush1.msra.mxu0 0.0
        %3972 = vmatprep.subr.mxu0 0.0
        %3973 = vmatpush1.msra.mxu0 0.0
        %3974 = vmatprep.subr.mxu0 0.0
        %3975 = vmatpush1.msra.mxu0 0.0
        %3976 = vmatprep.subr.mxu0 0.0
        %3977 = vmatpush1.msra.mxu0 0.0
        %3978 = vmatprep.subr.mxu0 0.0
        %3979 = vmatpush1.msra.mxu0 0.0
        %3980 = vmatprep.subr.mxu0 0.0
        %3981 = vmatpush1.msra.mxu0 0.0
        %3982 = vmatprep.subr.mxu0 0.0
        %3983 = vmatpush1.msra.mxu0 0.0
        %3984 = vmatprep.subr.mxu0 0.0
        %3985 = vmatpush1.msra.mxu0 0.0
        %3986 = vmatprep.subr.mxu0 0.0
        %3987 = vmatpush1.msra.mxu0 0.0
        %3988 = vmatprep.subr.mxu0 0.0
        %3989 = vmatpush1.msra.mxu0 0.0
        %3990 = vmatprep.subr.mxu0 0.0
        %3991 = vmatpush1.msra.mxu0 0.0
        %3992 = vmatprep.subr.mxu0 0.0
        %3993 = vmatpush1.msra.mxu0 0.0
        %3994 = vmatprep.subr.mxu0 0.0
        %3995 = vmatpush1.msra.mxu0 0.0
        %3996 = vmatprep.subr.mxu0 0.0
        %3997 = vmatpush1.msra.mxu0 0.0
        %3998 = vmatprep.subr.mxu0 0.0
        %3999 = vmatpush1.msra.mxu0 0.0
        %4000 = vmatprep.mubr.f32.mxu0 0.0
        %v4001 = vand.u32 %v286, 4294901760
        %4002 = vmatmul.mubr.f32.gmra.mrb[0].mxu0 %v4001
        %v4003 = vpop.f32.mrb[0].mxu0
        %v4004 = vadd.f32 %v3930, %v4003
        %v4005 = vpop.f32.mrb[0].mxu0
        %v4006 = vadd.f32 %v3932, %v4005
        %4007 = vdwg.mxu0
        %vm4008 = vcmp.gt.f32.partialorder %v749, 0.0
        %vm4009 = vcmp.gt.f32.partialorder %v751, 0.0
        %vm4010 = vcmp.gt.f32.partialorder %v1214, 0.0
        %vm4011 = vcmp.gt.f32.partialorder %v1216, 0.0
        %vm4012 = vcmp.gt.f32.partialorder %v1679, 0.0
        %vm4013 = vcmp.gt.f32.partialorder %v1681, 0.0
        %vm4014 = vcmp.gt.f32.partialorder %v2144, 0.0
        %vm4015 = vcmp.gt.f32.partialorder %v2146, 0.0
        %vm4016 = vcmp.gt.f32.partialorder %v2609, 0.0
        %vm4017 = vcmp.gt.f32.partialorder %v2611, 0.0
        %vm4018 = vcmp.gt.f32.partialorder %v3074, 0.0
        %vm4019 = vcmp.gt.f32.partialorder %v3076, 0.0
        %vm4020 = vcmp.gt.f32.partialorder %v3539, 0.0
        %vm4021 = vcmp.gt.f32.partialorder %v3541, 0.0
        %vm4022 = vcmp.gt.f32.partialorder %v4004, 0.0
        %vm4023 = vcmp.gt.f32.partialorder %v4006, 0.0
        %v4024 = vmul.f32 %v749, 0.01
        %v4025 = vmul.f32 %v751, 0.01
        %v4026 = vmul.f32 %v1214, 0.01
        %v4027 = vmul.f32 %v1216, 0.01
        %v4028 = vmul.f32 %v1679, 0.01
        %v4029 = vmul.f32 %v1681, 0.01
        %v4030 = vmul.f32 %v2144, 0.01
        %v4031 = vmul.f32 %v2146, 0.01
        %v4032 = vmul.f32 %v2609, 0.01
        %v4033 = vmul.f32 %v2611, 0.01
        %v4034 = vmul.f32 %v3074, 0.01
        %v4035 = vmul.f32 %v3076, 0.01
        %v4036 = vmul.f32 %v3539, 0.01
        %v4037 = vmul.f32 %v3541, 0.01
        %v4038 = vmul.f32 %v4004, 0.01
        %v4039 = vmul.f32 %v4006, 0.01
        %v4040 = vsel %vm4008, %v749, %v4024
        %v4041 = vsel %vm4009, %v751, %v4025
        %v4042 = vsel %vm4010, %v1214, %v4026
        %v4043 = vsel %vm4011, %v1216, %v4027
        %v4044 = vsel %vm4012, %v1679, %v4028
        %v4045 = vsel %vm4013, %v1681, %v4029
        %v4046 = vsel %vm4014, %v2144, %v4030
        %v4047 = vsel %vm4015, %v2146, %v4031
        %v4048 = vsel %vm4016, %v2609, %v4032
        %v4049 = vsel %vm4017, %v2611, %v4033
        %v4050 = vsel %vm4018, %v3074, %v4034
        %v4051 = vsel %vm4019, %v3076, %v4035
        %v4052 = vsel %vm4020, %v3539, %v4036
        %v4053 = vsel %vm4021, %v3541, %v4037
        %v4054 = vsel %vm4022, %v4004, %v4038
        %v4055 = vsel %vm4023, %v4006, %v4039
        %v4056 = vld [vmem:[%s3] sm:$0xff]
        %v4057 = vld [vmem:[%s4] sm:$0xff]
        %4059 = vset.pattern.permute.xlu0 0
        %4060 = vperm.xlu0 %4059, %v4057
        %v4061 = vpop.permute.xlu0 %4060
        %v4064 = vsel %vm284, %v4056, 0
        %v4066 = vand.u32 %v4041, 4294901760
        %4067 = vmatprep.subr.mxu0 %v4066
        %v4068 = vand.u32 %v4040, 4294901760
        %4069 = vmatpush1.msra.mxu0 %v4068
        %4070 = vmatprep.subr.mxu0 0.0
        %4071 = vmatpush1.msra.mxu0 0.0
        %4072 = vmatprep.subr.mxu0 0.0
        %4073 = vmatpush1.msra.mxu0 0.0
        %4074 = vmatprep.subr.mxu0 0.0
        %4075 = vmatpush1.msra.mxu0 0.0
        %4076 = vmatprep.subr.mxu0 0.0
        %4077 = vmatpush1.msra.mxu0 0.0
        %4078 = vmatprep.subr.mxu0 0.0
        %4079 = vmatpush1.msra.mxu0 0.0
        %4080 = vmatprep.subr.mxu0 0.0
        %4081 = vmatpush1.msra.mxu0 0.0
        %4082 = vmatprep.subr.mxu0 0.0
        %4083 = vmatpush1.msra.mxu0 0.0
        %4084 = vmatprep.subr.mxu0 0.0
        %4085 = vmatpush1.msra.mxu0 0.0
        %4086 = vmatprep.subr.mxu0 0.0
        %4087 = vmatpush1.msra.mxu0 0.0
        %4088 = vmatprep.subr.mxu0 0.0
        %4089 = vmatpush1.msra.mxu0 0.0
        %4090 = vmatprep.subr.mxu0 0.0
        %4091 = vmatpush1.msra.mxu0 0.0
        %4092 = vmatprep.subr.mxu0 0.0
        %4093 = vmatpush1.msra.mxu0 0.0
        %4094 = vmatprep.subr.mxu0 0.0
        %4095 = vmatpush1.msra.mxu0 0.0
        %4096 = vmatprep.subr.mxu0 0.0
        %4097 = vmatpush1.msra.mxu0 0.0
        %4098 = vmatprep.subr.mxu0 0.0
        %4099 = vmatpush1.msra.mxu0 0.0
        %4100 = vmatprep.subr.mxu0 0.0
        %4101 = vmatpush1.msra.mxu0 0.0
        %4102 = vmatprep.subr.mxu0 0.0
        %4103 = vmatpush1.msra.mxu0 0.0
        %4104 = vmatprep.subr.mxu0 0.0
        %4105 = vmatpush1.msra.mxu0 0.0
        %4106 = vmatprep.subr.mxu0 0.0
        %4107 = vmatpush1.msra.mxu0 0.0
        %4108 = vmatprep.subr.mxu0 0.0
        %4109 = vmatpush1.msra.mxu0 0.0
        %4110 = vmatprep.subr.mxu0 0.0
        %4111 = vmatpush1.msra.mxu0 0.0
        %4112 = vmatprep.subr.mxu0 0.0
        %4113 = vmatpush1.msra.mxu0 0.0
        %4114 = vmatprep.subr.mxu0 0.0
        %4115 = vmatpush1.msra.mxu0 0.0
        %4116 = vmatprep.subr.mxu0 0.0
        %4117 = vmatpush1.msra.mxu0 0.0
        %4118 = vmatprep.subr.mxu0 0.0
        %4119 = vmatpush1.msra.mxu0 0.0
        %4120 = vmatprep.subr.mxu0 0.0
        %4121 = vmatpush1.msra.mxu0 0.0
        %4122 = vmatprep.subr.mxu0 0.0
        %4123 = vmatpush1.msra.mxu0 0.0
        %4124 = vmatprep.subr.mxu0 0.0
        %4125 = vmatpush1.msra.mxu0 0.0
        %4126 = vmatprep.subr.mxu0 0.0
        %4127 = vmatpush1.msra.mxu0 0.0
        %4128 = vmatprep.subr.mxu0 0.0
        %4129 = vmatpush1.msra.mxu0 0.0
        %4130 = vmatprep.subr.mxu0 0.0
        %4131 = vmatpush1.msra.mxu0 0.0
        %4132 = vmatprep.mubr.f32.mxu0 0.0
        %v4133 = vand.u32 %v4064, 4294901760
        %v4134 = vsub.f32 %v4064, %v4133
        %v4135 = vand.u32 %v4134, 4294901760
        %v4136 = vsub.f32 %v4134, %v4135
        %v4137 = vand.u32 %v4136, 4294901760
        %4138 = vmatmul.mubr.f32.gmra.mrb[0].mxu0 %v4137
        %v4139 = vpop.f32.mrb[0].mxu0
        %v4140 = vadd.f32 %v4061, %v4139
        %v4141 = vpop.f32.mrb[0].mxu0
        %v4142 = vadd.f32 %v4061, %v4141
        %4143 = vdwg.mxu0
        %v4144 = vand.u32 %v4041, 4294901760
        %v4145 = vsub.f32 %v4041, %v4144
        %v4146 = vand.u32 %v4145, 4294901760
        %v4147 = vsub.f32 %v4145, %v4146
        %v4148 = vand.u32 %v4147, 4294901760
        %4149 = vmatprep.subr.mxu0 %v4148
        %v4150 = vand.u32 %v4040, 4294901760
        %v4151 = vsub.f32 %v4040, %v4150
        %v4152 = vand.u32 %v4151, 4294901760
        %v4153 = vsub.f32 %v4151, %v4152
        %v4154 = vand.u32 %v4153, 4294901760
        %4155 = vmatpush1.msra.mxu0 %v4154
        %4156 = vmatprep.subr.mxu0 0.0
        %4157 = vmatpush1.msra.mxu0 0.0
        %4158 = vmatprep.subr.mxu0 0.0
        %4159 = vmatpush1.msra.mxu0 0.0
        %4160 = vmatprep.subr.mxu0 0.0
        %4161 = vmatpush1.msra.mxu0 0.0
        %4162 = vmatprep.subr.mxu0 0.0
        %4163 = vmatpush1.msra.mxu0 0.0
        %4164 = vmatprep.subr.mxu0 0.0
        %4165 = vmatpush1.msra.mxu0 0.0
        %4166 = vmatprep.subr.mxu0 0.0
        %4167 = vmatpush1.msra.mxu0 0.0
        %4168 = vmatprep.subr.mxu0 0.0
        %4169 = vmatpush1.msra.mxu0 0.0
        %4170 = vmatprep.subr.mxu0 0.0
        %4171 = vmatpush1.msra.mxu0 0.0
        %4172 = vmatprep.subr.mxu0 0.0
        %4173 = vmatpush1.msra.mxu0 0.0
        %4174 = vmatprep.subr.mxu0 0.0
        %4175 = vmatpush1.msra.mxu0 0.0
        %4176 = vmatprep.subr.mxu0 0.0
        %4177 = vmatpush1.msra.mxu0 0.0
        %4178 = vmatprep.subr.mxu0 0.0
        %4179 = vmatpush1.msra.mxu0 0.0
        %4180 = vmatprep.subr.mxu0 0.0
        %4181 = vmatpush1.msra.mxu0 0.0
        %4182 = vmatprep.subr.mxu0 0.0
        %4183 = vmatpush1.msra.mxu0 0.0
        %4184 = vmatprep.subr.mxu0 0.0
        %4185 = vmatpush1.msra.mxu0 0.0
        %4186 = vmatprep.subr.mxu0 0.0
        %4187 = vmatpush1.msra.mxu0 0.0
        %4188 = vmatprep.subr.mxu0 0.0
        %4189 = vmatpush1.msra.mxu0 0.0
        %4190 = vmatprep.subr.mxu0 0.0
        %4191 = vmatpush1.msra.mxu0 0.0
        %4192 = vmatprep.subr.mxu0 0.0
        %4193 = vmatpush1.msra.mxu0 0.0
        %4194 = vmatprep.subr.mxu0 0.0
        %4195 = vmatpush1.msra.mxu0 0.0
        %4196 = vmatprep.subr.mxu0 0.0
        %4197 = vmatpush1.msra.mxu0 0.0
        %4198 = vmatprep.subr.mxu0 0.0
        %4199 = vmatpush1.msra.mxu0 0.0
        %4200 = vmatprep.subr.mxu0 0.0
        %4201 = vmatpush1.msra.mxu0 0.0
        %4202 = vmatprep.subr.mxu0 0.0
        %4203 = vmatpush1.msra.mxu0 0.0
        %4204 = vmatprep.subr.mxu0 0.0
        %4205 = vmatpush1.msra.mxu0 0.0
        %4206 = vmatprep.subr.mxu0 0.0
        %4207 = vmatpush1.msra.mxu0 0.0
        %4208 = vmatprep.subr.mxu0 0.0
        %4209 = vmatpush1.msra.mxu0 0.0
        %4210 = vmatprep.subr.mxu0 0.0
        %4211 = vmatpush1.msra.mxu0 0.0
        %4212 = vmatprep.subr.mxu0 0.0
        %4213 = vmatpush1.msra.mxu0 0.0
        %4214 = vmatprep.subr.mxu0 0.0
        %4215 = vmatpush1.msra.mxu0 0.0
        %4216 = vmatprep.subr.mxu0 0.0
        %4217 = vmatpush1.msra.mxu0 0.0
        %4218 = vmatprep.mubr.f32.mxu0 0.0
        %v4219 = vand.u32 %v4064, 4294901760
        %4220 = vmatmul.mubr.f32.gmra.mrb[0].mxu0 %v4219
        %v4221 = vpop.f32.mrb[0].mxu0
        %v4222 = vadd.f32 %v4140, %v4221
        %v4223 = vpop.f32.mrb[0].mxu0
        %v4224 = vadd.f32 %v4142, %v4223
        %4225 = vdwg.mxu0
        %v4226 = vand.u32 %v4041, 4294901760
        %v4227 = vsub.f32 %v4041, %v4226
        %4228 = vmatprep.subr.mxu0 %v4227
        %v4229 = vand.u32 %v4040, 4294901760
        %v4230 = vsub.f32 %v4040, %v4229
        %4231 = vmatpush1.msra.mxu0 %v4230
        %4232 = vmatprep.subr.mxu0 0.0
        %4233 = vmatpush1.msra.mxu0 0.0
        %4234 = vmatprep.subr.mxu0 0.0
        %4235 = vmatpush1.msra.mxu0 0.0
        %4236 = vmatprep.subr.mxu0 0.0
        %4237 = vmatpush1.msra.mxu0 0.0
        %4238 = vmatprep.subr.mxu0 0.0
        %4239 = vmatpush1.msra.mxu0 0.0
        %4240 = vmatprep.subr.mxu0 0.0
        %4241 = vmatpush1.msra.mxu0 0.0
        %4242 = vmatprep.subr.mxu0 0.0
        %4243 = vmatpush1.msra.mxu0 0.0
        %4244 = vmatprep.subr.mxu0 0.0
        %4245 = vmatpush1.msra.mxu0 0.0
        %4246 = vmatprep.subr.mxu0 0.0
        %4247 = vmatpush1.msra.mxu0 0.0
        %4248 = vmatprep.subr.mxu0 0.0
        %4249 = vmatpush1.msra.mxu0 0.0
        %4250 = vmatprep.subr.mxu0 0.0
        %4251 = vmatpush1.msra.mxu0 0.0
        %4252 = vmatprep.subr.mxu0 0.0
        %4253 = vmatpush1.msra.mxu0 0.0
        %4254 = vmatprep.subr.mxu0 0.0
        %4255 = vmatpush1.msra.mxu0 0.0
        %4256 = vmatprep.subr.mxu0 0.0
        %4257 = vmatpush1.msra.mxu0 0.0
        %4258 = vmatprep.subr.mxu0 0.0
        %4259 = vmatpush1.msra.mxu0 0.0
        %4260 = vmatprep.subr.mxu0 0.0
        %4261 = vmatpush1.msra.mxu0 0.0
        %4262 = vmatprep.subr.mxu0 0.0
        %4263 = vmatpush1.msra.mxu0 0.0
        %4264 = vmatprep.subr.mxu0 0.0
        %4265 = vmatpush1.msra.mxu0 0.0
        %4266 = vmatprep.subr.mxu0 0.0
        %4267 = vmatpush1.msra.mxu0 0.0
        %4268 = vmatprep.subr.mxu0 0.0
        %4269 = vmatpush1.msra.mxu0 0.0
        %4270 = vmatprep.subr.mxu0 0.0
        %4271 = vmatpush1.msra.mxu0 0.0
        %4272 = vmatprep.subr.mxu0 0.0
        %4273 = vmatpush1.msra.mxu0 0.0
        %4274 = vmatprep.subr.mxu0 0.0
        %4275 = vmatpush1.msra.mxu0 0.0
        %4276 = vmatprep.subr.mxu0 0.0
        %4277 = vmatpush1.msra.mxu0 0.0
        %4278 = vmatprep.subr.mxu0 0.0
        %4279 = vmatpush1.msra.mxu0 0.0
        %4280 = vmatprep.subr.mxu0 0.0
        %4281 = vmatpush1.msra.mxu0 0.0
        %4282 = vmatprep.subr.mxu0 0.0
        %4283 = vmatpush1.msra.mxu0 0.0
        %4284 = vmatprep.subr.mxu0 0.0
        %4285 = vmatpush1.msra.mxu0 0.0
        %4286 = vmatprep.subr.mxu0 0.0
        %4287 = vmatpush1.msra.mxu0 0.0
        %4288 = vmatprep.subr.mxu0 0.0
        %4289 = vmatpush1.msra.mxu0 0.0
        %4290 = vmatprep.subr.mxu0 0.0
        %4291 = vmatpush1.msra.mxu0 0.0
        %4292 = vmatprep.subr.mxu0 0.0
        %4293 = vmatpush1.msra.mxu0 0.0
        %4294 = vmatprep.mubr.f32.mxu0 0.0
        %v4295 = vand.u32 %v4064, 4294901760
        %v4296 = vsub.f32 %v4064, %v4295
        %4297 = vmatmul.mubr.f32.gmra.mrb[0].mxu0 %v4296
        %v4298 = vpop.f32.mrb[0].mxu0
        %v4299 = vadd.f32 %v4222, %v4298
        %v4300 = vpop.f32.mrb[0].mxu0
        %v4301 = vadd.f32 %v4224, %v4300
        %4302 = vdwg.mxu0
        %v4303 = vand.u32 %v4041, 4294901760
        %4304 = vmatprep.subr.mxu0 %v4303
        %v4305 = vand.u32 %v4040, 4294901760
        %4306 = vmatpush1.msra.mxu0 %v4305
        %4307 = vmatprep.subr.mxu0 0.0
        %4308 = vmatpush1.msra.mxu0 0.0
        %4309 = vmatprep.subr.mxu0 0.0
        %4310 = vmatpush1.msra.mxu0 0.0
        %4311 = vmatprep.subr.mxu0 0.0
        %4312 = vmatpush1.msra.mxu0 0.0
        %4313 = vmatprep.subr.mxu0 0.0
        %4314 = vmatpush1.msra.mxu0 0.0
        %4315 = vmatprep.subr.mxu0 0.0
        %4316 = vmatpush1.msra.mxu0 0.0
        %4317 = vmatprep.subr.mxu0 0.0
        %4318 = vmatpush1.msra.mxu0 0.0
        %4319 = vmatprep.subr.mxu0 0.0
        %4320 = vmatpush1.msra.mxu0 0.0
        %4321 = vmatprep.subr.mxu0 0.0
        %4322 = vmatpush1.msra.mxu0 0.0
        %4323 = vmatprep.subr.mxu0 0.0
        %4324 = vmatpush1.msra.mxu0 0.0
        %4325 = vmatprep.subr.mxu0 0.0
        %4326 = vmatpush1.msra.mxu0 0.0
        %4327 = vmatprep.subr.mxu0 0.0
        %4328 = vmatpush1.msra.mxu0 0.0
        %4329 = vmatprep.subr.mxu0 0.0
        %4330 = vmatpush1.msra.mxu0 0.0
        %4331 = vmatprep.subr.mxu0 0.0
        %4332 = vmatpush1.msra.mxu0 0.0
        %4333 = vmatprep.subr.mxu0 0.0
        %4334 = vmatpush1.msra.mxu0 0.0
        %4335 = vmatprep.subr.mxu0 0.0
        %4336 = vmatpush1.msra.mxu0 0.0
        %4337 = vmatprep.subr.mxu0 0.0
        %4338 = vmatpush1.msra.mxu0 0.0
        %4339 = vmatprep.subr.mxu0 0.0
        %4340 = vmatpush1.msra.mxu0 0.0
        %4341 = vmatprep.subr.mxu0 0.0
        %4342 = vmatpush1.msra.mxu0 0.0
        %4343 = vmatprep.subr.mxu0 0.0
        %4344 = vmatpush1.msra.mxu0 0.0
        %4345 = vmatprep.subr.mxu0 0.0
        %4346 = vmatpush1.msra.mxu0 0.0
        %4347 = vmatprep.subr.mxu0 0.0
        %4348 = vmatpush1.msra.mxu0 0.0
        %4349 = vmatprep.subr.mxu0 0.0
        %4350 = vmatpush1.msra.mxu0 0.0
        %4351 = vmatprep.subr.mxu0 0.0
        %4352 = vmatpush1.msra.mxu0 0.0
        %4353 = vmatprep.subr.mxu0 0.0
        %4354 = vmatpush1.msra.mxu0 0.0
        %4355 = vmatprep.subr.mxu0 0.0
        %4356 = vmatpush1.msra.mxu0 0.0
        %4357 = vmatprep.subr.mxu0 0.0
        %4358 = vmatpush1.msra.mxu0 0.0
        %4359 = vmatprep.subr.mxu0 0.0
        %4360 = vmatpush1.msra.mxu0 0.0
        %4361 = vmatprep.subr.mxu0 0.0
        %4362 = vmatpush1.msra.mxu0 0.0
        %4363 = vmatprep.subr.mxu0 0.0
        %4364 = vmatpush1.msra.mxu0 0.0
        %4365 = vmatprep.subr.mxu0 0.0
        %4366 = vmatpush1.msra.mxu0 0.0
        %4367 = vmatprep.subr.mxu0 0.0
        %4368 = vmatpush1.msra.mxu0 0.0
        %4369 = vmatprep.mubr.f32.mxu0 0.0
        %v4370 = vand.u32 %v4064, 4294901760
        %v4371 = vsub.f32 %v4064, %v4370
        %v4372 = vand.u32 %v4371, 4294901760
        %4373 = vmatmul.mubr.f32.gmra.mrb[0].mxu0 %v4372
        %v4374 = vpop.f32.mrb[0].mxu0
        %v4375 = vadd.f32 %v4299, %v4374
        %v4376 = vpop.f32.mrb[0].mxu0
        %v4377 = vadd.f32 %v4301, %v4376
        %4378 = vdwg.mxu0
        %v4379 = vand.u32 %v4041, 4294901760
        %v4380 = vsub.f32 %v4041, %v4379
        %v4381 = vand.u32 %v4380, 4294901760
        %4382 = vmatprep.subr.mxu0 %v4381
        %v4383 = vand.u32 %v4040, 4294901760
        %v4384 = vsub.f32 %v4040, %v4383
        %v4385 = vand.u32 %v4384, 4294901760
        %4386 = vmatpush1.msra.mxu0 %v4385
        %4387 = vmatprep.subr.mxu0 0.0
        %4388 = vmatpush1.msra.mxu0 0.0
        %4389 = vmatprep.subr.mxu0 0.0
        %4390 = vmatpush1.msra.mxu0 0.0
        %4391 = vmatprep.subr.mxu0 0.0
        %4392 = vmatpush1.msra.mxu0 0.0
        %4393 = vmatprep.subr.mxu0 0.0
        %4394 = vmatpush1.msra.mxu0 0.0
        %4395 = vmatprep.subr.mxu0 0.0
        %4396 = vmatpush1.msra.mxu0 0.0
        %4397 = vmatprep.subr.mxu0 0.0
        %4398 = vmatpush1.msra.mxu0 0.0
        %4399 = vmatprep.subr.mxu0 0.0
        %4400 = vmatpush1.msra.mxu0 0.0
        %4401 = vmatprep.subr.mxu0 0.0
        %4402 = vmatpush1.msra.mxu0 0.0
        %4403 = vmatprep.subr.mxu0 0.0
        %4404 = vmatpush1.msra.mxu0 0.0
        %4405 = vmatprep.subr.mxu0 0.0
        %4406 = vmatpush1.msra.mxu0 0.0
        %4407 = vmatprep.subr.mxu0 0.0
        %4408 = vmatpush1.msra.mxu0 0.0
        %4409 = vmatprep.subr.mxu0 0.0
        %4410 = vmatpush1.msra.mxu0 0.0
        %4411 = vmatprep.subr.mxu0 0.0
        %4412 = vmatpush1.msra.mxu0 0.0
        %4413 = vmatprep.subr.mxu0 0.0
        %4414 = vmatpush1.msra.mxu0 0.0
        %4415 = vmatprep.subr.mxu0 0.0
        %4416 = vmatpush1.msra.mxu0 0.0
        %4417 = vmatprep.subr.mxu0 0.0
        %4418 = vmatpush1.msra.mxu0 0.0
        %4419 = vmatprep.subr.mxu0 0.0
        %4420 = vmatpush1.msra.mxu0 0.0
        %4421 = vmatprep.subr.mxu0 0.0
        %4422 = vmatpush1.msra.mxu0 0.0
        %4423 = vmatprep.subr.mxu0 0.0
        %4424 = vmatpush1.msra.mxu0 0.0
        %4425 = vmatprep.subr.mxu0 0.0
        %4426 = vmatpush1.msra.mxu0 0.0
        %4427 = vmatprep.subr.mxu0 0.0
        %4428 = vmatpush1.msra.mxu0 0.0
        %4429 = vmatprep.subr.mxu0 0.0
        %4430 = vmatpush1.msra.mxu0 0.0
        %4431 = vmatprep.subr.mxu0 0.0
        %4432 = vmatpush1.msra.mxu0 0.0
        %4433 = vmatprep.subr.mxu0 0.0
        %4434 = vmatpush1.msra.mxu0 0.0
        %4435 = vmatprep.subr.mxu0 0.0
        %4436 = vmatpush1.msra.mxu0 0.0
        %4437 = vmatprep.subr.mxu0 0.0
        %4438 = vmatpush1.msra.mxu0 0.0
        %4439 = vmatprep.subr.mxu0 0.0
        %4440 = vmatpush1.msra.mxu0 0.0
        %4441 = vmatprep.subr.mxu0 0.0
        %4442 = vmatpush1.msra.mxu0 0.0
        %4443 = vmatprep.subr.mxu0 0.0
        %4444 = vmatpush1.msra.mxu0 0.0
        %4445 = vmatprep.subr.mxu0 0.0
        %4446 = vmatpush1.msra.mxu0 0.0
        %4447 = vmatprep.subr.mxu0 0.0
        %4448 = vmatpush1.msra.mxu0 0.0
        %4449 = vmatprep.mubr.f32.mxu0 0.0
        %v4450 = vand.u32 %v4064, 4294901760
        %4451 = vmatmul.mubr.f32.gmra.mrb[0].mxu0 %v4450
        %v4452 = vpop.f32.mrb[0].mxu0
        %v4453 = vadd.f32 %v4375, %v4452
        %v4454 = vpop.f32.mrb[0].mxu0
        %v4455 = vadd.f32 %v4377, %v4454
        %4456 = vdwg.mxu0
        %v4457 = vand.u32 %v4041, 4294901760
        %4458 = vmatprep.subr.mxu0 %v4457
        %v4459 = vand.u32 %v4040, 4294901760
        %4460 = vmatpush1.msra.mxu0 %v4459
        %4461 = vmatprep.subr.mxu0 0.0
        %4462 = vmatpush1.msra.mxu0 0.0
        %4463 = vmatprep.subr.mxu0 0.0
        %4464 = vmatpush1.msra.mxu0 0.0
        %4465 = vmatprep.subr.mxu0 0.0
        %4466 = vmatpush1.msra.mxu0 0.0
        %4467 = vmatprep.subr.mxu0 0.0
        %4468 = vmatpush1.msra.mxu0 0.0
        %4469 = vmatprep.subr.mxu0 0.0
        %4470 = vmatpush1.msra.mxu0 0.0
        %4471 = vmatprep.subr.mxu0 0.0
        %4472 = vmatpush1.msra.mxu0 0.0
        %4473 = vmatprep.subr.mxu0 0.0
        %4474 = vmatpush1.msra.mxu0 0.0
        %4475 = vmatprep.subr.mxu0 0.0
        %4476 = vmatpush1.msra.mxu0 0.0
        %4477 = vmatprep.subr.mxu0 0.0
        %4478 = vmatpush1.msra.mxu0 0.0
        %4479 = vmatprep.subr.mxu0 0.0
        %4480 = vmatpush1.msra.mxu0 0.0
        %4481 = vmatprep.subr.mxu0 0.0
        %4482 = vmatpush1.msra.mxu0 0.0
        %4483 = vmatprep.subr.mxu0 0.0
        %4484 = vmatpush1.msra.mxu0 0.0
        %4485 = vmatprep.subr.mxu0 0.0
        %4486 = vmatpush1.msra.mxu0 0.0
        %4487 = vmatprep.subr.mxu0 0.0
        %4488 = vmatpush1.msra.mxu0 0.0
        %4489 = vmatprep.subr.mxu0 0.0
        %4490 = vmatpush1.msra.mxu0 0.0
        %4491 = vmatprep.subr.mxu0 0.0
        %4492 = vmatpush1.msra.mxu0 0.0
        %4493 = vmatprep.subr.mxu0 0.0
        %4494 = vmatpush1.msra.mxu0 0.0
        %4495 = vmatprep.subr.mxu0 0.0
        %4496 = vmatpush1.msra.mxu0 0.0
        %4497 = vmatprep.subr.mxu0 0.0
        %4498 = vmatpush1.msra.mxu0 0.0
        %4499 = vmatprep.subr.mxu0 0.0
        %4500 = vmatpush1.msra.mxu0 0.0
        %4501 = vmatprep.subr.mxu0 0.0
        %4502 = vmatpush1.msra.mxu0 0.0
        %4503 = vmatprep.subr.mxu0 0.0
        %4504 = vmatpush1.msra.mxu0 0.0
        %4505 = vmatprep.subr.mxu0 0.0
        %4506 = vmatpush1.msra.mxu0 0.0
        %4507 = vmatprep.subr.mxu0 0.0
        %4508 = vmatpush1.msra.mxu0 0.0
        %4509 = vmatprep.subr.mxu0 0.0
        %4510 = vmatpush1.msra.mxu0 0.0
        %4511 = vmatprep.subr.mxu0 0.0
        %4512 = vmatpush1.msra.mxu0 0.0
        %4513 = vmatprep.subr.mxu0 0.0
        %4514 = vmatpush1.msra.mxu0 0.0
        %4515 = vmatprep.subr.mxu0 0.0
        %4516 = vmatpush1.msra.mxu0 0.0
        %4517 = vmatprep.subr.mxu0 0.0
        %4518 = vmatpush1.msra.mxu0 0.0
        %4519 = vmatprep.subr.mxu0 0.0
        %4520 = vmatpush1.msra.mxu0 0.0
        %4521 = vmatprep.subr.mxu0 0.0
        %4522 = vmatpush1.msra.mxu0 0.0
        %4523 = vmatprep.mubr.f32.mxu0 0.0
        %v4524 = vand.u32 %v4064, 4294901760
        %4525 = vmatmul.mubr.f32.gmra.mrb[0].mxu0 %v4524
        %v4526 = vpop.f32.mrb[0].mxu0
        %v4527 = vadd.f32 %v4453, %v4526
        %v4528 = vpop.f32.mrb[0].mxu0
        %v4529 = vadd.f32 %v4455, %v4528
        %4530 = vdwg.mxu0
        %v4531 = vand.u32 %v4043, 4294901760
        %4532 = vmatprep.subr.mxu0 %v4531
        %v4533 = vand.u32 %v4042, 4294901760
        %4534 = vmatpush1.msra.mxu0 %v4533
        %4535 = vmatprep.subr.mxu0 0.0
        %4536 = vmatpush1.msra.mxu0 0.0
        %4537 = vmatprep.subr.mxu0 0.0
        %4538 = vmatpush1.msra.mxu0 0.0
        %4539 = vmatprep.subr.mxu0 0.0
        %4540 = vmatpush1.msra.mxu0 0.0
        %4541 = vmatprep.subr.mxu0 0.0
        %4542 = vmatpush1.msra.mxu0 0.0
        %4543 = vmatprep.subr.mxu0 0.0
        %4544 = vmatpush1.msra.mxu0 0.0
        %4545 = vmatprep.subr.mxu0 0.0
        %4546 = vmatpush1.msra.mxu0 0.0
        %4547 = vmatprep.subr.mxu0 0.0
        %4548 = vmatpush1.msra.mxu0 0.0
        %4549 = vmatprep.subr.mxu0 0.0
        %4550 = vmatpush1.msra.mxu0 0.0
        %4551 = vmatprep.subr.mxu0 0.0
        %4552 = vmatpush1.msra.mxu0 0.0
        %4553 = vmatprep.subr.mxu0 0.0
        %4554 = vmatpush1.msra.mxu0 0.0
        %4555 = vmatprep.subr.mxu0 0.0
        %4556 = vmatpush1.msra.mxu0 0.0
        %4557 = vmatprep.subr.mxu0 0.0
        %4558 = vmatpush1.msra.mxu0 0.0
        %4559 = vmatprep.subr.mxu0 0.0
        %4560 = vmatpush1.msra.mxu0 0.0
        %4561 = vmatprep.subr.mxu0 0.0
        %4562 = vmatpush1.msra.mxu0 0.0
        %4563 = vmatprep.subr.mxu0 0.0
        %4564 = vmatpush1.msra.mxu0 0.0
        %4565 = vmatprep.subr.mxu0 0.0
        %4566 = vmatpush1.msra.mxu0 0.0
        %4567 = vmatprep.subr.mxu0 0.0
        %4568 = vmatpush1.msra.mxu0 0.0
        %4569 = vmatprep.subr.mxu0 0.0
        %4570 = vmatpush1.msra.mxu0 0.0
        %4571 = vmatprep.subr.mxu0 0.0
        %4572 = vmatpush1.msra.mxu0 0.0
        %4573 = vmatprep.subr.mxu0 0.0
        %4574 = vmatpush1.msra.mxu0 0.0
        %4575 = vmatprep.subr.mxu0 0.0
        %4576 = vmatpush1.msra.mxu0 0.0
        %4577 = vmatprep.subr.mxu0 0.0
        %4578 = vmatpush1.msra.mxu0 0.0
        %4579 = vmatprep.subr.mxu0 0.0
        %4580 = vmatpush1.msra.mxu0 0.0
        %4581 = vmatprep.subr.mxu0 0.0
        %4582 = vmatpush1.msra.mxu0 0.0
        %4583 = vmatprep.subr.mxu0 0.0
        %4584 = vmatpush1.msra.mxu0 0.0
        %4585 = vmatprep.subr.mxu0 0.0
        %4586 = vmatpush1.msra.mxu0 0.0
        %4587 = vmatprep.subr.mxu0 0.0
        %4588 = vmatpush1.msra.mxu0 0.0
        %4589 = vmatprep.subr.mxu0 0.0
        %4590 = vmatpush1.msra.mxu0 0.0
        %4591 = vmatprep.subr.mxu0 0.0
        %4592 = vmatpush1.msra.mxu0 0.0
        %4593 = vmatprep.subr.mxu0 0.0
        %4594 = vmatpush1.msra.mxu0 0.0
        %4595 = vmatprep.subr.mxu0 0.0
        %4596 = vmatpush1.msra.mxu0 0.0
        %4597 = vmatprep.mubr.f32.mxu0 0.0
        %v4598 = vand.u32 %v4064, 4294901760
        %v4599 = vsub.f32 %v4064, %v4598
        %v4600 = vand.u32 %v4599, 4294901760
        %v4601 = vsub.f32 %v4599, %v4600
        %v4602 = vand.u32 %v4601, 4294901760
        %4603 = vmatmul.mubr.f32.gmra.mrb[0].mxu0 %v4602
        %v4604 = vpop.f32.mrb[0].mxu0
        %v4605 = vadd.f32 %v4061, %v4604
        %v4606 = vpop.f32.mrb[0].mxu0
        %v4607 = vadd.f32 %v4061, %v4606
        %4608 = vdwg.mxu0
        %v4609 = vand.u32 %v4043, 4294901760
        %v4610 = vsub.f32 %v4043, %v4609
        %v4611 = vand.u32 %v4610, 4294901760
        %v4612 = vsub.f32 %v4610, %v4611
        %v4613 = vand.u32 %v4612, 4294901760
        %4614 = vmatprep.subr.mxu0 %v4613
        %v4615 = vand.u32 %v4042, 4294901760
        %v4616 = vsub.f32 %v4042, %v4615
        %v4617 = vand.u32 %v4616, 4294901760
        %v4618 = vsub.f32 %v4616, %v4617
        %v4619 = vand.u32 %v4618, 4294901760
        %4620 = vmatpush1.msra.mxu0 %v4619
        %4621 = vmatprep.subr.mxu0 0.0
        %4622 = vmatpush1.msra.mxu0 0.0
        %4623 = vmatprep.subr.mxu0 0.0
        %4624 = vmatpush1.msra.mxu0 0.0
        %4625 = vmatprep.subr.mxu0 0.0
        %4626 = vmatpush1.msra.mxu0 0.0
        %4627 = vmatprep.subr.mxu0 0.0
        %4628 = vmatpush1.msra.mxu0 0.0
        %4629 = vmatprep.subr.mxu0 0.0
        %4630 = vmatpush1.msra.mxu0 0.0
        %4631 = vmatprep.subr.mxu0 0.0
        %4632 = vmatpush1.msra.mxu0 0.0
        %4633 = vmatprep.subr.mxu0 0.0
        %4634 = vmatpush1.msra.mxu0 0.0
        %4635 = vmatprep.subr.mxu0 0.0
        %4636 = vmatpush1.msra.mxu0 0.0
        %4637 = vmatprep.subr.mxu0 0.0
        %4638 = vmatpush1.msra.mxu0 0.0
        %4639 = vmatprep.subr.mxu0 0.0
        %4640 = vmatpush1.msra.mxu0 0.0
        %4641 = vmatprep.subr.mxu0 0.0
        %4642 = vmatpush1.msra.mxu0 0.0
        %4643 = vmatprep.subr.mxu0 0.0
        %4644 = vmatpush1.msra.mxu0 0.0
        %4645 = vmatprep.subr.mxu0 0.0
        %4646 = vmatpush1.msra.mxu0 0.0
        %4647 = vmatprep.subr.mxu0 0.0
        %4648 = vmatpush1.msra.mxu0 0.0
        %4649 = vmatprep.subr.mxu0 0.0
        %4650 = vmatpush1.msra.mxu0 0.0
        %4651 = vmatprep.subr.mxu0 0.0
        %4652 = vmatpush1.msra.mxu0 0.0
        %4653 = vmatprep.subr.mxu0 0.0
        %4654 = vmatpush1.msra.mxu0 0.0
        %4655 = vmatprep.subr.mxu0 0.0
        %4656 = vmatpush1.msra.mxu0 0.0
        %4657 = vmatprep.subr.mxu0 0.0
        %4658 = vmatpush1.msra.mxu0 0.0
        %4659 = vmatprep.subr.mxu0 0.0
        %4660 = vmatpush1.msra.mxu0 0.0
        %4661 = vmatprep.subr.mxu0 0.0
        %4662 = vmatpush1.msra.mxu0 0.0
        %4663 = vmatprep.subr.mxu0 0.0
        %4664 = vmatpush1.msra.mxu0 0.0
        %4665 = vmatprep.subr.mxu0 0.0
        %4666 = vmatpush1.msra.mxu0 0.0
        %4667 = vmatprep.subr.mxu0 0.0
        %4668 = vmatpush1.msra.mxu0 0.0
        %4669 = vmatprep.subr.mxu0 0.0
        %4670 = vmatpush1.msra.mxu0 0.0
        %4671 = vmatprep.subr.mxu0 0.0
        %4672 = vmatpush1.msra.mxu0 0.0
        %4673 = vmatprep.subr.mxu0 0.0
        %4674 = vmatpush1.msra.mxu0 0.0
        %4675 = vmatprep.subr.mxu0 0.0
        %4676 = vmatpush1.msra.mxu0 0.0
        %4677 = vmatprep.subr.mxu0 0.0
        %4678 = vmatpush1.msra.mxu0 0.0
        %4679 = vmatprep.subr.mxu0 0.0
        %4680 = vmatpush1.msra.mxu0 0.0
        %4681 = vmatprep.subr.mxu0 0.0
        %4682 = vmatpush1.msra.mxu0 0.0
        %4683 = vmatprep.mubr.f32.mxu0 0.0
        %v4684 = vand.u32 %v4064, 4294901760
        %4685 = vmatmul.mubr.f32.gmra.mrb[0].mxu0 %v4684
        %v4686 = vpop.f32.mrb[0].mxu0
        %v4687 = vadd.f32 %v4605, %v4686
        %v4688 = vpop.f32.mrb[0].mxu0
        %v4689 = vadd.f32 %v4607, %v4688
        %4690 = vdwg.mxu0
        %v4691 = vand.u32 %v4043, 4294901760
        %v4692 = vsub.f32 %v4043, %v4691
        %4693 = vmatprep.subr.mxu0 %v4692
        %v4694 = vand.u32 %v4042, 4294901760
        %v4695 = vsub.f32 %v4042, %v4694
        %4696 = vmatpush1.msra.mxu0 %v4695
        %4697 = vmatprep.subr.mxu0 0.0
        %4698 = vmatpush1.msra.mxu0 0.0
        %4699 = vmatprep.subr.mxu0 0.0
        %4700 = vmatpush1.msra.mxu0 0.0
        %4701 = vmatprep.subr.mxu0 0.0
        %4702 = vmatpush1.msra.mxu0 0.0
        %4703 = vmatprep.subr.mxu0 0.0
        %4704 = vmatpush1.msra.mxu0 0.0
        %4705 = vmatprep.subr.mxu0 0.0
        %4706 = vmatpush1.msra.mxu0 0.0
        %4707 = vmatprep.subr.mxu0 0.0
        %4708 = vmatpush1.msra.mxu0 0.0
        %4709 = vmatprep.subr.mxu0 0.0
        %4710 = vmatpush1.msra.mxu0 0.0
        %4711 = vmatprep.subr.mxu0 0.0
        %4712 = vmatpush1.msra.mxu0 0.0
        %4713 = vmatprep.subr.mxu0 0.0
        %4714 = vmatpush1.msra.mxu0 0.0
        %4715 = vmatprep.subr.mxu0 0.0
        %4716 = vmatpush1.msra.mxu0 0.0
        %4717 = vmatprep.subr.mxu0 0.0
        %4718 = vmatpush1.msra.mxu0 0.0
        %4719 = vmatprep.subr.mxu0 0.0
        %4720 = vmatpush1.msra.mxu0 0.0
        %4721 = vmatprep.subr.mxu0 0.0
        %4722 = vmatpush1.msra.mxu0 0.0
        %4723 = vmatprep.subr.mxu0 0.0
        %4724 = vmatpush1.msra.mxu0 0.0
        %4725 = vmatprep.subr.mxu0 0.0
        %4726 = vmatpush1.msra.mxu0 0.0
        %4727 = vmatprep.subr.mxu0 0.0
        %4728 = vmatpush1.msra.mxu0 0.0
        %4729 = vmatprep.subr.mxu0 0.0
        %4730 = vmatpush1.msra.mxu0 0.0
        %4731 = vmatprep.subr.mxu0 0.0
        %4732 = vmatpush1.msra.mxu0 0.0
        %4733 = vmatprep.subr.mxu0 0.0
        %4734 = vmatpush1.msra.mxu0 0.0
        %4735 = vmatprep.subr.mxu0 0.0
        %4736 = vmatpush1.msra.mxu0 0.0
        %4737 = vmatprep.subr.mxu0 0.0
        %4738 = vmatpush1.msra.mxu0 0.0
        %4739 = vmatprep.subr.mxu0 0.0
        %4740 = vmatpush1.msra.mxu0 0.0
        %4741 = vmatprep.subr.mxu0 0.0
        %4742 = vmatpush1.msra.mxu0 0.0
        %4743 = vmatprep.subr.mxu0 0.0
        %4744 = vmatpush1.msra.mxu0 0.0
        %4745 = vmatprep.subr.mxu0 0.0
        %4746 = vmatpush1.msra.mxu0 0.0
        %4747 = vmatprep.subr.mxu0 0.0
        %4748 = vmatpush1.msra.mxu0 0.0
        %4749 = vmatprep.subr.mxu0 0.0
        %4750 = vmatpush1.msra.mxu0 0.0
        %4751 = vmatprep.subr.mxu0 0.0
        %4752 = vmatpush1.msra.mxu0 0.0
        %4753 = vmatprep.subr.mxu0 0.0
        %4754 = vmatpush1.msra.mxu0 0.0
        %4755 = vmatprep.subr.mxu0 0.0
        %4756 = vmatpush1.msra.mxu0 0.0
        %4757 = vmatprep.subr.mxu0 0.0
        %4758 = vmatpush1.msra.mxu0 0.0
        %4759 = vmatprep.mubr.f32.mxu0 0.0
        %v4760 = vand.u32 %v4064, 4294901760
        %v4761 = vsub.f32 %v4064, %v4760
        %4762 = vmatmul.mubr.f32.gmra.mrb[0].mxu0 %v4761
        %v4763 = vpop.f32.mrb[0].mxu0
        %v4764 = vadd.f32 %v4687, %v4763
        %v4765 = vpop.f32.mrb[0].mxu0
        %v4766 = vadd.f32 %v4689, %v4765
        %4767 = vdwg.mxu0
        %v4768 = vand.u32 %v4043, 4294901760
        %4769 = vmatprep.subr.mxu0 %v4768
        %v4770 = vand.u32 %v4042, 4294901760
        %4771 = vmatpush1.msra.mxu0 %v4770
        %4772 = vmatprep.subr.mxu0 0.0
        %4773 = vmatpush1.msra.mxu0 0.0
        %4774 = vmatprep.subr.mxu0 0.0
        %4775 = vmatpush1.msra.mxu0 0.0
        %4776 = vmatprep.subr.mxu0 0.0
        %4777 = vmatpush1.msra.mxu0 0.0
        %4778 = vmatprep.subr.mxu0 0.0
        %4779 = vmatpush1.msra.mxu0 0.0
        %4780 = vmatprep.subr.mxu0 0.0
        %4781 = vmatpush1.msra.mxu0 0.0
        %4782 = vmatprep.subr.mxu0 0.0
        %4783 = vmatpush1.msra.mxu0 0.0
        %4784 = vmatprep.subr.mxu0 0.0
        %4785 = vmatpush1.msra.mxu0 0.0
        %4786 = vmatprep.subr.mxu0 0.0
        %4787 = vmatpush1.msra.mxu0 0.0
        %4788 = vmatprep.subr.mxu0 0.0
        %4789 = vmatpush1.msra.mxu0 0.0
        %4790 = vmatprep.subr.mxu0 0.0
        %4791 = vmatpush1.msra.mxu0 0.0
        %4792 = vmatprep.subr.mxu0 0.0
        %4793 = vmatpush1.msra.mxu0 0.0
        %4794 = vmatprep.subr.mxu0 0.0
        %4795 = vmatpush1.msra.mxu0 0.0
        %4796 = vmatprep.subr.mxu0 0.0
        %4797 = vmatpush1.msra.mxu0 0.0
        %4798 = vmatprep.subr.mxu0 0.0
        %4799 = vmatpush1.msra.mxu0 0.0
        %4800 = vmatprep.subr.mxu0 0.0
        %4801 = vmatpush1.msra.mxu0 0.0
        %4802 = vmatprep.subr.mxu0 0.0
        %4803 = vmatpush1.msra.mxu0 0.0
        %4804 = vmatprep.subr.mxu0 0.0
        %4805 = vmatpush1.msra.mxu0 0.0
        %4806 = vmatprep.subr.mxu0 0.0
        %4807 = vmatpush1.msra.mxu0 0.0
        %4808 = vmatprep.subr.mxu0 0.0
        %4809 = vmatpush1.msra.mxu0 0.0
        %4810 = vmatprep.subr.mxu0 0.0
        %4811 = vmatpush1.msra.mxu0 0.0
        %4812 = vmatprep.subr.mxu0 0.0
        %4813 = vmatpush1.msra.mxu0 0.0
        %4814 = vmatprep.subr.mxu0 0.0
        %4815 = vmatpush1.msra.mxu0 0.0
        %4816 = vmatprep.subr.mxu0 0.0
        %4817 = vmatpush1.msra.mxu0 0.0
        %4818 = vmatprep.subr.mxu0 0.0
        %4819 = vmatpush1.msra.mxu0 0.0
        %4820 = vmatprep.subr.mxu0 0.0
        %4821 = vmatpush1.msra.mxu0 0.0
        %4822 = vmatprep.subr.mxu0 0.0
        %4823 = vmatpush1.msra.mxu0 0.0
        %4824 = vmatprep.subr.mxu0 0.0
        %4825 = vmatpush1.msra.mxu0 0.0
        %4826 = vmatprep.subr.mxu0 0.0
        %4827 = vmatpush1.msra.mxu0 0.0
        %4828 = vmatprep.subr.mxu0 0.0
        %4829 = vmatpush1.msra.mxu0 0.0
        %4830 = vmatprep.subr.mxu0 0.0
        %4831 = vmatpush1.msra.mxu0 0.0
        %4832 = vmatprep.subr.mxu0 0.0
        %4833 = vmatpush1.msra.mxu0 0.0
        %4834 = vmatprep.mubr.f32.mxu0 0.0
        %v4835 = vand.u32 %v4064, 4294901760
        %v4836 = vsub.f32 %v4064, %v4835
        %v4837 = vand.u32 %v4836, 4294901760
        %4838 = vmatmul.mubr.f32.gmra.mrb[0].mxu0 %v4837
        %v4839 = vpop.f32.mrb[0].mxu0
        %v4840 = vadd.f32 %v4764, %v4839
        %v4841 = vpop.f32.mrb[0].mxu0
        %v4842 = vadd.f32 %v4766, %v4841
        %4843 = vdwg.mxu0
        %v4844 = vand.u32 %v4043, 4294901760
        %v4845 = vsub.f32 %v4043, %v4844
        %v4846 = vand.u32 %v4845, 4294901760
        %4847 = vmatprep.subr.mxu0 %v4846
        %v4848 = vand.u32 %v4042, 4294901760
        %v4849 = vsub.f32 %v4042, %v4848
        %v4850 = vand.u32 %v4849, 4294901760
        %4851 = vmatpush1.msra.mxu0 %v4850
        %4852 = vmatprep.subr.mxu0 0.0
        %4853 = vmatpush1.msra.mxu0 0.0
        %4854 = vmatprep.subr.mxu0 0.0
        %4855 = vmatpush1.msra.mxu0 0.0
        %4856 = vmatprep.subr.mxu0 0.0
        %4857 = vmatpush1.msra.mxu0 0.0
        %4858 = vmatprep.subr.mxu0 0.0
        %4859 = vmatpush1.msra.mxu0 0.0
        %4860 = vmatprep.subr.mxu0 0.0
        %4861 = vmatpush1.msra.mxu0 0.0
        %4862 = vmatprep.subr.mxu0 0.0
        %4863 = vmatpush1.msra.mxu0 0.0
        %4864 = vmatprep.subr.mxu0 0.0
        %4865 = vmatpush1.msra.mxu0 0.0
        %4866 = vmatprep.subr.mxu0 0.0
        %4867 = vmatpush1.msra.mxu0 0.0
        %4868 = vmatprep.subr.mxu0 0.0
        %4869 = vmatpush1.msra.mxu0 0.0
        %4870 = vmatprep.subr.mxu0 0.0
        %4871 = vmatpush1.msra.mxu0 0.0
        %4872 = vmatprep.subr.mxu0 0.0
        %4873 = vmatpush1.msra.mxu0 0.0
        %4874 = vmatprep.subr.mxu0 0.0
        %4875 = vmatpush1.msra.mxu0 0.0
        %4876 = vmatprep.subr.mxu0 0.0
        %4877 = vmatpush1.msra.mxu0 0.0
        %4878 = vmatprep.subr.mxu0 0.0
        %4879 = vmatpush1.msra.mxu0 0.0
        %4880 = vmatprep.subr.mxu0 0.0
        %4881 = vmatpush1.msra.mxu0 0.0
        %4882 = vmatprep.subr.mxu0 0.0
        %4883 = vmatpush1.msra.mxu0 0.0
        %4884 = vmatprep.subr.mxu0 0.0
        %4885 = vmatpush1.msra.mxu0 0.0
        %4886 = vmatprep.subr.mxu0 0.0
        %4887 = vmatpush1.msra.mxu0 0.0
        %4888 = vmatprep.subr.mxu0 0.0
        %4889 = vmatpush1.msra.mxu0 0.0
        %4890 = vmatprep.subr.mxu0 0.0
        %4891 = vmatpush1.msra.mxu0 0.0
        %4892 = vmatprep.subr.mxu0 0.0
        %4893 = vmatpush1.msra.mxu0 0.0
        %4894 = vmatprep.subr.mxu0 0.0
        %4895 = vmatpush1.msra.mxu0 0.0
        %4896 = vmatprep.subr.mxu0 0.0
        %4897 = vmatpush1.msra.mxu0 0.0
        %4898 = vmatprep.subr.mxu0 0.0
        %4899 = vmatpush1.msra.mxu0 0.0
        %4900 = vmatprep.subr.mxu0 0.0
        %4901 = vmatpush1.msra.mxu0 0.0
        %4902 = vmatprep.subr.mxu0 0.0
        %4903 = vmatpush1.msra.mxu0 0.0
        %4904 = vmatprep.subr.mxu0 0.0
        %4905 = vmatpush1.msra.mxu0 0.0
        %4906 = vmatprep.subr.mxu0 0.0
        %4907 = vmatpush1.msra.mxu0 0.0
        %4908 = vmatprep.subr.mxu0 0.0
        %4909 = vmatpush1.msra.mxu0 0.0
        %4910 = vmatprep.subr.mxu0 0.0
        %4911 = vmatpush1.msra.mxu0 0.0
        %4912 = vmatprep.subr.mxu0 0.0
        %4913 = vmatpush1.msra.mxu0 0.0
        %4914 = vmatprep.mubr.f32.mxu0 0.0
        %v4915 = vand.u32 %v4064, 4294901760
        %4916 = vmatmul.mubr.f32.gmra.mrb[0].mxu0 %v4915
        %v4917 = vpop.f32.mrb[0].mxu0
        %v4918 = vadd.f32 %v4840, %v4917
        %v4919 = vpop.f32.mrb[0].mxu0
        %v4920 = vadd.f32 %v4842, %v4919
        %4921 = vdwg.mxu0
        %v4922 = vand.u32 %v4043, 4294901760
        %4923 = vmatprep.subr.mxu0 %v4922
        %v4924 = vand.u32 %v4042, 4294901760
        %4925 = vmatpush1.msra.mxu0 %v4924
        %4926 = vmatprep.subr.mxu0 0.0
        %4927 = vmatpush1.msra.mxu0 0.0
        %4928 = vmatprep.subr.mxu0 0.0
        %4929 = vmatpush1.msra.mxu0 0.0
        %4930 = vmatprep.subr.mxu0 0.0
        %4931 = vmatpush1.msra.mxu0 0.0
        %4932 = vmatprep.subr.mxu0 0.0
        %4933 = vmatpush1.msra.mxu0 0.0
        %4934 = vmatprep.subr.mxu0 0.0
        %4935 = vmatpush1.msra.mxu0 0.0
        %4936 = vmatprep.subr.mxu0 0.0
        %4937 = vmatpush1.msra.mxu0 0.0
        %4938 = vmatprep.subr.mxu0 0.0
        %4939 = vmatpush1.msra.mxu0 0.0
        %4940 = vmatprep.subr.mxu0 0.0
        %4941 = vmatpush1.msra.mxu0 0.0
        %4942 = vmatprep.subr.mxu0 0.0
        %4943 = vmatpush1.msra.mxu0 0.0
        %4944 = vmatprep.subr.mxu0 0.0
        %4945 = vmatpush1.msra.mxu0 0.0
        %4946 = vmatprep.subr.mxu0 0.0
        %4947 = vmatpush1.msra.mxu0 0.0
        %4948 = vmatprep.subr.mxu0 0.0
        %4949 = vmatpush1.msra.mxu0 0.0
        %4950 = vmatprep.subr.mxu0 0.0
        %4951 = vmatpush1.msra.mxu0 0.0
        %4952 = vmatprep.subr.mxu0 0.0
        %4953 = vmatpush1.msra.mxu0 0.0
        %4954 = vmatprep.subr.mxu0 0.0
        %4955 = vmatpush1.msra.mxu0 0.0
        %4956 = vmatprep.subr.mxu0 0.0
        %4957 = vmatpush1.msra.mxu0 0.0
        %4958 = vmatprep.subr.mxu0 0.0
        %4959 = vmatpush1.msra.mxu0 0.0
        %4960 = vmatprep.subr.mxu0 0.0
        %4961 = vmatpush1.msra.mxu0 0.0
        %4962 = vmatprep.subr.mxu0 0.0
        %4963 = vmatpush1.msra.mxu0 0.0
        %4964 = vmatprep.subr.mxu0 0.0
        %4965 = vmatpush1.msra.mxu0 0.0
        %4966 = vmatprep.subr.mxu0 0.0
        %4967 = vmatpush1.msra.mxu0 0.0
        %4968 = vmatprep.subr.mxu0 0.0
        %4969 = vmatpush1.msra.mxu0 0.0
        %4970 = vmatprep.subr.mxu0 0.0
        %4971 = vmatpush1.msra.mxu0 0.0
        %4972 = vmatprep.subr.mxu0 0.0
        %4973 = vmatpush1.msra.mxu0 0.0
        %4974 = vmatprep.subr.mxu0 0.0
        %4975 = vmatpush1.msra.mxu0 0.0
        %4976 = vmatprep.subr.mxu0 0.0
        %4977 = vmatpush1.msra.mxu0 0.0
        %4978 = vmatprep.subr.mxu0 0.0
        %4979 = vmatpush1.msra.mxu0 0.0
        %4980 = vmatprep.subr.mxu0 0.0
        %4981 = vmatpush1.msra.mxu0 0.0
        %4982 = vmatprep.subr.mxu0 0.0
        %4983 = vmatpush1.msra.mxu0 0.0
        %4984 = vmatprep.subr.mxu0 0.0
        %4985 = vmatpush1.msra.mxu0 0.0
        %4986 = vmatprep.subr.mxu0 0.0
        %4987 = vmatpush1.msra.mxu0 0.0
        %4988 = vmatprep.mubr.f32.mxu0 0.0
        %v4989 = vand.u32 %v4064, 4294901760
        %4990 = vmatmul.mubr.f32.gmra.mrb[0].mxu0 %v4989
        %v4991 = vpop.f32.mrb[0].mxu0
        %v4992 = vadd.f32 %v4918, %v4991
        %v4993 = vpop.f32.mrb[0].mxu0
        %v4994 = vadd.f32 %v4920, %v4993
        %4995 = vdwg.mxu0
        %v4996 = vand.u32 %v4045, 4294901760
        %4997 = vmatprep.subr.mxu0 %v4996
        %v4998 = vand.u32 %v4044, 4294901760
        %4999 = vmatpush1.msra.mxu0 %v4998
        %5000 = vmatprep.subr.mxu0 0.0
        %5001 = vmatpush1.msra.mxu0 0.0
        %5002 = vmatprep.subr.mxu0 0.0
        %5003 = vmatpush1.msra.mxu0 0.0
        %5004 = vmatprep.subr.mxu0 0.0
        %5005 = vmatpush1.msra.mxu0 0.0
        %5006 = vmatprep.subr.mxu0 0.0
        %5007 = vmatpush1.msra.mxu0 0.0
        %5008 = vmatprep.subr.mxu0 0.0
        %5009 = vmatpush1.msra.mxu0 0.0
        %5010 = vmatprep.subr.mxu0 0.0
        %5011 = vmatpush1.msra.mxu0 0.0
        %5012 = vmatprep.subr.mxu0 0.0
        %5013 = vmatpush1.msra.mxu0 0.0
        %5014 = vmatprep.subr.mxu0 0.0
        %5015 = vmatpush1.msra.mxu0 0.0
        %5016 = vmatprep.subr.mxu0 0.0
        %5017 = vmatpush1.msra.mxu0 0.0
        %5018 = vmatprep.subr.mxu0 0.0
        %5019 = vmatpush1.msra.mxu0 0.0
        %5020 = vmatprep.subr.mxu0 0.0
        %5021 = vmatpush1.msra.mxu0 0.0
        %5022 = vmatprep.subr.mxu0 0.0
        %5023 = vmatpush1.msra.mxu0 0.0
        %5024 = vmatprep.subr.mxu0 0.0
        %5025 = vmatpush1.msra.mxu0 0.0
        %5026 = vmatprep.subr.mxu0 0.0
        %5027 = vmatpush1.msra.mxu0 0.0
        %5028 = vmatprep.subr.mxu0 0.0
        %5029 = vmatpush1.msra.mxu0 0.0
        %5030 = vmatprep.subr.mxu0 0.0
        %5031 = vmatpush1.msra.mxu0 0.0
        %5032 = vmatprep.subr.mxu0 0.0
        %5033 = vmatpush1.msra.mxu0 0.0
        %5034 = vmatprep.subr.mxu0 0.0
        %5035 = vmatpush1.msra.mxu0 0.0
        %5036 = vmatprep.subr.mxu0 0.0
        %5037 = vmatpush1.msra.mxu0 0.0
        %5038 = vmatprep.subr.mxu0 0.0
        %5039 = vmatpush1.msra.mxu0 0.0
        %5040 = vmatprep.subr.mxu0 0.0
        %5041 = vmatpush1.msra.mxu0 0.0
        %5042 = vmatprep.subr.mxu0 0.0
        %5043 = vmatpush1.msra.mxu0 0.0
        %5044 = vmatprep.subr.mxu0 0.0
        %5045 = vmatpush1.msra.mxu0 0.0
        %5046 = vmatprep.subr.mxu0 0.0
        %5047 = vmatpush1.msra.mxu0 0.0
        %5048 = vmatprep.subr.mxu0 0.0
        %5049 = vmatpush1.msra.mxu0 0.0
        %5050 = vmatprep.subr.mxu0 0.0
        %5051 = vmatpush1.msra.mxu0 0.0
        %5052 = vmatprep.subr.mxu0 0.0
        %5053 = vmatpush1.msra.mxu0 0.0
        %5054 = vmatprep.subr.mxu0 0.0
        %5055 = vmatpush1.msra.mxu0 0.0
        %5056 = vmatprep.subr.mxu0 0.0
        %5057 = vmatpush1.msra.mxu0 0.0
        %5058 = vmatprep.subr.mxu0 0.0
        %5059 = vmatpush1.msra.mxu0 0.0
        %5060 = vmatprep.subr.mxu0 0.0
        %5061 = vmatpush1.msra.mxu0 0.0
        %5062 = vmatprep.mubr.f32.mxu0 0.0
        %v5063 = vand.u32 %v4064, 4294901760
        %v5064 = vsub.f32 %v4064, %v5063
        %v5065 = vand.u32 %v5064, 4294901760
        %v5066 = vsub.f32 %v5064, %v5065
        %v5067 = vand.u32 %v5066, 4294901760
        %5068 = vmatmul.mubr.f32.gmra.mrb[0].mxu0 %v5067
        %v5069 = vpop.f32.mrb[0].mxu0
        %v5070 = vadd.f32 %v4061, %v5069
        %v5071 = vpop.f32.mrb[0].mxu0
        %v5072 = vadd.f32 %v4061, %v5071
        %5073 = vdwg.mxu0
        %v5074 = vand.u32 %v4045, 4294901760
        %v5075 = vsub.f32 %v4045, %v5074
        %v5076 = vand.u32 %v5075, 4294901760
        %v5077 = vsub.f32 %v5075, %v5076
        %v5078 = vand.u32 %v5077, 4294901760
        %5079 = vmatprep.subr.mxu0 %v5078
        %v5080 = vand.u32 %v4044, 4294901760
        %v5081 = vsub.f32 %v4044, %v5080
        %v5082 = vand.u32 %v5081, 4294901760
        %v5083 = vsub.f32 %v5081, %v5082
        %v5084 = vand.u32 %v5083, 4294901760
        %5085 = vmatpush1.msra.mxu0 %v5084
        %5086 = vmatprep.subr.mxu0 0.0
        %5087 = vmatpush1.msra.mxu0 0.0
        %5088 = vmatprep.subr.mxu0 0.0
        %5089 = vmatpush1.msra.mxu0 0.0
        %5090 = vmatprep.subr.mxu0 0.0
        %5091 = vmatpush1.msra.mxu0 0.0
        %5092 = vmatprep.subr.mxu0 0.0
        %5093 = vmatpush1.msra.mxu0 0.0
        %5094 = vmatprep.subr.mxu0 0.0
        %5095 = vmatpush1.msra.mxu0 0.0
        %5096 = vmatprep.subr.mxu0 0.0
        %5097 = vmatpush1.msra.mxu0 0.0
        %5098 = vmatprep.subr.mxu0 0.0
        %5099 = vmatpush1.msra.mxu0 0.0
        %5100 = vmatprep.subr.mxu0 0.0
        %5101 = vmatpush1.msra.mxu0 0.0
        %5102 = vmatprep.subr.mxu0 0.0
        %5103 = vmatpush1.msra.mxu0 0.0
        %5104 = vmatprep.subr.mxu0 0.0
        %5105 = vmatpush1.msra.mxu0 0.0
        %5106 = vmatprep.subr.mxu0 0.0
        %5107 = vmatpush1.msra.mxu0 0.0
        %5108 = vmatprep.subr.mxu0 0.0
        %5109 = vmatpush1.msra.mxu0 0.0
        %5110 = vmatprep.subr.mxu0 0.0
        %5111 = vmatpush1.msra.mxu0 0.0
        %5112 = vmatprep.subr.mxu0 0.0
        %5113 = vmatpush1.msra.mxu0 0.0
        %5114 = vmatprep.subr.mxu0 0.0
        %5115 = vmatpush1.msra.mxu0 0.0
        %5116 = vmatprep.subr.mxu0 0.0
        %5117 = vmatpush1.msra.mxu0 0.0
        %5118 = vmatprep.subr.mxu0 0.0
        %5119 = vmatpush1.msra.mxu0 0.0
        %5120 = vmatprep.subr.mxu0 0.0
        %5121 = vmatpush1.msra.mxu0 0.0
        %5122 = vmatprep.subr.mxu0 0.0
        %5123 = vmatpush1.msra.mxu0 0.0
        %5124 = vmatprep.subr.mxu0 0.0
        %5125 = vmatpush1.msra.mxu0 0.0
        %5126 = vmatprep.subr.mxu0 0.0
        %5127 = vmatpush1.msra.mxu0 0.0
        %5128 = vmatprep.subr.mxu0 0.0
        %5129 = vmatpush1.msra.mxu0 0.0
        %5130 = vmatprep.subr.mxu0 0.0
        %5131 = vmatpush1.msra.mxu0 0.0
        %5132 = vmatprep.subr.mxu0 0.0
        %5133 = vmatpush1.msra.mxu0 0.0
        %5134 = vmatprep.subr.mxu0 0.0
        %5135 = vmatpush1.msra.mxu0 0.0
        %5136 = vmatprep.subr.mxu0 0.0
        %5137 = vmatpush1.msra.mxu0 0.0
        %5138 = vmatprep.subr.mxu0 0.0
        %5139 = vmatpush1.msra.mxu0 0.0
        %5140 = vmatprep.subr.mxu0 0.0
        %5141 = vmatpush1.msra.mxu0 0.0
        %5142 = vmatprep.subr.mxu0 0.0
        %5143 = vmatpush1.msra.mxu0 0.0
        %5144 = vmatprep.subr.mxu0 0.0
        %5145 = vmatpush1.msra.mxu0 0.0
        %5146 = vmatprep.subr.mxu0 0.0
        %5147 = vmatpush1.msra.mxu0 0.0
        %5148 = vmatprep.mubr.f32.mxu0 0.0
        %v5149 = vand.u32 %v4064, 4294901760
        %5150 = vmatmul.mubr.f32.gmra.mrb[0].mxu0 %v5149
        %v5151 = vpop.f32.mrb[0].mxu0
        %v5152 = vadd.f32 %v5070, %v5151
        %v5153 = vpop.f32.mrb[0].mxu0
        %v5154 = vadd.f32 %v5072, %v5153
        %5155 = vdwg.mxu0
        %v5156 = vand.u32 %v4045, 4294901760
        %v5157 = vsub.f32 %v4045, %v5156
        %5158 = vmatprep.subr.mxu0 %v5157
        %v5159 = vand.u32 %v4044, 4294901760
        %v5160 = vsub.f32 %v4044, %v5159
        %5161 = vmatpush1.msra.mxu0 %v5160
        %5162 = vmatprep.subr.mxu0 0.0
        %5163 = vmatpush1.msra.mxu0 0.0
        %5164 = vmatprep.subr.mxu0 0.0
        %5165 = vmatpush1.msra.mxu0 0.0
        %5166 = vmatprep.subr.mxu0 0.0
        %5167 = vmatpush1.msra.mxu0 0.0
        %5168 = vmatprep.subr.mxu0 0.0
        %5169 = vmatpush1.msra.mxu0 0.0
        %5170 = vmatprep.subr.mxu0 0.0
        %5171 = vmatpush1.msra.mxu0 0.0
        %5172 = vmatprep.subr.mxu0 0.0
        %5173 = vmatpush1.msra.mxu0 0.0
        %5174 = vmatprep.subr.mxu0 0.0
        %5175 = vmatpush1.msra.mxu0 0.0
        %5176 = vmatprep.subr.mxu0 0.0
        %5177 = vmatpush1.msra.mxu0 0.0
        %5178 = vmatprep.subr.mxu0 0.0
        %5179 = vmatpush1.msra.mxu0 0.0
        %5180 = vmatprep.subr.mxu0 0.0
        %5181 = vmatpush1.msra.mxu0 0.0
        %5182 = vmatprep.subr.mxu0 0.0
        %5183 = vmatpush1.msra.mxu0 0.0
        %5184 = vmatprep.subr.mxu0 0.0
        %5185 = vmatpush1.msra.mxu0 0.0
        %5186 = vmatprep.subr.mxu0 0.0
        %5187 = vmatpush1.msra.mxu0 0.0
        %5188 = vmatprep.subr.mxu0 0.0
        %5189 = vmatpush1.msra.mxu0 0.0
        %5190 = vmatprep.subr.mxu0 0.0
        %5191 = vmatpush1.msra.mxu0 0.0
        %5192 = vmatprep.subr.mxu0 0.0
        %5193 = vmatpush1.msra.mxu0 0.0
        %5194 = vmatprep.subr.mxu0 0.0
        %5195 = vmatpush1.msra.mxu0 0.0
        %5196 = vmatprep.subr.mxu0 0.0
        %5197 = vmatpush1.msra.mxu0 0.0
        %5198 = vmatprep.subr.mxu0 0.0
        %5199 = vmatpush1.msra.mxu0 0.0
        %5200 = vmatprep.subr.mxu0 0.0
        %5201 = vmatpush1.msra.mxu0 0.0
        %5202 = vmatprep.subr.mxu0 0.0
        %5203 = vmatpush1.msra.mxu0 0.0
        %5204 = vmatprep.subr.mxu0 0.0
        %5205 = vmatpush1.msra.mxu0 0.0
        %5206 = vmatprep.subr.mxu0 0.0
        %5207 = vmatpush1.msra.mxu0 0.0
        %5208 = vmatprep.subr.mxu0 0.0
        %5209 = vmatpush1.msra.mxu0 0.0
        %5210 = vmatprep.subr.mxu0 0.0
        %5211 = vmatpush1.msra.mxu0 0.0
        %5212 = vmatprep.subr.mxu0 0.0
        %5213 = vmatpush1.msra.mxu0 0.0
        %5214 = vmatprep.subr.mxu0 0.0
        %5215 = vmatpush1.msra.mxu0 0.0
        %5216 = vmatprep.subr.mxu0 0.0
        %5217 = vmatpush1.msra.mxu0 0.0
        %5218 = vmatprep.subr.mxu0 0.0
        %5219 = vmatpush1.msra.mxu0 0.0
        %5220 = vmatprep.subr.mxu0 0.0
        %5221 = vmatpush1.msra.mxu0 0.0
        %5222 = vmatprep.subr.mxu0 0.0
        %5223 = vmatpush1.msra.mxu0 0.0
        %5224 = vmatprep.mubr.f32.mxu0 0.0
        %v5225 = vand.u32 %v4064, 4294901760
        %v5226 = vsub.f32 %v4064, %v5225
        %5227 = vmatmul.mubr.f32.gmra.mrb[0].mxu0 %v5226
        %v5228 = vpop.f32.mrb[0].mxu0
        %v5229 = vadd.f32 %v5152, %v5228
        %v5230 = vpop.f32.mrb[0].mxu0
        %v5231 = vadd.f32 %v5154, %v5230
        %5232 = vdwg.mxu0
        %v5233 = vand.u32 %v4045, 4294901760
        %5234 = vmatprep.subr.mxu0 %v5233
        %v5235 = vand.u32 %v4044, 4294901760
        %5236 = vmatpush1.msra.mxu0 %v5235
        %5237 = vmatprep.subr.mxu0 0.0
        %5238 = vmatpush1.msra.mxu0 0.0
        %5239 = vmatprep.subr.mxu0 0.0
        %5240 = vmatpush1.msra.mxu0 0.0
        %5241 = vmatprep.subr.mxu0 0.0
        %5242 = vmatpush1.msra.mxu0 0.0
        %5243 = vmatprep.subr.mxu0 0.0
        %5244 = vmatpush1.msra.mxu0 0.0
        %5245 = vmatprep.subr.mxu0 0.0
        %5246 = vmatpush1.msra.mxu0 0.0
        %5247 = vmatprep.subr.mxu0 0.0
        %5248 = vmatpush1.msra.mxu0 0.0
        %5249 = vmatprep.subr.mxu0 0.0
        %5250 = vmatpush1.msra.mxu0 0.0
        %5251 = vmatprep.subr.mxu0 0.0
        %5252 = vmatpush1.msra.mxu0 0.0
        %5253 = vmatprep.subr.mxu0 0.0
        %5254 = vmatpush1.msra.mxu0 0.0
        %5255 = vmatprep.subr.mxu0 0.0
        %5256 = vmatpush1.msra.mxu0 0.0
        %5257 = vmatprep.subr.mxu0 0.0
        %5258 = vmatpush1.msra.mxu0 0.0
        %5259 = vmatprep.subr.mxu0 0.0
        %5260 = vmatpush1.msra.mxu0 0.0
        %5261 = vmatprep.subr.mxu0 0.0
        %5262 = vmatpush1.msra.mxu0 0.0
        %5263 = vmatprep.subr.mxu0 0.0
        %5264 = vmatpush1.msra.mxu0 0.0
        %5265 = vmatprep.subr.mxu0 0.0
        %5266 = vmatpush1.msra.mxu0 0.0
        %5267 = vmatprep.subr.mxu0 0.0
        %5268 = vmatpush1.msra.mxu0 0.0
        %5269 = vmatprep.subr.mxu0 0.0
        %5270 = vmatpush1.msra.mxu0 0.0
        %5271 = vmatprep.subr.mxu0 0.0
        %5272 = vmatpush1.msra.mxu0 0.0
        %5273 = vmatprep.subr.mxu0 0.0
        %5274 = vmatpush1.msra.mxu0 0.0
        %5275 = vmatprep.subr.mxu0 0.0
        %5276 = vmatpush1.msra.mxu0 0.0
        %5277 = vmatprep.subr.mxu0 0.0
        %5278 = vmatpush1.msra.mxu0 0.0
        %5279 = vmatprep.subr.mxu0 0.0
        %5280 = vmatpush1.msra.mxu0 0.0
        %5281 = vmatprep.subr.mxu0 0.0
        %5282 = vmatpush1.msra.mxu0 0.0
        %5283 = vmatprep.subr.mxu0 0.0
        %5284 = vmatpush1.msra.mxu0 0.0
        %5285 = vmatprep.subr.mxu0 0.0
        %5286 = vmatpush1.msra.mxu0 0.0
        %5287 = vmatprep.subr.mxu0 0.0
        %5288 = vmatpush1.msra.mxu0 0.0
        %5289 = vmatprep.subr.mxu0 0.0
        %5290 = vmatpush1.msra.mxu0 0.0
        %5291 = vmatprep.subr.mxu0 0.0
        %5292 = vmatpush1.msra.mxu0 0.0
        %5293 = vmatprep.subr.mxu0 0.0
        %5294 = vmatpush1.msra.mxu0 0.0
        %5295 = vmatprep.subr.mxu0 0.0
        %5296 = vmatpush1.msra.mxu0 0.0
        %5297 = vmatprep.subr.mxu0 0.0
        %5298 = vmatpush1.msra.mxu0 0.0
        %5299 = vmatprep.mubr.f32.mxu0 0.0
        %v5300 = vand.u32 %v4064, 4294901760
        %v5301 = vsub.f32 %v4064, %v5300
        %v5302 = vand.u32 %v5301, 4294901760
        %5303 = vmatmul.mubr.f32.gmra.mrb[0].mxu0 %v5302
        %v5304 = vpop.f32.mrb[0].mxu0
        %v5305 = vadd.f32 %v5229, %v5304
        %v5306 = vpop.f32.mrb[0].mxu0
        %v5307 = vadd.f32 %v5231, %v5306
        %5308 = vdwg.mxu0
        %v5309 = vand.u32 %v4045, 4294901760
        %v5310 = vsub.f32 %v4045, %v5309
        %v5311 = vand.u32 %v5310, 4294901760
        %5312 = vmatprep.subr.mxu0 %v5311
        %v5313 = vand.u32 %v4044, 4294901760
        %v5314 = vsub.f32 %v4044, %v5313
        %v5315 = vand.u32 %v5314, 4294901760
        %5316 = vmatpush1.msra.mxu0 %v5315
        %5317 = vmatprep.subr.mxu0 0.0
        %5318 = vmatpush1.msra.mxu0 0.0
        %5319 = vmatprep.subr.mxu0 0.0
        %5320 = vmatpush1.msra.mxu0 0.0
        %5321 = vmatprep.subr.mxu0 0.0
        %5322 = vmatpush1.msra.mxu0 0.0
        %5323 = vmatprep.subr.mxu0 0.0
        %5324 = vmatpush1.msra.mxu0 0.0
        %5325 = vmatprep.subr.mxu0 0.0
        %5326 = vmatpush1.msra.mxu0 0.0
        %5327 = vmatprep.subr.mxu0 0.0
        %5328 = vmatpush1.msra.mxu0 0.0
        %5329 = vmatprep.subr.mxu0 0.0
        %5330 = vmatpush1.msra.mxu0 0.0
        %5331 = vmatprep.subr.mxu0 0.0
        %5332 = vmatpush1.msra.mxu0 0.0
        %5333 = vmatprep.subr.mxu0 0.0
        %5334 = vmatpush1.msra.mxu0 0.0
        %5335 = vmatprep.subr.mxu0 0.0
        %5336 = vmatpush1.msra.mxu0 0.0
        %5337 = vmatprep.subr.mxu0 0.0
        %5338 = vmatpush1.msra.mxu0 0.0
        %5339 = vmatprep.subr.mxu0 0.0
        %5340 = vmatpush1.msra.mxu0 0.0
        %5341 = vmatprep.subr.mxu0 0.0
        %5342 = vmatpush1.msra.mxu0 0.0
        %5343 = vmatprep.subr.mxu0 0.0
        %5344 = vmatpush1.msra.mxu0 0.0
        %5345 = vmatprep.subr.mxu0 0.0
        %5346 = vmatpush1.msra.mxu0 0.0
        %5347 = vmatprep.subr.mxu0 0.0
        %5348 = vmatpush1.msra.mxu0 0.0
        %5349 = vmatprep.subr.mxu0 0.0
        %5350 = vmatpush1.msra.mxu0 0.0
        %5351 = vmatprep.subr.mxu0 0.0
        %5352 = vmatpush1.msra.mxu0 0.0
        %5353 = vmatprep.subr.mxu0 0.0
        %5354 = vmatpush1.msra.mxu0 0.0
        %5355 = vmatprep.subr.mxu0 0.0
        %5356 = vmatpush1.msra.mxu0 0.0
        %5357 = vmatprep.subr.mxu0 0.0
        %5358 = vmatpush1.msra.mxu0 0.0
        %5359 = vmatprep.subr.mxu0 0.0
        %5360 = vmatpush1.msra.mxu0 0.0
        %5361 = vmatprep.subr.mxu0 0.0
        %5362 = vmatpush1.msra.mxu0 0.0
        %5363 = vmatprep.subr.mxu0 0.0
        %5364 = vmatpush1.msra.mxu0 0.0
        %5365 = vmatprep.subr.mxu0 0.0
        %5366 = vmatpush1.msra.mxu0 0.0
        %5367 = vmatprep.subr.mxu0 0.0
        %5368 = vmatpush1.msra.mxu0 0.0
        %5369 = vmatprep.subr.mxu0 0.0
        %5370 = vmatpush1.msra.mxu0 0.0
        %5371 = vmatprep.subr.mxu0 0.0
        %5372 = vmatpush1.msra.mxu0 0.0
        %5373 = vmatprep.subr.mxu0 0.0
        %5374 = vmatpush1.msra.mxu0 0.0
        %5375 = vmatprep.subr.mxu0 0.0
        %5376 = vmatpush1.msra.mxu0 0.0
        %5377 = vmatprep.subr.mxu0 0.0
        %5378 = vmatpush1.msra.mxu0 0.0
        %5379 = vmatprep.mubr.f32.mxu0 0.0
        %v5380 = vand.u32 %v4064, 4294901760
        %5381 = vmatmul.mubr.f32.gmra.mrb[0].mxu0 %v5380
        %v5382 = vpop.f32.mrb[0].mxu0
        %v5383 = vadd.f32 %v5305, %v5382
        %v5384 = vpop.f32.mrb[0].mxu0
        %v5385 = vadd.f32 %v5307, %v5384
        %5386 = vdwg.mxu0
        %v5387 = vand.u32 %v4045, 4294901760
        %5388 = vmatprep.subr.mxu0 %v5387
        %v5389 = vand.u32 %v4044, 4294901760
        %5390 = vmatpush1.msra.mxu0 %v5389
        %5391 = vmatprep.subr.mxu0 0.0
        %5392 = vmatpush1.msra.mxu0 0.0
        %5393 = vmatprep.subr.mxu0 0.0
        %5394 = vmatpush1.msra.mxu0 0.0
        %5395 = vmatprep.subr.mxu0 0.0
        %5396 = vmatpush1.msra.mxu0 0.0
        %5397 = vmatprep.subr.mxu0 0.0
        %5398 = vmatpush1.msra.mxu0 0.0
        %5399 = vmatprep.subr.mxu0 0.0
        %5400 = vmatpush1.msra.mxu0 0.0
        %5401 = vmatprep.subr.mxu0 0.0
        %5402 = vmatpush1.msra.mxu0 0.0
        %5403 = vmatprep.subr.mxu0 0.0
        %5404 = vmatpush1.msra.mxu0 0.0
        %5405 = vmatprep.subr.mxu0 0.0
        %5406 = vmatpush1.msra.mxu0 0.0
        %5407 = vmatprep.subr.mxu0 0.0
        %5408 = vmatpush1.msra.mxu0 0.0
        %5409 = vmatprep.subr.mxu0 0.0
        %5410 = vmatpush1.msra.mxu0 0.0
        %5411 = vmatprep.subr.mxu0 0.0
        %5412 = vmatpush1.msra.mxu0 0.0
        %5413 = vmatprep.subr.mxu0 0.0
        %5414 = vmatpush1.msra.mxu0 0.0
        %5415 = vmatprep.subr.mxu0 0.0
        %5416 = vmatpush1.msra.mxu0 0.0
        %5417 = vmatprep.subr.mxu0 0.0
        %5418 = vmatpush1.msra.mxu0 0.0
        %5419 = vmatprep.subr.mxu0 0.0
        %5420 = vmatpush1.msra.mxu0 0.0
        %5421 = vmatprep.subr.mxu0 0.0
        %5422 = vmatpush1.msra.mxu0 0.0
        %5423 = vmatprep.subr.mxu0 0.0
        %5424 = vmatpush1.msra.mxu0 0.0
        %5425 = vmatprep.subr.mxu0 0.0
        %5426 = vmatpush1.msra.mxu0 0.0
        %5427 = vmatprep.subr.mxu0 0.0
        %5428 = vmatpush1.msra.mxu0 0.0
        %5429 = vmatprep.subr.mxu0 0.0
        %5430 = vmatpush1.msra.mxu0 0.0
        %5431 = vmatprep.subr.mxu0 0.0
        %5432 = vmatpush1.msra.mxu0 0.0
        %5433 = vmatprep.subr.mxu0 0.0
        %5434 = vmatpush1.msra.mxu0 0.0
        %5435 = vmatprep.subr.mxu0 0.0
        %5436 = vmatpush1.msra.mxu0 0.0
        %5437 = vmatprep.subr.mxu0 0.0
        %5438 = vmatpush1.msra.mxu0 0.0
        %5439 = vmatprep.subr.mxu0 0.0
        %5440 = vmatpush1.msra.mxu0 0.0
        %5441 = vmatprep.subr.mxu0 0.0
        %5442 = vmatpush1.msra.mxu0 0.0
        %5443 = vmatprep.subr.mxu0 0.0
        %5444 = vmatpush1.msra.mxu0 0.0
        %5445 = vmatprep.subr.mxu0 0.0
        %5446 = vmatpush1.msra.mxu0 0.0
        %5447 = vmatprep.subr.mxu0 0.0
        %5448 = vmatpush1.msra.mxu0 0.0
        %5449 = vmatprep.subr.mxu0 0.0
        %5450 = vmatpush1.msra.mxu0 0.0
        %5451 = vmatprep.subr.mxu0 0.0
        %5452 = vmatpush1.msra.mxu0 0.0
        %5453 = vmatprep.mubr.f32.mxu0 0.0
        %v5454 = vand.u32 %v4064, 4294901760
        %5455 = vmatmul.mubr.f32.gmra.mrb[0].mxu0 %v5454
        %v5456 = vpop.f32.mrb[0].mxu0
        %v5457 = vadd.f32 %v5383, %v5456
        %v5458 = vpop.f32.mrb[0].mxu0
        %v5459 = vadd.f32 %v5385, %v5458
        %5460 = vdwg.mxu0
        %v5461 = vand.u32 %v4047, 4294901760
        %5462 = vmatprep.subr.mxu0 %v5461
        %v5463 = vand.u32 %v4046, 4294901760
        %5464 = vmatpush1.msra.mxu0 %v5463
        %5465 = vmatprep.subr.mxu0 0.0
        %5466 = vmatpush1.msra.mxu0 0.0
        %5467 = vmatprep.subr.mxu0 0.0
        %5468 = vmatpush1.msra.mxu0 0.0
        %5469 = vmatprep.subr.mxu0 0.0
        %5470 = vmatpush1.msra.mxu0 0.0
        %5471 = vmatprep.subr.mxu0 0.0
        %5472 = vmatpush1.msra.mxu0 0.0
        %5473 = vmatprep.subr.mxu0 0.0
        %5474 = vmatpush1.msra.mxu0 0.0
        %5475 = vmatprep.subr.mxu0 0.0
        %5476 = vmatpush1.msra.mxu0 0.0
        %5477 = vmatprep.subr.mxu0 0.0
        %5478 = vmatpush1.msra.mxu0 0.0
        %5479 = vmatprep.subr.mxu0 0.0
        %5480 = vmatpush1.msra.mxu0 0.0
        %5481 = vmatprep.subr.mxu0 0.0
        %5482 = vmatpush1.msra.mxu0 0.0
        %5483 = vmatprep.subr.mxu0 0.0
        %5484 = vmatpush1.msra.mxu0 0.0
        %5485 = vmatprep.subr.mxu0 0.0
        %5486 = vmatpush1.msra.mxu0 0.0
        %5487 = vmatprep.subr.mxu0 0.0
        %5488 = vmatpush1.msra.mxu0 0.0
        %5489 = vmatprep.subr.mxu0 0.0
        %5490 = vmatpush1.msra.mxu0 0.0
        %5491 = vmatprep.subr.mxu0 0.0
        %5492 = vmatpush1.msra.mxu0 0.0
        %5493 = vmatprep.subr.mxu0 0.0
        %5494 = vmatpush1.msra.mxu0 0.0
        %5495 = vmatprep.subr.mxu0 0.0
        %5496 = vmatpush1.msra.mxu0 0.0
        %5497 = vmatprep.subr.mxu0 0.0
        %5498 = vmatpush1.msra.mxu0 0.0
        %5499 = vmatprep.subr.mxu0 0.0
        %5500 = vmatpush1.msra.mxu0 0.0
        %5501 = vmatprep.subr.mxu0 0.0
        %5502 = vmatpush1.msra.mxu0 0.0
        %5503 = vmatprep.subr.mxu0 0.0
        %5504 = vmatpush1.msra.mxu0 0.0
        %5505 = vmatprep.subr.mxu0 0.0
        %5506 = vmatpush1.msra.mxu0 0.0
        %5507 = vmatprep.subr.mxu0 0.0
        %5508 = vmatpush1.msra.mxu0 0.0
        %5509 = vmatprep.subr.mxu0 0.0
        %5510 = vmatpush1.msra.mxu0 0.0
        %5511 = vmatprep.subr.mxu0 0.0
        %5512 = vmatpush1.msra.mxu0 0.0
        %5513 = vmatprep.subr.mxu0 0.0
        %5514 = vmatpush1.msra.mxu0 0.0
        %5515 = vmatprep.subr.mxu0 0.0
        %5516 = vmatpush1.msra.mxu0 0.0
        %5517 = vmatprep.subr.mxu0 0.0
        %5518 = vmatpush1.msra.mxu0 0.0
        %5519 = vmatprep.subr.mxu0 0.0
        %5520 = vmatpush1.msra.mxu0 0.0
        %5521 = vmatprep.subr.mxu0 0.0
        %5522 = vmatpush1.msra.mxu0 0.0
        %5523 = vmatprep.subr.mxu0 0.0
        %5524 = vmatpush1.msra.mxu0 0.0
        %5525 = vmatprep.subr.mxu0 0.0
        %5526 = vmatpush1.msra.mxu0 0.0
        %5527 = vmatprep.mubr.f32.mxu0 0.0
        %v5528 = vand.u32 %v4064, 4294901760
        %v5529 = vsub.f32 %v4064, %v5528
        %v5530 = vand.u32 %v5529, 4294901760
        %v5531 = vsub.f32 %v5529, %v5530
        %v5532 = vand.u32 %v5531, 4294901760
        %5533 = vmatmul.mubr.f32.gmra.mrb[0].mxu0 %v5532
        %v5534 = vpop.f32.mrb[0].mxu0
        %v5535 = vadd.f32 %v4061, %v5534
        %v5536 = vpop.f32.mrb[0].mxu0
        %v5537 = vadd.f32 %v4061, %v5536
        %5538 = vdwg.mxu0
        %v5539 = vand.u32 %v4047, 4294901760
        %v5540 = vsub.f32 %v4047, %v5539
        %v5541 = vand.u32 %v5540, 4294901760
        %v5542 = vsub.f32 %v5540, %v5541
        %v5543 = vand.u32 %v5542, 4294901760
        %5544 = vmatprep.subr.mxu0 %v5543
        %v5545 = vand.u32 %v4046, 4294901760
        %v5546 = vsub.f32 %v4046, %v5545
        %v5547 = vand.u32 %v5546, 4294901760
        %v5548 = vsub.f32 %v5546, %v5547
        %v5549 = vand.u32 %v5548, 4294901760
        %5550 = vmatpush1.msra.mxu0 %v5549
        %5551 = vmatprep.subr.mxu0 0.0
        %5552 = vmatpush1.msra.mxu0 0.0
        %5553 = vmatprep.subr.mxu0 0.0
        %5554 = vmatpush1.msra.mxu0 0.0
        %5555 = vmatprep.subr.mxu0 0.0
        %5556 = vmatpush1.msra.mxu0 0.0
        %5557 = vmatprep.subr.mxu0 0.0
        %5558 = vmatpush1.msra.mxu0 0.0
        %5559 = vmatprep.subr.mxu0 0.0
        %5560 = vmatpush1.msra.mxu0 0.0
        %5561 = vmatprep.subr.mxu0 0.0
        %5562 = vmatpush1.msra.mxu0 0.0
        %5563 = vmatprep.subr.mxu0 0.0
        %5564 = vmatpush1.msra.mxu0 0.0
        %5565 = vmatprep.subr.mxu0 0.0
        %5566 = vmatpush1.msra.mxu0 0.0
        %5567 = vmatprep.subr.mxu0 0.0
        %5568 = vmatpush1.msra.mxu0 0.0
        %5569 = vmatprep.subr.mxu0 0.0
        %5570 = vmatpush1.msra.mxu0 0.0
        %5571 = vmatprep.subr.mxu0 0.0
        %5572 = vmatpush1.msra.mxu0 0.0
        %5573 = vmatprep.subr.mxu0 0.0
        %5574 = vmatpush1.msra.mxu0 0.0
        %5575 = vmatprep.subr.mxu0 0.0
        %5576 = vmatpush1.msra.mxu0 0.0
        %5577 = vmatprep.subr.mxu0 0.0
        %5578 = vmatpush1.msra.mxu0 0.0
        %5579 = vmatprep.subr.mxu0 0.0
        %5580 = vmatpush1.msra.mxu0 0.0
        %5581 = vmatprep.subr.mxu0 0.0
        %5582 = vmatpush1.msra.mxu0 0.0
        %5583 = vmatprep.subr.mxu0 0.0
        %5584 = vmatpush1.msra.mxu0 0.0
        %5585 = vmatprep.subr.mxu0 0.0
        %5586 = vmatpush1.msra.mxu0 0.0
        %5587 = vmatprep.subr.mxu0 0.0
        %5588 = vmatpush1.msra.mxu0 0.0
        %5589 = vmatprep.subr.mxu0 0.0
        %5590 = vmatpush1.msra.mxu0 0.0
        %5591 = vmatprep.subr.mxu0 0.0
        %5592 = vmatpush1.msra.mxu0 0.0
        %5593 = vmatprep.subr.mxu0 0.0
        %5594 = vmatpush1.msra.mxu0 0.0
        %5595 = vmatprep.subr.mxu0 0.0
        %5596 = vmatpush1.msra.mxu0 0.0
        %5597 = vmatprep.subr.mxu0 0.0
        %5598 = vmatpush1.msra.mxu0 0.0
        %5599 = vmatprep.subr.mxu0 0.0
        %5600 = vmatpush1.msra.mxu0 0.0
        %5601 = vmatprep.subr.mxu0 0.0
        %5602 = vmatpush1.msra.mxu0 0.0
        %5603 = vmatprep.subr.mxu0 0.0
        %5604 = vmatpush1.msra.mxu0 0.0
        %5605 = vmatprep.subr.mxu0 0.0
        %5606 = vmatpush1.msra.mxu0 0.0
        %5607 = vmatprep.subr.mxu0 0.0
        %5608 = vmatpush1.msra.mxu0 0.0
        %5609 = vmatprep.subr.mxu0 0.0
        %5610 = vmatpush1.msra.mxu0 0.0
        %5611 = vmatprep.subr.mxu0 0.0
        %5612 = vmatpush1.msra.mxu0 0.0
        %5613 = vmatprep.mubr.f32.mxu0 0.0
        %v5614 = vand.u32 %v4064, 4294901760
        %5615 = vmatmul.mubr.f32.gmra.mrb[0].mxu0 %v5614
        %v5616 = vpop.f32.mrb[0].mxu0
        %v5617 = vadd.f32 %v5535, %v5616
        %v5618 = vpop.f32.mrb[0].mxu0
        %v5619 = vadd.f32 %v5537, %v5618
        %5620 = vdwg.mxu0
        %v5621 = vand.u32 %v4047, 4294901760
        %v5622 = vsub.f32 %v4047, %v5621
        %5623 = vmatprep.subr.mxu0 %v5622
        %v5624 = vand.u32 %v4046, 4294901760
        %v5625 = vsub.f32 %v4046, %v5624
        %5626 = vmatpush1.msra.mxu0 %v5625
        %5627 = vmatprep.subr.mxu0 0.0
        %5628 = vmatpush1.msra.mxu0 0.0
        %5629 = vmatprep.subr.mxu0 0.0
        %5630 = vmatpush1.msra.mxu0 0.0
        %5631 = vmatprep.subr.mxu0 0.0
        %5632 = vmatpush1.msra.mxu0 0.0
        %5633 = vmatprep.subr.mxu0 0.0
        %5634 = vmatpush1.msra.mxu0 0.0
        %5635 = vmatprep.subr.mxu0 0.0
        %5636 = vmatpush1.msra.mxu0 0.0
        %5637 = vmatprep.subr.mxu0 0.0
        %5638 = vmatpush1.msra.mxu0 0.0
        %5639 = vmatprep.subr.mxu0 0.0
        %5640 = vmatpush1.msra.mxu0 0.0
        %5641 = vmatprep.subr.mxu0 0.0
        %5642 = vmatpush1.msra.mxu0 0.0
        %5643 = vmatprep.subr.mxu0 0.0
        %5644 = vmatpush1.msra.mxu0 0.0
        %5645 = vmatprep.subr.mxu0 0.0
        %5646 = vmatpush1.msra.mxu0 0.0
        %5647 = vmatprep.subr.mxu0 0.0
        %5648 = vmatpush1.msra.mxu0 0.0
        %5649 = vmatprep.subr.mxu0 0.0
        %5650 = vmatpush1.msra.mxu0 0.0
        %5651 = vmatprep.subr.mxu0 0.0
        %5652 = vmatpush1.msra.mxu0 0.0
        %5653 = vmatprep.subr.mxu0 0.0
        %5654 = vmatpush1.msra.mxu0 0.0
        %5655 = vmatprep.subr.mxu0 0.0
        %5656 = vmatpush1.msra.mxu0 0.0
        %5657 = vmatprep.subr.mxu0 0.0
        %5658 = vmatpush1.msra.mxu0 0.0
        %5659 = vmatprep.subr.mxu0 0.0
        %5660 = vmatpush1.msra.mxu0 0.0
        %5661 = vmatprep.subr.mxu0 0.0
        %5662 = vmatpush1.msra.mxu0 0.0
        %5663 = vmatprep.subr.mxu0 0.0
        %5664 = vmatpush1.msra.mxu0 0.0
        %5665 = vmatprep.subr.mxu0 0.0
        %5666 = vmatpush1.msra.mxu0 0.0
        %5667 = vmatprep.subr.mxu0 0.0
        %5668 = vmatpush1.msra.mxu0 0.0
        %5669 = vmatprep.subr.mxu0 0.0
        %5670 = vmatpush1.msra.mxu0 0.0
        %5671 = vmatprep.subr.mxu0 0.0
        %5672 = vmatpush1.msra.mxu0 0.0
        %5673 = vmatprep.subr.mxu0 0.0
        %5674 = vmatpush1.msra.mxu0 0.0
        %5675 = vmatprep.subr.mxu0 0.0
        %5676 = vmatpush1.msra.mxu0 0.0
        %5677 = vmatprep.subr.mxu0 0.0
        %5678 = vmatpush1.msra.mxu0 0.0
        %5679 = vmatprep.subr.mxu0 0.0
        %5680 = vmatpush1.msra.mxu0 0.0
        %5681 = vmatprep.subr.mxu0 0.0
        %5682 = vmatpush1.msra.mxu0 0.0
        %5683 = vmatprep.subr.mxu0 0.0
        %5684 = vmatpush1.msra.mxu0 0.0
        %5685 = vmatprep.subr.mxu0 0.0
        %5686 = vmatpush1.msra.mxu0 0.0
        %5687 = vmatprep.subr.mxu0 0.0
        %5688 = vmatpush1.msra.mxu0 0.0
        %5689 = vmatprep.mubr.f32.mxu0 0.0
        %v5690 = vand.u32 %v4064, 4294901760
        %v5691 = vsub.f32 %v4064, %v5690
        %5692 = vmatmul.mubr.f32.gmra.mrb[0].mxu0 %v5691
        %v5693 = vpop.f32.mrb[0].mxu0
        %v5694 = vadd.f32 %v5617, %v5693
        %v5695 = vpop.f32.mrb[0].mxu0
        %v5696 = vadd.f32 %v5619, %v5695
        %5697 = vdwg.mxu0
        %v5698 = vand.u32 %v4047, 4294901760
        %5699 = vmatprep.subr.mxu0 %v5698
        %v5700 = vand.u32 %v4046, 4294901760
        %5701 = vmatpush1.msra.mxu0 %v5700
        %5702 = vmatprep.subr.mxu0 0.0
        %5703 = vmatpush1.msra.mxu0 0.0
        %5704 = vmatprep.subr.mxu0 0.0
        %5705 = vmatpush1.msra.mxu0 0.0
        %5706 = vmatprep.subr.mxu0 0.0
        %5707 = vmatpush1.msra.mxu0 0.0
        %5708 = vmatprep.subr.mxu0 0.0
        %5709 = vmatpush1.msra.mxu0 0.0
        %5710 = vmatprep.subr.mxu0 0.0
        %5711 = vmatpush1.msra.mxu0 0.0
        %5712 = vmatprep.subr.mxu0 0.0
        %5713 = vmatpush1.msra.mxu0 0.0
        %5714 = vmatprep.subr.mxu0 0.0
        %5715 = vmatpush1.msra.mxu0 0.0
        %5716 = vmatprep.subr.mxu0 0.0
        %5717 = vmatpush1.msra.mxu0 0.0
        %5718 = vmatprep.subr.mxu0 0.0
        %5719 = vmatpush1.msra.mxu0 0.0
        %5720 = vmatprep.subr.mxu0 0.0
        %5721 = vmatpush1.msra.mxu0 0.0
        %5722 = vmatprep.subr.mxu0 0.0
        %5723 = vmatpush1.msra.mxu0 0.0
        %5724 = vmatprep.subr.mxu0 0.0
        %5725 = vmatpush1.msra.mxu0 0.0
        %5726 = vmatprep.subr.mxu0 0.0
        %5727 = vmatpush1.msra.mxu0 0.0
        %5728 = vmatprep.subr.mxu0 0.0
        %5729 = vmatpush1.msra.mxu0 0.0
        %5730 = vmatprep.subr.mxu0 0.0
        %5731 = vmatpush1.msra.mxu0 0.0
        %5732 = vmatprep.subr.mxu0 0.0
        %5733 = vmatpush1.msra.mxu0 0.0
        %5734 = vmatprep.subr.mxu0 0.0
        %5735 = vmatpush1.msra.mxu0 0.0
        %5736 = vmatprep.subr.mxu0 0.0
        %5737 = vmatpush1.msra.mxu0 0.0
        %5738 = vmatprep.subr.mxu0 0.0
        %5739 = vmatpush1.msra.mxu0 0.0
        %5740 = vmatprep.subr.mxu0 0.0
        %5741 = vmatpush1.msra.mxu0 0.0
        %5742 = vmatprep.subr.mxu0 0.0
        %5743 = vmatpush1.msra.mxu0 0.0
        %5744 = vmatprep.subr.mxu0 0.0
        %5745 = vmatpush1.msra.mxu0 0.0
        %5746 = vmatprep.subr.mxu0 0.0
        %5747 = vmatpush1.msra.mxu0 0.0
        %5748 = vmatprep.subr.mxu0 0.0
        %5749 = vmatpush1.msra.mxu0 0.0
        %5750 = vmatprep.subr.mxu0 0.0
        %5751 = vmatpush1.msra.mxu0 0.0
        %5752 = vmatprep.subr.mxu0 0.0
        %5753 = vmatpush1.msra.mxu0 0.0
        %5754 = vmatprep.subr.mxu0 0.0
        %5755 = vmatpush1.msra.mxu0 0.0
        %5756 = vmatprep.subr.mxu0 0.0
        %5757 = vmatpush1.msra.mxu0 0.0
        %5758 = vmatprep.subr.mxu0 0.0
        %5759 = vmatpush1.msra.mxu0 0.0
        %5760 = vmatprep.subr.mxu0 0.0
        %5761 = vmatpush1.msra.mxu0 0.0
        %5762 = vmatprep.subr.mxu0 0.0
        %5763 = vmatpush1.msra.mxu0 0.0
        %5764 = vmatprep.mubr.f32.mxu0 0.0
        %v5765 = vand.u32 %v4064, 4294901760
        %v5766 = vsub.f32 %v4064, %v5765
        %v5767 = vand.u32 %v5766, 4294901760
        %5768 = vmatmul.mubr.f32.gmra.mrb[0].mxu0 %v5767
        %v5769 = vpop.f32.mrb[0].mxu0
        %v5770 = vadd.f32 %v5694, %v5769
        %v5771 = vpop.f32.mrb[0].mxu0
        %v5772 = vadd.f32 %v5696, %v5771
        %5773 = vdwg.mxu0
        %v5774 = vand.u32 %v4047, 4294901760
        %v5775 = vsub.f32 %v4047, %v5774
        %v5776 = vand.u32 %v5775, 4294901760
        %5777 = vmatprep.subr.mxu0 %v5776
        %v5778 = vand.u32 %v4046, 4294901760
        %v5779 = vsub.f32 %v4046, %v5778
        %v5780 = vand.u32 %v5779, 4294901760
        %5781 = vmatpush1.msra.mxu0 %v5780
        %5782 = vmatprep.subr.mxu0 0.0
        %5783 = vmatpush1.msra.mxu0 0.0
        %5784 = vmatprep.subr.mxu0 0.0
        %5785 = vmatpush1.msra.mxu0 0.0
        %5786 = vmatprep.subr.mxu0 0.0
        %5787 = vmatpush1.msra.mxu0 0.0
        %5788 = vmatprep.subr.mxu0 0.0
        %5789 = vmatpush1.msra.mxu0 0.0
        %5790 = vmatprep.subr.mxu0 0.0
        %5791 = vmatpush1.msra.mxu0 0.0
        %5792 = vmatprep.subr.mxu0 0.0
        %5793 = vmatpush1.msra.mxu0 0.0
        %5794 = vmatprep.subr.mxu0 0.0
        %5795 = vmatpush1.msra.mxu0 0.0
        %5796 = vmatprep.subr.mxu0 0.0
        %5797 = vmatpush1.msra.mxu0 0.0
        %5798 = vmatprep.subr.mxu0 0.0
        %5799 = vmatpush1.msra.mxu0 0.0
        %5800 = vmatprep.subr.mxu0 0.0
        %5801 = vmatpush1.msra.mxu0 0.0
        %5802 = vmatprep.subr.mxu0 0.0
        %5803 = vmatpush1.msra.mxu0 0.0
        %5804 = vmatprep.subr.mxu0 0.0
        %5805 = vmatpush1.msra.mxu0 0.0
        %5806 = vmatprep.subr.mxu0 0.0
        %5807 = vmatpush1.msra.mxu0 0.0
        %5808 = vmatprep.subr.mxu0 0.0
        %5809 = vmatpush1.msra.mxu0 0.0
        %5810 = vmatprep.subr.mxu0 0.0
        %5811 = vmatpush1.msra.mxu0 0.0
        %5812 = vmatprep.subr.mxu0 0.0
        %5813 = vmatpush1.msra.mxu0 0.0
        %5814 = vmatprep.subr.mxu0 0.0
        %5815 = vmatpush1.msra.mxu0 0.0
        %5816 = vmatprep.subr.mxu0 0.0
        %5817 = vmatpush1.msra.mxu0 0.0
        %5818 = vmatprep.subr.mxu0 0.0
        %5819 = vmatpush1.msra.mxu0 0.0
        %5820 = vmatprep.subr.mxu0 0.0
        %5821 = vmatpush1.msra.mxu0 0.0
        %5822 = vmatprep.subr.mxu0 0.0
        %5823 = vmatpush1.msra.mxu0 0.0
        %5824 = vmatprep.subr.mxu0 0.0
        %5825 = vmatpush1.msra.mxu0 0.0
        %5826 = vmatprep.subr.mxu0 0.0
        %5827 = vmatpush1.msra.mxu0 0.0
        %5828 = vmatprep.subr.mxu0 0.0
        %5829 = vmatpush1.msra.mxu0 0.0
        %5830 = vmatprep.subr.mxu0 0.0
        %5831 = vmatpush1.msra.mxu0 0.0
        %5832 = vmatprep.subr.mxu0 0.0
        %5833 = vmatpush1.msra.mxu0 0.0
        %5834 = vmatprep.subr.mxu0 0.0
        %5835 = vmatpush1.msra.mxu0 0.0
        %5836 = vmatprep.subr.mxu0 0.0
        %5837 = vmatpush1.msra.mxu0 0.0
        %5838 = vmatprep.subr.mxu0 0.0
        %5839 = vmatpush1.msra.mxu0 0.0
        %5840 = vmatprep.subr.mxu0 0.0
        %5841 = vmatpush1.msra.mxu0 0.0
        %5842 = vmatprep.subr.mxu0 0.0
        %5843 = vmatpush1.msra.mxu0 0.0
        %5844 = vmatprep.mubr.f32.mxu0 0.0
        %v5845 = vand.u32 %v4064, 4294901760
        %5846 = vmatmul.mubr.f32.gmra.mrb[0].mxu0 %v5845
        %v5847 = vpop.f32.mrb[0].mxu0
        %v5848 = vadd.f32 %v5770, %v5847
        %v5849 = vpop.f32.mrb[0].mxu0
        %v5850 = vadd.f32 %v5772, %v5849
        %5851 = vdwg.mxu0
        %v5852 = vand.u32 %v4047, 4294901760
        %5853 = vmatprep.subr.mxu0 %v5852
        %v5854 = vand.u32 %v4046, 4294901760
        %5855 = vmatpush1.msra.mxu0 %v5854
        %5856 = vmatprep.subr.mxu0 0.0
        %5857 = vmatpush1.msra.mxu0 0.0
        %5858 = vmatprep.subr.mxu0 0.0
        %5859 = vmatpush1.msra.mxu0 0.0
        %5860 = vmatprep.subr.mxu0 0.0
        %5861 = vmatpush1.msra.mxu0 0.0
        %5862 = vmatprep.subr.mxu0 0.0
        %5863 = vmatpush1.msra.mxu0 0.0
        %5864 = vmatprep.subr.mxu0 0.0
        %5865 = vmatpush1.msra.mxu0 0.0
        %5866 = vmatprep.subr.mxu0 0.0
        %5867 = vmatpush1.msra.mxu0 0.0
        %5868 = vmatprep.subr.mxu0 0.0
        %5869 = vmatpush1.msra.mxu0 0.0
        %5870 = vmatprep.subr.mxu0 0.0
        %5871 = vmatpush1.msra.mxu0 0.0
        %5872 = vmatprep.subr.mxu0 0.0
        %5873 = vmatpush1.msra.mxu0 0.0
        %5874 = vmatprep.subr.mxu0 0.0
        %5875 = vmatpush1.msra.mxu0 0.0
        %5876 = vmatprep.subr.mxu0 0.0
        %5877 = vmatpush1.msra.mxu0 0.0
        %5878 = vmatprep.subr.mxu0 0.0
        %5879 = vmatpush1.msra.mxu0 0.0
        %5880 = vmatprep.subr.mxu0 0.0
        %5881 = vmatpush1.msra.mxu0 0.0
        %5882 = vmatprep.subr.mxu0 0.0
        %5883 = vmatpush1.msra.mxu0 0.0
        %5884 = vmatprep.subr.mxu0 0.0
        %5885 = vmatpush1.msra.mxu0 0.0
        %5886 = vmatprep.subr.mxu0 0.0
        %5887 = vmatpush1.msra.mxu0 0.0
        %5888 = vmatprep.subr.mxu0 0.0
        %5889 = vmatpush1.msra.mxu0 0.0
        %5890 = vmatprep.subr.mxu0 0.0
        %5891 = vmatpush1.msra.mxu0 0.0
        %5892 = vmatprep.subr.mxu0 0.0
        %5893 = vmatpush1.msra.mxu0 0.0
        %5894 = vmatprep.subr.mxu0 0.0
        %5895 = vmatpush1.msra.mxu0 0.0
        %5896 = vmatprep.subr.mxu0 0.0
        %5897 = vmatpush1.msra.mxu0 0.0
        %5898 = vmatprep.subr.mxu0 0.0
        %5899 = vmatpush1.msra.mxu0 0.0
        %5900 = vmatprep.subr.mxu0 0.0
        %5901 = vmatpush1.msra.mxu0 0.0
        %5902 = vmatprep.subr.mxu0 0.0
        %5903 = vmatpush1.msra.mxu0 0.0
        %5904 = vmatprep.subr.mxu0 0.0
        %5905 = vmatpush1.msra.mxu0 0.0
        %5906 = vmatprep.subr.mxu0 0.0
        %5907 = vmatpush1.msra.mxu0 0.0
        %5908 = vmatprep.subr.mxu0 0.0
        %5909 = vmatpush1.msra.mxu0 0.0
        %5910 = vmatprep.subr.mxu0 0.0
        %5911 = vmatpush1.msra.mxu0 0.0
        %5912 = vmatprep.subr.mxu0 0.0
        %5913 = vmatpush1.msra.mxu0 0.0
        %5914 = vmatprep.subr.mxu0 0.0
        %5915 = vmatpush1.msra.mxu0 0.0
        %5916 = vmatprep.subr.mxu0 0.0
        %5917 = vmatpush1.msra.mxu0 0.0
        %5918 = vmatprep.mubr.f32.mxu0 0.0
        %v5919 = vand.u32 %v4064, 4294901760
        %5920 = vmatmul.mubr.f32.gmra.mrb[0].mxu0 %v5919
        %v5921 = vpop.f32.mrb[0].mxu0
        %v5922 = vadd.f32 %v5848, %v5921
        %v5923 = vpop.f32.mrb[0].mxu0
        %v5924 = vadd.f32 %v5850, %v5923
        %5925 = vdwg.mxu0
        %v5926 = vand.u32 %v4049, 4294901760
        %5927 = vmatprep.subr.mxu0 %v5926
        %v5928 = vand.u32 %v4048, 4294901760
        %5929 = vmatpush1.msra.mxu0 %v5928
        %5930 = vmatprep.subr.mxu0 0.0
        %5931 = vmatpush1.msra.mxu0 0.0
        %5932 = vmatprep.subr.mxu0 0.0
        %5933 = vmatpush1.msra.mxu0 0.0
        %5934 = vmatprep.subr.mxu0 0.0
        %5935 = vmatpush1.msra.mxu0 0.0
        %5936 = vmatprep.subr.mxu0 0.0
        %5937 = vmatpush1.msra.mxu0 0.0
        %5938 = vmatprep.subr.mxu0 0.0
        %5939 = vmatpush1.msra.mxu0 0.0
        %5940 = vmatprep.subr.mxu0 0.0
        %5941 = vmatpush1.msra.mxu0 0.0
        %5942 = vmatprep.subr.mxu0 0.0
        %5943 = vmatpush1.msra.mxu0 0.0
        %5944 = vmatprep.subr.mxu0 0.0
        %5945 = vmatpush1.msra.mxu0 0.0
        %5946 = vmatprep.subr.mxu0 0.0
        %5947 = vmatpush1.msra.mxu0 0.0
        %5948 = vmatprep.subr.mxu0 0.0
        %5949 = vmatpush1.msra.mxu0 0.0
        %5950 = vmatprep.subr.mxu0 0.0
        %5951 = vmatpush1.msra.mxu0 0.0
        %5952 = vmatprep.subr.mxu0 0.0
        %5953 = vmatpush1.msra.mxu0 0.0
        %5954 = vmatprep.subr.mxu0 0.0
        %5955 = vmatpush1.msra.mxu0 0.0
        %5956 = vmatprep.subr.mxu0 0.0
        %5957 = vmatpush1.msra.mxu0 0.0
        %5958 = vmatprep.subr.mxu0 0.0
        %5959 = vmatpush1.msra.mxu0 0.0
        %5960 = vmatprep.subr.mxu0 0.0
        %5961 = vmatpush1.msra.mxu0 0.0
        %5962 = vmatprep.subr.mxu0 0.0
        %5963 = vmatpush1.msra.mxu0 0.0
        %5964 = vmatprep.subr.mxu0 0.0
        %5965 = vmatpush1.msra.mxu0 0.0
        %5966 = vmatprep.subr.mxu0 0.0
        %5967 = vmatpush1.msra.mxu0 0.0
        %5968 = vmatprep.subr.mxu0 0.0
        %5969 = vmatpush1.msra.mxu0 0.0
        %5970 = vmatprep.subr.mxu0 0.0
        %5971 = vmatpush1.msra.mxu0 0.0
        %5972 = vmatprep.subr.mxu0 0.0
        %5973 = vmatpush1.msra.mxu0 0.0
        %5974 = vmatprep.subr.mxu0 0.0
        %5975 = vmatpush1.msra.mxu0 0.0
        %5976 = vmatprep.subr.mxu0 0.0
        %5977 = vmatpush1.msra.mxu0 0.0
        %5978 = vmatprep.subr.mxu0 0.0
        %5979 = vmatpush1.msra.mxu0 0.0
        %5980 = vmatprep.subr.mxu0 0.0
        %5981 = vmatpush1.msra.mxu0 0.0
        %5982 = vmatprep.subr.mxu0 0.0
        %5983 = vmatpush1.msra.mxu0 0.0
        %5984 = vmatprep.subr.mxu0 0.0
        %5985 = vmatpush1.msra.mxu0 0.0
        %5986 = vmatprep.subr.mxu0 0.0
        %5987 = vmatpush1.msra.mxu0 0.0
        %5988 = vmatprep.subr.mxu0 0.0
        %5989 = vmatpush1.msra.mxu0 0.0
        %5990 = vmatprep.subr.mxu0 0.0
        %5991 = vmatpush1.msra.mxu0 0.0
        %5992 = vmatprep.mubr.f32.mxu0 0.0
        %v5993 = vand.u32 %v4064, 4294901760
        %v5994 = vsub.f32 %v4064, %v5993
        %v5995 = vand.u32 %v5994, 4294901760
        %v5996 = vsub.f32 %v5994, %v5995
        %v5997 = vand.u32 %v5996, 4294901760
        %5998 = vmatmul.mubr.f32.gmra.mrb[0].mxu0 %v5997
        %v5999 = vpop.f32.mrb[0].mxu0
        %v6000 = vadd.f32 %v4061, %v5999
        %v6001 = vpop.f32.mrb[0].mxu0
        %v6002 = vadd.f32 %v4061, %v6001
        %6003 = vdwg.mxu0
        %v6004 = vand.u32 %v4049, 4294901760
        %v6005 = vsub.f32 %v4049, %v6004
        %v6006 = vand.u32 %v6005, 4294901760
        %v6007 = vsub.f32 %v6005, %v6006
        %v6008 = vand.u32 %v6007, 4294901760
        %6009 = vmatprep.subr.mxu0 %v6008
        %v6010 = vand.u32 %v4048, 4294901760
        %v6011 = vsub.f32 %v4048, %v6010
        %v6012 = vand.u32 %v6011, 4294901760
        %v6013 = vsub.f32 %v6011, %v6012
        %v6014 = vand.u32 %v6013, 4294901760
        %6015 = vmatpush1.msra.mxu0 %v6014
        %6016 = vmatprep.subr.mxu0 0.0
        %6017 = vmatpush1.msra.mxu0 0.0
        %6018 = vmatprep.subr.mxu0 0.0
        %6019 = vmatpush1.msra.mxu0 0.0
        %6020 = vmatprep.subr.mxu0 0.0
        %6021 = vmatpush1.msra.mxu0 0.0
        %6022 = vmatprep.subr.mxu0 0.0
        %6023 = vmatpush1.msra.mxu0 0.0
        %6024 = vmatprep.subr.mxu0 0.0
        %6025 = vmatpush1.msra.mxu0 0.0
        %6026 = vmatprep.subr.mxu0 0.0
        %6027 = vmatpush1.msra.mxu0 0.0
        %6028 = vmatprep.subr.mxu0 0.0
        %6029 = vmatpush1.msra.mxu0 0.0
        %6030 = vmatprep.subr.mxu0 0.0
        %6031 = vmatpush1.msra.mxu0 0.0
        %6032 = vmatprep.subr.mxu0 0.0
        %6033 = vmatpush1.msra.mxu0 0.0
        %6034 = vmatprep.subr.mxu0 0.0
        %6035 = vmatpush1.msra.mxu0 0.0
        %6036 = vmatprep.subr.mxu0 0.0
        %6037 = vmatpush1.msra.mxu0 0.0
        %6038 = vmatprep.subr.mxu0 0.0
        %6039 = vmatpush1.msra.mxu0 0.0
        %6040 = vmatprep.subr.mxu0 0.0
        %6041 = vmatpush1.msra.mxu0 0.0
        %6042 = vmatprep.subr.mxu0 0.0
        %6043 = vmatpush1.msra.mxu0 0.0
        %6044 = vmatprep.subr.mxu0 0.0
        %6045 = vmatpush1.msra.mxu0 0.0
        %6046 = vmatprep.subr.mxu0 0.0
        %6047 = vmatpush1.msra.mxu0 0.0
        %6048 = vmatprep.subr.mxu0 0.0
        %6049 = vmatpush1.msra.mxu0 0.0
        %6050 = vmatprep.subr.mxu0 0.0
        %6051 = vmatpush1.msra.mxu0 0.0
        %6052 = vmatprep.subr.mxu0 0.0
        %6053 = vmatpush1.msra.mxu0 0.0
        %6054 = vmatprep.subr.mxu0 0.0
        %6055 = vmatpush1.msra.mxu0 0.0
        %6056 = vmatprep.subr.mxu0 0.0
        %6057 = vmatpush1.msra.mxu0 0.0
        %6058 = vmatprep.subr.mxu0 0.0
        %6059 = vmatpush1.msra.mxu0 0.0
        %6060 = vmatprep.subr.mxu0 0.0
        %6061 = vmatpush1.msra.mxu0 0.0
        %6062 = vmatprep.subr.mxu0 0.0
        %6063 = vmatpush1.msra.mxu0 0.0
        %6064 = vmatprep.subr.mxu0 0.0
        %6065 = vmatpush1.msra.mxu0 0.0
        %6066 = vmatprep.subr.mxu0 0.0
        %6067 = vmatpush1.msra.mxu0 0.0
        %6068 = vmatprep.subr.mxu0 0.0
        %6069 = vmatpush1.msra.mxu0 0.0
        %6070 = vmatprep.subr.mxu0 0.0
        %6071 = vmatpush1.msra.mxu0 0.0
        %6072 = vmatprep.subr.mxu0 0.0
        %6073 = vmatpush1.msra.mxu0 0.0
        %6074 = vmatprep.subr.mxu0 0.0
        %6075 = vmatpush1.msra.mxu0 0.0
        %6076 = vmatprep.subr.mxu0 0.0
        %6077 = vmatpush1.msra.mxu0 0.0
        %6078 = vmatprep.mubr.f32.mxu0 0.0
        %v6079 = vand.u32 %v4064, 4294901760
        %6080 = vmatmul.mubr.f32.gmra.mrb[0].mxu0 %v6079
        %v6081 = vpop.f32.mrb[0].mxu0
        %v6082 = vadd.f32 %v6000, %v6081
        %v6083 = vpop.f32.mrb[0].mxu0
        %v6084 = vadd.f32 %v6002, %v6083
        %6085 = vdwg.mxu0
        %v6086 = vand.u32 %v4049, 4294901760
        %v6087 = vsub.f32 %v4049, %v6086
        %6088 = vmatprep.subr.mxu0 %v6087
        %v6089 = vand.u32 %v4048, 4294901760
        %v6090 = vsub.f32 %v4048, %v6089
        %6091 = vmatpush1.msra.mxu0 %v6090
        %6092 = vmatprep.subr.mxu0 0.0
        %6093 = vmatpush1.msra.mxu0 0.0
        %6094 = vmatprep.subr.mxu0 0.0
        %6095 = vmatpush1.msra.mxu0 0.0
        %6096 = vmatprep.subr.mxu0 0.0
        %6097 = vmatpush1.msra.mxu0 0.0
        %6098 = vmatprep.subr.mxu0 0.0
        %6099 = vmatpush1.msra.mxu0 0.0
        %6100 = vmatprep.subr.mxu0 0.0
        %6101 = vmatpush1.msra.mxu0 0.0
        %6102 = vmatprep.subr.mxu0 0.0
        %6103 = vmatpush1.msra.mxu0 0.0
        %6104 = vmatprep.subr.mxu0 0.0
        %6105 = vmatpush1.msra.mxu0 0.0
        %6106 = vmatprep.subr.mxu0 0.0
        %6107 = vmatpush1.msra.mxu0 0.0
        %6108 = vmatprep.subr.mxu0 0.0
        %6109 = vmatpush1.msra.mxu0 0.0
        %6110 = vmatprep.subr.mxu0 0.0
        %6111 = vmatpush1.msra.mxu0 0.0
        %6112 = vmatprep.subr.mxu0 0.0
        %6113 = vmatpush1.msra.mxu0 0.0
        %6114 = vmatprep.subr.mxu0 0.0
        %6115 = vmatpush1.msra.mxu0 0.0
        %6116 = vmatprep.subr.mxu0 0.0
        %6117 = vmatpush1.msra.mxu0 0.0
        %6118 = vmatprep.subr.mxu0 0.0
        %6119 = vmatpush1.msra.mxu0 0.0
        %6120 = vmatprep.subr.mxu0 0.0
        %6121 = vmatpush1.msra.mxu0 0.0
        %6122 = vmatprep.subr.mxu0 0.0
        %6123 = vmatpush1.msra.mxu0 0.0
        %6124 = vmatprep.subr.mxu0 0.0
        %6125 = vmatpush1.msra.mxu0 0.0
        %6126 = vmatprep.subr.mxu0 0.0
        %6127 = vmatpush1.msra.mxu0 0.0
        %6128 = vmatprep.subr.mxu0 0.0
        %6129 = vmatpush1.msra.mxu0 0.0
        %6130 = vmatprep.subr.mxu0 0.0
        %6131 = vmatpush1.msra.mxu0 0.0
        %6132 = vmatprep.subr.mxu0 0.0
        %6133 = vmatpush1.msra.mxu0 0.0
        %6134 = vmatprep.subr.mxu0 0.0
        %6135 = vmatpush1.msra.mxu0 0.0
        %6136 = vmatprep.subr.mxu0 0.0
        %6137 = vmatpush1.msra.mxu0 0.0
        %6138 = vmatprep.subr.mxu0 0.0
        %6139 = vmatpush1.msra.mxu0 0.0
        %6140 = vmatprep.subr.mxu0 0.0
        %6141 = vmatpush1.msra.mxu0 0.0
        %6142 = vmatprep.subr.mxu0 0.0
        %6143 = vmatpush1.msra.mxu0 0.0
        %6144 = vmatprep.subr.mxu0 0.0
        %6145 = vmatpush1.msra.mxu0 0.0
        %6146 = vmatprep.subr.mxu0 0.0
        %6147 = vmatpush1.msra.mxu0 0.0
        %6148 = vmatprep.subr.mxu0 0.0
        %6149 = vmatpush1.msra.mxu0 0.0
        %6150 = vmatprep.subr.mxu0 0.0
        %6151 = vmatpush1.msra.mxu0 0.0
        %6152 = vmatprep.subr.mxu0 0.0
        %6153 = vmatpush1.msra.mxu0 0.0
        %6154 = vmatprep.mubr.f32.mxu0 0.0
        %v6155 = vand.u32 %v4064, 4294901760
        %v6156 = vsub.f32 %v4064, %v6155
        %6157 = vmatmul.mubr.f32.gmra.mrb[0].mxu0 %v6156
        %v6158 = vpop.f32.mrb[0].mxu0
        %v6159 = vadd.f32 %v6082, %v6158
        %v6160 = vpop.f32.mrb[0].mxu0
        %v6161 = vadd.f32 %v6084, %v6160
        %6162 = vdwg.mxu0
        %v6163 = vand.u32 %v4049, 4294901760
        %6164 = vmatprep.subr.mxu0 %v6163
        %v6165 = vand.u32 %v4048, 4294901760
        %6166 = vmatpush1.msra.mxu0 %v6165
        %6167 = vmatprep.subr.mxu0 0.0
        %6168 = vmatpush1.msra.mxu0 0.0
        %6169 = vmatprep.subr.mxu0 0.0
        %6170 = vmatpush1.msra.mxu0 0.0
        %6171 = vmatprep.subr.mxu0 0.0
        %6172 = vmatpush1.msra.mxu0 0.0
        %6173 = vmatprep.subr.mxu0 0.0
        %6174 = vmatpush1.msra.mxu0 0.0
        %6175 = vmatprep.subr.mxu0 0.0
        %6176 = vmatpush1.msra.mxu0 0.0
        %6177 = vmatprep.subr.mxu0 0.0
        %6178 = vmatpush1.msra.mxu0 0.0
        %6179 = vmatprep.subr.mxu0 0.0
        %6180 = vmatpush1.msra.mxu0 0.0
        %6181 = vmatprep.subr.mxu0 0.0
        %6182 = vmatpush1.msra.mxu0 0.0
        %6183 = vmatprep.subr.mxu0 0.0
        %6184 = vmatpush1.msra.mxu0 0.0
        %6185 = vmatprep.subr.mxu0 0.0
        %6186 = vmatpush1.msra.mxu0 0.0
        %6187 = vmatprep.subr.mxu0 0.0
        %6188 = vmatpush1.msra.mxu0 0.0
        %6189 = vmatprep.subr.mxu0 0.0
        %6190 = vmatpush1.msra.mxu0 0.0
        %6191 = vmatprep.subr.mxu0 0.0
        %6192 = vmatpush1.msra.mxu0 0.0
        %6193 = vmatprep.subr.mxu0 0.0
        %6194 = vmatpush1.msra.mxu0 0.0
        %6195 = vmatprep.subr.mxu0 0.0
        %6196 = vmatpush1.msra.mxu0 0.0
        %6197 = vmatprep.subr.mxu0 0.0
        %6198 = vmatpush1.msra.mxu0 0.0
        %6199 = vmatprep.subr.mxu0 0.0
        %6200 = vmatpush1.msra.mxu0 0.0
        %6201 = vmatprep.subr.mxu0 0.0
        %6202 = vmatpush1.msra.mxu0 0.0
        %6203 = vmatprep.subr.mxu0 0.0
        %6204 = vmatpush1.msra.mxu0 0.0
        %6205 = vmatprep.subr.mxu0 0.0
        %6206 = vmatpush1.msra.mxu0 0.0
        %6207 = vmatprep.subr.mxu0 0.0
        %6208 = vmatpush1.msra.mxu0 0.0
        %6209 = vmatprep.subr.mxu0 0.0
        %6210 = vmatpush1.msra.mxu0 0.0
        %6211 = vmatprep.subr.mxu0 0.0
        %6212 = vmatpush1.msra.mxu0 0.0
        %6213 = vmatprep.subr.mxu0 0.0
        %6214 = vmatpush1.msra.mxu0 0.0
        %6215 = vmatprep.subr.mxu0 0.0
        %6216 = vmatpush1.msra.mxu0 0.0
        %6217 = vmatprep.subr.mxu0 0.0
        %6218 = vmatpush1.msra.mxu0 0.0
        %6219 = vmatprep.subr.mxu0 0.0
        %6220 = vmatpush1.msra.mxu0 0.0
        %6221 = vmatprep.subr.mxu0 0.0
        %6222 = vmatpush1.msra.mxu0 0.0
        %6223 = vmatprep.subr.mxu0 0.0
        %6224 = vmatpush1.msra.mxu0 0.0
        %6225 = vmatprep.subr.mxu0 0.0
        %6226 = vmatpush1.msra.mxu0 0.0
        %6227 = vmatprep.subr.mxu0 0.0
        %6228 = vmatpush1.msra.mxu0 0.0
        %6229 = vmatprep.mubr.f32.mxu0 0.0
        %v6230 = vand.u32 %v4064, 4294901760
        %v6231 = vsub.f32 %v4064, %v6230
        %v6232 = vand.u32 %v6231, 4294901760
        %6233 = vmatmul.mubr.f32.gmra.mrb[0].mxu0 %v6232
        %v6234 = vpop.f32.mrb[0].mxu0
        %v6235 = vadd.f32 %v6159, %v6234
        %v6236 = vpop.f32.mrb[0].mxu0
        %v6237 = vadd.f32 %v6161, %v6236
        %6238 = vdwg.mxu0
        %v6239 = vand.u32 %v4049, 4294901760
        %v6240 = vsub.f32 %v4049, %v6239
        %v6241 = vand.u32 %v6240, 4294901760
        %6242 = vmatprep.subr.mxu0 %v6241
        %v6243 = vand.u32 %v4048, 4294901760
        %v6244 = vsub.f32 %v4048, %v6243
        %v6245 = vand.u32 %v6244, 4294901760
        %6246 = vmatpush1.msra.mxu0 %v6245
        %6247 = vmatprep.subr.mxu0 0.0
        %6248 = vmatpush1.msra.mxu0 0.0
        %6249 = vmatprep.subr.mxu0 0.0
        %6250 = vmatpush1.msra.mxu0 0.0
        %6251 = vmatprep.subr.mxu0 0.0
        %6252 = vmatpush1.msra.mxu0 0.0
        %6253 = vmatprep.subr.mxu0 0.0
        %6254 = vmatpush1.msra.mxu0 0.0
        %6255 = vmatprep.subr.mxu0 0.0
        %6256 = vmatpush1.msra.mxu0 0.0
        %6257 = vmatprep.subr.mxu0 0.0
        %6258 = vmatpush1.msra.mxu0 0.0
        %6259 = vmatprep.subr.mxu0 0.0
        %6260 = vmatpush1.msra.mxu0 0.0
        %6261 = vmatprep.subr.mxu0 0.0
        %6262 = vmatpush1.msra.mxu0 0.0
        %6263 = vmatprep.subr.mxu0 0.0
        %6264 = vmatpush1.msra.mxu0 0.0
        %6265 = vmatprep.subr.mxu0 0.0
        %6266 = vmatpush1.msra.mxu0 0.0
        %6267 = vmatprep.subr.mxu0 0.0
        %6268 = vmatpush1.msra.mxu0 0.0
        %6269 = vmatprep.subr.mxu0 0.0
        %6270 = vmatpush1.msra.mxu0 0.0
        %6271 = vmatprep.subr.mxu0 0.0
        %6272 = vmatpush1.msra.mxu0 0.0
        %6273 = vmatprep.subr.mxu0 0.0
        %6274 = vmatpush1.msra.mxu0 0.0
        %6275 = vmatprep.subr.mxu0 0.0
        %6276 = vmatpush1.msra.mxu0 0.0
        %6277 = vmatprep.subr.mxu0 0.0
        %6278 = vmatpush1.msra.mxu0 0.0
        %6279 = vmatprep.subr.mxu0 0.0
        %6280 = vmatpush1.msra.mxu0 0.0
        %6281 = vmatprep.subr.mxu0 0.0
        %6282 = vmatpush1.msra.mxu0 0.0
        %6283 = vmatprep.subr.mxu0 0.0
        %6284 = vmatpush1.msra.mxu0 0.0
        %6285 = vmatprep.subr.mxu0 0.0
        %6286 = vmatpush1.msra.mxu0 0.0
        %6287 = vmatprep.subr.mxu0 0.0
        %6288 = vmatpush1.msra.mxu0 0.0
        %6289 = vmatprep.subr.mxu0 0.0
        %6290 = vmatpush1.msra.mxu0 0.0
        %6291 = vmatprep.subr.mxu0 0.0
        %6292 = vmatpush1.msra.mxu0 0.0
        %6293 = vmatprep.subr.mxu0 0.0
        %6294 = vmatpush1.msra.mxu0 0.0
        %6295 = vmatprep.subr.mxu0 0.0
        %6296 = vmatpush1.msra.mxu0 0.0
        %6297 = vmatprep.subr.mxu0 0.0
        %6298 = vmatpush1.msra.mxu0 0.0
        %6299 = vmatprep.subr.mxu0 0.0
        %6300 = vmatpush1.msra.mxu0 0.0
        %6301 = vmatprep.subr.mxu0 0.0
        %6302 = vmatpush1.msra.mxu0 0.0
        %6303 = vmatprep.subr.mxu0 0.0
        %6304 = vmatpush1.msra.mxu0 0.0
        %6305 = vmatprep.subr.mxu0 0.0
        %6306 = vmatpush1.msra.mxu0 0.0
        %6307 = vmatprep.subr.mxu0 0.0
        %6308 = vmatpush1.msra.mxu0 0.0
        %6309 = vmatprep.mubr.f32.mxu0 0.0
        %v6310 = vand.u32 %v4064, 4294901760
        %6311 = vmatmul.mubr.f32.gmra.mrb[0].mxu0 %v6310
        %v6312 = vpop.f32.mrb[0].mxu0
        %v6313 = vadd.f32 %v6235, %v6312
        %v6314 = vpop.f32.mrb[0].mxu0
        %v6315 = vadd.f32 %v6237, %v6314
        %6316 = vdwg.mxu0
        %v6317 = vand.u32 %v4049, 4294901760
        %6318 = vmatprep.subr.mxu0 %v6317
        %v6319 = vand.u32 %v4048, 4294901760
        %6320 = vmatpush1.msra.mxu0 %v6319
        %6321 = vmatprep.subr.mxu0 0.0
        %6322 = vmatpush1.msra.mxu0 0.0
        %6323 = vmatprep.subr.mxu0 0.0
        %6324 = vmatpush1.msra.mxu0 0.0
        %6325 = vmatprep.subr.mxu0 0.0
        %6326 = vmatpush1.msra.mxu0 0.0
        %6327 = vmatprep.subr.mxu0 0.0
        %6328 = vmatpush1.msra.mxu0 0.0
        %6329 = vmatprep.subr.mxu0 0.0
        %6330 = vmatpush1.msra.mxu0 0.0
        %6331 = vmatprep.subr.mxu0 0.0
        %6332 = vmatpush1.msra.mxu0 0.0
        %6333 = vmatprep.subr.mxu0 0.0
        %6334 = vmatpush1.msra.mxu0 0.0
        %6335 = vmatprep.subr.mxu0 0.0
        %6336 = vmatpush1.msra.mxu0 0.0
        %6337 = vmatprep.subr.mxu0 0.0
        %6338 = vmatpush1.msra.mxu0 0.0
        %6339 = vmatprep.subr.mxu0 0.0
        %6340 = vmatpush1.msra.mxu0 0.0
        %6341 = vmatprep.subr.mxu0 0.0
        %6342 = vmatpush1.msra.mxu0 0.0
        %6343 = vmatprep.subr.mxu0 0.0
        %6344 = vmatpush1.msra.mxu0 0.0
        %6345 = vmatprep.subr.mxu0 0.0
        %6346 = vmatpush1.msra.mxu0 0.0
        %6347 = vmatprep.subr.mxu0 0.0
        %6348 = vmatpush1.msra.mxu0 0.0
        %6349 = vmatprep.subr.mxu0 0.0
        %6350 = vmatpush1.msra.mxu0 0.0
        %6351 = vmatprep.subr.mxu0 0.0
        %6352 = vmatpush1.msra.mxu0 0.0
        %6353 = vmatprep.subr.mxu0 0.0
        %6354 = vmatpush1.msra.mxu0 0.0
        %6355 = vmatprep.subr.mxu0 0.0
        %6356 = vmatpush1.msra.mxu0 0.0
        %6357 = vmatprep.subr.mxu0 0.0
        %6358 = vmatpush1.msra.mxu0 0.0
        %6359 = vmatprep.subr.mxu0 0.0
        %6360 = vmatpush1.msra.mxu0 0.0
        %6361 = vmatprep.subr.mxu0 0.0
        %6362 = vmatpush1.msra.mxu0 0.0
        %6363 = vmatprep.subr.mxu0 0.0
        %6364 = vmatpush1.msra.mxu0 0.0
        %6365 = vmatprep.subr.mxu0 0.0
        %6366 = vmatpush1.msra.mxu0 0.0
        %6367 = vmatprep.subr.mxu0 0.0
        %6368 = vmatpush1.msra.mxu0 0.0
        %6369 = vmatprep.subr.mxu0 0.0
        %6370 = vmatpush1.msra.mxu0 0.0
        %6371 = vmatprep.subr.mxu0 0.0
        %6372 = vmatpush1.msra.mxu0 0.0
        %6373 = vmatprep.subr.mxu0 0.0
        %6374 = vmatpush1.msra.mxu0 0.0
        %6375 = vmatprep.subr.mxu0 0.0
        %6376 = vmatpush1.msra.mxu0 0.0
        %6377 = vmatprep.subr.mxu0 0.0
        %6378 = vmatpush1.msra.mxu0 0.0
        %6379 = vmatprep.subr.mxu0 0.0
        %6380 = vmatpush1.msra.mxu0 0.0
        %6381 = vmatprep.subr.mxu0 0.0
        %6382 = vmatpush1.msra.mxu0 0.0
        %6383 = vmatprep.mubr.f32.mxu0 0.0
        %v6384 = vand.u32 %v4064, 4294901760
        %6385 = vmatmul.mubr.f32.gmra.mrb[0].mxu0 %v6384
        %v6386 = vpop.f32.mrb[0].mxu0
        %v6387 = vadd.f32 %v6313, %v6386
        %v6388 = vpop.f32.mrb[0].mxu0
        %v6389 = vadd.f32 %v6315, %v6388
        %6390 = vdwg.mxu0
        %v6391 = vand.u32 %v4051, 4294901760
        %6392 = vmatprep.subr.mxu0 %v6391
        %v6393 = vand.u32 %v4050, 4294901760
        %6394 = vmatpush1.msra.mxu0 %v6393
        %6395 = vmatprep.subr.mxu0 0.0
        %6396 = vmatpush1.msra.mxu0 0.0
        %6397 = vmatprep.subr.mxu0 0.0
        %6398 = vmatpush1.msra.mxu0 0.0
        %6399 = vmatprep.subr.mxu0 0.0
        %6400 = vmatpush1.msra.mxu0 0.0
        %6401 = vmatprep.subr.mxu0 0.0
        %6402 = vmatpush1.msra.mxu0 0.0
        %6403 = vmatprep.subr.mxu0 0.0
        %6404 = vmatpush1.msra.mxu0 0.0
        %6405 = vmatprep.subr.mxu0 0.0
        %6406 = vmatpush1.msra.mxu0 0.0
        %6407 = vmatprep.subr.mxu0 0.0
        %6408 = vmatpush1.msra.mxu0 0.0
        %6409 = vmatprep.subr.mxu0 0.0
        %6410 = vmatpush1.msra.mxu0 0.0
        %6411 = vmatprep.subr.mxu0 0.0
        %6412 = vmatpush1.msra.mxu0 0.0
        %6413 = vmatprep.subr.mxu0 0.0
        %6414 = vmatpush1.msra.mxu0 0.0
        %6415 = vmatprep.subr.mxu0 0.0
        %6416 = vmatpush1.msra.mxu0 0.0
        %6417 = vmatprep.subr.mxu0 0.0
        %6418 = vmatpush1.msra.mxu0 0.0
        %6419 = vmatprep.subr.mxu0 0.0
        %6420 = vmatpush1.msra.mxu0 0.0
        %6421 = vmatprep.subr.mxu0 0.0
        %6422 = vmatpush1.msra.mxu0 0.0
        %6423 = vmatprep.subr.mxu0 0.0
        %6424 = vmatpush1.msra.mxu0 0.0
        %6425 = vmatprep.subr.mxu0 0.0
        %6426 = vmatpush1.msra.mxu0 0.0
        %6427 = vmatprep.subr.mxu0 0.0
        %6428 = vmatpush1.msra.mxu0 0.0
        %6429 = vmatprep.subr.mxu0 0.0
        %6430 = vmatpush1.msra.mxu0 0.0
        %6431 = vmatprep.subr.mxu0 0.0
        %6432 = vmatpush1.msra.mxu0 0.0
        %6433 = vmatprep.subr.mxu0 0.0
        %6434 = vmatpush1.msra.mxu0 0.0
        %6435 = vmatprep.subr.mxu0 0.0
        %6436 = vmatpush1.msra.mxu0 0.0
        %6437 = vmatprep.subr.mxu0 0.0
        %6438 = vmatpush1.msra.mxu0 0.0
        %6439 = vmatprep.subr.mxu0 0.0
        %6440 = vmatpush1.msra.mxu0 0.0
        %6441 = vmatprep.subr.mxu0 0.0
        %6442 = vmatpush1.msra.mxu0 0.0
        %6443 = vmatprep.subr.mxu0 0.0
        %6444 = vmatpush1.msra.mxu0 0.0
        %6445 = vmatprep.subr.mxu0 0.0
        %6446 = vmatpush1.msra.mxu0 0.0
        %6447 = vmatprep.subr.mxu0 0.0
        %6448 = vmatpush1.msra.mxu0 0.0
        %6449 = vmatprep.subr.mxu0 0.0
        %6450 = vmatpush1.msra.mxu0 0.0
        %6451 = vmatprep.subr.mxu0 0.0
        %6452 = vmatpush1.msra.mxu0 0.0
        %6453 = vmatprep.subr.mxu0 0.0
        %6454 = vmatpush1.msra.mxu0 0.0
        %6455 = vmatprep.subr.mxu0 0.0
        %6456 = vmatpush1.msra.mxu0 0.0
        %6457 = vmatprep.mubr.f32.mxu0 0.0
        %v6458 = vand.u32 %v4064, 4294901760
        %v6459 = vsub.f32 %v4064, %v6458
        %v6460 = vand.u32 %v6459, 4294901760
        %v6461 = vsub.f32 %v6459, %v6460
        %v6462 = vand.u32 %v6461, 4294901760
        %6463 = vmatmul.mubr.f32.gmra.mrb[0].mxu0 %v6462
        %v6464 = vpop.f32.mrb[0].mxu0
        %v6465 = vadd.f32 %v4061, %v6464
        %v6466 = vpop.f32.mrb[0].mxu0
        %v6467 = vadd.f32 %v4061, %v6466
        %6468 = vdwg.mxu0
        %v6469 = vand.u32 %v4051, 4294901760
        %v6470 = vsub.f32 %v4051, %v6469
        %v6471 = vand.u32 %v6470, 4294901760
        %v6472 = vsub.f32 %v6470, %v6471
        %v6473 = vand.u32 %v6472, 4294901760
        %6474 = vmatprep.subr.mxu0 %v6473
        %v6475 = vand.u32 %v4050, 4294901760
        %v6476 = vsub.f32 %v4050, %v6475
        %v6477 = vand.u32 %v6476, 4294901760
        %v6478 = vsub.f32 %v6476, %v6477
        %v6479 = vand.u32 %v6478, 4294901760
        %6480 = vmatpush1.msra.mxu0 %v6479
        %6481 = vmatprep.subr.mxu0 0.0
        %6482 = vmatpush1.msra.mxu0 0.0
        %6483 = vmatprep.subr.mxu0 0.0
        %6484 = vmatpush1.msra.mxu0 0.0
        %6485 = vmatprep.subr.mxu0 0.0
        %6486 = vmatpush1.msra.mxu0 0.0
        %6487 = vmatprep.subr.mxu0 0.0
        %6488 = vmatpush1.msra.mxu0 0.0
        %6489 = vmatprep.subr.mxu0 0.0
        %6490 = vmatpush1.msra.mxu0 0.0
        %6491 = vmatprep.subr.mxu0 0.0
        %6492 = vmatpush1.msra.mxu0 0.0
        %6493 = vmatprep.subr.mxu0 0.0
        %6494 = vmatpush1.msra.mxu0 0.0
        %6495 = vmatprep.subr.mxu0 0.0
        %6496 = vmatpush1.msra.mxu0 0.0
        %6497 = vmatprep.subr.mxu0 0.0
        %6498 = vmatpush1.msra.mxu0 0.0
        %6499 = vmatprep.subr.mxu0 0.0
        %6500 = vmatpush1.msra.mxu0 0.0
        %6501 = vmatprep.subr.mxu0 0.0
        %6502 = vmatpush1.msra.mxu0 0.0
        %6503 = vmatprep.subr.mxu0 0.0
        %6504 = vmatpush1.msra.mxu0 0.0
        %6505 = vmatprep.subr.mxu0 0.0
        %6506 = vmatpush1.msra.mxu0 0.0
        %6507 = vmatprep.subr.mxu0 0.0
        %6508 = vmatpush1.msra.mxu0 0.0
        %6509 = vmatprep.subr.mxu0 0.0
        %6510 = vmatpush1.msra.mxu0 0.0
        %6511 = vmatprep.subr.mxu0 0.0
        %6512 = vmatpush1.msra.mxu0 0.0
        %6513 = vmatprep.subr.mxu0 0.0
        %6514 = vmatpush1.msra.mxu0 0.0
        %6515 = vmatprep.subr.mxu0 0.0
        %6516 = vmatpush1.msra.mxu0 0.0
        %6517 = vmatprep.subr.mxu0 0.0
        %6518 = vmatpush1.msra.mxu0 0.0
        %6519 = vmatprep.subr.mxu0 0.0
        %6520 = vmatpush1.msra.mxu0 0.0
        %6521 = vmatprep.subr.mxu0 0.0
        %6522 = vmatpush1.msra.mxu0 0.0
        %6523 = vmatprep.subr.mxu0 0.0
        %6524 = vmatpush1.msra.mxu0 0.0
        %6525 = vmatprep.subr.mxu0 0.0
        %6526 = vmatpush1.msra.mxu0 0.0
        %6527 = vmatprep.subr.mxu0 0.0
        %6528 = vmatpush1.msra.mxu0 0.0
        %6529 = vmatprep.subr.mxu0 0.0
        %6530 = vmatpush1.msra.mxu0 0.0
        %6531 = vmatprep.subr.mxu0 0.0
        %6532 = vmatpush1.msra.mxu0 0.0
        %6533 = vmatprep.subr.mxu0 0.0
        %6534 = vmatpush1.msra.mxu0 0.0
        %6535 = vmatprep.subr.mxu0 0.0
        %6536 = vmatpush1.msra.mxu0 0.0
        %6537 = vmatprep.subr.mxu0 0.0
        %6538 = vmatpush1.msra.mxu0 0.0
        %6539 = vmatprep.subr.mxu0 0.0
        %6540 = vmatpush1.msra.mxu0 0.0
        %6541 = vmatprep.subr.mxu0 0.0
        %6542 = vmatpush1.msra.mxu0 0.0
        %6543 = vmatprep.mubr.f32.mxu0 0.0
        %v6544 = vand.u32 %v4064, 4294901760
        %6545 = vmatmul.mubr.f32.gmra.mrb[0].mxu0 %v6544
        %v6546 = vpop.f32.mrb[0].mxu0
        %v6547 = vadd.f32 %v6465, %v6546
        %v6548 = vpop.f32.mrb[0].mxu0
        %v6549 = vadd.f32 %v6467, %v6548
        %6550 = vdwg.mxu0
        %v6551 = vand.u32 %v4051, 4294901760
        %v6552 = vsub.f32 %v4051, %v6551
        %6553 = vmatprep.subr.mxu0 %v6552
        %v6554 = vand.u32 %v4050, 4294901760
        %v6555 = vsub.f32 %v4050, %v6554
        %6556 = vmatpush1.msra.mxu0 %v6555
        %6557 = vmatprep.subr.mxu0 0.0
        %6558 = vmatpush1.msra.mxu0 0.0
        %6559 = vmatprep.subr.mxu0 0.0
        %6560 = vmatpush1.msra.mxu0 0.0
        %6561 = vmatprep.subr.mxu0 0.0
        %6562 = vmatpush1.msra.mxu0 0.0
        %6563 = vmatprep.subr.mxu0 0.0
        %6564 = vmatpush1.msra.mxu0 0.0
        %6565 = vmatprep.subr.mxu0 0.0
        %6566 = vmatpush1.msra.mxu0 0.0
        %6567 = vmatprep.subr.mxu0 0.0
        %6568 = vmatpush1.msra.mxu0 0.0
        %6569 = vmatprep.subr.mxu0 0.0
        %6570 = vmatpush1.msra.mxu0 0.0
        %6571 = vmatprep.subr.mxu0 0.0
        %6572 = vmatpush1.msra.mxu0 0.0
        %6573 = vmatprep.subr.mxu0 0.0
        %6574 = vmatpush1.msra.mxu0 0.0
        %6575 = vmatprep.subr.mxu0 0.0
        %6576 = vmatpush1.msra.mxu0 0.0
        %6577 = vmatprep.subr.mxu0 0.0
        %6578 = vmatpush1.msra.mxu0 0.0
        %6579 = vmatprep.subr.mxu0 0.0
        %6580 = vmatpush1.msra.mxu0 0.0
        %6581 = vmatprep.subr.mxu0 0.0
        %6582 = vmatpush1.msra.mxu0 0.0
        %6583 = vmatprep.subr.mxu0 0.0
        %6584 = vmatpush1.msra.mxu0 0.0
        %6585 = vmatprep.subr.mxu0 0.0
        %6586 = vmatpush1.msra.mxu0 0.0
        %6587 = vmatprep.subr.mxu0 0.0
        %6588 = vmatpush1.msra.mxu0 0.0
        %6589 = vmatprep.subr.mxu0 0.0
        %6590 = vmatpush1.msra.mxu0 0.0
        %6591 = vmatprep.subr.mxu0 0.0
        %6592 = vmatpush1.msra.mxu0 0.0
        %6593 = vmatprep.subr.mxu0 0.0
        %6594 = vmatpush1.msra.mxu0 0.0
        %6595 = vmatprep.subr.mxu0 0.0
        %6596 = vmatpush1.msra.mxu0 0.0
        %6597 = vmatprep.subr.mxu0 0.0
        %6598 = vmatpush1.msra.mxu0 0.0
        %6599 = vmatprep.subr.mxu0 0.0
        %6600 = vmatpush1.msra.mxu0 0.0
        %6601 = vmatprep.subr.mxu0 0.0
        %6602 = vmatpush1.msra.mxu0 0.0
        %6603 = vmatprep.subr.mxu0 0.0
        %6604 = vmatpush1.msra.mxu0 0.0
        %6605 = vmatprep.subr.mxu0 0.0
        %6606 = vmatpush1.msra.mxu0 0.0
        %6607 = vmatprep.subr.mxu0 0.0
        %6608 = vmatpush1.msra.mxu0 0.0
        %6609 = vmatprep.subr.mxu0 0.0
        %6610 = vmatpush1.msra.mxu0 0.0
        %6611 = vmatprep.subr.mxu0 0.0
        %6612 = vmatpush1.msra.mxu0 0.0
        %6613 = vmatprep.subr.mxu0 0.0
        %6614 = vmatpush1.msra.mxu0 0.0
        %6615 = vmatprep.subr.mxu0 0.0
        %6616 = vmatpush1.msra.mxu0 0.0
        %6617 = vmatprep.subr.mxu0 0.0
        %6618 = vmatpush1.msra.mxu0 0.0
        %6619 = vmatprep.mubr.f32.mxu0 0.0
        %v6620 = vand.u32 %v4064, 4294901760
        %v6621 = vsub.f32 %v4064, %v6620
        %6622 = vmatmul.mubr.f32.gmra.mrb[0].mxu0 %v6621
        %v6623 = vpop.f32.mrb[0].mxu0
        %v6624 = vadd.f32 %v6547, %v6623
        %v6625 = vpop.f32.mrb[0].mxu0
        %v6626 = vadd.f32 %v6549, %v6625
        %6627 = vdwg.mxu0
        %v6628 = vand.u32 %v4051, 4294901760
        %6629 = vmatprep.subr.mxu0 %v6628
        %v6630 = vand.u32 %v4050, 4294901760
        %6631 = vmatpush1.msra.mxu0 %v6630
        %6632 = vmatprep.subr.mxu0 0.0
        %6633 = vmatpush1.msra.mxu0 0.0
        %6634 = vmatprep.subr.mxu0 0.0
        %6635 = vmatpush1.msra.mxu0 0.0
        %6636 = vmatprep.subr.mxu0 0.0
        %6637 = vmatpush1.msra.mxu0 0.0
        %6638 = vmatprep.subr.mxu0 0.0
        %6639 = vmatpush1.msra.mxu0 0.0
        %6640 = vmatprep.subr.mxu0 0.0
        %6641 = vmatpush1.msra.mxu0 0.0
        %6642 = vmatprep.subr.mxu0 0.0
        %6643 = vmatpush1.msra.mxu0 0.0
        %6644 = vmatprep.subr.mxu0 0.0
        %6645 = vmatpush1.msra.mxu0 0.0
        %6646 = vmatprep.subr.mxu0 0.0
        %6647 = vmatpush1.msra.mxu0 0.0
        %6648 = vmatprep.subr.mxu0 0.0
        %6649 = vmatpush1.msra.mxu0 0.0
        %6650 = vmatprep.subr.mxu0 0.0
        %6651 = vmatpush1.msra.mxu0 0.0
        %6652 = vmatprep.subr.mxu0 0.0
        %6653 = vmatpush1.msra.mxu0 0.0
        %6654 = vmatprep.subr.mxu0 0.0
        %6655 = vmatpush1.msra.mxu0 0.0
        %6656 = vmatprep.subr.mxu0 0.0
        %6657 = vmatpush1.msra.mxu0 0.0
        %6658 = vmatprep.subr.mxu0 0.0
        %6659 = vmatpush1.msra.mxu0 0.0
        %6660 = vmatprep.subr.mxu0 0.0
        %6661 = vmatpush1.msra.mxu0 0.0
        %6662 = vmatprep.subr.mxu0 0.0
        %6663 = vmatpush1.msra.mxu0 0.0
        %6664 = vmatprep.subr.mxu0 0.0
        %6665 = vmatpush1.msra.mxu0 0.0
        %6666 = vmatprep.subr.mxu0 0.0
        %6667 = vmatpush1.msra.mxu0 0.0
        %6668 = vmatprep.subr.mxu0 0.0
        %6669 = vmatpush1.msra.mxu0 0.0
        %6670 = vmatprep.subr.mxu0 0.0
        %6671 = vmatpush1.msra.mxu0 0.0
        %6672 = vmatprep.subr.mxu0 0.0
        %6673 = vmatpush1.msra.mxu0 0.0
        %6674 = vmatprep.subr.mxu0 0.0
        %6675 = vmatpush1.msra.mxu0 0.0
        %6676 = vmatprep.subr.mxu0 0.0
        %6677 = vmatpush1.msra.mxu0 0.0
        %6678 = vmatprep.subr.mxu0 0.0
        %6679 = vmatpush1.msra.mxu0 0.0
        %6680 = vmatprep.subr.mxu0 0.0
        %6681 = vmatpush1.msra.mxu0 0.0
        %6682 = vmatprep.subr.mxu0 0.0
        %6683 = vmatpush1.msra.mxu0 0.0
        %6684 = vmatprep.subr.mxu0 0.0
        %6685 = vmatpush1.msra.mxu0 0.0
        %6686 = vmatprep.subr.mxu0 0.0
        %6687 = vmatpush1.msra.mxu0 0.0
        %6688 = vmatprep.subr.mxu0 0.0
        %6689 = vmatpush1.msra.mxu0 0.0
        %6690 = vmatprep.subr.mxu0 0.0
        %6691 = vmatpush1.msra.mxu0 0.0
        %6692 = vmatprep.subr.mxu0 0.0
        %6693 = vmatpush1.msra.mxu0 0.0
        %6694 = vmatprep.mubr.f32.mxu0 0.0
        %v6695 = vand.u32 %v4064, 4294901760
        %v6696 = vsub.f32 %v4064, %v6695
        %v6697 = vand.u32 %v6696, 4294901760
        %6698 = vmatmul.mubr.f32.gmra.mrb[0].mxu0 %v6697
        %v6699 = vpop.f32.mrb[0].mxu0
        %v6700 = vadd.f32 %v6624, %v6699
        %v6701 = vpop.f32.mrb[0].mxu0
        %v6702 = vadd.f32 %v6626, %v6701
        %6703 = vdwg.mxu0
        %v6704 = vand.u32 %v4051, 4294901760
        %v6705 = vsub.f32 %v4051, %v6704
        %v6706 = vand.u32 %v6705, 4294901760
        %6707 = vmatprep.subr.mxu0 %v6706
        %v6708 = vand.u32 %v4050, 4294901760
        %v6709 = vsub.f32 %v4050, %v6708
        %v6710 = vand.u32 %v6709, 4294901760
        %6711 = vmatpush1.msra.mxu0 %v6710
        %6712 = vmatprep.subr.mxu0 0.0
        %6713 = vmatpush1.msra.mxu0 0.0
        %6714 = vmatprep.subr.mxu0 0.0
        %6715 = vmatpush1.msra.mxu0 0.0
        %6716 = vmatprep.subr.mxu0 0.0
        %6717 = vmatpush1.msra.mxu0 0.0
        %6718 = vmatprep.subr.mxu0 0.0
        %6719 = vmatpush1.msra.mxu0 0.0
        %6720 = vmatprep.subr.mxu0 0.0
        %6721 = vmatpush1.msra.mxu0 0.0
        %6722 = vmatprep.subr.mxu0 0.0
        %6723 = vmatpush1.msra.mxu0 0.0
        %6724 = vmatprep.subr.mxu0 0.0
        %6725 = vmatpush1.msra.mxu0 0.0
        %6726 = vmatprep.subr.mxu0 0.0
        %6727 = vmatpush1.msra.mxu0 0.0
        %6728 = vmatprep.subr.mxu0 0.0
        %6729 = vmatpush1.msra.mxu0 0.0
        %6730 = vmatprep.subr.mxu0 0.0
        %6731 = vmatpush1.msra.mxu0 0.0
        %6732 = vmatprep.subr.mxu0 0.0
        %6733 = vmatpush1.msra.mxu0 0.0
        %6734 = vmatprep.subr.mxu0 0.0
        %6735 = vmatpush1.msra.mxu0 0.0
        %6736 = vmatprep.subr.mxu0 0.0
        %6737 = vmatpush1.msra.mxu0 0.0
        %6738 = vmatprep.subr.mxu0 0.0
        %6739 = vmatpush1.msra.mxu0 0.0
        %6740 = vmatprep.subr.mxu0 0.0
        %6741 = vmatpush1.msra.mxu0 0.0
        %6742 = vmatprep.subr.mxu0 0.0
        %6743 = vmatpush1.msra.mxu0 0.0
        %6744 = vmatprep.subr.mxu0 0.0
        %6745 = vmatpush1.msra.mxu0 0.0
        %6746 = vmatprep.subr.mxu0 0.0
        %6747 = vmatpush1.msra.mxu0 0.0
        %6748 = vmatprep.subr.mxu0 0.0
        %6749 = vmatpush1.msra.mxu0 0.0
        %6750 = vmatprep.subr.mxu0 0.0
        %6751 = vmatpush1.msra.mxu0 0.0
        %6752 = vmatprep.subr.mxu0 0.0
        %6753 = vmatpush1.msra.mxu0 0.0
        %6754 = vmatprep.subr.mxu0 0.0
        %6755 = vmatpush1.msra.mxu0 0.0
        %6756 = vmatprep.subr.mxu0 0.0
        %6757 = vmatpush1.msra.mxu0 0.0
        %6758 = vmatprep.subr.mxu0 0.0
        %6759 = vmatpush1.msra.mxu0 0.0
        %6760 = vmatprep.subr.mxu0 0.0
        %6761 = vmatpush1.msra.mxu0 0.0
        %6762 = vmatprep.subr.mxu0 0.0
        %6763 = vmatpush1.msra.mxu0 0.0
        %6764 = vmatprep.subr.mxu0 0.0
        %6765 = vmatpush1.msra.mxu0 0.0
        %6766 = vmatprep.subr.mxu0 0.0
        %6767 = vmatpush1.msra.mxu0 0.0
        %6768 = vmatprep.subr.mxu0 0.0
        %6769 = vmatpush1.msra.mxu0 0.0
        %6770 = vmatprep.subr.mxu0 0.0
        %6771 = vmatpush1.msra.mxu0 0.0
        %6772 = vmatprep.subr.mxu0 0.0
        %6773 = vmatpush1.msra.mxu0 0.0
        %6774 = vmatprep.mubr.f32.mxu0 0.0
        %v6775 = vand.u32 %v4064, 4294901760
        %6776 = vmatmul.mubr.f32.gmra.mrb[0].mxu0 %v6775
        %v6777 = vpop.f32.mrb[0].mxu0
        %v6778 = vadd.f32 %v6700, %v6777
        %v6779 = vpop.f32.mrb[0].mxu0
        %v6780 = vadd.f32 %v6702, %v6779
        %6781 = vdwg.mxu0
        %v6782 = vand.u32 %v4051, 4294901760
        %6783 = vmatprep.subr.mxu0 %v6782
        %v6784 = vand.u32 %v4050, 4294901760
        %6785 = vmatpush1.msra.mxu0 %v6784
        %6786 = vmatprep.subr.mxu0 0.0
        %6787 = vmatpush1.msra.mxu0 0.0
        %6788 = vmatprep.subr.mxu0 0.0
        %6789 = vmatpush1.msra.mxu0 0.0
        %6790 = vmatprep.subr.mxu0 0.0
        %6791 = vmatpush1.msra.mxu0 0.0
        %6792 = vmatprep.subr.mxu0 0.0
        %6793 = vmatpush1.msra.mxu0 0.0
        %6794 = vmatprep.subr.mxu0 0.0
        %6795 = vmatpush1.msra.mxu0 0.0
        %6796 = vmatprep.subr.mxu0 0.0
        %6797 = vmatpush1.msra.mxu0 0.0
        %6798 = vmatprep.subr.mxu0 0.0
        %6799 = vmatpush1.msra.mxu0 0.0
        %6800 = vmatprep.subr.mxu0 0.0
        %6801 = vmatpush1.msra.mxu0 0.0
        %6802 = vmatprep.subr.mxu0 0.0
        %6803 = vmatpush1.msra.mxu0 0.0
        %6804 = vmatprep.subr.mxu0 0.0
        %6805 = vmatpush1.msra.mxu0 0.0
        %6806 = vmatprep.subr.mxu0 0.0
        %6807 = vmatpush1.msra.mxu0 0.0
        %6808 = vmatprep.subr.mxu0 0.0
        %6809 = vmatpush1.msra.mxu0 0.0
        %6810 = vmatprep.subr.mxu0 0.0
        %6811 = vmatpush1.msra.mxu0 0.0
        %6812 = vmatprep.subr.mxu0 0.0
        %6813 = vmatpush1.msra.mxu0 0.0
        %6814 = vmatprep.subr.mxu0 0.0
        %6815 = vmatpush1.msra.mxu0 0.0
        %6816 = vmatprep.subr.mxu0 0.0
        %6817 = vmatpush1.msra.mxu0 0.0
        %6818 = vmatprep.subr.mxu0 0.0
        %6819 = vmatpush1.msra.mxu0 0.0
        %6820 = vmatprep.subr.mxu0 0.0
        %6821 = vmatpush1.msra.mxu0 0.0
        %6822 = vmatprep.subr.mxu0 0.0
        %6823 = vmatpush1.msra.mxu0 0.0
        %6824 = vmatprep.subr.mxu0 0.0
        %6825 = vmatpush1.msra.mxu0 0.0
        %6826 = vmatprep.subr.mxu0 0.0
        %6827 = vmatpush1.msra.mxu0 0.0
        %6828 = vmatprep.subr.mxu0 0.0
        %6829 = vmatpush1.msra.mxu0 0.0
        %6830 = vmatprep.subr.mxu0 0.0
        %6831 = vmatpush1.msra.mxu0 0.0
        %6832 = vmatprep.subr.mxu0 0.0
        %6833 = vmatpush1.msra.mxu0 0.0
        %6834 = vmatprep.subr.mxu0 0.0
        %6835 = vmatpush1.msra.mxu0 0.0
        %6836 = vmatprep.subr.mxu0 0.0
        %6837 = vmatpush1.msra.mxu0 0.0
        %6838 = vmatprep.subr.mxu0 0.0
        %6839 = vmatpush1.msra.mxu0 0.0
        %6840 = vmatprep.subr.mxu0 0.0
        %6841 = vmatpush1.msra.mxu0 0.0
        %6842 = vmatprep.subr.mxu0 0.0
        %6843 = vmatpush1.msra.mxu0 0.0
        %6844 = vmatprep.subr.mxu0 0.0
        %6845 = vmatpush1.msra.mxu0 0.0
        %6846 = vmatprep.subr.mxu0 0.0
        %6847 = vmatpush1.msra.mxu0 0.0
        %6848 = vmatprep.mubr.f32.mxu0 0.0
        %v6849 = vand.u32 %v4064, 4294901760
        %6850 = vmatmul.mubr.f32.gmra.mrb[0].mxu0 %v6849
        %v6851 = vpop.f32.mrb[0].mxu0
        %v6852 = vadd.f32 %v6778, %v6851
        %v6853 = vpop.f32.mrb[0].mxu0
        %v6854 = vadd.f32 %v6780, %v6853
        %6855 = vdwg.mxu0
        %v6856 = vand.u32 %v4053, 4294901760
        %6857 = vmatprep.subr.mxu0 %v6856
        %v6858 = vand.u32 %v4052, 4294901760
        %6859 = vmatpush1.msra.mxu0 %v6858
        %6860 = vmatprep.subr.mxu0 0.0
        %6861 = vmatpush1.msra.mxu0 0.0
        %6862 = vmatprep.subr.mxu0 0.0
        %6863 = vmatpush1.msra.mxu0 0.0
        %6864 = vmatprep.subr.mxu0 0.0
        %6865 = vmatpush1.msra.mxu0 0.0
        %6866 = vmatprep.subr.mxu0 0.0
        %6867 = vmatpush1.msra.mxu0 0.0
        %6868 = vmatprep.subr.mxu0 0.0
        %6869 = vmatpush1.msra.mxu0 0.0
        %6870 = vmatprep.subr.mxu0 0.0
        %6871 = vmatpush1.msra.mxu0 0.0
        %6872 = vmatprep.subr.mxu0 0.0
        %6873 = vmatpush1.msra.mxu0 0.0
        %6874 = vmatprep.subr.mxu0 0.0
        %6875 = vmatpush1.msra.mxu0 0.0
        %6876 = vmatprep.subr.mxu0 0.0
        %6877 = vmatpush1.msra.mxu0 0.0
        %6878 = vmatprep.subr.mxu0 0.0
        %6879 = vmatpush1.msra.mxu0 0.0
        %6880 = vmatprep.subr.mxu0 0.0
        %6881 = vmatpush1.msra.mxu0 0.0
        %6882 = vmatprep.subr.mxu0 0.0
        %6883 = vmatpush1.msra.mxu0 0.0
        %6884 = vmatprep.subr.mxu0 0.0
        %6885 = vmatpush1.msra.mxu0 0.0
        %6886 = vmatprep.subr.mxu0 0.0
        %6887 = vmatpush1.msra.mxu0 0.0
        %6888 = vmatprep.subr.mxu0 0.0
        %6889 = vmatpush1.msra.mxu0 0.0
        %6890 = vmatprep.subr.mxu0 0.0
        %6891 = vmatpush1.msra.mxu0 0.0
        %6892 = vmatprep.subr.mxu0 0.0
        %6893 = vmatpush1.msra.mxu0 0.0
        %6894 = vmatprep.subr.mxu0 0.0
        %6895 = vmatpush1.msra.mxu0 0.0
        %6896 = vmatprep.subr.mxu0 0.0
        %6897 = vmatpush1.msra.mxu0 0.0
        %6898 = vmatprep.subr.mxu0 0.0
        %6899 = vmatpush1.msra.mxu0 0.0
        %6900 = vmatprep.subr.mxu0 0.0
        %6901 = vmatpush1.msra.mxu0 0.0
        %6902 = vmatprep.subr.mxu0 0.0
        %6903 = vmatpush1.msra.mxu0 0.0
        %6904 = vmatprep.subr.mxu0 0.0
        %6905 = vmatpush1.msra.mxu0 0.0
        %6906 = vmatprep.subr.mxu0 0.0
        %6907 = vmatpush1.msra.mxu0 0.0
        %6908 = vmatprep.subr.mxu0 0.0
        %6909 = vmatpush1.msra.mxu0 0.0
        %6910 = vmatprep.subr.mxu0 0.0
        %6911 = vmatpush1.msra.mxu0 0.0
        %6912 = vmatprep.subr.mxu0 0.0
        %6913 = vmatpush1.msra.mxu0 0.0
        %6914 = vmatprep.subr.mxu0 0.0
        %6915 = vmatpush1.msra.mxu0 0.0
        %6916 = vmatprep.subr.mxu0 0.0
        %6917 = vmatpush1.msra.mxu0 0.0
        %6918 = vmatprep.subr.mxu0 0.0
        %6919 = vmatpush1.msra.mxu0 0.0
        %6920 = vmatprep.subr.mxu0 0.0
        %6921 = vmatpush1.msra.mxu0 0.0
        %6922 = vmatprep.mubr.f32.mxu0 0.0
        %v6923 = vand.u32 %v4064, 4294901760
        %v6924 = vsub.f32 %v4064, %v6923
        %v6925 = vand.u32 %v6924, 4294901760
        %v6926 = vsub.f32 %v6924, %v6925
        %v6927 = vand.u32 %v6926, 4294901760
        %6928 = vmatmul.mubr.f32.gmra.mrb[0].mxu0 %v6927
        %v6929 = vpop.f32.mrb[0].mxu0
        %v6930 = vadd.f32 %v4061, %v6929
        %v6931 = vpop.f32.mrb[0].mxu0
        %v6932 = vadd.f32 %v4061, %v6931
        %6933 = vdwg.mxu0
        %v6934 = vand.u32 %v4053, 4294901760
        %v6935 = vsub.f32 %v4053, %v6934
        %v6936 = vand.u32 %v6935, 4294901760
        %v6937 = vsub.f32 %v6935, %v6936
        %v6938 = vand.u32 %v6937, 4294901760
        %6939 = vmatprep.subr.mxu0 %v6938
        %v6940 = vand.u32 %v4052, 4294901760
        %v6941 = vsub.f32 %v4052, %v6940
        %v6942 = vand.u32 %v6941, 4294901760
        %v6943 = vsub.f32 %v6941, %v6942
        %v6944 = vand.u32 %v6943, 4294901760
        %6945 = vmatpush1.msra.mxu0 %v6944
        %6946 = vmatprep.subr.mxu0 0.0
        %6947 = vmatpush1.msra.mxu0 0.0
        %6948 = vmatprep.subr.mxu0 0.0
        %6949 = vmatpush1.msra.mxu0 0.0
        %6950 = vmatprep.subr.mxu0 0.0
        %6951 = vmatpush1.msra.mxu0 0.0
        %6952 = vmatprep.subr.mxu0 0.0
        %6953 = vmatpush1.msra.mxu0 0.0
        %6954 = vmatprep.subr.mxu0 0.0
        %6955 = vmatpush1.msra.mxu0 0.0
        %6956 = vmatprep.subr.mxu0 0.0
        %6957 = vmatpush1.msra.mxu0 0.0
        %6958 = vmatprep.subr.mxu0 0.0
        %6959 = vmatpush1.msra.mxu0 0.0
        %6960 = vmatprep.subr.mxu0 0.0
        %6961 = vmatpush1.msra.mxu0 0.0
        %6962 = vmatprep.subr.mxu0 0.0
        %6963 = vmatpush1.msra.mxu0 0.0
        %6964 = vmatprep.subr.mxu0 0.0
        %6965 = vmatpush1.msra.mxu0 0.0
        %6966 = vmatprep.subr.mxu0 0.0
        %6967 = vmatpush1.msra.mxu0 0.0
        %6968 = vmatprep.subr.mxu0 0.0
        %6969 = vmatpush1.msra.mxu0 0.0
        %6970 = vmatprep.subr.mxu0 0.0
        %6971 = vmatpush1.msra.mxu0 0.0
        %6972 = vmatprep.subr.mxu0 0.0
        %6973 = vmatpush1.msra.mxu0 0.0
        %6974 = vmatprep.subr.mxu0 0.0
        %6975 = vmatpush1.msra.mxu0 0.0
        %6976 = vmatprep.subr.mxu0 0.0
        %6977 = vmatpush1.msra.mxu0 0.0
        %6978 = vmatprep.subr.mxu0 0.0
        %6979 = vmatpush1.msra.mxu0 0.0
        %6980 = vmatprep.subr.mxu0 0.0
        %6981 = vmatpush1.msra.mxu0 0.0
        %6982 = vmatprep.subr.mxu0 0.0
        %6983 = vmatpush1.msra.mxu0 0.0
        %6984 = vmatprep.subr.mxu0 0.0
        %6985 = vmatpush1.msra.mxu0 0.0
        %6986 = vmatprep.subr.mxu0 0.0
        %6987 = vmatpush1.msra.mxu0 0.0
        %6988 = vmatprep.subr.mxu0 0.0
        %6989 = vmatpush1.msra.mxu0 0.0
        %6990 = vmatprep.subr.mxu0 0.0
        %6991 = vmatpush1.msra.mxu0 0.0
        %6992 = vmatprep.subr.mxu0 0.0
        %6993 = vmatpush1.msra.mxu0 0.0
        %6994 = vmatprep.subr.mxu0 0.0
        %6995 = vmatpush1.msra.mxu0 0.0
        %6996 = vmatprep.subr.mxu0 0.0
        %6997 = vmatpush1.msra.mxu0 0.0
        %6998 = vmatprep.subr.mxu0 0.0
        %6999 = vmatpush1.msra.mxu0 0.0
        %7000 = vmatprep.subr.mxu0 0.0
        %7001 = vmatpush1.msra.mxu0 0.0
        %7002 = vmatprep.subr.mxu0 0.0
        %7003 = vmatpush1.msra.mxu0 0.0
        %7004 = vmatprep.subr.mxu0 0.0
        %7005 = vmatpush1.msra.mxu0 0.0
        %7006 = vmatprep.subr.mxu0 0.0
        %7007 = vmatpush1.msra.mxu0 0.0
        %7008 = vmatprep.mubr.f32.mxu0 0.0
        %v7009 = vand.u32 %v4064, 4294901760
        %7010 = vmatmul.mubr.f32.gmra.mrb[0].mxu0 %v7009
        %v7011 = vpop.f32.mrb[0].mxu0
        %v7012 = vadd.f32 %v6930, %v7011
        %v7013 = vpop.f32.mrb[0].mxu0
        %v7014 = vadd.f32 %v6932, %v7013
        %7015 = vdwg.mxu0
        %v7016 = vand.u32 %v4053, 4294901760
        %v7017 = vsub.f32 %v4053, %v7016
        %7018 = vmatprep.subr.mxu0 %v7017
        %v7019 = vand.u32 %v4052, 4294901760
        %v7020 = vsub.f32 %v4052, %v7019
        %7021 = vmatpush1.msra.mxu0 %v7020
        %7022 = vmatprep.subr.mxu0 0.0
        %7023 = vmatpush1.msra.mxu0 0.0
        %7024 = vmatprep.subr.mxu0 0.0
        %7025 = vmatpush1.msra.mxu0 0.0
        %7026 = vmatprep.subr.mxu0 0.0
        %7027 = vmatpush1.msra.mxu0 0.0
        %7028 = vmatprep.subr.mxu0 0.0
        %7029 = vmatpush1.msra.mxu0 0.0
        %7030 = vmatprep.subr.mxu0 0.0
        %7031 = vmatpush1.msra.mxu0 0.0
        %7032 = vmatprep.subr.mxu0 0.0
        %7033 = vmatpush1.msra.mxu0 0.0
        %7034 = vmatprep.subr.mxu0 0.0
        %7035 = vmatpush1.msra.mxu0 0.0
        %7036 = vmatprep.subr.mxu0 0.0
        %7037 = vmatpush1.msra.mxu0 0.0
        %7038 = vmatprep.subr.mxu0 0.0
        %7039 = vmatpush1.msra.mxu0 0.0
        %7040 = vmatprep.subr.mxu0 0.0
        %7041 = vmatpush1.msra.mxu0 0.0
        %7042 = vmatprep.subr.mxu0 0.0
        %7043 = vmatpush1.msra.mxu0 0.0
        %7044 = vmatprep.subr.mxu0 0.0
        %7045 = vmatpush1.msra.mxu0 0.0
        %7046 = vmatprep.subr.mxu0 0.0
        %7047 = vmatpush1.msra.mxu0 0.0
        %7048 = vmatprep.subr.mxu0 0.0
        %7049 = vmatpush1.msra.mxu0 0.0
        %7050 = vmatprep.subr.mxu0 0.0
        %7051 = vmatpush1.msra.mxu0 0.0
        %7052 = vmatprep.subr.mxu0 0.0
        %7053 = vmatpush1.msra.mxu0 0.0
        %7054 = vmatprep.subr.mxu0 0.0
        %7055 = vmatpush1.msra.mxu0 0.0
        %7056 = vmatprep.subr.mxu0 0.0
        %7057 = vmatpush1.msra.mxu0 0.0
        %7058 = vmatprep.subr.mxu0 0.0
        %7059 = vmatpush1.msra.mxu0 0.0
        %7060 = vmatprep.subr.mxu0 0.0
        %7061 = vmatpush1.msra.mxu0 0.0
        %7062 = vmatprep.subr.mxu0 0.0
        %7063 = vmatpush1.msra.mxu0 0.0
        %7064 = vmatprep.subr.mxu0 0.0
        %7065 = vmatpush1.msra.mxu0 0.0
        %7066 = vmatprep.subr.mxu0 0.0
        %7067 = vmatpush1.msra.mxu0 0.0
        %7068 = vmatprep.subr.mxu0 0.0
        %7069 = vmatpush1.msra.mxu0 0.0
        %7070 = vmatprep.subr.mxu0 0.0
        %7071 = vmatpush1.msra.mxu0 0.0
        %7072 = vmatprep.subr.mxu0 0.0
        %7073 = vmatpush1.msra.mxu0 0.0
        %7074 = vmatprep.subr.mxu0 0.0
        %7075 = vmatpush1.msra.mxu0 0.0
        %7076 = vmatprep.subr.mxu0 0.0
        %7077 = vmatpush1.msra.mxu0 0.0
        %7078 = vmatprep.subr.mxu0 0.0
        %7079 = vmatpush1.msra.mxu0 0.0
        %7080 = vmatprep.subr.mxu0 0.0
        %7081 = vmatpush1.msra.mxu0 0.0
        %7082 = vmatprep.subr.mxu0 0.0
        %7083 = vmatpush1.msra.mxu0 0.0
        %7084 = vmatprep.mubr.f32.mxu0 0.0
        %v7085 = vand.u32 %v4064, 4294901760
        %v7086 = vsub.f32 %v4064, %v7085
        %7087 = vmatmul.mubr.f32.gmra.mrb[0].mxu0 %v7086
        %v7088 = vpop.f32.mrb[0].mxu0
        %v7089 = vadd.f32 %v7012, %v7088
        %v7090 = vpop.f32.mrb[0].mxu0
        %v7091 = vadd.f32 %v7014, %v7090
        %7092 = vdwg.mxu0
        %v7093 = vand.u32 %v4053, 4294901760
        %7094 = vmatprep.subr.mxu0 %v7093
        %v7095 = vand.u32 %v4052, 4294901760
        %7096 = vmatpush1.msra.mxu0 %v7095
        %7097 = vmatprep.subr.mxu0 0.0
        %7098 = vmatpush1.msra.mxu0 0.0
        %7099 = vmatprep.subr.mxu0 0.0
        %7100 = vmatpush1.msra.mxu0 0.0
        %7101 = vmatprep.subr.mxu0 0.0
        %7102 = vmatpush1.msra.mxu0 0.0
        %7103 = vmatprep.subr.mxu0 0.0
        %7104 = vmatpush1.msra.mxu0 0.0
        %7105 = vmatprep.subr.mxu0 0.0
        %7106 = vmatpush1.msra.mxu0 0.0
        %7107 = vmatprep.subr.mxu0 0.0
        %7108 = vmatpush1.msra.mxu0 0.0
        %7109 = vmatprep.subr.mxu0 0.0
        %7110 = vmatpush1.msra.mxu0 0.0
        %7111 = vmatprep.subr.mxu0 0.0
        %7112 = vmatpush1.msra.mxu0 0.0
        %7113 = vmatprep.subr.mxu0 0.0
        %7114 = vmatpush1.msra.mxu0 0.0
        %7115 = vmatprep.subr.mxu0 0.0
        %7116 = vmatpush1.msra.mxu0 0.0
        %7117 = vmatprep.subr.mxu0 0.0
        %7118 = vmatpush1.msra.mxu0 0.0
        %7119 = vmatprep.subr.mxu0 0.0
        %7120 = vmatpush1.msra.mxu0 0.0
        %7121 = vmatprep.subr.mxu0 0.0
        %7122 = vmatpush1.msra.mxu0 0.0
        %7123 = vmatprep.subr.mxu0 0.0
        %7124 = vmatpush1.msra.mxu0 0.0
        %7125 = vmatprep.subr.mxu0 0.0
        %7126 = vmatpush1.msra.mxu0 0.0
        %7127 = vmatprep.subr.mxu0 0.0
        %7128 = vmatpush1.msra.mxu0 0.0
        %7129 = vmatprep.subr.mxu0 0.0
        %7130 = vmatpush1.msra.mxu0 0.0
        %7131 = vmatprep.subr.mxu0 0.0
        %7132 = vmatpush1.msra.mxu0 0.0
        %7133 = vmatprep.subr.mxu0 0.0
        %7134 = vmatpush1.msra.mxu0 0.0
        %7135 = vmatprep.subr.mxu0 0.0
        %7136 = vmatpush1.msra.mxu0 0.0
        %7137 = vmatprep.subr.mxu0 0.0
        %7138 = vmatpush1.msra.mxu0 0.0
        %7139 = vmatprep.subr.mxu0 0.0
        %7140 = vmatpush1.msra.mxu0 0.0
        %7141 = vmatprep.subr.mxu0 0.0
        %7142 = vmatpush1.msra.mxu0 0.0
        %7143 = vmatprep.subr.mxu0 0.0
        %7144 = vmatpush1.msra.mxu0 0.0
        %7145 = vmatprep.subr.mxu0 0.0
        %7146 = vmatpush1.msra.mxu0 0.0
        %7147 = vmatprep.subr.mxu0 0.0
        %7148 = vmatpush1.msra.mxu0 0.0
        %7149 = vmatprep.subr.mxu0 0.0
        %7150 = vmatpush1.msra.mxu0 0.0
        %7151 = vmatprep.subr.mxu0 0.0
        %7152 = vmatpush1.msra.mxu0 0.0
        %7153 = vmatprep.subr.mxu0 0.0
        %7154 = vmatpush1.msra.mxu0 0.0
        %7155 = vmatprep.subr.mxu0 0.0
        %7156 = vmatpush1.msra.mxu0 0.0
        %7157 = vmatprep.subr.mxu0 0.0
        %7158 = vmatpush1.msra.mxu0 0.0
        %7159 = vmatprep.mubr.f32.mxu0 0.0
        %v7160 = vand.u32 %v4064, 4294901760
        %v7161 = vsub.f32 %v4064, %v7160
        %v7162 = vand.u32 %v7161, 4294901760
        %7163 = vmatmul.mubr.f32.gmra.mrb[0].mxu0 %v7162
        %v7164 = vpop.f32.mrb[0].mxu0
        %v7165 = vadd.f32 %v7089, %v7164
        %v7166 = vpop.f32.mrb[0].mxu0
        %v7167 = vadd.f32 %v7091, %v7166
        %7168 = vdwg.mxu0
        %v7169 = vand.u32 %v4053, 4294901760
        %v7170 = vsub.f32 %v4053, %v7169
        %v7171 = vand.u32 %v7170, 4294901760
        %7172 = vmatprep.subr.mxu0 %v7171
        %v7173 = vand.u32 %v4052, 4294901760
        %v7174 = vsub.f32 %v4052, %v7173
        %v7175 = vand.u32 %v7174, 4294901760
        %7176 = vmatpush1.msra.mxu0 %v7175
        %7177 = vmatprep.subr.mxu0 0.0
        %7178 = vmatpush1.msra.mxu0 0.0
        %7179 = vmatprep.subr.mxu0 0.0
        %7180 = vmatpush1.msra.mxu0 0.0
        %7181 = vmatprep.subr.mxu0 0.0
        %7182 = vmatpush1.msra.mxu0 0.0
        %7183 = vmatprep.subr.mxu0 0.0
        %7184 = vmatpush1.msra.mxu0 0.0
        %7185 = vmatprep.subr.mxu0 0.0
        %7186 = vmatpush1.msra.mxu0 0.0
        %7187 = vmatprep.subr.mxu0 0.0
        %7188 = vmatpush1.msra.mxu0 0.0
        %7189 = vmatprep.subr.mxu0 0.0
        %7190 = vmatpush1.msra.mxu0 0.0
        %7191 = vmatprep.subr.mxu0 0.0
        %7192 = vmatpush1.msra.mxu0 0.0
        %7193 = vmatprep.subr.mxu0 0.0
        %7194 = vmatpush1.msra.mxu0 0.0
        %7195 = vmatprep.subr.mxu0 0.0
        %7196 = vmatpush1.msra.mxu0 0.0
        %7197 = vmatprep.subr.mxu0 0.0
        %7198 = vmatpush1.msra.mxu0 0.0
        %7199 = vmatprep.subr.mxu0 0.0
        %7200 = vmatpush1.msra.mxu0 0.0
        %7201 = vmatprep.subr.mxu0 0.0
        %7202 = vmatpush1.msra.mxu0 0.0
        %7203 = vmatprep.subr.mxu0 0.0
        %7204 = vmatpush1.msra.mxu0 0.0
        %7205 = vmatprep.subr.mxu0 0.0
        %7206 = vmatpush1.msra.mxu0 0.0
        %7207 = vmatprep.subr.mxu0 0.0
        %7208 = vmatpush1.msra.mxu0 0.0
        %7209 = vmatprep.subr.mxu0 0.0
        %7210 = vmatpush1.msra.mxu0 0.0
        %7211 = vmatprep.subr.mxu0 0.0
        %7212 = vmatpush1.msra.mxu0 0.0
        %7213 = vmatprep.subr.mxu0 0.0
        %7214 = vmatpush1.msra.mxu0 0.0
        %7215 = vmatprep.subr.mxu0 0.0
        %7216 = vmatpush1.msra.mxu0 0.0
        %7217 = vmatprep.subr.mxu0 0.0
        %7218 = vmatpush1.msra.mxu0 0.0
        %7219 = vmatprep.subr.mxu0 0.0
        %7220 = vmatpush1.msra.mxu0 0.0
        %7221 = vmatprep.subr.mxu0 0.0
        %7222 = vmatpush1.msra.mxu0 0.0
        %7223 = vmatprep.subr.mxu0 0.0
        %7224 = vmatpush1.msra.mxu0 0.0
        %7225 = vmatprep.subr.mxu0 0.0
        %7226 = vmatpush1.msra.mxu0 0.0
        %7227 = vmatprep.subr.mxu0 0.0
        %7228 = vmatpush1.msra.mxu0 0.0
        %7229 = vmatprep.subr.mxu0 0.0
        %7230 = vmatpush1.msra.mxu0 0.0
        %7231 = vmatprep.subr.mxu0 0.0
        %7232 = vmatpush1.msra.mxu0 0.0
        %7233 = vmatprep.subr.mxu0 0.0
        %7234 = vmatpush1.msra.mxu0 0.0
        %7235 = vmatprep.subr.mxu0 0.0
        %7236 = vmatpush1.msra.mxu0 0.0
        %7237 = vmatprep.subr.mxu0 0.0
        %7238 = vmatpush1.msra.mxu0 0.0
        %7239 = vmatprep.mubr.f32.mxu0 0.0
        %v7240 = vand.u32 %v4064, 4294901760
        %7241 = vmatmul.mubr.f32.gmra.mrb[0].mxu0 %v7240
        %v7242 = vpop.f32.mrb[0].mxu0
        %v7243 = vadd.f32 %v7165, %v7242
        %v7244 = vpop.f32.mrb[0].mxu0
        %v7245 = vadd.f32 %v7167, %v7244
        %7246 = vdwg.mxu0
        %v7247 = vand.u32 %v4053, 4294901760
        %7248 = vmatprep.subr.mxu0 %v7247
        %v7249 = vand.u32 %v4052, 4294901760
        %7250 = vmatpush1.msra.mxu0 %v7249
        %7251 = vmatprep.subr.mxu0 0.0
        %7252 = vmatpush1.msra.mxu0 0.0
        %7253 = vmatprep.subr.mxu0 0.0
        %7254 = vmatpush1.msra.mxu0 0.0
        %7255 = vmatprep.subr.mxu0 0.0
        %7256 = vmatpush1.msra.mxu0 0.0
        %7257 = vmatprep.subr.mxu0 0.0
        %7258 = vmatpush1.msra.mxu0 0.0
        %7259 = vmatprep.subr.mxu0 0.0
        %7260 = vmatpush1.msra.mxu0 0.0
        %7261 = vmatprep.subr.mxu0 0.0
        %7262 = vmatpush1.msra.mxu0 0.0
        %7263 = vmatprep.subr.mxu0 0.0
        %7264 = vmatpush1.msra.mxu0 0.0
        %7265 = vmatprep.subr.mxu0 0.0
        %7266 = vmatpush1.msra.mxu0 0.0
        %7267 = vmatprep.subr.mxu0 0.0
        %7268 = vmatpush1.msra.mxu0 0.0
        %7269 = vmatprep.subr.mxu0 0.0
        %7270 = vmatpush1.msra.mxu0 0.0
        %7271 = vmatprep.subr.mxu0 0.0
        %7272 = vmatpush1.msra.mxu0 0.0
        %7273 = vmatprep.subr.mxu0 0.0
        %7274 = vmatpush1.msra.mxu0 0.0
        %7275 = vmatprep.subr.mxu0 0.0
        %7276 = vmatpush1.msra.mxu0 0.0
        %7277 = vmatprep.subr.mxu0 0.0
        %7278 = vmatpush1.msra.mxu0 0.0
        %7279 = vmatprep.subr.mxu0 0.0
        %7280 = vmatpush1.msra.mxu0 0.0
        %7281 = vmatprep.subr.mxu0 0.0
        %7282 = vmatpush1.msra.mxu0 0.0
        %7283 = vmatprep.subr.mxu0 0.0
        %7284 = vmatpush1.msra.mxu0 0.0
        %7285 = vmatprep.subr.mxu0 0.0
        %7286 = vmatpush1.msra.mxu0 0.0
        %7287 = vmatprep.subr.mxu0 0.0
        %7288 = vmatpush1.msra.mxu0 0.0
        %7289 = vmatprep.subr.mxu0 0.0
        %7290 = vmatpush1.msra.mxu0 0.0
        %7291 = vmatprep.subr.mxu0 0.0
        %7292 = vmatpush1.msra.mxu0 0.0
        %7293 = vmatprep.subr.mxu0 0.0
        %7294 = vmatpush1.msra.mxu0 0.0
        %7295 = vmatprep.subr.mxu0 0.0
        %7296 = vmatpush1.msra.mxu0 0.0
        %7297 = vmatprep.subr.mxu0 0.0
        %7298 = vmatpush1.msra.mxu0 0.0
        %7299 = vmatprep.subr.mxu0 0.0
        %7300 = vmatpush1.msra.mxu0 0.0
        %7301 = vmatprep.subr.mxu0 0.0
        %7302 = vmatpush1.msra.mxu0 0.0
        %7303 = vmatprep.subr.mxu0 0.0
        %7304 = vmatpush1.msra.mxu0 0.0
        %7305 = vmatprep.subr.mxu0 0.0
        %7306 = vmatpush1.msra.mxu0 0.0
        %7307 = vmatprep.subr.mxu0 0.0
        %7308 = vmatpush1.msra.mxu0 0.0
        %7309 = vmatprep.subr.mxu0 0.0
        %7310 = vmatpush1.msra.mxu0 0.0
        %7311 = vmatprep.subr.mxu0 0.0
        %7312 = vmatpush1.msra.mxu0 0.0
        %7313 = vmatprep.mubr.f32.mxu0 0.0
        %v7314 = vand.u32 %v4064, 4294901760
        %7315 = vmatmul.mubr.f32.gmra.mrb[0].mxu0 %v7314
        %v7316 = vpop.f32.mrb[0].mxu0
        %v7317 = vadd.f32 %v7243, %v7316
        %v7318 = vpop.f32.mrb[0].mxu0
        %v7319 = vadd.f32 %v7245, %v7318
        %7320 = vdwg.mxu0
        %v7321 = vand.u32 %v4055, 4294901760
        %7322 = vmatprep.subr.mxu0 %v7321
        %v7323 = vand.u32 %v4054, 4294901760
        %7324 = vmatpush1.msra.mxu0 %v7323
        %7325 = vmatprep.subr.mxu0 0.0
        %7326 = vmatpush1.msra.mxu0 0.0
        %7327 = vmatprep.subr.mxu0 0.0
        %7328 = vmatpush1.msra.mxu0 0.0
        %7329 = vmatprep.subr.mxu0 0.0
        %7330 = vmatpush1.msra.mxu0 0.0
        %7331 = vmatprep.subr.mxu0 0.0
        %7332 = vmatpush1.msra.mxu0 0.0
        %7333 = vmatprep.subr.mxu0 0.0
        %7334 = vmatpush1.msra.mxu0 0.0
        %7335 = vmatprep.subr.mxu0 0.0
        %7336 = vmatpush1.msra.mxu0 0.0
        %7337 = vmatprep.subr.mxu0 0.0
        %7338 = vmatpush1.msra.mxu0 0.0
        %7339 = vmatprep.subr.mxu0 0.0
        %7340 = vmatpush1.msra.mxu0 0.0
        %7341 = vmatprep.subr.mxu0 0.0
        %7342 = vmatpush1.msra.mxu0 0.0
        %7343 = vmatprep.subr.mxu0 0.0
        %7344 = vmatpush1.msra.mxu0 0.0
        %7345 = vmatprep.subr.mxu0 0.0
        %7346 = vmatpush1.msra.mxu0 0.0
        %7347 = vmatprep.subr.mxu0 0.0
        %7348 = vmatpush1.msra.mxu0 0.0
        %7349 = vmatprep.subr.mxu0 0.0
        %7350 = vmatpush1.msra.mxu0 0.0
        %7351 = vmatprep.subr.mxu0 0.0
        %7352 = vmatpush1.msra.mxu0 0.0
        %7353 = vmatprep.subr.mxu0 0.0
        %7354 = vmatpush1.msra.mxu0 0.0
        %7355 = vmatprep.subr.mxu0 0.0
        %7356 = vmatpush1.msra.mxu0 0.0
        %7357 = vmatprep.subr.mxu0 0.0
        %7358 = vmatpush1.msra.mxu0 0.0
        %7359 = vmatprep.subr.mxu0 0.0
        %7360 = vmatpush1.msra.mxu0 0.0
        %7361 = vmatprep.subr.mxu0 0.0
        %7362 = vmatpush1.msra.mxu0 0.0
        %7363 = vmatprep.subr.mxu0 0.0
        %7364 = vmatpush1.msra.mxu0 0.0
        %7365 = vmatprep.subr.mxu0 0.0
        %7366 = vmatpush1.msra.mxu0 0.0
        %7367 = vmatprep.subr.mxu0 0.0
        %7368 = vmatpush1.msra.mxu0 0.0
        %7369 = vmatprep.subr.mxu0 0.0
        %7370 = vmatpush1.msra.mxu0 0.0
        %7371 = vmatprep.subr.mxu0 0.0
        %7372 = vmatpush1.msra.mxu0 0.0
        %7373 = vmatprep.subr.mxu0 0.0
        %7374 = vmatpush1.msra.mxu0 0.0
        %7375 = vmatprep.subr.mxu0 0.0
        %7376 = vmatpush1.msra.mxu0 0.0
        %7377 = vmatprep.subr.mxu0 0.0
        %7378 = vmatpush1.msra.mxu0 0.0
        %7379 = vmatprep.subr.mxu0 0.0
        %7380 = vmatpush1.msra.mxu0 0.0
        %7381 = vmatprep.subr.mxu0 0.0
        %7382 = vmatpush1.msra.mxu0 0.0
        %7383 = vmatprep.subr.mxu0 0.0
        %7384 = vmatpush1.msra.mxu0 0.0
        %7385 = vmatprep.subr.mxu0 0.0
        %7386 = vmatpush1.msra.mxu0 0.0
        %7387 = vmatprep.mubr.f32.mxu0 0.0
        %v7388 = vand.u32 %v4064, 4294901760
        %v7389 = vsub.f32 %v4064, %v7388
        %v7390 = vand.u32 %v7389, 4294901760
        %v7391 = vsub.f32 %v7389, %v7390
        %v7392 = vand.u32 %v7391, 4294901760
        %7393 = vmatmul.mubr.f32.gmra.mrb[0].mxu0 %v7392
        %v7394 = vpop.f32.mrb[0].mxu0
        %v7395 = vadd.f32 %v4061, %v7394
        %v7396 = vpop.f32.mrb[0].mxu0
        %v7397 = vadd.f32 %v4061, %v7396
        %7398 = vdwg.mxu0
        %v7399 = vand.u32 %v4055, 4294901760
        %v7400 = vsub.f32 %v4055, %v7399
        %v7401 = vand.u32 %v7400, 4294901760
        %v7402 = vsub.f32 %v7400, %v7401
        %v7403 = vand.u32 %v7402, 4294901760
        %7404 = vmatprep.subr.mxu0 %v7403
        %v7405 = vand.u32 %v4054, 4294901760
        %v7406 = vsub.f32 %v4054, %v7405
        %v7407 = vand.u32 %v7406, 4294901760
        %v7408 = vsub.f32 %v7406, %v7407
        %v7409 = vand.u32 %v7408, 4294901760
        %7410 = vmatpush1.msra.mxu0 %v7409
        %7411 = vmatprep.subr.mxu0 0.0
        %7412 = vmatpush1.msra.mxu0 0.0
        %7413 = vmatprep.subr.mxu0 0.0
        %7414 = vmatpush1.msra.mxu0 0.0
        %7415 = vmatprep.subr.mxu0 0.0
        %7416 = vmatpush1.msra.mxu0 0.0
        %7417 = vmatprep.subr.mxu0 0.0
        %7418 = vmatpush1.msra.mxu0 0.0
        %7419 = vmatprep.subr.mxu0 0.0
        %7420 = vmatpush1.msra.mxu0 0.0
        %7421 = vmatprep.subr.mxu0 0.0
        %7422 = vmatpush1.msra.mxu0 0.0
        %7423 = vmatprep.subr.mxu0 0.0
        %7424 = vmatpush1.msra.mxu0 0.0
        %7425 = vmatprep.subr.mxu0 0.0
        %7426 = vmatpush1.msra.mxu0 0.0
        %7427 = vmatprep.subr.mxu0 0.0
        %7428 = vmatpush1.msra.mxu0 0.0
        %7429 = vmatprep.subr.mxu0 0.0
        %7430 = vmatpush1.msra.mxu0 0.0
        %7431 = vmatprep.subr.mxu0 0.0
        %7432 = vmatpush1.msra.mxu0 0.0
        %7433 = vmatprep.subr.mxu0 0.0
        %7434 = vmatpush1.msra.mxu0 0.0
        %7435 = vmatprep.subr.mxu0 0.0
        %7436 = vmatpush1.msra.mxu0 0.0
        %7437 = vmatprep.subr.mxu0 0.0
        %7438 = vmatpush1.msra.mxu0 0.0
        %7439 = vmatprep.subr.mxu0 0.0
        %7440 = vmatpush1.msra.mxu0 0.0
        %7441 = vmatprep.subr.mxu0 0.0
        %7442 = vmatpush1.msra.mxu0 0.0
        %7443 = vmatprep.subr.mxu0 0.0
        %7444 = vmatpush1.msra.mxu0 0.0
        %7445 = vmatprep.subr.mxu0 0.0
        %7446 = vmatpush1.msra.mxu0 0.0
        %7447 = vmatprep.subr.mxu0 0.0
        %7448 = vmatpush1.msra.mxu0 0.0
        %7449 = vmatprep.subr.mxu0 0.0
        %7450 = vmatpush1.msra.mxu0 0.0
        %7451 = vmatprep.subr.mxu0 0.0
        %7452 = vmatpush1.msra.mxu0 0.0
        %7453 = vmatprep.subr.mxu0 0.0
        %7454 = vmatpush1.msra.mxu0 0.0
        %7455 = vmatprep.subr.mxu0 0.0
        %7456 = vmatpush1.msra.mxu0 0.0
        %7457 = vmatprep.subr.mxu0 0.0
        %7458 = vmatpush1.msra.mxu0 0.0
        %7459 = vmatprep.subr.mxu0 0.0
        %7460 = vmatpush1.msra.mxu0 0.0
        %7461 = vmatprep.subr.mxu0 0.0
        %7462 = vmatpush1.msra.mxu0 0.0
        %7463 = vmatprep.subr.mxu0 0.0
        %7464 = vmatpush1.msra.mxu0 0.0
        %7465 = vmatprep.subr.mxu0 0.0
        %7466 = vmatpush1.msra.mxu0 0.0
        %7467 = vmatprep.subr.mxu0 0.0
        %7468 = vmatpush1.msra.mxu0 0.0
        %7469 = vmatprep.subr.mxu0 0.0
        %7470 = vmatpush1.msra.mxu0 0.0
        %7471 = vmatprep.subr.mxu0 0.0
        %7472 = vmatpush1.msra.mxu0 0.0
        %7473 = vmatprep.mubr.f32.mxu0 0.0
        %v7474 = vand.u32 %v4064, 4294901760
        %7475 = vmatmul.mubr.f32.gmra.mrb[0].mxu0 %v7474
        %v7476 = vpop.f32.mrb[0].mxu0
        %v7477 = vadd.f32 %v7395, %v7476
        %v7478 = vpop.f32.mrb[0].mxu0
        %v7479 = vadd.f32 %v7397, %v7478
        %7480 = vdwg.mxu0
        %v7481 = vand.u32 %v4055, 4294901760
        %v7482 = vsub.f32 %v4055, %v7481
        %7483 = vmatprep.subr.mxu0 %v7482
        %v7484 = vand.u32 %v4054, 4294901760
        %v7485 = vsub.f32 %v4054, %v7484
        %7486 = vmatpush1.msra.mxu0 %v7485
        %7487 = vmatprep.subr.mxu0 0.0
        %7488 = vmatpush1.msra.mxu0 0.0
        %7489 = vmatprep.subr.mxu0 0.0
        %7490 = vmatpush1.msra.mxu0 0.0
        %7491 = vmatprep.subr.mxu0 0.0
        %7492 = vmatpush1.msra.mxu0 0.0
        %7493 = vmatprep.subr.mxu0 0.0
        %7494 = vmatpush1.msra.mxu0 0.0
        %7495 = vmatprep.subr.mxu0 0.0
        %7496 = vmatpush1.msra.mxu0 0.0
        %7497 = vmatprep.subr.mxu0 0.0
        %7498 = vmatpush1.msra.mxu0 0.0
        %7499 = vmatprep.subr.mxu0 0.0
        %7500 = vmatpush1.msra.mxu0 0.0
        %7501 = vmatprep.subr.mxu0 0.0
        %7502 = vmatpush1.msra.mxu0 0.0
        %7503 = vmatprep.subr.mxu0 0.0
        %7504 = vmatpush1.msra.mxu0 0.0
        %7505 = vmatprep.subr.mxu0 0.0
        %7506 = vmatpush1.msra.mxu0 0.0
        %7507 = vmatprep.subr.mxu0 0.0
        %7508 = vmatpush1.msra.mxu0 0.0
        %7509 = vmatprep.subr.mxu0 0.0
        %7510 = vmatpush1.msra.mxu0 0.0
        %7511 = vmatprep.subr.mxu0 0.0
        %7512 = vmatpush1.msra.mxu0 0.0
        %7513 = vmatprep.subr.mxu0 0.0
        %7514 = vmatpush1.msra.mxu0 0.0
        %7515 = vmatprep.subr.mxu0 0.0
        %7516 = vmatpush1.msra.mxu0 0.0
        %7517 = vmatprep.subr.mxu0 0.0
        %7518 = vmatpush1.msra.mxu0 0.0
        %7519 = vmatprep.subr.mxu0 0.0
        %7520 = vmatpush1.msra.mxu0 0.0
        %7521 = vmatprep.subr.mxu0 0.0
        %7522 = vmatpush1.msra.mxu0 0.0
        %7523 = vmatprep.subr.mxu0 0.0
        %7524 = vmatpush1.msra.mxu0 0.0
        %7525 = vmatprep.subr.mxu0 0.0
        %7526 = vmatpush1.msra.mxu0 0.0
        %7527 = vmatprep.subr.mxu0 0.0
        %7528 = vmatpush1.msra.mxu0 0.0
        %7529 = vmatprep.subr.mxu0 0.0
        %7530 = vmatpush1.msra.mxu0 0.0
        %7531 = vmatprep.subr.mxu0 0.0
        %7532 = vmatpush1.msra.mxu0 0.0
        %7533 = vmatprep.subr.mxu0 0.0
        %7534 = vmatpush1.msra.mxu0 0.0
        %7535 = vmatprep.subr.mxu0 0.0
        %7536 = vmatpush1.msra.mxu0 0.0
        %7537 = vmatprep.subr.mxu0 0.0
        %7538 = vmatpush1.msra.mxu0 0.0
        %7539 = vmatprep.subr.mxu0 0.0
        %7540 = vmatpush1.msra.mxu0 0.0
        %7541 = vmatprep.subr.mxu0 0.0
        %7542 = vmatpush1.msra.mxu0 0.0
        %7543 = vmatprep.subr.mxu0 0.0
        %7544 = vmatpush1.msra.mxu0 0.0
        %7545 = vmatprep.subr.mxu0 0.0
        %7546 = vmatpush1.msra.mxu0 0.0
        %7547 = vmatprep.subr.mxu0 0.0
        %7548 = vmatpush1.msra.mxu0 0.0
        %7549 = vmatprep.mubr.f32.mxu0 0.0
        %v7550 = vand.u32 %v4064, 4294901760
        %v7551 = vsub.f32 %v4064, %v7550
        %7552 = vmatmul.mubr.f32.gmra.mrb[0].mxu0 %v7551
        %v7553 = vpop.f32.mrb[0].mxu0
        %v7554 = vadd.f32 %v7477, %v7553
        %v7555 = vpop.f32.mrb[0].mxu0
        %v7556 = vadd.f32 %v7479, %v7555
        %7557 = vdwg.mxu0
        %v7558 = vand.u32 %v4055, 4294901760
        %7559 = vmatprep.subr.mxu0 %v7558
        %v7560 = vand.u32 %v4054, 4294901760
        %7561 = vmatpush1.msra.mxu0 %v7560
        %7562 = vmatprep.subr.mxu0 0.0
        %7563 = vmatpush1.msra.mxu0 0.0
        %7564 = vmatprep.subr.mxu0 0.0
        %7565 = vmatpush1.msra.mxu0 0.0
        %7566 = vmatprep.subr.mxu0 0.0
        %7567 = vmatpush1.msra.mxu0 0.0
        %7568 = vmatprep.subr.mxu0 0.0
        %7569 = vmatpush1.msra.mxu0 0.0
        %7570 = vmatprep.subr.mxu0 0.0
        %7571 = vmatpush1.msra.mxu0 0.0
        %7572 = vmatprep.subr.mxu0 0.0
        %7573 = vmatpush1.msra.mxu0 0.0
        %7574 = vmatprep.subr.mxu0 0.0
        %7575 = vmatpush1.msra.mxu0 0.0
        %7576 = vmatprep.subr.mxu0 0.0
        %7577 = vmatpush1.msra.mxu0 0.0
        %7578 = vmatprep.subr.mxu0 0.0
        %7579 = vmatpush1.msra.mxu0 0.0
        %7580 = vmatprep.subr.mxu0 0.0
        %7581 = vmatpush1.msra.mxu0 0.0
        %7582 = vmatprep.subr.mxu0 0.0
        %7583 = vmatpush1.msra.mxu0 0.0
        %7584 = vmatprep.subr.mxu0 0.0
        %7585 = vmatpush1.msra.mxu0 0.0
        %7586 = vmatprep.subr.mxu0 0.0
        %7587 = vmatpush1.msra.mxu0 0.0
        %7588 = vmatprep.subr.mxu0 0.0
        %7589 = vmatpush1.msra.mxu0 0.0
        %7590 = vmatprep.subr.mxu0 0.0
        %7591 = vmatpush1.msra.mxu0 0.0
        %7592 = vmatprep.subr.mxu0 0.0
        %7593 = vmatpush1.msra.mxu0 0.0
        %7594 = vmatprep.subr.mxu0 0.0
        %7595 = vmatpush1.msra.mxu0 0.0
        %7596 = vmatprep.subr.mxu0 0.0
        %7597 = vmatpush1.msra.mxu0 0.0
        %7598 = vmatprep.subr.mxu0 0.0
        %7599 = vmatpush1.msra.mxu0 0.0
        %7600 = vmatprep.subr.mxu0 0.0
        %7601 = vmatpush1.msra.mxu0 0.0
        %7602 = vmatprep.subr.mxu0 0.0
        %7603 = vmatpush1.msra.mxu0 0.0
        %7604 = vmatprep.subr.mxu0 0.0
        %7605 = vmatpush1.msra.mxu0 0.0
        %7606 = vmatprep.subr.mxu0 0.0
        %7607 = vmatpush1.msra.mxu0 0.0
        %7608 = vmatprep.subr.mxu0 0.0
        %7609 = vmatpush1.msra.mxu0 0.0
        %7610 = vmatprep.subr.mxu0 0.0
        %7611 = vmatpush1.msra.mxu0 0.0
        %7612 = vmatprep.subr.mxu0 0.0
        %7613 = vmatpush1.msra.mxu0 0.0
        %7614 = vmatprep.subr.mxu0 0.0
        %7615 = vmatpush1.msra.mxu0 0.0
        %7616 = vmatprep.subr.mxu0 0.0
        %7617 = vmatpush1.msra.mxu0 0.0
        %7618 = vmatprep.subr.mxu0 0.0
        %7619 = vmatpush1.msra.mxu0 0.0
        %7620 = vmatprep.subr.mxu0 0.0
        %7621 = vmatpush1.msra.mxu0 0.0
        %7622 = vmatprep.subr.mxu0 0.0
        %7623 = vmatpush1.msra.mxu0 0.0
        %7624 = vmatprep.mubr.f32.mxu0 0.0
        %v7625 = vand.u32 %v4064, 4294901760
        %v7626 = vsub.f32 %v4064, %v7625
        %v7627 = vand.u32 %v7626, 4294901760
        %7628 = vmatmul.mubr.f32.gmra.mrb[0].mxu0 %v7627
        %v7629 = vpop.f32.mrb[0].mxu0
        %v7630 = vadd.f32 %v7554, %v7629
        %v7631 = vpop.f32.mrb[0].mxu0
        %v7632 = vadd.f32 %v7556, %v7631
        %7633 = vdwg.mxu0
        %v7634 = vand.u32 %v4055, 4294901760
        %v7635 = vsub.f32 %v4055, %v7634
        %v7636 = vand.u32 %v7635, 4294901760
        %7637 = vmatprep.subr.mxu0 %v7636
        %v7638 = vand.u32 %v4054, 4294901760
        %v7639 = vsub.f32 %v4054, %v7638
        %v7640 = vand.u32 %v7639, 4294901760
        %7641 = vmatpush1.msra.mxu0 %v7640
        %7642 = vmatprep.subr.mxu0 0.0
        %7643 = vmatpush1.msra.mxu0 0.0
        %7644 = vmatprep.subr.mxu0 0.0
        %7645 = vmatpush1.msra.mxu0 0.0
        %7646 = vmatprep.subr.mxu0 0.0
        %7647 = vmatpush1.msra.mxu0 0.0
        %7648 = vmatprep.subr.mxu0 0.0
        %7649 = vmatpush1.msra.mxu0 0.0
        %7650 = vmatprep.subr.mxu0 0.0
        %7651 = vmatpush1.msra.mxu0 0.0
        %7652 = vmatprep.subr.mxu0 0.0
        %7653 = vmatpush1.msra.mxu0 0.0
        %7654 = vmatprep.subr.mxu0 0.0
        %7655 = vmatpush1.msra.mxu0 0.0
        %7656 = vmatprep.subr.mxu0 0.0
        %7657 = vmatpush1.msra.mxu0 0.0
        %7658 = vmatprep.subr.mxu0 0.0
        %7659 = vmatpush1.msra.mxu0 0.0
        %7660 = vmatprep.subr.mxu0 0.0
        %7661 = vmatpush1.msra.mxu0 0.0
        %7662 = vmatprep.subr.mxu0 0.0
        %7663 = vmatpush1.msra.mxu0 0.0
        %7664 = vmatprep.subr.mxu0 0.0
        %7665 = vmatpush1.msra.mxu0 0.0
        %7666 = vmatprep.subr.mxu0 0.0
        %7667 = vmatpush1.msra.mxu0 0.0
        %7668 = vmatprep.subr.mxu0 0.0
        %7669 = vmatpush1.msra.mxu0 0.0
        %7670 = vmatprep.subr.mxu0 0.0
        %7671 = vmatpush1.msra.mxu0 0.0
        %7672 = vmatprep.subr.mxu0 0.0
        %7673 = vmatpush1.msra.mxu0 0.0
        %7674 = vmatprep.subr.mxu0 0.0
        %7675 = vmatpush1.msra.mxu0 0.0
        %7676 = vmatprep.subr.mxu0 0.0
        %7677 = vmatpush1.msra.mxu0 0.0
        %7678 = vmatprep.subr.mxu0 0.0
        %7679 = vmatpush1.msra.mxu0 0.0
        %7680 = vmatprep.subr.mxu0 0.0
        %7681 = vmatpush1.msra.mxu0 0.0
        %7682 = vmatprep.subr.mxu0 0.0
        %7683 = vmatpush1.msra.mxu0 0.0
        %7684 = vmatprep.subr.mxu0 0.0
        %7685 = vmatpush1.msra.mxu0 0.0
        %7686 = vmatprep.subr.mxu0 0.0
        %7687 = vmatpush1.msra.mxu0 0.0
        %7688 = vmatprep.subr.mxu0 0.0
        %7689 = vmatpush1.msra.mxu0 0.0
        %7690 = vmatprep.subr.mxu0 0.0
        %7691 = vmatpush1.msra.mxu0 0.0
        %7692 = vmatprep.subr.mxu0 0.0
        %7693 = vmatpush1.msra.mxu0 0.0
        %7694 = vmatprep.subr.mxu0 0.0
        %7695 = vmatpush1.msra.mxu0 0.0
        %7696 = vmatprep.subr.mxu0 0.0
        %7697 = vmatpush1.msra.mxu0 0.0
        %7698 = vmatprep.subr.mxu0 0.0
        %7699 = vmatpush1.msra.mxu0 0.0
        %7700 = vmatprep.subr.mxu0 0.0
        %7701 = vmatpush1.msra.mxu0 0.0
        %7702 = vmatprep.subr.mxu0 0.0
        %7703 = vmatpush1.msra.mxu0 0.0
        %7704 = vmatprep.mubr.f32.mxu0 0.0
        %v7705 = vand.u32 %v4064, 4294901760
        %7706 = vmatmul.mubr.f32.gmra.mrb[0].mxu0 %v7705
        %v7707 = vpop.f32.mrb[0].mxu0
        %v7708 = vadd.f32 %v7630, %v7707
        %v7709 = vpop.f32.mrb[0].mxu0
        %v7710 = vadd.f32 %v7632, %v7709
        %7711 = vdwg.mxu0
        %v7712 = vand.u32 %v4055, 4294901760
        %7713 = vmatprep.subr.mxu0 %v7712
        %v7714 = vand.u32 %v4054, 4294901760
        %7715 = vmatpush1.msra.mxu0 %v7714
        %7716 = vmatprep.subr.mxu0 0.0
        %7717 = vmatpush1.msra.mxu0 0.0
        %7718 = vmatprep.subr.mxu0 0.0
        %7719 = vmatpush1.msra.mxu0 0.0
        %7720 = vmatprep.subr.mxu0 0.0
        %7721 = vmatpush1.msra.mxu0 0.0
        %7722 = vmatprep.subr.mxu0 0.0
        %7723 = vmatpush1.msra.mxu0 0.0
        %7724 = vmatprep.subr.mxu0 0.0
        %7725 = vmatpush1.msra.mxu0 0.0
        %7726 = vmatprep.subr.mxu0 0.0
        %7727 = vmatpush1.msra.mxu0 0.0
        %7728 = vmatprep.subr.mxu0 0.0
        %7729 = vmatpush1.msra.mxu0 0.0
        %7730 = vmatprep.subr.mxu0 0.0
        %7731 = vmatpush1.msra.mxu0 0.0
        %7732 = vmatprep.subr.mxu0 0.0
        %7733 = vmatpush1.msra.mxu0 0.0
        %7734 = vmatprep.subr.mxu0 0.0
        %7735 = vmatpush1.msra.mxu0 0.0
        %7736 = vmatprep.subr.mxu0 0.0
        %7737 = vmatpush1.msra.mxu0 0.0
        %7738 = vmatprep.subr.mxu0 0.0
        %7739 = vmatpush1.msra.mxu0 0.0
        %7740 = vmatprep.subr.mxu0 0.0
        %7741 = vmatpush1.msra.mxu0 0.0
        %7742 = vmatprep.subr.mxu0 0.0
        %7743 = vmatpush1.msra.mxu0 0.0
        %7744 = vmatprep.subr.mxu0 0.0
        %7745 = vmatpush1.msra.mxu0 0.0
        %7746 = vmatprep.subr.mxu0 0.0
        %7747 = vmatpush1.msra.mxu0 0.0
        %7748 = vmatprep.subr.mxu0 0.0
        %7749 = vmatpush1.msra.mxu0 0.0
        %7750 = vmatprep.subr.mxu0 0.0
        %7751 = vmatpush1.msra.mxu0 0.0
        %7752 = vmatprep.subr.mxu0 0.0
        %7753 = vmatpush1.msra.mxu0 0.0
        %7754 = vmatprep.subr.mxu0 0.0
        %7755 = vmatpush1.msra.mxu0 0.0
        %7756 = vmatprep.subr.mxu0 0.0
        %7757 = vmatpush1.msra.mxu0 0.0
        %7758 = vmatprep.subr.mxu0 0.0
        %7759 = vmatpush1.msra.mxu0 0.0
        %7760 = vmatprep.subr.mxu0 0.0
        %7761 = vmatpush1.msra.mxu0 0.0
        %7762 = vmatprep.subr.mxu0 0.0
        %7763 = vmatpush1.msra.mxu0 0.0
        %7764 = vmatprep.subr.mxu0 0.0
        %7765 = vmatpush1.msra.mxu0 0.0
        %7766 = vmatprep.subr.mxu0 0.0
        %7767 = vmatpush1.msra.mxu0 0.0
        %7768 = vmatprep.subr.mxu0 0.0
        %7769 = vmatpush1.msra.mxu0 0.0
        %7770 = vmatprep.subr.mxu0 0.0
        %7771 = vmatpush1.msra.mxu0 0.0
        %7772 = vmatprep.subr.mxu0 0.0
        %7773 = vmatpush1.msra.mxu0 0.0
        %7774 = vmatprep.subr.mxu0 0.0
        %7775 = vmatpush1.msra.mxu0 0.0
        %7776 = vmatprep.subr.mxu0 0.0
        %7777 = vmatpush1.msra.mxu0 0.0
        %7778 = vmatprep.mubr.f32.mxu0 0.0
        %v7779 = vand.u32 %v4064, 4294901760
        %7780 = vmatmul.mubr.f32.gmra.mrb[0].mxu0 %v7779
        %v7781 = vpop.f32.mrb[0].mxu0
        %v7782 = vadd.f32 %v7708, %v7781
        %v7783 = vpop.f32.mrb[0].mxu0
        %v7784 = vadd.f32 %v7710, %v7783
        %7785 = vdwg.mxu0
        %v7786 = vadd.f32 %v4527, %v261
        %v7787 = vadd.f32 %v4529, %v262
        %v7788 = vadd.f32 %v4992, %v263
        %v7789 = vadd.f32 %v4994, %v264
        %v7790 = vadd.f32 %v5457, %v265
        %v7791 = vadd.f32 %v5459, %v266
        %v7792 = vadd.f32 %v5922, %v267
        %v7793 = vadd.f32 %v5924, %v268
        %v7794 = vadd.f32 %v6387, %v269
        %v7795 = vadd.f32 %v6389, %v270
        %v7796 = vadd.f32 %v6852, %v271
        %v7797 = vadd.f32 %v6854, %v272
        %v7798 = vadd.f32 %v7317, %v273
        %v7799 = vadd.f32 %v7319, %v274
        %v7800 = vadd.f32 %v7782, %v275
        %v7801 = vadd.f32 %v7784, %v276
        %vm7802 = vcmp.gt.f32.partialorder %v7786, 0.0
        %vm7803 = vcmp.gt.f32.partialorder %v7787, 0.0
        %vm7804 = vcmp.gt.f32.partialorder %v7788, 0.0
        %vm7805 = vcmp.gt.f32.partialorder %v7789, 0.0
        %vm7806 = vcmp.gt.f32.partialorder %v7790, 0.0
        %vm7807 = vcmp.gt.f32.partialorder %v7791, 0.0
        %vm7808 = vcmp.gt.f32.partialorder %v7792, 0.0
        %vm7809 = vcmp.gt.f32.partialorder %v7793, 0.0
        %vm7810 = vcmp.gt.f32.partialorder %v7794, 0.0
        %vm7811 = vcmp.gt.f32.partialorder %v7795, 0.0
        %vm7812 = vcmp.gt.f32.partialorder %v7796, 0.0
        %vm7813 = vcmp.gt.f32.partialorder %v7797, 0.0
        %vm7814 = vcmp.gt.f32.partialorder %v7798, 0.0
        %vm7815 = vcmp.gt.f32.partialorder %v7799, 0.0
        %vm7816 = vcmp.gt.f32.partialorder %v7800, 0.0
        %vm7817 = vcmp.gt.f32.partialorder %v7801, 0.0
        %v7818 = vmul.f32 %v7786, 0.01
        %v7819 = vmul.f32 %v7787, 0.01
        %v7820 = vmul.f32 %v7788, 0.01
        %v7821 = vmul.f32 %v7789, 0.01
        %v7822 = vmul.f32 %v7790, 0.01
        %v7823 = vmul.f32 %v7791, 0.01
        %v7824 = vmul.f32 %v7792, 0.01
        %v7825 = vmul.f32 %v7793, 0.01
        %v7826 = vmul.f32 %v7794, 0.01
        %v7827 = vmul.f32 %v7795, 0.01
        %v7828 = vmul.f32 %v7796, 0.01
        %v7829 = vmul.f32 %v7797, 0.01
        %v7830 = vmul.f32 %v7798, 0.01
        %v7831 = vmul.f32 %v7799, 0.01
        %v7832 = vmul.f32 %v7800, 0.01
        %v7833 = vmul.f32 %v7801, 0.01
        %v7834 = vsel %vm7802, %v7786, %v7818
        %v7835 = vsel %vm7803, %v7787, %v7819
        %v7836 = vsel %vm7804, %v7788, %v7820
        %v7837 = vsel %vm7805, %v7789, %v7821
        %v7838 = vsel %vm7806, %v7790, %v7822
        %v7839 = vsel %vm7807, %v7791, %v7823
        %v7840 = vsel %vm7808, %v7792, %v7824
        %v7841 = vsel %vm7809, %v7793, %v7825
        %v7842 = vsel %vm7810, %v7794, %v7826
        %v7843 = vsel %vm7811, %v7795, %v7827
        %v7844 = vsel %vm7812, %v7796, %v7828
        %v7845 = vsel %vm7813, %v7797, %v7829
        %v7846 = vsel %vm7814, %v7798, %v7830
        %v7847 = vsel %vm7815, %v7799, %v7831
        %v7848 = vsel %vm7816, %v7800, %v7832
        %v7849 = vsel %vm7817, %v7801, %v7833
        %7850 = vst [vmem:[%s258] sm:$0xff] %v7834
        %7851 = vst [vmem:[%s258 + $0x8] sm:$0xff] %v7835
        %7852 = vst [vmem:[%s258 + $0x10] sm:$0xff] %v7836
        %7853 = vst [vmem:[%s258 + $0x18] sm:$0xff] %v7837
        %7854 = vst [vmem:[%s258 + $0x20] sm:$0xff] %v7838
        %7855 = vst [vmem:[%s258 + $0x28] sm:$0xff] %v7839
        %7856 = vst [vmem:[%s258 + $0x30] sm:$0xff] %v7840
        %7857 = vst [vmem:[%s258 + $0x38] sm:$0xff] %v7841
        %7858 = vst [vmem:[%s258 + $0x40] sm:$0xff] %v7842
        %7859 = vst [vmem:[%s258 + $0x48] sm:$0xff] %v7843
        %7860 = vst [vmem:[%s258 + $0x50] sm:$0xff] %v7844
        %7861 = vst [vmem:[%s258 + $0x58] sm:$0xff] %v7845
        %7862 = vst [vmem:[%s258 + $0x60] sm:$0xff] %v7846
        %7863 = vst [vmem:[%s258 + $0x68] sm:$0xff] %v7847
        %7864 = vst [vmem:[%s258 + $0x70] sm:$0xff] %v7848
        %7865 = vst [vmem:[%s258 + $0x78] sm:$0xff] %v7849
        %s7866 = sand.u32 %s156, 1
        %s7867 = scalar_lea.sflag [#allocation4], %s7866
        %s7868 = sand.u32 %s156, 1
        %s7869 = smul.addr %s7868, 128
        %s7870 = scalar_lea.vmem [#allocation5], %s7869
        // Predicated region
        $region45: #{tpu_custom_call.1} parent=39 // pred_check
          %p7871 = pneg %p166
        $region46: #{tpu_custom_call.1} parent=39 // pred_check_branch
          %7873 = sbr.rel (%p7871) target = $region48
        $region47: #{tpu_custom_call.1} parent=39 // pred_region
          %s7874 = smul.u32 16, %s27
          %s7876 = ssub.s32 2048, 2048
          %7877 = vsyncadd %s7867, %s7876
          %s7878 = smul.addr %s26, 32
          %s7879 = sadd.s32 %s7874, %s7878
          %s7880 = smul.addr %s7879, 128
          %s7881 = scalar_lea.hbm %s5, %s7880
          %s7883 = sshll.u32 %s7870, 4
          %s7884 = int_to_ptr.vmem [resolvable:$true] %s7883
          %7886 = dma.vmem_to_hbm [thread:$0]  %s7884, 2048, %s7881, %s7867
        $region48: #{tpu_custom_call.1} parent=39 // pred_fallthru
          _
      $region40: #{tpu_custom_call.1} parent=5 // pred_fallthru
        _
      %p7887 = scmp.le.s32.totalorder 2, %s17
      // Predicated region
      $region49: #{tpu_custom_call.1} parent=5 // pred_check
        %p7888 = pneg %p7887
      $region50: #{tpu_custom_call.1} parent=5 // pred_check_branch
        %7890 = sbr.rel (%p7888) target = $region52
      $region51: #{tpu_custom_call.1} parent=5 // pred_region
        %s7891 = ssub.s32 %s17, 2
        // Predicated region
        $region53: #{tpu_custom_call.1} parent=51 // pred_check
          %p7892 = pneg %p172
        $region54: #{tpu_custom_call.1} parent=51 // pred_check_branch
          %7894 = sbr.rel (%p7892) target = $region56
        $region55: #{tpu_custom_call.1} parent=51 // pred_region
          %s7895 = sand.u32 %s157, 1
          %s7896 = scalar_lea.sflag [#allocation4], %s7895
          %s7897 = sand.u32 %s157, 1
          %s7898 = smul.addr %s7897, 128
          %s7899 = scalar_lea.vmem [#allocation5], %s7898
          %7900 = dma.done %s7896, 2048
        $region56: #{tpu_custom_call.1} parent=51 // pred_fallthru
          _
      $region52: #{tpu_custom_call.1} parent=5 // pred_fallthru
        _
    $region6: #{tpu_custom_call.1} parent=1 // loop_footer
      %s21 = sadd.s32 1, %s17
    $region7: #{tpu_custom_call.1} parent=1 // loop_footer_branch
      %16 = sbr.rel target = $region3
    $region8: #{tpu_custom_call.1} parent=1 // loop_exit
      _
    %7901 = vsyncpa [#allocation3], 1
    %s7902 = scalar_lea.sflag [#allocation3], 1
    %7903 = vsyncpa %s7902, 1
    %7904 = vsyncpa [#allocation4], 1
    %s7905 = scalar_lea.sflag [#allocation4], 1
    %7906 = vsyncpa %s7905, 1

</llo_original>
